<compile_context>
chip_gen: v7x
topology: tpu7x:2x2x1
jax: 0.10.0
libtpu: 0.0.40
codegen_flags: <defaults>
</compile_context>

<pallas_src>
import math

import jax
import jax.numpy as jnp
from jax import lax
from jax.experimental import pallas as pl
from jax.experimental.pallas import tpu as pltpu

# ------------------------- config (small synthetic shapes) -------------------------
B = 2                  # batch (number of captions)
NUM_RETRIEVAL = 2      # retrievals per caption
BR = B * NUM_RETRIEVAL
N_DB = 32              # database entries
N_DB_PAD = 128         # DB padded to a lane-dense width for the score kernel output
LATENT_DIM = 128       # latent / CLIP feature dim (d_model)
MOTION_DIM = 16        # raw motion feature dim
MAX_SEQ_LEN = 16       # motion sequence length T
T_TEXT = 8             # CLIP sequence length (77 in the real model)
NUM_HEADS = 4
HEAD_DIM = LATENT_DIM // NUM_HEADS
FF_SIZE = 256          # text-encoder feed-forward dim
FFN_DIM = 256          # motion-encoder FFN dim
NUM_LAYERS = 1         # text-encoder layers
NUM_MOTION_LAYERS = 2  # motion-encoder layers
STRIDE = 4
KINEMATIC_COEF = 0.1
LN_EPS = 1e-5
NEG_INF = -1e30

# Leading 'parallel' grid axis: both v7x TensorCores get half of BR; on v5e/v6e it is just a
# loop split (neutral).  Layer axis is the inner 'arbitrary' (weight streaming) axis.
NUM_SPLITS = 2
BR_SPLIT = BR // NUM_SPLITS
L_STEPS = max(NUM_MOTION_LAYERS, NUM_LAYERS)


# ------------------------------- in-kernel helpers --------------------------------
def _gelu(x):
    # TODO(synk): PyTorch uses exact erf-GELU; erf has no Mosaic lowering, tanh approx used.
    c = math.sqrt(2.0 / math.pi)
    return 0.5 * x * (1.0 + jnp.tanh(c * (x + 0.044715 * x * x * x)))


def _layer_norm(x, w, b):
    mu = jnp.mean(x, axis=-1, keepdims=True)
    var = jnp.mean((x - mu) ** 2, axis=-1, keepdims=True)
    return (x - mu) * lax.rsqrt(var + LN_EPS) * w + b


# ----------------------------------- score kernel ----------------------------------
def _score_kernel(tfT_ref, mlen_ref, bias_ref, q_ref, len_ref, out_ref):
    """score = cos(db_text, query) * exp(-coef * |m_len - len| / max(|m_len - len|, len)).

    DB text features arrive pre-L2-normalized & transposed (static preprocessing), padded to a
    lane-dense width; `bias` is a precomputed additive 0/-inf mask for the padded columns.
    Exact divides are used so approx-reciprocal error cannot flip the top-k ordering.
    """
    tfT = tfT_ref[...]                                               # (D, Npad), unit columns
    q = q_ref[...]                                                   # (B, D)
    dots = jnp.dot(q, tfT, preferred_element_type=jnp.float32)       # (B, Npad)
    q_norm = jnp.sqrt(jnp.sum(q * q, axis=-1, keepdims=True))        # (B, 1)
    cos = dots / jnp.maximum(q_norm, 1e-8)

    lengths = len_ref[...]                                           # (B, 1)
    rel = jnp.abs(mlen_ref[...] - lengths)                           # (B, Npad)
    rel = rel / jnp.maximum(rel, lengths)
    out_ref[...] = cos * jnp.exp(-rel * KINEMATIC_COEF) + bias_ref[...]


def _score_spec(shape):
    nd = len(shape)
    return pl.BlockSpec(shape, lambda i: (0,) * nd)


def retrieval_scores(db, query_features, lengths_f):
    D, Np = db["text_features_norm_T"].shape
    Bq = query_features.shape[0]
    # TODO(synk): for realistic N_DB, tile the DB axis (grid=(cdiv(Npad, TN),), 'parallel')
    # so the database streams through VMEM instead of being fully resident.
    return pl.pallas_call(
        _score_kernel,
        out_shape=jax.ShapeDtypeStruct((Bq, Np), jnp.float32),
        grid=(1,),
        in_specs=[
            _score_spec((D, Np)),
            _score_spec((1, Np)),
            _score_spec((1, Np)),
            _score_spec((Bq, D)),
            _score_spec((Bq, 1)),
        ],
        out_specs=_score_spec((Bq, Np)),
        compiler_params=pltpu.CompilerParams(dimension_semantics=("arbitrary",)),
    )(db["text_features_norm_T"], db["m_lengths_pad"], db["pad_bias"],
      query_features, lengths_f.reshape(Bq, 1))


# ------------------------------ fused branch kernel --------------------------------
def _fused_branch_kernel(
        idx_ref,                                   # scalar prefetch: (BR,) int32 in SMEM
        motions_hbm, clip_hbm,                     # HBM-resident DB (pl.ANY)
        pw_ref, pb_ref, pos_ref,                   # motion_proj + pos embedding
        mw1_ref, mb1_ref, mw2_ref, mb2_ref,        # motion FFN layer l (streamed)
        wqkv_ref, bqkv_ref, wo_ref, bo_ref,        # text layer l (streamed)
        ln1w_ref, ln1b_ref, tw1_ref, tb1_ref, tw2_ref, tb2_ref, ln2w_ref, ln2b_ref,
        raw_out_ref, mot_out_ref, txt_out_ref,     # outputs (blocked per split)
        m_raw, m_act, t_act, sems):                # scratch
    p = pl.program_id(0)          # BR split ('parallel')
    l = pl.program_id(1)          # layer step ('arbitrary')
    D = LATENT_DIM
    T = MAX_SEQ_LEN
    Tt = T_TEXT
    hd = HEAD_DIM
    BRs = BR_SPLIT

    # ---- l == 0: gather this split's DB rows + motion_proj + positional embedding ----
    @pl.when(l == 0)
    def _gather_and_project():
        base = p * BRs
        for r in range(BRs):
            i = idx_ref[base + r]
            pltpu.make_async_copy(motions_hbm.at[i], m_raw.at[r], sems.at[0, r]).start()
            pltpu.make_async_copy(clip_hbm.at[i], t_act.at[r], sems.at[1, r]).start()
        for r in range(BRs):
            pltpu.make_async_copy(motions_hbm.at[0], m_raw.at[r], sems.at[0, r]).wait()
        raw_out_ref[...] = m_raw[...]                                 # raw_motion output
        xm = m_raw[...].reshape(BRs * T, MOTION_DIM)
        y = jnp.dot(xm.astype(jnp.bfloat16), pw_ref[...],
                    preferred_element_type=jnp.float32) + pb_ref[...]
        y = y.reshape(BRs, T, D) + pos_ref[...][None]                 # + motion_pos_embedding
        m_act[...] = y.reshape(BRs * T, D)
        # text-row DMAs stay in flight; they are waited just before the text layer below.

    # ---- motion EncoderLayer l (sa_block=None -> pure FFN residual block) ----
    @pl.when(l < NUM_MOTION_LAYERS)
    def _motion_layer():
        x = m_act[...]
        h = _gelu(jnp.dot(x.astype(jnp.bfloat16), mw1_ref[0],
                          preferred_element_type=jnp.float32) + mb1_ref[0])
        m_act[...] = x + jnp.dot(h.astype(jnp.bfloat16), mw2_ref[0],
                                 preferred_element_type=jnp.float32) + mb2_ref[0]

    # ---- last motion layer: write only every STRIDE-th row (re_motion output) ----
    @pl.when(l == NUM_MOTION_LAYERS - 1)
    def _write_motion():
        y3 = m_act[...].reshape(BRs, T, D)
        for t in range(T // STRIDE):
            mot_out_ref[:, t:t + 1, :] = y3[:, t * STRIDE:t * STRIDE + 1, :]

    # ---- text TransformerEncoderLayer l (post-norm, gelu, dropout=0) ----
    @pl.when(l < NUM_LAYERS)
    def _text_layer():
        @pl.when(l == 0)
        def _wait_text_gather():
            for r in range(BRs):
                pltpu.make_async_copy(clip_hbm.at[0], t_act.at[r], sems.at[1, r]).wait()

        scale = 1.0 / math.sqrt(hd)
        x3 = t_act[...]                                               # (BRs, Tt, D) f32
        x2 = x3.reshape(BRs * Tt, D)
        qkv = jnp.dot(x2.astype(jnp.bfloat16), wqkv_ref[0],
                      preferred_element_type=jnp.float32) + bqkv_ref[0]
        q = qkv[:, 0:D].reshape(BRs, Tt, D)
        k = qkv[:, D:2 * D].reshape(BRs, Tt, D)
        v = qkv[:, 2 * D:3 * D].reshape(BRs, Tt, D)
        wo2 = wo_ref[0]                                               # (D, D) bf16

        def _attend(qh, kh, vh):
            s = jnp.einsum('bqd,bkd->bqk', qh.astype(jnp.bfloat16), kh.astype(jnp.bfloat16),
                           preferred_element_type=jnp.float32) * scale
            s = s - jnp.max(s, axis=-1, keepdims=True)
            pr = jnp.exp(s)
            pr = pr / jnp.sum(pr, axis=-1, keepdims=True)
            return jnp.einsum('bqk,bkd->bqd', pr.astype(jnp.bfloat16), vh.astype(jnp.bfloat16),
                              preferred_element_type=jnp.float32)

        # non-final layers: full sequence, result kept resident in t_act
        @pl.when(l < NUM_LAYERS - 1)
        def _full_seq_layer():
            attn = jnp.zeros((BRs * Tt, D), jnp.float32)
            for h in range(NUM_HEADS):
                sl = slice(h * hd, (h + 1) * hd)
                oh = _attend(q[:, :, sl], k[:, :, sl], v[:, :, sl])
                attn = attn + jnp.dot(oh.reshape(BRs * Tt, hd).astype(jnp.bfloat16),
                                      wo2[sl, :], preferred_element_type=jnp.float32)
            y = _layer_norm(x2 + attn + bo_ref[0], ln1w_ref[0], ln1b_ref[0])
            hf = _gelu(jnp.dot(y.astype(jnp.bfloat16), tw1_ref[0],
                               preferred_element_type=jnp.float32) + tb1_ref[0])
            ff = jnp.dot(hf.astype(jnp.bfloat16), tw2_ref[0],
                         preferred_element_type=jnp.float32) + tb2_ref[0]
            t_act[...] = _layer_norm(y + ff, ln2w_ref[0], ln2b_ref[0]).reshape(BRs, Tt, D)

        # final layer: only the last token is consumed downstream -> compute just that row
        @pl.when(l == NUM_LAYERS - 1)
        def _last_token_layer():
            x_last = x3[:, Tt - 1, :]                                 # (BRs, D)
            attn = jnp.zeros((BRs, D), jnp.float32)
            for h in range(NUM_HEADS):
                sl = slice(h * hd, (h + 1) * hd)
                oh = _attend(q[:, Tt - 1:Tt, sl], k[:, :, sl], v[:, :, sl])   # (BRs, 1, hd)
                attn = attn + jnp.dot(oh.reshape(BRs, hd).astype(jnp.bfloat16),
                                      wo2[sl, :], preferred_element_type=jnp.float32)
            y = _layer_norm(x_last + attn + bo_ref[0], ln1w_ref[0], ln1b_ref[0])
            hf = _gelu(jnp.dot(y.astype(jnp.bfloat16), tw1_ref[0],
                               preferred_element_type=jnp.float32) + tb1_ref[0])
            ff = jnp.dot(hf.astype(jnp.bfloat16), tw2_ref[0],
                         preferred_element_type=jnp.float32) + tb2_ref[0]
            txt_out_ref[...] = _layer_norm(y + ff, ln2w_ref[0],
                                           ln2b_ref[0]).reshape(BRs, 1, D)


# -------------------------------- pallas wrapper ------------------------------------
def _const_spec(shape):
    nd = len(shape)
    return pl.BlockSpec(shape, lambda p, l, idx: (0,) * nd)


def _motion_layer_spec(shape):
    nd = len(shape)
    return pl.BlockSpec((1,) + shape,
                        lambda p, l, idx: (jnp.minimum(l, NUM_MOTION_LAYERS - 1),) + (0,) * nd)


def _text_layer_spec(shape):
    nd = len(shape)
    return pl.BlockSpec((1,) + shape,
                        lambda p, l, idx: (jnp.minimum(l, NUM_LAYERS - 1),) + (0,) * nd)


def fused_branches(all_indexes, db, params):
    D, Fm, F = LATENT_DIM, FFN_DIM, FF_SIZE
    T = MAX_SEQ_LEN

    raw_spec = pl.BlockSpec((BR_SPLIT, T, MOTION_DIM), lambda p, l, idx: (p, 0, 0))
    mot_spec = pl.BlockSpec((BR_SPLIT, T // STRIDE, D), lambda p, l, idx: (p, 0, 0))
    txt_spec = pl.BlockSpec((BR_SPLIT, 1, D), lambda p, l, idx: (p, 0, 0))

    grid_spec = pltpu.PrefetchScalarGridSpec(
        num_scalar_prefetch=1,                    # top-k indices -> SMEM
        grid=(NUM_SPLITS, L_STEPS),
        in_specs=[
            pl.BlockSpec(memory_space=pl.ANY),    # motions DB stays in HBM (manual gather)
            pl.BlockSpec(memory_space=pl.ANY),    # clip_seq_features DB stays in HBM
            _const_spec((MOTION_DIM, D)),         # motion_proj_w
            _const_spec((1, D)),                  # motion_proj_b
            _const_spec((T, D)),                  # motion_pos_embedding
            _motion_layer_spec((D, Fm)), _motion_layer_spec((1, Fm)),
            _motion_layer_spec((Fm, D)), _motion_layer_spec((1, D)),
            _text_layer_spec((D, 3 * D)), _text_layer_spec((1, 3 * D)),   # fused QKV
            _text_layer_spec((D, D)), _text_layer_spec((1, D)),           # wo, bo
            _text_layer_spec((1, D)), _text_layer_spec((1, D)),           # ln1
            _text_layer_spec((D, F)), _text_layer_spec((1, F)),           # linear1
            _text_layer_spec((F, D)), _text_layer_spec((1, D)),           # linear2
            _text_layer_spec((1, D)), _text_layer_spec((1, D)),           # ln2
        ],
        out_specs=(raw_spec, mot_spec, txt_spec),
        scratch_shapes=[
            pltpu.VMEM((BR_SPLIT, T, MOTION_DIM), jnp.float32),   # gathered raw motions
            pltpu.VMEM((BR_SPLIT * T, D), jnp.float32),           # resident motion activations
            pltpu.VMEM((BR_SPLIT, T_TEXT, D), jnp.float32),       # resident text activations
            pltpu.SemaphoreType.DMA((2, BR_SPLIT)),
        ],
    )
    return pl.pallas_call(
        _fused_branch_kernel,
        out_shape=(
            jax.ShapeDtypeStruct((BR, T, MOTION_DIM), jnp.float32),
            jax.ShapeDtypeStruct((BR, T // STRIDE, D), jnp.float32),
            jax.ShapeDtypeStruct((BR, 1, D), jnp.float32),
        ),
        grid_spec=grid_spec,
        compiler_params=pltpu.CompilerParams(
            dimension_semantics=("parallel", "arbitrary")),
    )(all_indexes, db["motions"], db["clip_seq_features"],
      params["motion_proj_w"], params["motion_proj_b"], params["motion_pos_embedding"],
      params["motion_w1"], params["motion_b1"], params["motion_w2"], params["motion_b2"],
      params["text_wqkv"], params["text_bqkv"], params["text_wo"], params["text_bo"],
      params["text_ln1w"], params["text_ln1b"], params["text_w1"], params["text_b1"],
      params["text_w2"], params["text_b2"], params["text_ln2w"], params["text_ln2b"])


# -------------------------------- full forward pass ---------------------------------
def retrieval_database_forward(params, db, query_clip_features, lengths):
    """Mirrors RetrievalDatabase.forward (eval mode), with CLIP query features precomputed."""
    Bq = query_clip_features.shape[0]
    R = NUM_RETRIEVAL
    T = MAX_SEQ_LEN

    # --- retrieve(): score & top-k (eval path) ---
    # TODO(synk): training-mode filtering (m_length != length) and caption-hash caching are
    # host-side / string control flow; eval-mode top-k via lax.top_k is used here.
    scores = retrieval_scores(db, query_clip_features, lengths.astype(jnp.float32))
    _, top_idx = lax.top_k(scores, R)                       # (B, R)
    all_indexes = top_idx.reshape(-1).astype(jnp.int32)     # (B*R,)

    all_m_lengths = jnp.take(db["m_lengths"], all_indexes, axis=0)                # (BR,)
    src_mask = (jnp.arange(T)[None, :] < all_m_lengths[:, None]).astype(jnp.float32)

    # --- fused branch kernel: in-kernel DB gather + motion & text encoders ---
    raw_motion, re_motion, re_text = fused_branches(all_indexes, db, params)

    return {
        "re_text": re_text.reshape(Bq, R, 1, LATENT_DIM),
        "re_motion": re_motion.reshape(Bq, R, T // STRIDE, LATENT_DIM),
        "re_mask": src_mask[:, ::STRIDE].reshape(Bq, R, -1),
        "raw_motion": raw_motion,
        "raw_motion_length": all_m_lengths,
        "raw_motion_mask": src_mask,
    }


# ------------------------------ deterministic params --------------------------------
def init_params(key):
    ks = iter(jax.random.split(key, 64))
    D, F, Fm = LATENT_DIM, FF_SIZE, FFN_DIM
    Lm, L = NUM_MOTION_LAYERS, NUM_LAYERS

    def w(shape, s=0.02):
        # bf16 weights: halve DMA bytes / resident VMEM, 2x MXU rate on v6e/v7x.
        return (s * jax.random.normal(next(ks), shape)).astype(jnp.bfloat16)

    return {
        # motion projection + positional embedding
        "motion_proj_w": w((MOTION_DIM, D)),
        "motion_proj_b": jnp.zeros((1, D), jnp.float32),
        "motion_pos_embedding": jax.random.normal(next(ks), (MAX_SEQ_LEN, D)).astype(jnp.float32),
        # motion encoder FFN stacks (linear2 zero-initialised as in zero_module)
        "motion_w1": w((Lm, D, Fm)),
        "motion_b1": jnp.zeros((Lm, 1, Fm), jnp.float32),
        "motion_w2": jnp.zeros((Lm, Fm, D), jnp.bfloat16),
        "motion_b2": jnp.zeros((Lm, 1, D), jnp.float32),
        # text transformer stacks (QKV fused into one (D, 3D) weight per layer)
        "text_wqkv": w((L, D, 3 * D)),
        "text_bqkv": jnp.zeros((L, 1, 3 * D), jnp.float32),
        "text_wo": w((L, D, D)),
        "text_bo": jnp.zeros((L, 1, D), jnp.float32),
        "text_ln1w": jnp.ones((L, 1, D), jnp.float32),
        "text_ln1b": jnp.zeros((L, 1, D), jnp.float32),
        "text_w1": w((L, D, F)),
        "text_b1": jnp.zeros((L, 1, F), jnp.float32),
        "text_w2": w((L, F, D)),
        "text_b2": jnp.zeros((L, 1, D), jnp.float32),
        "text_ln2w": jnp.ones((L, 1, D), jnp.float32),
        "text_ln2b": jnp.zeros((L, 1, D), jnp.float32),
    }


def init_database(key):
    k1, k2, k3, k4 = jax.random.split(key, 4)
    text_features = jax.random.normal(k1, (N_DB, LATENT_DIM)).astype(jnp.float32)
    m_lengths = jax.random.randint(k3, (N_DB,), 4, MAX_SEQ_LEN + 1).astype(jnp.int32)

    # Static database preprocessing (done once, not per forward):
    #  - L2-normalize DB text features, store transposed and padded to a lane-dense width,
    #  - precompute the additive 0/-inf padding bias for the score kernel.
    norms = jnp.sqrt(jnp.sum(text_features * text_features, axis=-1, keepdims=True))
    tf_norm = text_features / jnp.maximum(norms, 1e-8)
    tfT = jnp.zeros((LATENT_DIM, N_DB_PAD), jnp.float32).at[:, :N_DB].set(tf_norm.T)
    m_lengths_pad = jnp.zeros((1, N_DB_PAD), jnp.float32).at[0, :N_DB].set(
        m_lengths.astype(jnp.float32))
    pad_bias = jnp.where(jnp.arange(N_DB_PAD) < N_DB, 0.0, NEG_INF
                         ).astype(jnp.float32).reshape(1, N_DB_PAD)

    return {
        "text_features_norm_T": tfT,              # (D, N_DB_PAD), unit columns
        "m_lengths_pad": m_lengths_pad,           # (1, N_DB_PAD) f32
        "pad_bias": pad_bias,                     # (1, N_DB_PAD) 0 / -inf
        "motions": jax.random.normal(k2, (N_DB, MAX_SEQ_LEN, MOTION_DIM)).astype(jnp.float32),
        "m_lengths": m_lengths,
        "clip_seq_features": jax.random.normal(k4, (N_DB, T_TEXT, LATENT_DIM)).astype(jnp.float32),
    }


# --------------------------------------- main ---------------------------------------
if __name__ == "__main__":
    root = jax.random.PRNGKey(0)
    k_params, k_db, k_query = jax.random.split(root, 3)

    params = init_params(k_params)
    db = init_database(k_db)
    # CLIP text features for each caption (stands in for clip_model.encode_text)
    query_clip_features = jax.random.normal(k_query, (B, LATENT_DIM)).astype(jnp.float32)
    lengths = jnp.array([10, 7], dtype=jnp.int32)

    fwd = jax.jit(retrieval_database_forward)
    out = fwd(params, db, query_clip_features, lengths)
    out = jax.tree_util.tree_map(jax.block_until_ready, out)

    assert out["re_text"].shape == (B, NUM_RETRIEVAL, 1, LATENT_DIM)
    assert out["re_motion"].shape == (B, NUM_RETRIEVAL, MAX_SEQ_LEN // STRIDE, LATENT_DIM)
    assert out["re_mask"].shape == (B, NUM_RETRIEVAL, MAX_SEQ_LEN // STRIDE)
    assert out["raw_motion"].shape == (B * NUM_RETRIEVAL, MAX_SEQ_LEN, MOTION_DIM)
    assert out["raw_motion_mask"].shape == (B * NUM_RETRIEVAL, MAX_SEQ_LEN)
    print("KERNEL_OK")
</pallas_src>

<mosaic_0001>
module attributes {stable_mosaic.version = 11 : i64} {
  func.func @_score_kernel(%arg0: i32, %arg1: memref<128x128xf32, #tpu.memory_space<vmem>>, %arg2: memref<1x128xf32, #tpu.memory_space<vmem>>, %arg3: memref<1x128xf32, #tpu.memory_space<vmem>>, %arg4: memref<2x128xf32, #tpu.memory_space<vmem>>, %arg5: memref<2x1xf32, #tpu.memory_space<vmem>>, %arg6: memref<2x128xf32, #tpu.memory_space<vmem>>) attributes {dimension_semantics = [#tpu.dimension_semantics<arbitrary>], iteration_bounds = array<i64: 1>, scalar_prefetch = 0 : i64, scratch_operands = 0 : i64, tpu.core_type = #tpu.core_type<tc>, window_params = [{pipeline_mode = #tpu.pipeline_mode<synchronous>, transform_indices = @transform_0, window_bounds = array<i64: 128, 128>}, {pipeline_mode = #tpu.pipeline_mode<synchronous>, transform_indices = @transform_1, window_bounds = array<i64: 1, 128>}, {pipeline_mode = #tpu.pipeline_mode<synchronous>, transform_indices = @transform_2, window_bounds = array<i64: 1, 128>}, {pipeline_mode = #tpu.pipeline_mode<synchronous>, transform_indices = @transform_3, window_bounds = array<i64: 2, 128>}, {pipeline_mode = #tpu.pipeline_mode<synchronous>, transform_indices = @transform_4, window_bounds = array<i64: 2, 1>}, {pipeline_mode = #tpu.pipeline_mode<synchronous>, transform_indices = @transform_5, window_bounds = array<i64: 2, 128>}]} {
    %c0 = arith.constant 0 : index
    %c0_0 = arith.constant 0 : index
    %0 = vector.load %arg1[%c0, %c0_0] : memref<128x128xf32, #tpu.memory_space<vmem>>, vector<128x128xf32>
    %c0_1 = arith.constant 0 : index
    %c0_2 = arith.constant 0 : index
    %1 = vector.load %arg4[%c0_1, %c0_2] : memref<2x128xf32, #tpu.memory_space<vmem>>, vector<2x128xf32>
    %cst = arith.constant dense<0.000000e+00> : vector<2x128xf32>
    %2 = tpu.matmul %1, %0, %cst {dimension_numbers = #tpu.dot_dimension_numbers<[1], [0], [0], [1], [0, 0, 1, 1], [], []>} : vector<2x128xf32>, vector<128x128xf32>, vector<2x128xf32> -> vector<2x128xf32>
    %3 = arith.mulf %1, %1 : vector<2x128xf32>
    %cst_3 = arith.constant dense<0.000000e+00> : vector<2xf32>
    %4 = vector.multi_reduction <add>, %3, %cst_3 [1] : vector<2x128xf32> to vector<2xf32>
    %5 = vector.shape_cast %4 : vector<2xf32> to vector<2x1xf32>
    %6 = math.sqrt %5 : vector<2x1xf32>
    %cst_4 = arith.constant 9.99999993E-9 : f32
    %7 = vector.broadcast %cst_4 : f32 to vector<2x1xf32>
    %8 = arith.maximumf %6, %7 : vector<2x1xf32>
    %9 = vector.broadcast %8 : vector<2x1xf32> to vector<2x128xf32>
    %10 = arith.divf %2, %9 : vector<2x128xf32>
    %c0_5 = arith.constant 0 : index
    %c0_6 = arith.constant 0 : index
    %11 = vector.load %arg5[%c0_5, %c0_6] : memref<2x1xf32, #tpu.memory_space<vmem>>, vector<2x1xf32>
    %c0_7 = arith.constant 0 : index
    %c0_8 = arith.constant 0 : index
    %12 = vector.load %arg2[%c0_7, %c0_8] : memref<1x128xf32, #tpu.memory_space<vmem>>, vector<1x128xf32>
    %13 = vector.broadcast %12 : vector<1x128xf32> to vector<2x128xf32>
    %14 = vector.broadcast %11 : vector<2x1xf32> to vector<2x128xf32>
    %15 = arith.subf %13, %14 : vector<2x128xf32>
    %16 = math.absf %15 : vector<2x128xf32>
    %17 = vector.broadcast %11 : vector<2x1xf32> to vector<2x128xf32>
    %18 = arith.maximumf %16, %17 : vector<2x128xf32>
    %19 = arith.divf %16, %18 : vector<2x128xf32>
    %cst_9 = arith.constant 0.000000e+00 : f32
    %20 = vector.broadcast %cst_9 : f32 to vector<2x128xf32>
    %21 = arith.subf %20, %19 : vector<2x128xf32>
    %cst_10 = arith.constant 1.000000e-01 : f32
    %22 = vector.broadcast %cst_10 : f32 to vector<2x128xf32>
    %23 = arith.mulf %21, %22 : vector<2x128xf32>
    %24 = math.exp %23 : vector<2x128xf32>
    %25 = arith.mulf %10, %24 : vector<2x128xf32>
    %c0_11 = arith.constant 0 : index
    %c0_12 = arith.constant 0 : index
    %26 = vector.load %arg3[%c0_11, %c0_12] : memref<1x128xf32, #tpu.memory_space<vmem>>, vector<1x128xf32>
    %27 = vector.broadcast %26 : vector<1x128xf32> to vector<2x128xf32>
    %28 = arith.addf %25, %27 : vector<2x128xf32>
    %c0_13 = arith.constant 0 : index
    %c0_14 = arith.constant 0 : index
    %29 = vector.load %arg6[%c0_13, %c0_14] : memref<2x128xf32, #tpu.memory_space<vmem>>, vector<2x128xf32>
    tpu.vector_store %arg6[%c0_13, %c0_14], %28 {strides = array<i32>} : memref<2x128xf32, #tpu.memory_space<vmem>>, vector<2x128xf32>,
    return
  }
  func.func @transform_0(%arg0: i32) -> (i32, i32) {
    %c0_i32 = arith.constant 0 : i32
    %c0_i32_0 = arith.constant 0 : i32
    %c0_i32_1 = arith.constant 0 : i32
    return %c0_i32, %c0_i32_0 : i32, i32
  }
  func.func @transform_1(%arg0: i32) -> (i32, i32) {
    %c0_i32 = arith.constant 0 : i32
    %c0_i32_0 = arith.constant 0 : i32
    %c0_i32_1 = arith.constant 0 : i32
    return %c0_i32, %c0_i32_0 : i32, i32
  }
  func.func @transform_2(%arg0: i32) -> (i32, i32) {
    %c0_i32 = arith.constant 0 : i32
    %c0_i32_0 = arith.constant 0 : i32
    %c0_i32_1 = arith.constant 0 : i32
    return %c0_i32, %c0_i32_0 : i32, i32
  }
  func.func @transform_3(%arg0: i32) -> (i32, i32) {
    %c0_i32 = arith.constant 0 : i32
    %c0_i32_0 = arith.constant 0 : i32
    %c0_i32_1 = arith.constant 0 : i32
    return %c0_i32, %c0_i32_0 : i32, i32
  }
  func.func @transform_4(%arg0: i32) -> (i32, i32) {
    %c0_i32 = arith.constant 0 : i32
    %c0_i32_0 = arith.constant 0 : i32
    %c0_i32_1 = arith.constant 0 : i32
    return %c0_i32, %c0_i32_0 : i32, i32
  }
  func.func @transform_5(%arg0: i32) -> (i32, i32) {
    %c0_i32 = arith.constant 0 : i32
    %c0_i32_0 = arith.constant 0 : i32
    %c0_i32_1 = arith.constant 0 : i32
    return %c0_i32, %c0_i32_0 : i32, i32
  }
}

module attributes {stable_mosaic.version = 11 : i64} {
  func.func @_fused_branch_kernel(%arg0: i32, %arg1: i32, %arg2: memref<4xi32, #tpu.memory_space<smem>>, %arg3: memref<32x16x16xf32, #tpu.memory_space<any>>, %arg4: memref<32x8x128xf32, #tpu.memory_space<any>>, %arg5: memref<16x128xbf16, #tpu.memory_space<vmem>>, %arg6: memref<1x128xf32, #tpu.memory_space<vmem>>, %arg7: memref<16x128xf32, #tpu.memory_space<vmem>>, %arg8: memref<1x128x256xbf16, #tpu.memory_space<vmem>>, %arg9: memref<1x1x256xf32, #tpu.memory_space<vmem>>, %arg10: memref<1x256x128xbf16, #tpu.memory_space<vmem>>, %arg11: memref<1x1x128xf32, #tpu.memory_space<vmem>>, %arg12: memref<1x128x384xbf16, #tpu.memory_space<vmem>>, %arg13: memref<1x1x384xf32, #tpu.memory_space<vmem>>, %arg14: memref<1x128x128xbf16, #tpu.memory_space<vmem>>, %arg15: memref<1x1x128xf32, #tpu.memory_space<vmem>>, %arg16: memref<1x1x128xf32, #tpu.memory_space<vmem>>, %arg17: memref<1x1x128xf32, #tpu.memory_space<vmem>>, %arg18: memref<1x128x256xbf16, #tpu.memory_space<vmem>>, %arg19: memref<1x1x256xf32, #tpu.memory_space<vmem>>, %arg20: memref<1x256x128xbf16, #tpu.memory_space<vmem>>, %arg21: memref<1x1x128xf32, #tpu.memory_space<vmem>>, %arg22: memref<1x1x128xf32, #tpu.memory_space<vmem>>, %arg23: memref<1x1x128xf32, #tpu.memory_space<vmem>>, %arg24: memref<2x16x16xf32, #tpu.memory_space<vmem>>, %arg25: memref<2x4x128xf32, #tpu.memory_space<vmem>>, %arg26: memref<2x1x128xf32, #tpu.memory_space<vmem>>, %arg27: memref<2x16x16xf32, #tpu.memory_space<vmem>>, %arg28: memref<32x128xf32, #tpu.memory_space<vmem>>, %arg29: memref<2x8x128xf32, #tpu.memory_space<vmem>>, %arg30: memref<2x2x!tpu.dma_semaphore, #tpu.memory_space<semaphore_mem>>) attributes {dimension_semantics = [#tpu.dimension_semantics<parallel>, #tpu.dimension_semantics<arbitrary>], iteration_bounds = array<i64: 2, 2>, scalar_prefetch = 1 : i64, scratch_operands = 4 : i64, tpu.core_type = #tpu.core_type<tc>, window_params = [{}, {}, {pipeline_mode = #tpu.pipeline_mode<synchronous>, transform_indices = @transform_2, window_bounds = array<i64: 16, 128>}, {pipeline_mode = #tpu.pipeline_mode<synchronous>, transform_indices = @transform_3, window_bounds = array<i64: 1, 128>}, {pipeline_mode = #tpu.pipeline_mode<synchronous>, transform_indices = @transform_4, window_bounds = array<i64: 16, 128>}, {transform_indices = @transform_5, window_bounds = array<i64: 1, 128, 256>}, {transform_indices = @transform_6, window_bounds = array<i64: 1, 1, 256>}, {transform_indices = @transform_7, window_bounds = array<i64: 1, 256, 128>}, {transform_indices = @transform_8, window_bounds = array<i64: 1, 1, 128>}, {transform_indices = @transform_9, window_bounds = array<i64: 1, 128, 384>}, {transform_indices = @transform_10, window_bounds = array<i64: 1, 1, 384>}, {transform_indices = @transform_11, window_bounds = array<i64: 1, 128, 128>}, {transform_indices = @transform_12, window_bounds = array<i64: 1, 1, 128>}, {transform_indices = @transform_13, window_bounds = array<i64: 1, 1, 128>}, {transform_indices = @transform_14, window_bounds = array<i64: 1, 1, 128>}, {transform_indices = @transform_15, window_bounds = array<i64: 1, 128, 256>}, {transform_indices = @transform_16, window_bounds = array<i64: 1, 1, 256>}, {transform_indices = @transform_17, window_bounds = array<i64: 1, 256, 128>}, {transform_indices = @transform_18, window_bounds = array<i64: 1, 1, 128>}, {transform_indices = @transform_19, window_bounds = array<i64: 1, 1, 128>}, {transform_indices = @transform_20, window_bounds = array<i64: 1, 1, 128>}, {transform_indices = @transform_21, window_bounds = array<i64: 2, 16, 16>}, {transform_indices = @transform_22, window_bounds = array<i64: 2, 4, 128>}, {transform_indices = @transform_23, window_bounds = array<i64: 2, 1, 128>}]} {
    %c0_i32 = arith.constant 0 : i32
    %0 = arith.cmpi eq, %arg1, %c0_i32 : i32
    %1 = arith.extui %0 : i1 to i32
    %c0_i32_0 = arith.constant 0 : i32
    %2 = arith.cmpi ne, %1, %c0_i32_0 : i32
    scf.if %2 {
      %c2_i32_5 = arith.constant 2 : i32
      %12 = arith.muli %arg0, %c2_i32_5 : i32
      %c0_i32_6 = arith.constant 0 : i32
      %13 = arith.addi %12, %c0_i32_6 : i32
      %14 = arith.index_cast %13 : i32 to index
      %15 = memref.load %arg2[%14] : memref<4xi32, #tpu.memory_space<smem>>
      %c0_i32_7 = arith.constant 0 : i32
      %c0_i32_8 = arith.constant 0 : i32
      %c0_i32_9 = arith.constant 0 : i32
      %c0_i32_10 = arith.constant 0 : i32
      %c0_i32_11 = arith.constant 0 : i32
      %16 = tpu.memref_slice %arg3[%15, %c0_i32_10, %c0_i32_11] : memref<32x16x16xf32, #tpu.memory_space<any>> -> memref<1x16x16xf32, #tpu.memory_space<any>>
      %17 = tpu.memref_squeeze %16 : memref<1x16x16xf32, #tpu.memory_space<any>> -> memref<16x16xf32, #tpu.memory_space<any>>
      %c0_i32_12 = arith.constant 0 : i32
      %c0_i32_13 = arith.constant 0 : i32
      %18 = tpu.memref_slice %arg27[%c0_i32_7, %c0_i32_12, %c0_i32_13] : memref<2x16x16xf32, #tpu.memory_space<vmem>> -> memref<1x16x16xf32, #tpu.memory_space<vmem>>
      %19 = tpu.memref_squeeze %18 : memref<1x16x16xf32, #tpu.memory_space<vmem>> -> memref<16x16xf32, #tpu.memory_space<vmem>>
      %20 = tpu.memref_slice %arg30[%c0_i32_8, %c0_i32_9] : memref<2x2x!tpu.dma_semaphore, #tpu.memory_space<semaphore_mem>> -> memref<1x1x!tpu.dma_semaphore, #tpu.memory_space<semaphore_mem>>
      %21 = tpu.memref_squeeze %20 : memref<1x1x!tpu.dma_semaphore, #tpu.memory_space<semaphore_mem>> -> memref<!tpu.dma_semaphore, #tpu.memory_space<semaphore_mem>>
      tpu.enqueue_dma source(%17 : memref<16x16xf32, #tpu.memory_space<any>>) target(%19 : memref<16x16xf32, #tpu.memory_space<vmem>>) target_semaphore(%21 : memref<!tpu.dma_semaphore, #tpu.memory_space<semaphore_mem>>)
      %c0_i32_14 = arith.constant 0 : i32
      %c1_i32_15 = arith.constant 1 : i32
      %c0_i32_16 = arith.constant 0 : i32
      %c0_i32_17 = arith.constant 0 : i32
      %c0_i32_18 = arith.constant 0 : i32
      %22 = tpu.memref_slice %arg4[%15, %c0_i32_17, %c0_i32_18] : memref<32x8x128xf32, #tpu.memory_space<any>> -> memref<1x8x128xf32, #tpu.memory_space<any>>
      %23 = tpu.memref_squeeze %22 : memref<1x8x128xf32, #tpu.memory_space<any>> -> memref<8x128xf32, #tpu.memory_space<any>>
      %c0_i32_19 = arith.constant 0 : i32
      %c0_i32_20 = arith.constant 0 : i32
      %24 = tpu.memref_slice %arg29[%c0_i32_14, %c0_i32_19, %c0_i32_20] : memref<2x8x128xf32, #tpu.memory_space<vmem>> -> memref<1x8x128xf32, #tpu.memory_space<vmem>>
      %25 = tpu.memref_squeeze %24 : memref<1x8x128xf32, #tpu.memory_space<vmem>> -> memref<8x128xf32, #tpu.memory_space<vmem>>
      %26 = tpu.memref_slice %arg30[%c1_i32_15, %c0_i32_16] : memref<2x2x!tpu.dma_semaphore, #tpu.memory_space<semaphore_mem>> -> memref<1x1x!tpu.dma_semaphore, #tpu.memory_space<semaphore_mem>>
      %27 = tpu.memref_squeeze %26 : memref<1x1x!tpu.dma_semaphore, #tpu.memory_space<semaphore_mem>> -> memref<!tpu.dma_semaphore, #tpu.memory_space<semaphore_mem>>
      tpu.enqueue_dma source(%23 : memref<8x128xf32, #tpu.memory_space<any>>) target(%25 : memref<8x128xf32, #tpu.memory_space<vmem>>) target_semaphore(%27 : memref<!tpu.dma_semaphore, #tpu.memory_space<semaphore_mem>>)
      %c1_i32_21 = arith.constant 1 : i32
      %28 = arith.addi %12, %c1_i32_21 : i32
      %29 = arith.index_cast %28 : i32 to index
      %30 = memref.load %arg2[%29] : memref<4xi32, #tpu.memory_space<smem>>
      %c1_i32_22 = arith.constant 1 : i32
      %c0_i32_23 = arith.constant 0 : i32
      %c1_i32_24 = arith.constant 1 : i32
      %c0_i32_25 = arith.constant 0 : i32
      %c0_i32_26 = arith.constant 0 : i32
      %31 = tpu.memref_slice %arg3[%30, %c0_i32_25, %c0_i32_26] : memref<32x16x16xf32, #tpu.memory_space<any>> -> memref<1x16x16xf32, #tpu.memory_space<any>>
      %32 = tpu.memref_squeeze %31 : memref<1x16x16xf32, #tpu.memory_space<any>> -> memref<16x16xf32, #tpu.memory_space<any>>
      %c0_i32_27 = arith.constant 0 : i32
      %c0_i32_28 = arith.constant 0 : i32
      %33 = tpu.memref_slice %arg27[%c1_i32_22, %c0_i32_27, %c0_i32_28] : memref<2x16x16xf32, #tpu.memory_space<vmem>> -> memref<1x16x16xf32, #tpu.memory_space<vmem>>
      %34 = tpu.memref_squeeze %33 : memref<1x16x16xf32, #tpu.memory_space<vmem>> -> memref<16x16xf32, #tpu.memory_space<vmem>>
      %35 = tpu.memref_slice %arg30[%c0_i32_23, %c1_i32_24] : memref<2x2x!tpu.dma_semaphore, #tpu.memory_space<semaphore_mem>> -> memref<1x1x!tpu.dma_semaphore, #tpu.memory_space<semaphore_mem>>
      %36 = tpu.memref_squeeze %35 : memref<1x1x!tpu.dma_semaphore, #tpu.memory_space<semaphore_mem>> -> memref<!tpu.dma_semaphore, #tpu.memory_space<semaphore_mem>>
      tpu.enqueue_dma source(%32 : memref<16x16xf32, #tpu.memory_space<any>>) target(%34 : memref<16x16xf32, #tpu.memory_space<vmem>>) target_semaphore(%36 : memref<!tpu.dma_semaphore, #tpu.memory_space<semaphore_mem>>)
      %c1_i32_29 = arith.constant 1 : i32
      %c1_i32_30 = arith.constant 1 : i32
      %c1_i32_31 = arith.constant 1 : i32
      %c0_i32_32 = arith.constant 0 : i32
      %c0_i32_33 = arith.constant 0 : i32
      %37 = tpu.memref_slice %arg4[%30, %c0_i32_32, %c0_i32_33] : memref<32x8x128xf32, #tpu.memory_space<any>> -> memref<1x8x128xf32, #tpu.memory_space<any>>
      %38 = tpu.memref_squeeze %37 : memref<1x8x128xf32, #tpu.memory_space<any>> -> memref<8x128xf32, #tpu.memory_space<any>>
      %c0_i32_34 = arith.constant 0 : i32
      %c0_i32_35 = arith.constant 0 : i32
      %39 = tpu.memref_slice %arg29[%c1_i32_29, %c0_i32_34, %c0_i32_35] : memref<2x8x128xf32, #tpu.memory_space<vmem>> -> memref<1x8x128xf32, #tpu.memory_space<vmem>>
      %40 = tpu.memref_squeeze %39 : memref<1x8x128xf32, #tpu.memory_space<vmem>> -> memref<8x128xf32, #tpu.memory_space<vmem>>
      %41 = tpu.memref_slice %arg30[%c1_i32_30, %c1_i32_31] : memref<2x2x!tpu.dma_semaphore, #tpu.memory_space<semaphore_mem>> -> memref<1x1x!tpu.dma_semaphore, #tpu.memory_space<semaphore_mem>>
      %42 = tpu.memref_squeeze %41 : memref<1x1x!tpu.dma_semaphore, #tpu.memory_space<semaphore_mem>> -> memref<!tpu.dma_semaphore, #tpu.memory_space<semaphore_mem>>
      tpu.enqueue_dma source(%38 : memref<8x128xf32, #tpu.memory_space<any>>) target(%40 : memref<8x128xf32, #tpu.memory_space<vmem>>) target_semaphore(%42 : memref<!tpu.dma_semaphore, #tpu.memory_space<semaphore_mem>>)
      %c0_i32_36 = arith.constant 0 : i32
      %c0_i32_37 = arith.constant 0 : i32
      %c0_i32_38 = arith.constant 0 : i32
      %c0_i32_39 = arith.constant 0 : i32
      %c0_i32_40 = arith.constant 0 : i32
      %c0_i32_41 = arith.constant 0 : i32
      %43 = tpu.memref_slice %arg3[%c0_i32_36, %c0_i32_40, %c0_i32_41] : memref<32x16x16xf32, #tpu.memory_space<any>> -> memref<1x16x16xf32, #tpu.memory_space<any>>
      %44 = tpu.memref_squeeze %43 : memref<1x16x16xf32, #tpu.memory_space<any>> -> memref<16x16xf32, #tpu.memory_space<any>>
      %c0_i32_42 = arith.constant 0 : i32
      %c0_i32_43 = arith.constant 0 : i32
      %45 = tpu.memref_slice %arg27[%c0_i32_37, %c0_i32_42, %c0_i32_43] : memref<2x16x16xf32, #tpu.memory_space<vmem>> -> memref<1x16x16xf32, #tpu.memory_space<vmem>>
      %46 = tpu.memref_squeeze %45 : memref<1x16x16xf32, #tpu.memory_space<vmem>> -> memref<16x16xf32, #tpu.memory_space<vmem>>
      %47 = tpu.memref_slice %arg30[%c0_i32_38, %c0_i32_39] : memref<2x2x!tpu.dma_semaphore, #tpu.memory_space<semaphore_mem>> -> memref<1x1x!tpu.dma_semaphore, #tpu.memory_space<semaphore_mem>>
      %48 = tpu.memref_squeeze %47 : memref<1x1x!tpu.dma_semaphore, #tpu.memory_space<semaphore_mem>> -> memref<!tpu.dma_semaphore, #tpu.memory_space<semaphore_mem>>
      tpu.wait_dma2 semaphore(%48 : memref<!tpu.dma_semaphore, #tpu.memory_space<semaphore_mem>>) src(%44 : memref<16x16xf32, #tpu.memory_space<any>>) dst(%46 : memref<16x16xf32, #tpu.memory_space<vmem>>)
      %c0_i32_44 = arith.constant 0 : i32
      %c1_i32_45 = arith.constant 1 : i32
      %c0_i32_46 = arith.constant 0 : i32
      %c1_i32_47 = arith.constant 1 : i32
      %c0_i32_48 = arith.constant 0 : i32
      %c0_i32_49 = arith.constant 0 : i32
      %49 = tpu.memref_slice %arg3[%c0_i32_44, %c0_i32_48, %c0_i32_49] : memref<32x16x16xf32, #tpu.memory_space<any>> -> memref<1x16x16xf32, #tpu.memory_space<any>>
      %50 = tpu.memref_squeeze %49 : memref<1x16x16xf32, #tpu.memory_space<any>> -> memref<16x16xf32, #tpu.memory_space<any>>
      %c0_i32_50 = arith.constant 0 : i32
      %c0_i32_51 = arith.constant 0 : i32
      %51 = tpu.memref_slice %arg27[%c1_i32_45, %c0_i32_50, %c0_i32_51] : memref<2x16x16xf32, #tpu.memory_space<vmem>> -> memref<1x16x16xf32, #tpu.memory_space<vmem>>
      %52 = tpu.memref_squeeze %51 : memref<1x16x16xf32, #tpu.memory_space<vmem>> -> memref<16x16xf32, #tpu.memory_space<vmem>>
      %53 = tpu.memref_slice %arg30[%c0_i32_46, %c1_i32_47] : memref<2x2x!tpu.dma_semaphore, #tpu.memory_space<semaphore_mem>> -> memref<1x1x!tpu.dma_semaphore, #tpu.memory_space<semaphore_mem>>
      %54 = tpu.memref_squeeze %53 : memref<1x1x!tpu.dma_semaphore, #tpu.memory_space<semaphore_mem>> -> memref<!tpu.dma_semaphore, #tpu.memory_space<semaphore_mem>>
      tpu.wait_dma2 semaphore(%54 : memref<!tpu.dma_semaphore, #tpu.memory_space<semaphore_mem>>) src(%50 : memref<16x16xf32, #tpu.memory_space<any>>) dst(%52 : memref<16x16xf32, #tpu.memory_space<vmem>>)
      %c0 = arith.constant 0 : index
      %c0_52 = arith.constant 0 : index
      %c0_53 = arith.constant 0 : index
      %55 = vector.load %arg27[%c0, %c0_52, %c0_53] : memref<2x16x16xf32, #tpu.memory_space<vmem>>, vector<2x16x16xf32>
      %c0_54 = arith.constant 0 : index
      %c0_55 = arith.constant 0 : index
      %c0_56 = arith.constant 0 : index
      %56 = vector.load %arg24[%c0_54, %c0_55, %c0_56] : memref<2x16x16xf32, #tpu.memory_space<vmem>>, vector<2x16x16xf32>
      tpu.vector_store %arg24[%c0_54, %c0_55, %c0_56], %55 {strides = array<i32>} : memref<2x16x16xf32, #tpu.memory_space<vmem>>, vector<2x16x16xf32>,
      %c0_57 = arith.constant 0 : index
      %c0_58 = arith.constant 0 : index
      %c0_59 = arith.constant 0 : index
      %57 = vector.load %arg27[%c0_57, %c0_58, %c0_59] : memref<2x16x16xf32, #tpu.memory_space<vmem>>, vector<2x16x16xf32>
      %58 = vector.shape_cast %57 : vector<2x16x16xf32> to vector<32x16xf32>
      %59 = arith.truncf %58 : vector<32x16xf32> to vector<32x16xbf16>
      %c0_60 = arith.constant 0 : index
      %c0_61 = arith.constant 0 : index
      %60 = vector.load %arg5[%c0_60, %c0_61] : memref<16x128xbf16, #tpu.memory_space<vmem>>, vector<16x128xbf16>
      %cst = arith.constant dense<0.000000e+00> : vector<32x128xf32>
      %61 = tpu.matmul %59, %60, %cst {dimension_numbers = #tpu.dot_dimension_numbers<[1], [0], [0], [1], [0, 0, 1, 1], [], []>} : vector<32x16xbf16>, vector<16x128xbf16>, vector<32x128xf32> -> vector<32x128xf32>
      %c0_62 = arith.constant 0 : index
      %c0_63 = arith.constant 0 : index
      %62 = vector.load %arg6[%c0_62, %c0_63] : memref<1x128xf32, #tpu.memory_space<vmem>>, vector<1x128xf32>
      %63 = vector.broadcast %62 : vector<1x128xf32> to vector<32x128xf32>
      %64 = arith.addf %61, %63 : vector<32x128xf32>
      %65 = vector.shape_cast %64 : vector<32x128xf32> to vector<2x16x128xf32>
      %c0_64 = arith.constant 0 : index
      %c0_65 = arith.constant 0 : index
      %66 = vector.load %arg7[%c0_64, %c0_65] : memref<16x128xf32, #tpu.memory_space<vmem>>, vector<16x128xf32>
      %67 = vector.shape_cast %66 : vector<16x128xf32> to vector<1x16x128xf32>
      %68 = vector.broadcast %67 : vector<1x16x128xf32> to vector<2x16x128xf32>
      %69 = arith.addf %65, %68 : vector<2x16x128xf32>
      %70 = vector.shape_cast %69 : vector<2x16x128xf32> to vector<32x128xf32>
      %c0_66 = arith.constant 0 : index
      %c0_67 = arith.constant 0 : index
      %71 = vector.load %arg28[%c0_66, %c0_67] : memref<32x128xf32, #tpu.memory_space<vmem>>, vector<32x128xf32>
      tpu.vector_store %arg28[%c0_66, %c0_67], %70 {strides = array<i32>} : memref<32x128xf32, #tpu.memory_space<vmem>>, vector<32x128xf32>,
    } else {
    }
    %c2_i32 = arith.constant 2 : i32
    %3 = arith.cmpi slt, %arg1, %c2_i32 : i32
    %4 = arith.extui %3 : i1 to i32
    %c0_i32_1 = arith.constant 0 : i32
    %5 = arith.cmpi ne, %4, %c0_i32_1 : i32
    scf.if %5 {
      %c0 = arith.constant 0 : index
      %c0_5 = arith.constant 0 : index
      %12 = vector.load %arg28[%c0, %c0_5] : memref<32x128xf32, #tpu.memory_space<vmem>>, vector<32x128xf32>
      %13 = arith.truncf %12 : vector<32x128xf32> to vector<32x128xbf16>
      %c0_6 = arith.constant 0 : index
      %c0_7 = arith.constant 0 : index
      %c0_8 = arith.constant 0 : index
      %14 = vector.load %arg8[%c0_6, %c0_7, %c0_8] : memref<1x128x256xbf16, #tpu.memory_space<vmem>>, vector<1x128x256xbf16>
      %15 = vector.shape_cast %14 : vector<1x128x256xbf16> to vector<128x256xbf16>
      %cst = arith.constant dense<0.000000e+00> : vector<32x256xf32>
      %16 = tpu.matmul %13, %15, %cst {dimension_numbers = #tpu.dot_dimension_numbers<[1], [0], [0], [1], [0, 0, 1, 1], [], []>} : vector<32x128xbf16>, vector<128x256xbf16>, vector<32x256xf32> -> vector<32x256xf32>
      %c0_9 = arith.constant 0 : index
      %c0_10 = arith.constant 0 : index
      %c0_11 = arith.constant 0 : index
      %17 = vector.load %arg9[%c0_9, %c0_10, %c0_11] : memref<1x1x256xf32, #tpu.memory_space<vmem>>, vector<1x1x256xf32>
      %18 = vector.shape_cast %17 : vector<1x1x256xf32> to vector<1x256xf32>
      %19 = vector.broadcast %18 : vector<1x256xf32> to vector<32x256xf32>
      %20 = arith.addf %16, %19 : vector<32x256xf32>
      %cst_12 = arith.constant 5.000000e-01 : f32
      %21 = vector.broadcast %cst_12 : f32 to vector<32x256xf32>
      %22 = arith.mulf %21, %20 : vector<32x256xf32>
      %cst_13 = arith.constant 4.471500e-02 : f32
      %23 = vector.broadcast %cst_13 : f32 to vector<32x256xf32>
      %24 = arith.mulf %23, %20 : vector<32x256xf32>
      %25 = arith.mulf %24, %20 : vector<32x256xf32>
      %26 = arith.mulf %25, %20 : vector<32x256xf32>
      %27 = arith.addf %20, %26 : vector<32x256xf32>
      %cst_14 = arith.constant 0.797884583 : f32
      %28 = vector.broadcast %cst_14 : f32 to vector<32x256xf32>
      %29 = arith.mulf %28, %27 : vector<32x256xf32>
      %30 = math.tanh %29 : vector<32x256xf32>
      %cst_15 = arith.constant 1.000000e+00 : f32
      %31 = vector.broadcast %cst_15 : f32 to vector<32x256xf32>
      %32 = arith.addf %31, %30 : vector<32x256xf32>
      %33 = arith.mulf %22, %32 : vector<32x256xf32>
      %34 = arith.truncf %33 : vector<32x256xf32> to vector<32x256xbf16>
      %c0_16 = arith.constant 0 : index
      %c0_17 = arith.constant 0 : index
      %c0_18 = arith.constant 0 : index
      %35 = vector.load %arg10[%c0_16, %c0_17, %c0_18] : memref<1x256x128xbf16, #tpu.memory_space<vmem>>, vector<1x256x128xbf16>
      %36 = vector.shape_cast %35 : vector<1x256x128xbf16> to vector<256x128xbf16>
      %cst_19 = arith.constant dense<0.000000e+00> : vector<32x128xf32>
      %37 = tpu.matmul %34, %36, %cst_19 {dimension_numbers = #tpu.dot_dimension_numbers<[1], [0], [0], [1], [0, 0, 1, 1], [], []>} : vector<32x256xbf16>, vector<256x128xbf16>, vector<32x128xf32> -> vector<32x128xf32>
      %38 = arith.addf %12, %37 : vector<32x128xf32>
      %c0_20 = arith.constant 0 : index
      %c0_21 = arith.constant 0 : index
      %c0_22 = arith.constant 0 : index
      %39 = vector.load %arg11[%c0_20, %c0_21, %c0_22] : memref<1x1x128xf32, #tpu.memory_space<vmem>>, vector<1x1x128xf32>
      %40 = vector.shape_cast %39 : vector<1x1x128xf32> to vector<1x128xf32>
      %41 = vector.broadcast %40 : vector<1x128xf32> to vector<32x128xf32>
      %42 = arith.addf %38, %41 : vector<32x128xf32>
      %c0_23 = arith.constant 0 : index
      %c0_24 = arith.constant 0 : index
      %43 = vector.load %arg28[%c0_23, %c0_24] : memref<32x128xf32, #tpu.memory_space<vmem>>, vector<32x128xf32>
      tpu.vector_store %arg28[%c0_23, %c0_24], %42 {strides = array<i32>} : memref<32x128xf32, #tpu.memory_space<vmem>>, vector<32x128xf32>,
    } else {
    }
    %c1_i32 = arith.constant 1 : i32
    %6 = arith.cmpi eq, %arg1, %c1_i32 : i32
    %7 = arith.extui %6 : i1 to i32
    %c0_i32_2 = arith.constant 0 : i32
    %8 = arith.cmpi ne, %7, %c0_i32_2 : i32
    scf.if %8 {
      %c0 = arith.constant 0 : index
      %c0_5 = arith.constant 0 : index
      %12 = vector.load %arg28[%c0, %c0_5] : memref<32x128xf32, #tpu.memory_space<vmem>>, vector<32x128xf32>
      %13 = vector.shape_cast %12 : vector<32x128xf32> to vector<2x16x128xf32>
      %14 = vector.extract_strided_slice %13 {offsets = [0, 0, 0], sizes = [2, 1, 128], strides = [1, 1, 1]} : vector<2x16x128xf32> to vector<2x1x128xf32>
      %c0_6 = arith.constant 0 : index
      %c0_7 = arith.constant 0 : index
      %c0_8 = arith.constant 0 : index
      %15 = vector.load %arg25[%c0_6, %c0_7, %c0_8] : memref<2x4x128xf32, #tpu.memory_space<vmem>>, vector<2x1x128xf32>
      tpu.vector_store %arg25[%c0_6, %c0_7, %c0_8], %14 {strides = array<i32>} : memref<2x4x128xf32, #tpu.memory_space<vmem>>, vector<2x1x128xf32>,
      %16 = vector.extract_strided_slice %13 {offsets = [0, 4, 0], sizes = [2, 1, 128], strides = [1, 1, 1]} : vector<2x16x128xf32> to vector<2x1x128xf32>
      %c0_9 = arith.constant 0 : index
      %c1 = arith.constant 1 : index
      %c0_10 = arith.constant 0 : index
      %17 = vector.load %arg25[%c0_9, %c1, %c0_10] : memref<2x4x128xf32, #tpu.memory_space<vmem>>, vector<2x1x128xf32>
      tpu.vector_store %arg25[%c0_9, %c1, %c0_10], %16 {strides = array<i32>} : memref<2x4x128xf32, #tpu.memory_space<vmem>>, vector<2x1x128xf32>,
      %18 = vector.extract_strided_slice %13 {offsets = [0, 8, 0], sizes = [2, 1, 128], strides = [1, 1, 1]} : vector<2x16x128xf32> to vector<2x1x128xf32>
      %c0_11 = arith.constant 0 : index
      %c2 = arith.constant 2 : index
      %c0_12 = arith.constant 0 : index
      %19 = vector.load %arg25[%c0_11, %c2, %c0_12] : memref<2x4x128xf32, #tpu.memory_space<vmem>>, vector<2x1x128xf32>
      tpu.vector_store %arg25[%c0_11, %c2, %c0_12], %18 {strides = array<i32>} : memref<2x4x128xf32, #tpu.memory_space<vmem>>, vector<2x1x128xf32>,
      %20 = vector.extract_strided_slice %13 {offsets = [0, 12, 0], sizes = [2, 1, 128], strides = [1, 1, 1]} : vector<2x16x128xf32> to vector<2x1x128xf32>
      %c0_13 = arith.constant 0 : index
      %c3 = arith.constant 3 : index
      %c0_14 = arith.constant 0 : index
      %21 = vector.load %arg25[%c0_13, %c3, %c0_14] : memref<2x4x128xf32, #tpu.memory_space<vmem>>, vector<2x1x128xf32>
      tpu.vector_store %arg25[%c0_13, %c3, %c0_14], %20 {strides = array<i32>} : memref<2x4x128xf32, #tpu.memory_space<vmem>>, vector<2x1x128xf32>,
    } else {
    }
    %c1_i32_3 = arith.constant 1 : i32
    %9 = arith.cmpi slt, %arg1, %c1_i32_3 : i32
    %10 = arith.extui %9 : i1 to i32
    %c0_i32_4 = arith.constant 0 : i32
    %11 = arith.cmpi ne, %10, %c0_i32_4 : i32
    scf.if %11 {
      %c0_i32_5 = arith.constant 0 : i32
      %12 = arith.cmpi eq, %arg1, %c0_i32_5 : i32
      %13 = arith.extui %12 : i1 to i32
      %c0_i32_6 = arith.constant 0 : i32
      %14 = arith.cmpi ne, %13, %c0_i32_6 : i32
      scf.if %14 {
        %c0_i32_22 = arith.constant 0 : i32
        %c0_i32_23 = arith.constant 0 : i32
        %c1_i32_24 = arith.constant 1 : i32
        %c0_i32_25 = arith.constant 0 : i32
        %c0_i32_26 = arith.constant 0 : i32
        %c0_i32_27 = arith.constant 0 : i32
        %39 = tpu.memref_slice %arg4[%c0_i32_22, %c0_i32_26, %c0_i32_27] : memref<32x8x128xf32, #tpu.memory_space<any>> -> memref<1x8x128xf32, #tpu.memory_space<any>>
        %40 = tpu.memref_squeeze %39 : memref<1x8x128xf32, #tpu.memory_space<any>> -> memref<8x128xf32, #tpu.memory_space<any>>
        %c0_i32_28 = arith.constant 0 : i32
        %c0_i32_29 = arith.constant 0 : i32
        %41 = tpu.memref_slice %arg29[%c0_i32_23, %c0_i32_28, %c0_i32_29] : memref<2x8x128xf32, #tpu.memory_space<vmem>> -> memref<1x8x128xf32, #tpu.memory_space<vmem>>
        %42 = tpu.memref_squeeze %41 : memref<1x8x128xf32, #tpu.memory_space<vmem>> -> memref<8x128xf32, #tpu.memory_space<vmem>>
        %43 = tpu.memref_slice %arg30[%c1_i32_24, %c0_i32_25] : memref<2x2x!tpu.dma_semaphore, #tpu.memory_space<semaphore_mem>> -> memref<1x1x!tpu.dma_semaphore, #tpu.memory_space<semaphore_mem>>
        %44 = tpu.memref_squeeze %43 : memref<1x1x!tpu.dma_semaphore, #tpu.memory_space<semaphore_mem>> -> memref<!tpu.dma_semaphore, #tpu.memory_space<semaphore_mem>>
        tpu.wait_dma2 semaphore(%44 : memref<!tpu.dma_semaphore, #tpu.memory_space<semaphore_mem>>) src(%40 : memref<8x128xf32, #tpu.memory_space<any>>) dst(%42 : memref<8x128xf32, #tpu.memory_space<vmem>>)
        %c0_i32_30 = arith.constant 0 : i32
        %c1_i32_31 = arith.constant 1 : i32
        %c1_i32_32 = arith.constant 1 : i32
        %c1_i32_33 = arith.constant 1 : i32
        %c0_i32_34 = arith.constant 0 : i32
        %c0_i32_35 = arith.constant 0 : i32
        %45 = tpu.memref_slice %arg4[%c0_i32_30, %c0_i32_34, %c0_i32_35] : memref<32x8x128xf32, #tpu.memory_space<any>> -> memref<1x8x128xf32, #tpu.memory_space<any>>
        %46 = tpu.memref_squeeze %45 : memref<1x8x128xf32, #tpu.memory_space<any>> -> memref<8x128xf32, #tpu.memory_space<any>>
        %c0_i32_36 = arith.constant 0 : i32
        %c0_i32_37 = arith.constant 0 : i32
        %47 = tpu.memref_slice %arg29[%c1_i32_31, %c0_i32_36, %c0_i32_37] : memref<2x8x128xf32, #tpu.memory_space<vmem>> -> memref<1x8x128xf32, #tpu.memory_space<vmem>>
        %48 = tpu.memref_squeeze %47 : memref<1x8x128xf32, #tpu.memory_space<vmem>> -> memref<8x128xf32, #tpu.memory_space<vmem>>
        %49 = tpu.memref_slice %arg30[%c1_i32_32, %c1_i32_33] : memref<2x2x!tpu.dma_semaphore, #tpu.memory_space<semaphore_mem>> -> memref<1x1x!tpu.dma_semaphore, #tpu.memory_space<semaphore_mem>>
        %50 = tpu.memref_squeeze %49 : memref<1x1x!tpu.dma_semaphore, #tpu.memory_space<semaphore_mem>> -> memref<!tpu.dma_semaphore, #tpu.memory_space<semaphore_mem>>
        tpu.wait_dma2 semaphore(%50 : memref<!tpu.dma_semaphore, #tpu.memory_space<semaphore_mem>>) src(%46 : memref<8x128xf32, #tpu.memory_space<any>>) dst(%48 : memref<8x128xf32, #tpu.memory_space<vmem>>)
      } else {
      }
      %c0 = arith.constant 0 : index
      %c0_7 = arith.constant 0 : index
      %c0_8 = arith.constant 0 : index
      %15 = vector.load %arg29[%c0, %c0_7, %c0_8] : memref<2x8x128xf32, #tpu.memory_space<vmem>>, vector<2x8x128xf32>
      %16 = vector.shape_cast %15 : vector<2x8x128xf32> to vector<16x128xf32>
      %17 = arith.truncf %16 : vector<16x128xf32> to vector<16x128xbf16>
      %c0_9 = arith.constant 0 : index
      %c0_10 = arith.constant 0 : index
      %c0_11 = arith.constant 0 : index
      %18 = vector.load %arg12[%c0_9, %c0_10, %c0_11] : memref<1x128x384xbf16, #tpu.memory_space<vmem>>, vector<1x128x384xbf16>
      %19 = vector.shape_cast %18 : vector<1x128x384xbf16> to vector<128x384xbf16>
      %cst = arith.constant dense<0.000000e+00> : vector<16x384xf32>
      %20 = tpu.matmul %17, %19, %cst {dimension_numbers = #tpu.dot_dimension_numbers<[1], [0], [0], [1], [0, 0, 1, 1], [], []>} : vector<16x128xbf16>, vector<128x384xbf16>, vector<16x384xf32> -> vector<16x384xf32>
      %c0_12 = arith.constant 0 : index
      %c0_13 = arith.constant 0 : index
      %c0_14 = arith.constant 0 : index
      %21 = vector.load %arg13[%c0_12, %c0_13, %c0_14] : memref<1x1x384xf32, #tpu.memory_space<vmem>>, vector<1x1x384xf32>
      %22 = vector.shape_cast %21 : vector<1x1x384xf32> to vector<1x384xf32>
      %23 = vector.broadcast %22 : vector<1x384xf32> to vector<16x384xf32>
      %24 = arith.addf %20, %23 : vector<16x384xf32>
      %25 = vector.extract_strided_slice %24 {offsets = [0, 0], sizes = [16, 128], strides = [1, 1]} : vector<16x384xf32> to vector<16x128xf32>
      %26 = vector.shape_cast %25 : vector<16x128xf32> to vector<2x8x128xf32>
      %27 = vector.extract_strided_slice %24 {offsets = [0, 128], sizes = [16, 128], strides = [1, 1]} : vector<16x384xf32> to vector<16x128xf32>
      %28 = vector.shape_cast %27 : vector<16x128xf32> to vector<2x8x128xf32>
      %29 = vector.extract_strided_slice %24 {offsets = [0, 256], sizes = [16, 128], strides = [1, 1]} : vector<16x384xf32> to vector<16x128xf32>
      %30 = vector.shape_cast %29 : vector<16x128xf32> to vector<2x8x128xf32>
      %c0_15 = arith.constant 0 : index
      %c0_16 = arith.constant 0 : index
      %c0_17 = arith.constant 0 : index
      %31 = vector.load %arg14[%c0_15, %c0_16, %c0_17] : memref<1x128x128xbf16, #tpu.memory_space<vmem>>, vector<1x128x128xbf16>
      %32 = vector.shape_cast %31 : vector<1x128x128xbf16> to vector<128x128xbf16>
      %c0_i32_18 = arith.constant 0 : i32
      %33 = arith.cmpi slt, %arg1, %c0_i32_18 : i32
      %34 = arith.extui %33 : i1 to i32
      %c0_i32_19 = arith.constant 0 : i32
      %35 = arith.cmpi ne, %34, %c0_i32_19 : i32
      scf.if %35 {
        %cst_22 = arith.constant 0.000000e+00 : f32
        %39 = vector.broadcast %cst_22 : f32 to vector<16x128xf32>
        %40 = vector.extract_strided_slice %26 {offsets = [0, 0, 0], sizes = [2, 8, 32], strides = [1, 1, 1]} : vector<2x8x128xf32> to vector<2x8x32xf32>
        %41 = vector.extract_strided_slice %28 {offsets = [0, 0, 0], sizes = [2, 8, 32], strides = [1, 1, 1]} : vector<2x8x128xf32> to vector<2x8x32xf32>
        %42 = vector.extract_strided_slice %30 {offsets = [0, 0, 0], sizes = [2, 8, 32], strides = [1, 1, 1]} : vector<2x8x128xf32> to vector<2x8x32xf32>
        %43 = arith.truncf %40 : vector<2x8x32xf32> to vector<2x8x32xbf16>
        %44 = arith.truncf %41 : vector<2x8x32xf32> to vector<2x8x32xbf16>
        "tpu.trace_start"() <{level = 10 : i32, message = "bqd,bkd->bqk"}> : () -> ()
        %cst_23 = arith.constant dense<0.000000e+00> : vector<2x8x8xf32>
        %45 = tpu.matmul %43, %44, %cst_23 {dimension_numbers = #tpu.dot_dimension_numbers<[2], [2], [1], [1], [0, 0, 0, 1, 1, 1], [0], [0]>} : vector<2x8x32xbf16>, vector<2x8x32xbf16>, vector<2x8x8xf32> -> vector<2x8x8xf32>
        "tpu.trace_stop"() : () -> ()
        %cst_24 = arith.constant 0.176776692 : f32
        %46 = vector.broadcast %cst_24 : f32 to vector<2x8x8xf32>
        %47 = arith.mulf %45, %46 : vector<2x8x8xf32>
        %cst_25 = arith.constant dense<0xFF800000> : vector<2x8xf32>
        %48 = vector.multi_reduction <maximumf>, %47, %cst_25 [2] : vector<2x8x8xf32> to vector<2x8xf32>
        %49 = vector.shape_cast %48 : vector<2x8xf32> to vector<2x8x1xf32>
        %50 = vector.broadcast %49 : vector<2x8x1xf32> to vector<2x8x8xf32>
        %51 = arith.subf %47, %50 : vector<2x8x8xf32>
        %52 = math.exp %51 : vector<2x8x8xf32>
        %cst_26 = arith.constant dense<0.000000e+00> : vector<2x8xf32>
        %53 = vector.multi_reduction <add>, %52, %cst_26 [2] : vector<2x8x8xf32> to vector<2x8xf32>
        %54 = vector.shape_cast %53 : vector<2x8xf32> to vector<2x8x1xf32>
        %55 = vector.broadcast %54 : vector<2x8x1xf32> to vector<2x8x8xf32>
        %56 = arith.divf %52, %55 : vector<2x8x8xf32>
        %57 = arith.truncf %56 : vector<2x8x8xf32> to vector<2x8x8xbf16>
        %58 = arith.truncf %42 : vector<2x8x32xf32> to vector<2x8x32xbf16>
        "tpu.trace_start"() <{level = 10 : i32, message = "bqk,bkd->bqd"}> : () -> ()
        %cst_27 = arith.constant dense<0.000000e+00> : vector<2x8x32xf32>
        %59 = tpu.matmul %57, %58, %cst_27 {dimension_numbers = #tpu.dot_dimension_numbers<[2], [1], [1], [2], [0, 0, 0, 1, 1, 2], [0], [0]>} : vector<2x8x8xbf16>, vector<2x8x32xbf16>, vector<2x8x32xf32> -> vector<2x8x32xf32>
        "tpu.trace_stop"() : () -> ()
        %60 = vector.shape_cast %59 : vector<2x8x32xf32> to vector<16x32xf32>
        %61 = arith.truncf %60 : vector<16x32xf32> to vector<16x32xbf16>
        %62 = vector.extract_strided_slice %32 {offsets = [0, 0], sizes = [32, 128], strides = [1, 1]} : vector<128x128xbf16> to vector<32x128xbf16>
        %cst_28 = arith.constant dense<0.000000e+00> : vector<16x128xf32>
        %63 = tpu.matmul %61, %62, %cst_28 {dimension_numbers = #tpu.dot_dimension_numbers<[1], [0], [0], [1], [0, 0, 1, 1], [], []>} : vector<16x32xbf16>, vector<32x128xbf16>, vector<16x128xf32> -> vector<16x128xf32>
        %64 = arith.addf %39, %63 : vector<16x128xf32>
        %65 = vector.extract_strided_slice %26 {offsets = [0, 0, 32], sizes = [2, 8, 32], strides = [1, 1, 1]} : vector<2x8x128xf32> to vector<2x8x32xf32>
        %66 = vector.extract_strided_slice %28 {offsets = [0, 0, 32], sizes = [2, 8, 32], strides = [1, 1, 1]} : vector<2x8x128xf32> to vector<2x8x32xf32>
        %67 = vector.extract_strided_slice %30 {offsets = [0, 0, 32], sizes = [2, 8, 32], strides = [1, 1, 1]} : vector<2x8x128xf32> to vector<2x8x32xf32>
        %68 = arith.truncf %65 : vector<2x8x32xf32> to vector<2x8x32xbf16>
        %69 = arith.truncf %66 : vector<2x8x32xf32> to vector<2x8x32xbf16>
        "tpu.trace_start"() <{level = 10 : i32, message = "bqd,bkd->bqk"}> : () -> ()
        %cst_29 = arith.constant dense<0.000000e+00> : vector<2x8x8xf32>
        %70 = tpu.matmul %68, %69, %cst_29 {dimension_numbers = #tpu.dot_dimension_numbers<[2], [2], [1], [1], [0, 0, 0, 1, 1, 1], [0], [0]>} : vector<2x8x32xbf16>, vector<2x8x32xbf16>, vector<2x8x8xf32> -> vector<2x8x8xf32>
        "tpu.trace_stop"() : () -> ()
        %cst_30 = arith.constant 0.176776692 : f32
        %71 = vector.broadcast %cst_30 : f32 to vector<2x8x8xf32>
        %72 = arith.mulf %70, %71 : vector<2x8x8xf32>
        %cst_31 = arith.constant dense<0xFF800000> : vector<2x8xf32>
        %73 = vector.multi_reduction <maximumf>, %72, %cst_31 [2] : vector<2x8x8xf32> to vector<2x8xf32>
        %74 = vector.shape_cast %73 : vector<2x8xf32> to vector<2x8x1xf32>
        %75 = vector.broadcast %74 : vector<2x8x1xf32> to vector<2x8x8xf32>
        %76 = arith.subf %72, %75 : vector<2x8x8xf32>
        %77 = math.exp %76 : vector<2x8x8xf32>
        %cst_32 = arith.constant dense<0.000000e+00> : vector<2x8xf32>
        %78 = vector.multi_reduction <add>, %77, %cst_32 [2] : vector<2x8x8xf32> to vector<2x8xf32>
        %79 = vector.shape_cast %78 : vector<2x8xf32> to vector<2x8x1xf32>
        %80 = vector.broadcast %79 : vector<2x8x1xf32> to vector<2x8x8xf32>
        %81 = arith.divf %77, %80 : vector<2x8x8xf32>
        %82 = arith.truncf %81 : vector<2x8x8xf32> to vector<2x8x8xbf16>
        %83 = arith.truncf %67 : vector<2x8x32xf32> to vector<2x8x32xbf16>
        "tpu.trace_start"() <{level = 10 : i32, message = "bqk,bkd->bqd"}> : () -> ()
        %cst_33 = arith.constant dense<0.000000e+00> : vector<2x8x32xf32>
        %84 = tpu.matmul %82, %83, %cst_33 {dimension_numbers = #tpu.dot_dimension_numbers<[2], [1], [1], [2], [0, 0, 0, 1, 1, 2], [0], [0]>} : vector<2x8x8xbf16>, vector<2x8x32xbf16>, vector<2x8x32xf32> -> vector<2x8x32xf32>
        "tpu.trace_stop"() : () -> ()
        %85 = vector.shape_cast %84 : vector<2x8x32xf32> to vector<16x32xf32>
        %86 = arith.truncf %85 : vector<16x32xf32> to vector<16x32xbf16>
        %87 = vector.extract_strided_slice %32 {offsets = [32, 0], sizes = [32, 128], strides = [1, 1]} : vector<128x128xbf16> to vector<32x128xbf16>
        %cst_34 = arith.constant dense<0.000000e+00> : vector<16x128xf32>
        %88 = tpu.matmul %86, %87, %cst_34 {dimension_numbers = #tpu.dot_dimension_numbers<[1], [0], [0], [1], [0, 0, 1, 1], [], []>} : vector<16x32xbf16>, vector<32x128xbf16>, vector<16x128xf32> -> vector<16x128xf32>
        %89 = arith.addf %64, %88 : vector<16x128xf32>
        %90 = vector.extract_strided_slice %26 {offsets = [0, 0, 64], sizes = [2, 8, 32], strides = [1, 1, 1]} : vector<2x8x128xf32> to vector<2x8x32xf32>
        %91 = vector.extract_strided_slice %28 {offsets = [0, 0, 64], sizes = [2, 8, 32], strides = [1, 1, 1]} : vector<2x8x128xf32> to vector<2x8x32xf32>
        %92 = vector.extract_strided_slice %30 {offsets = [0, 0, 64], sizes = [2, 8, 32], strides = [1, 1, 1]} : vector<2x8x128xf32> to vector<2x8x32xf32>
        %93 = arith.truncf %90 : vector<2x8x32xf32> to vector<2x8x32xbf16>
        %94 = arith.truncf %91 : vector<2x8x32xf32> to vector<2x8x32xbf16>
        "tpu.trace_start"() <{level = 10 : i32, message = "bqd,bkd->bqk"}> : () -> ()
        %cst_35 = arith.constant dense<0.000000e+00> : vector<2x8x8xf32>
        %95 = tpu.matmul %93, %94, %cst_35 {dimension_numbers = #tpu.dot_dimension_numbers<[2], [2], [1], [1], [0, 0, 0, 1, 1, 1], [0], [0]>} : vector<2x8x32xbf16>, vector<2x8x32xbf16>, vector<2x8x8xf32> -> vector<2x8x8xf32>
        "tpu.trace_stop"() : () -> ()
        %cst_36 = arith.constant 0.176776692 : f32
        %96 = vector.broadcast %cst_36 : f32 to vector<2x8x8xf32>
        %97 = arith.mulf %95, %96 : vector<2x8x8xf32>
        %cst_37 = arith.constant dense<0xFF800000> : vector<2x8xf32>
        %98 = vector.multi_reduction <maximumf>, %97, %cst_37 [2] : vector<2x8x8xf32> to vector<2x8xf32>
        %99 = vector.shape_cast %98 : vector<2x8xf32> to vector<2x8x1xf32>
        %100 = vector.broadcast %99 : vector<2x8x1xf32> to vector<2x8x8xf32>
        %101 = arith.subf %97, %100 : vector<2x8x8xf32>
        %102 = math.exp %101 : vector<2x8x8xf32>
        %cst_38 = arith.constant dense<0.000000e+00> : vector<2x8xf32>
        %103 = vector.multi_reduction <add>, %102, %cst_38 [2] : vector<2x8x8xf32> to vector<2x8xf32>
        %104 = vector.shape_cast %103 : vector<2x8xf32> to vector<2x8x1xf32>
        %105 = vector.broadcast %104 : vector<2x8x1xf32> to vector<2x8x8xf32>
        %106 = arith.divf %102, %105 : vector<2x8x8xf32>
        %107 = arith.truncf %106 : vector<2x8x8xf32> to vector<2x8x8xbf16>
        %108 = arith.truncf %92 : vector<2x8x32xf32> to vector<2x8x32xbf16>
        "tpu.trace_start"() <{level = 10 : i32, message = "bqk,bkd->bqd"}> : () -> ()
        %cst_39 = arith.constant dense<0.000000e+00> : vector<2x8x32xf32>
        %109 = tpu.matmul %107, %108, %cst_39 {dimension_numbers = #tpu.dot_dimension_numbers<[2], [1], [1], [2], [0, 0, 0, 1, 1, 2], [0], [0]>} : vector<2x8x8xbf16>, vector<2x8x32xbf16>, vector<2x8x32xf32> -> vector<2x8x32xf32>
        "tpu.trace_stop"() : () -> ()
        %110 = vector.shape_cast %109 : vector<2x8x32xf32> to vector<16x32xf32>
        %111 = arith.truncf %110 : vector<16x32xf32> to vector<16x32xbf16>
        %112 = vector.extract_strided_slice %32 {offsets = [64, 0], sizes = [32, 128], strides = [1, 1]} : vector<128x128xbf16> to vector<32x128xbf16>
        %cst_40 = arith.constant dense<0.000000e+00> : vector<16x128xf32>
        %113 = tpu.matmul %111, %112, %cst_40 {dimension_numbers = #tpu.dot_dimension_numbers<[1], [0], [0], [1], [0, 0, 1, 1], [], []>} : vector<16x32xbf16>, vector<32x128xbf16>, vector<16x128xf32> -> vector<16x128xf32>
        %114 = arith.addf %89, %113 : vector<16x128xf32>
        %115 = vector.extract_strided_slice %26 {offsets = [0, 0, 96], sizes = [2, 8, 32], strides = [1, 1, 1]} : vector<2x8x128xf32> to vector<2x8x32xf32>
        %116 = vector.extract_strided_slice %28 {offsets = [0, 0, 96], sizes = [2, 8, 32], strides = [1, 1, 1]} : vector<2x8x128xf32> to vector<2x8x32xf32>
        %117 = vector.extract_strided_slice %30 {offsets = [0, 0, 96], sizes = [2, 8, 32], strides = [1, 1, 1]} : vector<2x8x128xf32> to vector<2x8x32xf32>
        %118 = arith.truncf %115 : vector<2x8x32xf32> to vector<2x8x32xbf16>
        %119 = arith.truncf %116 : vector<2x8x32xf32> to vector<2x8x32xbf16>
        "tpu.trace_start"() <{level = 10 : i32, message = "bqd,bkd->bqk"}> : () -> ()
        %cst_41 = arith.constant dense<0.000000e+00> : vector<2x8x8xf32>
        %120 = tpu.matmul %118, %119, %cst_41 {dimension_numbers = #tpu.dot_dimension_numbers<[2], [2], [1], [1], [0, 0, 0, 1, 1, 1], [0], [0]>} : vector<2x8x32xbf16>, vector<2x8x32xbf16>, vector<2x8x8xf32> -> vector<2x8x8xf32>
        "tpu.trace_stop"() : () -> ()
        %cst_42 = arith.constant 0.176776692 : f32
        %121 = vector.broadcast %cst_42 : f32 to vector<2x8x8xf32>
        %122 = arith.mulf %120, %121 : vector<2x8x8xf32>
        %cst_43 = arith.constant dense<0xFF800000> : vector<2x8xf32>
        %123 = vector.multi_reduction <maximumf>, %122, %cst_43 [2] : vector<2x8x8xf32> to vector<2x8xf32>
        %124 = vector.shape_cast %123 : vector<2x8xf32> to vector<2x8x1xf32>
        %125 = vector.broadcast %124 : vector<2x8x1xf32> to vector<2x8x8xf32>
        %126 = arith.subf %122, %125 : vector<2x8x8xf32>
        %127 = math.exp %126 : vector<2x8x8xf32>
        %cst_44 = arith.constant dense<0.000000e+00> : vector<2x8xf32>
        %128 = vector.multi_reduction <add>, %127, %cst_44 [2] : vector<2x8x8xf32> to vector<2x8xf32>
        %129 = vector.shape_cast %128 : vector<2x8xf32> to vector<2x8x1xf32>
        %130 = vector.broadcast %129 : vector<2x8x1xf32> to vector<2x8x8xf32>
        %131 = arith.divf %127, %130 : vector<2x8x8xf32>
        %132 = arith.truncf %131 : vector<2x8x8xf32> to vector<2x8x8xbf16>
        %133 = arith.truncf %117 : vector<2x8x32xf32> to vector<2x8x32xbf16>
        "tpu.trace_start"() <{level = 10 : i32, message = "bqk,bkd->bqd"}> : () -> ()
        %cst_45 = arith.constant dense<0.000000e+00> : vector<2x8x32xf32>
        %134 = tpu.matmul %132, %133, %cst_45 {dimension_numbers = #tpu.dot_dimension_numbers<[2], [1], [1], [2], [0, 0, 0, 1, 1, 2], [0], [0]>} : vector<2x8x8xbf16>, vector<2x8x32xbf16>, vector<2x8x32xf32> -> vector<2x8x32xf32>
        "tpu.trace_stop"() : () -> ()
        %135 = vector.shape_cast %134 : vector<2x8x32xf32> to vector<16x32xf32>
        %136 = arith.truncf %135 : vector<16x32xf32> to vector<16x32xbf16>
        %137 = vector.extract_strided_slice %32 {offsets = [96, 0], sizes = [32, 128], strides = [1, 1]} : vector<128x128xbf16> to vector<32x128xbf16>
        %cst_46 = arith.constant dense<0.000000e+00> : vector<16x128xf32>
        %138 = tpu.matmul %136, %137, %cst_46 {dimension_numbers = #tpu.dot_dimension_numbers<[1], [0], [0], [1], [0, 0, 1, 1], [], []>} : vector<16x32xbf16>, vector<32x128xbf16>, vector<16x128xf32> -> vector<16x128xf32>
        %139 = arith.addf %114, %138 : vector<16x128xf32>
        %140 = arith.addf %16, %139 : vector<16x128xf32>
        %c0_47 = arith.constant 0 : index
        %c0_48 = arith.constant 0 : index
        %c0_49 = arith.constant 0 : index
        %141 = vector.load %arg15[%c0_47, %c0_48, %c0_49] : memref<1x1x128xf32, #tpu.memory_space<vmem>>, vector<1x1x128xf32>
        %142 = vector.shape_cast %141 : vector<1x1x128xf32> to vector<1x128xf32>
        %143 = vector.broadcast %142 : vector<1x128xf32> to vector<16x128xf32>
        %144 = arith.addf %140, %143 : vector<16x128xf32>
        %c0_50 = arith.constant 0 : index
        %c0_51 = arith.constant 0 : index
        %c0_52 = arith.constant 0 : index
        %145 = vector.load %arg16[%c0_50, %c0_51, %c0_52] : memref<1x1x128xf32, #tpu.memory_space<vmem>>, vector<1x1x128xf32>
        %146 = vector.shape_cast %145 : vector<1x1x128xf32> to vector<1x128xf32>
        %c0_53 = arith.constant 0 : index
        %c0_54 = arith.constant 0 : index
        %c0_55 = arith.constant 0 : index
        %147 = vector.load %arg17[%c0_53, %c0_54, %c0_55] : memref<1x1x128xf32, #tpu.memory_space<vmem>>, vector<1x1x128xf32>
        %148 = vector.shape_cast %147 : vector<1x1x128xf32> to vector<1x128xf32>
        %cst_56 = arith.constant dense<0.000000e+00> : vector<16xf32>
        %149 = vector.multi_reduction <add>, %144, %cst_56 [1] : vector<16x128xf32> to vector<16xf32>
        %150 = vector.shape_cast %149 : vector<16xf32> to vector<16x1xf32>
        %cst_57 = arith.constant 1.280000e+02 : f32
        %151 = vector.broadcast %cst_57 : f32 to vector<16x1xf32>
        %152 = arith.divf %150, %151 : vector<16x1xf32>
        %153 = vector.broadcast %152 : vector<16x1xf32> to vector<16x128xf32>
        %154 = arith.subf %144, %153 : vector<16x128xf32>
        %155 = arith.mulf %154, %154 : vector<16x128xf32>
        %cst_58 = arith.constant dense<0.000000e+00> : vector<16xf32>
        %156 = vector.multi_reduction <add>, %155, %cst_58 [1] : vector<16x128xf32> to vector<16xf32>
        %157 = vector.shape_cast %156 : vector<16xf32> to vector<16x1xf32>
        %cst_59 = arith.constant 1.280000e+02 : f32
        %158 = vector.broadcast %cst_59 : f32 to vector<16x1xf32>
        %159 = arith.divf %157, %158 : vector<16x1xf32>
        %160 = vector.broadcast %152 : vector<16x1xf32> to vector<16x128xf32>
        %161 = arith.subf %144, %160 : vector<16x128xf32>
        %cst_60 = arith.constant 9.99999974E-6 : f32
        %162 = vector.broadcast %cst_60 : f32 to vector<16x1xf32>
        %163 = arith.addf %159, %162 : vector<16x1xf32>
        %164 = math.rsqrt %163 : vector<16x1xf32>
        %165 = vector.broadcast %164 : vector<16x1xf32> to vector<16x128xf32>
        %166 = arith.mulf %161, %165 : vector<16x128xf32>
        %167 = vector.broadcast %146 : vector<1x128xf32> to vector<16x128xf32>
        %168 = arith.mulf %166, %167 : vector<16x128xf32>
        %169 = vector.broadcast %148 : vector<1x128xf32> to vector<16x128xf32>
        %170 = arith.addf %168, %169 : vector<16x128xf32>
        %171 = arith.truncf %170 : vector<16x128xf32> to vector<16x128xbf16>
        %c0_61 = arith.constant 0 : index
        %c0_62 = arith.constant 0 : index
        %c0_63 = arith.constant 0 : index
        %172 = vector.load %arg18[%c0_61, %c0_62, %c0_63] : memref<1x128x256xbf16, #tpu.memory_space<vmem>>, vector<1x128x256xbf16>
        %173 = vector.shape_cast %172 : vector<1x128x256xbf16> to vector<128x256xbf16>
        %cst_64 = arith.constant dense<0.000000e+00> : vector<16x256xf32>
        %174 = tpu.matmul %171, %173, %cst_64 {dimension_numbers = #tpu.dot_dimension_numbers<[1], [0], [0], [1], [0, 0, 1, 1], [], []>} : vector<16x128xbf16>, vector<128x256xbf16>, vector<16x256xf32> -> vector<16x256xf32>
        %c0_65 = arith.constant 0 : index
        %c0_66 = arith.constant 0 : index
        %c0_67 = arith.constant 0 : index
        %175 = vector.load %arg19[%c0_65, %c0_66, %c0_67] : memref<1x1x256xf32, #tpu.memory_space<vmem>>, vector<1x1x256xf32>
        %176 = vector.shape_cast %175 : vector<1x1x256xf32> to vector<1x256xf32>
        %177 = vector.broadcast %176 : vector<1x256xf32> to vector<16x256xf32>
        %178 = arith.addf %174, %177 : vector<16x256xf32>
        %cst_68 = arith.constant 5.000000e-01 : f32
        %179 = vector.broadcast %cst_68 : f32 to vector<16x256xf32>
        %180 = arith.mulf %179, %178 : vector<16x256xf32>
        %cst_69 = arith.constant 4.471500e-02 : f32
        %181 = vector.broadcast %cst_69 : f32 to vector<16x256xf32>
        %182 = arith.mulf %181, %178 : vector<16x256xf32>
        %183 = arith.mulf %182, %178 : vector<16x256xf32>
        %184 = arith.mulf %183, %178 : vector<16x256xf32>
        %185 = arith.addf %178, %184 : vector<16x256xf32>
        %cst_70 = arith.constant 0.797884583 : f32
        %186 = vector.broadcast %cst_70 : f32 to vector<16x256xf32>
        %187 = arith.mulf %186, %185 : vector<16x256xf32>
        %188 = math.tanh %187 : vector<16x256xf32>
        %cst_71 = arith.constant 1.000000e+00 : f32
        %189 = vector.broadcast %cst_71 : f32 to vector<16x256xf32>
        %190 = arith.addf %189, %188 : vector<16x256xf32>
        %191 = arith.mulf %180, %190 : vector<16x256xf32>
        %192 = arith.truncf %191 : vector<16x256xf32> to vector<16x256xbf16>
        %c0_72 = arith.constant 0 : index
        %c0_73 = arith.constant 0 : index
        %c0_74 = arith.constant 0 : index
        %193 = vector.load %arg20[%c0_72, %c0_73, %c0_74] : memref<1x256x128xbf16, #tpu.memory_space<vmem>>, vector<1x256x128xbf16>
        %194 = vector.shape_cast %193 : vector<1x256x128xbf16> to vector<256x128xbf16>
        %cst_75 = arith.constant dense<0.000000e+00> : vector<16x128xf32>
        %195 = tpu.matmul %192, %194, %cst_75 {dimension_numbers = #tpu.dot_dimension_numbers<[1], [0], [0], [1], [0, 0, 1, 1], [], []>} : vector<16x256xbf16>, vector<256x128xbf16>, vector<16x128xf32> -> vector<16x128xf32>
        %c0_76 = arith.constant 0 : index
        %c0_77 = arith.constant 0 : index
        %c0_78 = arith.constant 0 : index
        %196 = vector.load %arg21[%c0_76, %c0_77, %c0_78] : memref<1x1x128xf32, #tpu.memory_space<vmem>>, vector<1x1x128xf32>
        %197 = vector.shape_cast %196 : vector<1x1x128xf32> to vector<1x128xf32>
        %198 = vector.broadcast %197 : vector<1x128xf32> to vector<16x128xf32>
        %199 = arith.addf %195, %198 : vector<16x128xf32>
        %200 = arith.addf %170, %199 : vector<16x128xf32>
        %c0_79 = arith.constant 0 : index
        %c0_80 = arith.constant 0 : index
        %c0_81 = arith.constant 0 : index
        %201 = vector.load %arg22[%c0_79, %c0_80, %c0_81] : memref<1x1x128xf32, #tpu.memory_space<vmem>>, vector<1x1x128xf32>
        %202 = vector.shape_cast %201 : vector<1x1x128xf32> to vector<1x128xf32>
        %c0_82 = arith.constant 0 : index
        %c0_83 = arith.constant 0 : index
        %c0_84 = arith.constant 0 : index
        %203 = vector.load %arg23[%c0_82, %c0_83, %c0_84] : memref<1x1x128xf32, #tpu.memory_space<vmem>>, vector<1x1x128xf32>
        %204 = vector.shape_cast %203 : vector<1x1x128xf32> to vector<1x128xf32>
        %cst_85 = arith.constant dense<0.000000e+00> : vector<16xf32>
        %205 = vector.multi_reduction <add>, %200, %cst_85 [1] : vector<16x128xf32> to vector<16xf32>
        %206 = vector.shape_cast %205 : vector<16xf32> to vector<16x1xf32>
        %cst_86 = arith.constant 1.280000e+02 : f32
        %207 = vector.broadcast %cst_86 : f32 to vector<16x1xf32>
        %208 = arith.divf %206, %207 : vector<16x1xf32>
        %209 = vector.broadcast %208 : vector<16x1xf32> to vector<16x128xf32>
        %210 = arith.subf %200, %209 : vector<16x128xf32>
        %211 = arith.mulf %210, %210 : vector<16x128xf32>
        %cst_87 = arith.constant dense<0.000000e+00> : vector<16xf32>
        %212 = vector.multi_reduction <add>, %211, %cst_87 [1] : vector<16x128xf32> to vector<16xf32>
        %213 = vector.shape_cast %212 : vector<16xf32> to vector<16x1xf32>
        %cst_88 = arith.constant 1.280000e+02 : f32
        %214 = vector.broadcast %cst_88 : f32 to vector<16x1xf32>
        %215 = arith.divf %213, %214 : vector<16x1xf32>
        %216 = vector.broadcast %208 : vector<16x1xf32> to vector<16x128xf32>
        %217 = arith.subf %200, %216 : vector<16x128xf32>
        %cst_89 = arith.constant 9.99999974E-6 : f32
        %218 = vector.broadcast %cst_89 : f32 to vector<16x1xf32>
        %219 = arith.addf %215, %218 : vector<16x1xf32>
        %220 = math.rsqrt %219 : vector<16x1xf32>
        %221 = vector.broadcast %220 : vector<16x1xf32> to vector<16x128xf32>
        %222 = arith.mulf %217, %221 : vector<16x128xf32>
        %223 = vector.broadcast %202 : vector<1x128xf32> to vector<16x128xf32>
        %224 = arith.mulf %222, %223 : vector<16x128xf32>
        %225 = vector.broadcast %204 : vector<1x128xf32> to vector<16x128xf32>
        %226 = arith.addf %224, %225 : vector<16x128xf32>
        %227 = vector.shape_cast %226 : vector<16x128xf32> to vector<2x8x128xf32>
        %c0_90 = arith.constant 0 : index
        %c0_91 = arith.constant 0 : index
        %c0_92 = arith.constant 0 : index
        %228 = vector.load %arg29[%c0_90, %c0_91, %c0_92] : memref<2x8x128xf32, #tpu.memory_space<vmem>>, vector<2x8x128xf32>
        tpu.vector_store %arg29[%c0_90, %c0_91, %c0_92], %227 {strides = array<i32>} : memref<2x8x128xf32, #tpu.memory_space<vmem>>, vector<2x8x128xf32>,
      } else {
      }
      %c0_i32_20 = arith.constant 0 : i32
      %36 = arith.cmpi eq, %arg1, %c0_i32_20 : i32
      %37 = arith.extui %36 : i1 to i32
      %c0_i32_21 = arith.constant 0 : i32
      %38 = arith.cmpi ne, %37, %c0_i32_21 : i32
      scf.if %38 {
        %39 = vector.extract_strided_slice %15 {offsets = [0, 7, 0], sizes = [2, 1, 128], strides = [1, 1, 1]} : vector<2x8x128xf32> to vector<2x1x128xf32>
        %40 = vector.shape_cast %39 : vector<2x1x128xf32> to vector<2x128xf32>
        %cst_22 = arith.constant 0.000000e+00 : f32
        %41 = vector.broadcast %cst_22 : f32 to vector<2x128xf32>
        %42 = vector.extract_strided_slice %26 {offsets = [0, 7, 0], sizes = [2, 1, 32], strides = [1, 1, 1]} : vector<2x8x128xf32> to vector<2x1x32xf32>
        %43 = vector.extract_strided_slice %28 {offsets = [0, 0, 0], sizes = [2, 8, 32], strides = [1, 1, 1]} : vector<2x8x128xf32> to vector<2x8x32xf32>
        %44 = vector.extract_strided_slice %30 {offsets = [0, 0, 0], sizes = [2, 8, 32], strides = [1, 1, 1]} : vector<2x8x128xf32> to vector<2x8x32xf32>
        %45 = arith.truncf %42 : vector<2x1x32xf32> to vector<2x1x32xbf16>
        %46 = arith.truncf %43 : vector<2x8x32xf32> to vector<2x8x32xbf16>
        "tpu.trace_start"() <{level = 10 : i32, message = "bqd,bkd->bqk"}> : () -> ()
        %cst_23 = arith.constant dense<0.000000e+00> : vector<2x1x8xf32>
        %47 = tpu.matmul %45, %46, %cst_23 {dimension_numbers = #tpu.dot_dimension_numbers<[2], [2], [1], [1], [0, 0, 0, 1, 1, 1], [0], [0]>} : vector<2x1x32xbf16>, vector<2x8x32xbf16>, vector<2x1x8xf32> -> vector<2x1x8xf32>
        "tpu.trace_stop"() : () -> ()
        %cst_24 = arith.constant 0.176776692 : f32
        %48 = vector.broadcast %cst_24 : f32 to vector<2x1x8xf32>
        %49 = arith.mulf %47, %48 : vector<2x1x8xf32>
        %cst_25 = arith.constant dense<0xFF800000> : vector<2x1xf32>
        %50 = vector.multi_reduction <maximumf>, %49, %cst_25 [2] : vector<2x1x8xf32> to vector<2x1xf32>
        %51 = vector.shape_cast %50 : vector<2x1xf32> to vector<2x1x1xf32>
        %52 = vector.broadcast %51 : vector<2x1x1xf32> to vector<2x1x8xf32>
        %53 = arith.subf %49, %52 : vector<2x1x8xf32>
        %54 = math.exp %53 : vector<2x1x8xf32>
        %cst_26 = arith.constant dense<0.000000e+00> : vector<2x1xf32>
        %55 = vector.multi_reduction <add>, %54, %cst_26 [2] : vector<2x1x8xf32> to vector<2x1xf32>
        %56 = vector.shape_cast %55 : vector<2x1xf32> to vector<2x1x1xf32>
        %57 = vector.broadcast %56 : vector<2x1x1xf32> to vector<2x1x8xf32>
        %58 = arith.divf %54, %57 : vector<2x1x8xf32>
        %59 = arith.truncf %58 : vector<2x1x8xf32> to vector<2x1x8xbf16>
        %60 = arith.truncf %44 : vector<2x8x32xf32> to vector<2x8x32xbf16>
        "tpu.trace_start"() <{level = 10 : i32, message = "bqk,bkd->bqd"}> : () -> ()
        %cst_27 = arith.constant dense<0.000000e+00> : vector<2x1x32xf32>
        %61 = tpu.matmul %59, %60, %cst_27 {dimension_numbers = #tpu.dot_dimension_numbers<[2], [1], [1], [2], [0, 0, 0, 1, 1, 2], [0], [0]>} : vector<2x1x8xbf16>, vector<2x8x32xbf16>, vector<2x1x32xf32> -> vector<2x1x32xf32>
        "tpu.trace_stop"() : () -> ()
        %62 = vector.shape_cast %61 : vector<2x1x32xf32> to vector<2x32xf32>
        %63 = arith.truncf %62 : vector<2x32xf32> to vector<2x32xbf16>
        %64 = vector.extract_strided_slice %32 {offsets = [0, 0], sizes = [32, 128], strides = [1, 1]} : vector<128x128xbf16> to vector<32x128xbf16>
        %cst_28 = arith.constant dense<0.000000e+00> : vector<2x128xf32>
        %65 = tpu.matmul %63, %64, %cst_28 {dimension_numbers = #tpu.dot_dimension_numbers<[1], [0], [0], [1], [0, 0, 1, 1], [], []>} : vector<2x32xbf16>, vector<32x128xbf16>, vector<2x128xf32> -> vector<2x128xf32>
        %66 = arith.addf %41, %65 : vector<2x128xf32>
        %67 = vector.extract_strided_slice %26 {offsets = [0, 7, 32], sizes = [2, 1, 32], strides = [1, 1, 1]} : vector<2x8x128xf32> to vector<2x1x32xf32>
        %68 = vector.extract_strided_slice %28 {offsets = [0, 0, 32], sizes = [2, 8, 32], strides = [1, 1, 1]} : vector<2x8x128xf32> to vector<2x8x32xf32>
        %69 = vector.extract_strided_slice %30 {offsets = [0, 0, 32], sizes = [2, 8, 32], strides = [1, 1, 1]} : vector<2x8x128xf32> to vector<2x8x32xf32>
        %70 = arith.truncf %67 : vector<2x1x32xf32> to vector<2x1x32xbf16>
        %71 = arith.truncf %68 : vector<2x8x32xf32> to vector<2x8x32xbf16>
        "tpu.trace_start"() <{level = 10 : i32, message = "bqd,bkd->bqk"}> : () -> ()
        %cst_29 = arith.constant dense<0.000000e+00> : vector<2x1x8xf32>
        %72 = tpu.matmul %70, %71, %cst_29 {dimension_numbers = #tpu.dot_dimension_numbers<[2], [2], [1], [1], [0, 0, 0, 1, 1, 1], [0], [0]>} : vector<2x1x32xbf16>, vector<2x8x32xbf16>, vector<2x1x8xf32> -> vector<2x1x8xf32>
        "tpu.trace_stop"() : () -> ()
        %cst_30 = arith.constant 0.176776692 : f32
        %73 = vector.broadcast %cst_30 : f32 to vector<2x1x8xf32>
        %74 = arith.mulf %72, %73 : vector<2x1x8xf32>
        %cst_31 = arith.constant dense<0xFF800000> : vector<2x1xf32>
        %75 = vector.multi_reduction <maximumf>, %74, %cst_31 [2] : vector<2x1x8xf32> to vector<2x1xf32>
        %76 = vector.shape_cast %75 : vector<2x1xf32> to vector<2x1x1xf32>
        %77 = vector.broadcast %76 : vector<2x1x1xf32> to vector<2x1x8xf32>
        %78 = arith.subf %74, %77 : vector<2x1x8xf32>
        %79 = math.exp %78 : vector<2x1x8xf32>
        %cst_32 = arith.constant dense<0.000000e+00> : vector<2x1xf32>
        %80 = vector.multi_reduction <add>, %79, %cst_32 [2] : vector<2x1x8xf32> to vector<2x1xf32>
        %81 = vector.shape_cast %80 : vector<2x1xf32> to vector<2x1x1xf32>
        %82 = vector.broadcast %81 : vector<2x1x1xf32> to vector<2x1x8xf32>
        %83 = arith.divf %79, %82 : vector<2x1x8xf32>
        %84 = arith.truncf %83 : vector<2x1x8xf32> to vector<2x1x8xbf16>
        %85 = arith.truncf %69 : vector<2x8x32xf32> to vector<2x8x32xbf16>
        "tpu.trace_start"() <{level = 10 : i32, message = "bqk,bkd->bqd"}> : () -> ()
        %cst_33 = arith.constant dense<0.000000e+00> : vector<2x1x32xf32>
        %86 = tpu.matmul %84, %85, %cst_33 {dimension_numbers = #tpu.dot_dimension_numbers<[2], [1], [1], [2], [0, 0, 0, 1, 1, 2], [0], [0]>} : vector<2x1x8xbf16>, vector<2x8x32xbf16>, vector<2x1x32xf32> -> vector<2x1x32xf32>
        "tpu.trace_stop"() : () -> ()
        %87 = vector.shape_cast %86 : vector<2x1x32xf32> to vector<2x32xf32>
        %88 = arith.truncf %87 : vector<2x32xf32> to vector<2x32xbf16>
        %89 = vector.extract_strided_slice %32 {offsets = [32, 0], sizes = [32, 128], strides = [1, 1]} : vector<128x128xbf16> to vector<32x128xbf16>
        %cst_34 = arith.constant dense<0.000000e+00> : vector<2x128xf32>
        %90 = tpu.matmul %88, %89, %cst_34 {dimension_numbers = #tpu.dot_dimension_numbers<[1], [0], [0], [1], [0, 0, 1, 1], [], []>} : vector<2x32xbf16>, vector<32x128xbf16>, vector<2x128xf32> -> vector<2x128xf32>
        %91 = arith.addf %66, %90 : vector<2x128xf32>
        %92 = vector.extract_strided_slice %26 {offsets = [0, 7, 64], sizes = [2, 1, 32], strides = [1, 1, 1]} : vector<2x8x128xf32> to vector<2x1x32xf32>
        %93 = vector.extract_strided_slice %28 {offsets = [0, 0, 64], sizes = [2, 8, 32], strides = [1, 1, 1]} : vector<2x8x128xf32> to vector<2x8x32xf32>
        %94 = vector.extract_strided_slice %30 {offsets = [0, 0, 64], sizes = [2, 8, 32], strides = [1, 1, 1]} : vector<2x8x128xf32> to vector<2x8x32xf32>
        %95 = arith.truncf %92 : vector<2x1x32xf32> to vector<2x1x32xbf16>
        %96 = arith.truncf %93 : vector<2x8x32xf32> to vector<2x8x32xbf16>
        "tpu.trace_start"() <{level = 10 : i32, message = "bqd,bkd->bqk"}> : () -> ()
        %cst_35 = arith.constant dense<0.000000e+00> : vector<2x1x8xf32>
        %97 = tpu.matmul %95, %96, %cst_35 {dimension_numbers = #tpu.dot_dimension_numbers<[2], [2], [1], [1], [0, 0, 0, 1, 1, 1], [0], [0]>} : vector<2x1x32xbf16>, vector<2x8x32xbf16>, vector<2x1x8xf32> -> vector<2x1x8xf32>
        "tpu.trace_stop"() : () -> ()
        %cst_36 = arith.constant 0.176776692 : f32
        %98 = vector.broadcast %cst_36 : f32 to vector<2x1x8xf32>
        %99 = arith.mulf %97, %98 : vector<2x1x8xf32>
        %cst_37 = arith.constant dense<0xFF800000> : vector<2x1xf32>
        %100 = vector.multi_reduction <maximumf>, %99, %cst_37 [2] : vector<2x1x8xf32> to vector<2x1xf32>
        %101 = vector.shape_cast %100 : vector<2x1xf32> to vector<2x1x1xf32>
        %102 = vector.broadcast %101 : vector<2x1x1xf32> to vector<2x1x8xf32>
        %103 = arith.subf %99, %102 : vector<2x1x8xf32>
        %104 = math.exp %103 : vector<2x1x8xf32>
        %cst_38 = arith.constant dense<0.000000e+00> : vector<2x1xf32>
        %105 = vector.multi_reduction <add>, %104, %cst_38 [2] : vector<2x1x8xf32> to vector<2x1xf32>
        %106 = vector.shape_cast %105 : vector<2x1xf32> to vector<2x1x1xf32>
        %107 = vector.broadcast %106 : vector<2x1x1xf32> to vector<2x1x8xf32>
        %108 = arith.divf %104, %107 : vector<2x1x8xf32>
        %109 = arith.truncf %108 : vector<2x1x8xf32> to vector<2x1x8xbf16>
        %110 = arith.truncf %94 : vector<2x8x32xf32> to vector<2x8x32xbf16>
        "tpu.trace_start"() <{level = 10 : i32, message = "bqk,bkd->bqd"}> : () -> ()
        %cst_39 = arith.constant dense<0.000000e+00> : vector<2x1x32xf32>
        %111 = tpu.matmul %109, %110, %cst_39 {dimension_numbers = #tpu.dot_dimension_numbers<[2], [1], [1], [2], [0, 0, 0, 1, 1, 2], [0], [0]>} : vector<2x1x8xbf16>, vector<2x8x32xbf16>, vector<2x1x32xf32> -> vector<2x1x32xf32>
        "tpu.trace_stop"() : () -> ()
        %112 = vector.shape_cast %111 : vector<2x1x32xf32> to vector<2x32xf32>
        %113 = arith.truncf %112 : vector<2x32xf32> to vector<2x32xbf16>
        %114 = vector.extract_strided_slice %32 {offsets = [64, 0], sizes = [32, 128], strides = [1, 1]} : vector<128x128xbf16> to vector<32x128xbf16>
        %cst_40 = arith.constant dense<0.000000e+00> : vector<2x128xf32>
        %115 = tpu.matmul %113, %114, %cst_40 {dimension_numbers = #tpu.dot_dimension_numbers<[1], [0], [0], [1], [0, 0, 1, 1], [], []>} : vector<2x32xbf16>, vector<32x128xbf16>, vector<2x128xf32> -> vector<2x128xf32>
        %116 = arith.addf %91, %115 : vector<2x128xf32>
        %117 = vector.extract_strided_slice %26 {offsets = [0, 7, 96], sizes = [2, 1, 32], strides = [1, 1, 1]} : vector<2x8x128xf32> to vector<2x1x32xf32>
        %118 = vector.extract_strided_slice %28 {offsets = [0, 0, 96], sizes = [2, 8, 32], strides = [1, 1, 1]} : vector<2x8x128xf32> to vector<2x8x32xf32>
        %119 = vector.extract_strided_slice %30 {offsets = [0, 0, 96], sizes = [2, 8, 32], strides = [1, 1, 1]} : vector<2x8x128xf32> to vector<2x8x32xf32>
        %120 = arith.truncf %117 : vector<2x1x32xf32> to vector<2x1x32xbf16>
        %121 = arith.truncf %118 : vector<2x8x32xf32> to vector<2x8x32xbf16>
        "tpu.trace_start"() <{level = 10 : i32, message = "bqd,bkd->bqk"}> : () -> ()
        %cst_41 = arith.constant dense<0.000000e+00> : vector<2x1x8xf32>
        %122 = tpu.matmul %120, %121, %cst_41 {dimension_numbers = #tpu.dot_dimension_numbers<[2], [2], [1], [1], [0, 0, 0, 1, 1, 1], [0], [0]>} : vector<2x1x32xbf16>, vector<2x8x32xbf16>, vector<2x1x8xf32> -> vector<2x1x8xf32>
        "tpu.trace_stop"() : () -> ()
        %cst_42 = arith.constant 0.176776692 : f32
        %123 = vector.broadcast %cst_42 : f32 to vector<2x1x8xf32>
        %124 = arith.mulf %122, %123 : vector<2x1x8xf32>
        %cst_43 = arith.constant dense<0xFF800000> : vector<2x1xf32>
        %125 = vector.multi_reduction <maximumf>, %124, %cst_43 [2] : vector<2x1x8xf32> to vector<2x1xf32>
        %126 = vector.shape_cast %125 : vector<2x1xf32> to vector<2x1x1xf32>
        %127 = vector.broadcast %126 : vector<2x1x1xf32> to vector<2x1x8xf32>
        %128 = arith.subf %124, %127 : vector<2x1x8xf32>
        %129 = math.exp %128 : vector<2x1x8xf32>
        %cst_44 = arith.constant dense<0.000000e+00> : vector<2x1xf32>
        %130 = vector.multi_reduction <add>, %129, %cst_44 [2] : vector<2x1x8xf32> to vector<2x1xf32>
        %131 = vector.shape_cast %130 : vector<2x1xf32> to vector<2x1x1xf32>
        %132 = vector.broadcast %131 : vector<2x1x1xf32> to vector<2x1x8xf32>
        %133 = arith.divf %129, %132 : vector<2x1x8xf32>
        %134 = arith.truncf %133 : vector<2x1x8xf32> to vector<2x1x8xbf16>
        %135 = arith.truncf %119 : vector<2x8x32xf32> to vector<2x8x32xbf16>
        "tpu.trace_start"() <{level = 10 : i32, message = "bqk,bkd->bqd"}> : () -> ()
        %cst_45 = arith.constant dense<0.000000e+00> : vector<2x1x32xf32>
        %136 = tpu.matmul %134, %135, %cst_45 {dimension_numbers = #tpu.dot_dimension_numbers<[2], [1], [1], [2], [0, 0, 0, 1, 1, 2], [0], [0]>} : vector<2x1x8xbf16>, vector<2x8x32xbf16>, vector<2x1x32xf32> -> vector<2x1x32xf32>
        "tpu.trace_stop"() : () -> ()
        %137 = vector.shape_cast %136 : vector<2x1x32xf32> to vector<2x32xf32>
        %138 = arith.truncf %137 : vector<2x32xf32> to vector<2x32xbf16>
        %139 = vector.extract_strided_slice %32 {offsets = [96, 0], sizes = [32, 128], strides = [1, 1]} : vector<128x128xbf16> to vector<32x128xbf16>
        %cst_46 = arith.constant dense<0.000000e+00> : vector<2x128xf32>
        %140 = tpu.matmul %138, %139, %cst_46 {dimension_numbers = #tpu.dot_dimension_numbers<[1], [0], [0], [1], [0, 0, 1, 1], [], []>} : vector<2x32xbf16>, vector<32x128xbf16>, vector<2x128xf32> -> vector<2x128xf32>
        %141 = arith.addf %116, %140 : vector<2x128xf32>
        %142 = arith.addf %40, %141 : vector<2x128xf32>
        %c0_47 = arith.constant 0 : index
        %c0_48 = arith.constant 0 : index
        %c0_49 = arith.constant 0 : index
        %143 = vector.load %arg15[%c0_47, %c0_48, %c0_49] : memref<1x1x128xf32, #tpu.memory_space<vmem>>, vector<1x1x128xf32>
        %144 = vector.shape_cast %143 : vector<1x1x128xf32> to vector<1x128xf32>
        %145 = vector.broadcast %144 : vector<1x128xf32> to vector<2x128xf32>
        %146 = arith.addf %142, %145 : vector<2x128xf32>
        %c0_50 = arith.constant 0 : index
        %c0_51 = arith.constant 0 : index
        %c0_52 = arith.constant 0 : index
        %147 = vector.load %arg16[%c0_50, %c0_51, %c0_52] : memref<1x1x128xf32, #tpu.memory_space<vmem>>, vector<1x1x128xf32>
        %148 = vector.shape_cast %147 : vector<1x1x128xf32> to vector<1x128xf32>
        %c0_53 = arith.constant 0 : index
        %c0_54 = arith.constant 0 : index
        %c0_55 = arith.constant 0 : index
        %149 = vector.load %arg17[%c0_53, %c0_54, %c0_55] : memref<1x1x128xf32, #tpu.memory_space<vmem>>, vector<1x1x128xf32>
        %150 = vector.shape_cast %149 : vector<1x1x128xf32> to vector<1x128xf32>
        %cst_56 = arith.constant dense<0.000000e+00> : vector<2xf32>
        %151 = vector.multi_reduction <add>, %146, %cst_56 [1] : vector<2x128xf32> to vector<2xf32>
        %152 = vector.shape_cast %151 : vector<2xf32> to vector<2x1xf32>
        %cst_57 = arith.constant 1.280000e+02 : f32
        %153 = vector.broadcast %cst_57 : f32 to vector<2x1xf32>
        %154 = arith.divf %152, %153 : vector<2x1xf32>
        %155 = vector.broadcast %154 : vector<2x1xf32> to vector<2x128xf32>
        %156 = arith.subf %146, %155 : vector<2x128xf32>
        %157 = arith.mulf %156, %156 : vector<2x128xf32>
        %cst_58 = arith.constant dense<0.000000e+00> : vector<2xf32>
        %158 = vector.multi_reduction <add>, %157, %cst_58 [1] : vector<2x128xf32> to vector<2xf32>
        %159 = vector.shape_cast %158 : vector<2xf32> to vector<2x1xf32>
        %cst_59 = arith.constant 1.280000e+02 : f32
        %160 = vector.broadcast %cst_59 : f32 to vector<2x1xf32>
        %161 = arith.divf %159, %160 : vector<2x1xf32>
        %162 = vector.broadcast %154 : vector<2x1xf32> to vector<2x128xf32>
        %163 = arith.subf %146, %162 : vector<2x128xf32>
        %cst_60 = arith.constant 9.99999974E-6 : f32
        %164 = vector.broadcast %cst_60 : f32 to vector<2x1xf32>
        %165 = arith.addf %161, %164 : vector<2x1xf32>
        %166 = math.rsqrt %165 : vector<2x1xf32>
        %167 = vector.broadcast %166 : vector<2x1xf32> to vector<2x128xf32>
        %168 = arith.mulf %163, %167 : vector<2x128xf32>
        %169 = vector.broadcast %148 : vector<1x128xf32> to vector<2x128xf32>
        %170 = arith.mulf %168, %169 : vector<2x128xf32>
        %171 = vector.broadcast %150 : vector<1x128xf32> to vector<2x128xf32>
        %172 = arith.addf %170, %171 : vector<2x128xf32>
        %173 = arith.truncf %172 : vector<2x128xf32> to vector<2x128xbf16>
        %c0_61 = arith.constant 0 : index
        %c0_62 = arith.constant 0 : index
        %c0_63 = arith.constant 0 : index
        %174 = vector.load %arg18[%c0_61, %c0_62, %c0_63] : memref<1x128x256xbf16, #tpu.memory_space<vmem>>, vector<1x128x256xbf16>
        %175 = vector.shape_cast %174 : vector<1x128x256xbf16> to vector<128x256xbf16>
        %cst_64 = arith.constant dense<0.000000e+00> : vector<2x256xf32>
        %176 = tpu.matmul %173, %175, %cst_64 {dimension_numbers = #tpu.dot_dimension_numbers<[1], [0], [0], [1], [0, 0, 1, 1], [], []>} : vector<2x128xbf16>, vector<128x256xbf16>, vector<2x256xf32> -> vector<2x256xf32>
        %c0_65 = arith.constant 0 : index
        %c0_66 = arith.constant 0 : index
        %c0_67 = arith.constant 0 : index
        %177 = vector.load %arg19[%c0_65, %c0_66, %c0_67] : memref<1x1x256xf32, #tpu.memory_space<vmem>>, vector<1x1x256xf32>
        %178 = vector.shape_cast %177 : vector<1x1x256xf32> to vector<1x256xf32>
        %179 = vector.broadcast %178 : vector<1x256xf32> to vector<2x256xf32>
        %180 = arith.addf %176, %179 : vector<2x256xf32>
        %cst_68 = arith.constant 5.000000e-01 : f32
        %181 = vector.broadcast %cst_68 : f32 to vector<2x256xf32>
        %182 = arith.mulf %181, %180 : vector<2x256xf32>
        %cst_69 = arith.constant 4.471500e-02 : f32
        %183 = vector.broadcast %cst_69 : f32 to vector<2x256xf32>
        %184 = arith.mulf %183, %180 : vector<2x256xf32>
        %185 = arith.mulf %184, %180 : vector<2x256xf32>
        %186 = arith.mulf %185, %180 : vector<2x256xf32>
        %187 = arith.addf %180, %186 : vector<2x256xf32>
        %cst_70 = arith.constant 0.797884583 : f32
        %188 = vector.broadcast %cst_70 : f32 to vector<2x256xf32>
        %189 = arith.mulf %188, %187 : vector<2x256xf32>
        %190 = math.tanh %189 : vector<2x256xf32>
        %cst_71 = arith.constant 1.000000e+00 : f32
        %191 = vector.broadcast %cst_71 : f32 to vector<2x256xf32>
        %192 = arith.addf %191, %190 : vector<2x256xf32>
        %193 = arith.mulf %182, %192 : vector<2x256xf32>
        %194 = arith.truncf %193 : vector<2x256xf32> to vector<2x256xbf16>
        %c0_72 = arith.constant 0 : index
        %c0_73 = arith.constant 0 : index
        %c0_74 = arith.constant 0 : index
        %195 = vector.load %arg20[%c0_72, %c0_73, %c0_74] : memref<1x256x128xbf16, #tpu.memory_space<vmem>>, vector<1x256x128xbf16>
        %196 = vector.shape_cast %195 : vector<1x256x128xbf16> to vector<256x128xbf16>
        %cst_75 = arith.constant dense<0.000000e+00> : vector<2x128xf32>
        %197 = tpu.matmul %194, %196, %cst_75 {dimension_numbers = #tpu.dot_dimension_numbers<[1], [0], [0], [1], [0, 0, 1, 1], [], []>} : vector<2x256xbf16>, vector<256x128xbf16>, vector<2x128xf32> -> vector<2x128xf32>
        %c0_76 = arith.constant 0 : index
        %c0_77 = arith.constant 0 : index
        %c0_78 = arith.constant 0 : index
        %198 = vector.load %arg21[%c0_76, %c0_77, %c0_78] : memref<1x1x128xf32, #tpu.memory_space<vmem>>, vector<1x1x128xf32>
        %199 = vector.shape_cast %198 : vector<1x1x128xf32> to vector<1x128xf32>
        %200 = vector.broadcast %199 : vector<1x128xf32> to vector<2x128xf32>
        %201 = arith.addf %197, %200 : vector<2x128xf32>
        %202 = arith.addf %172, %201 : vector<2x128xf32>
        %c0_79 = arith.constant 0 : index
        %c0_80 = arith.constant 0 : index
        %c0_81 = arith.constant 0 : index
        %203 = vector.load %arg22[%c0_79, %c0_80, %c0_81] : memref<1x1x128xf32, #tpu.memory_space<vmem>>, vector<1x1x128xf32>
        %204 = vector.shape_cast %203 : vector<1x1x128xf32> to vector<1x128xf32>
        %c0_82 = arith.constant 0 : index
        %c0_83 = arith.constant 0 : index
        %c0_84 = arith.constant 0 : index
        %205 = vector.load %arg23[%c0_82, %c0_83, %c0_84] : memref<1x1x128xf32, #tpu.memory_space<vmem>>, vector<1x1x128xf32>
        %206 = vector.shape_cast %205 : vector<1x1x128xf32> to vector<1x128xf32>
        %cst_85 = arith.constant dense<0.000000e+00> : vector<2xf32>
        %207 = vector.multi_reduction <add>, %202, %cst_85 [1] : vector<2x128xf32> to vector<2xf32>
        %208 = vector.shape_cast %207 : vector<2xf32> to vector<2x1xf32>
        %cst_86 = arith.constant 1.280000e+02 : f32
        %209 = vector.broadcast %cst_86 : f32 to vector<2x1xf32>
        %210 = arith.divf %208, %209 : vector<2x1xf32>
        %211 = vector.broadcast %210 : vector<2x1xf32> to vector<2x128xf32>
        %212 = arith.subf %202, %211 : vector<2x128xf32>
        %213 = arith.mulf %212, %212 : vector<2x128xf32>
        %cst_87 = arith.constant dense<0.000000e+00> : vector<2xf32>
        %214 = vector.multi_reduction <add>, %213, %cst_87 [1] : vector<2x128xf32> to vector<2xf32>
        %215 = vector.shape_cast %214 : vector<2xf32> to vector<2x1xf32>
        %cst_88 = arith.constant 1.280000e+02 : f32
        %216 = vector.broadcast %cst_88 : f32 to vector<2x1xf32>
        %217 = arith.divf %215, %216 : vector<2x1xf32>
        %218 = vector.broadcast %210 : vector<2x1xf32> to vector<2x128xf32>
        %219 = arith.subf %202, %218 : vector<2x128xf32>
        %cst_89 = arith.constant 9.99999974E-6 : f32
        %220 = vector.broadcast %cst_89 : f32 to vector<2x1xf32>
        %221 = arith.addf %217, %220 : vector<2x1xf32>
        %222 = math.rsqrt %221 : vector<2x1xf32>
        %223 = vector.broadcast %222 : vector<2x1xf32> to vector<2x128xf32>
        %224 = arith.mulf %219, %223 : vector<2x128xf32>
        %225 = vector.broadcast %204 : vector<1x128xf32> to vector<2x128xf32>
        %226 = arith.mulf %224, %225 : vector<2x128xf32>
        %227 = vector.broadcast %206 : vector<1x128xf32> to vector<2x128xf32>
        %228 = arith.addf %226, %227 : vector<2x128xf32>
        %229 = vector.shape_cast %228 : vector<2x128xf32> to vector<2x1x128xf32>
        %c0_90 = arith.constant 0 : index
        %c0_91 = arith.constant 0 : index
        %c0_92 = arith.constant 0 : index
        %230 = vector.load %arg26[%c0_90, %c0_91, %c0_92] : memref<2x1x128xf32, #tpu.memory_space<vmem>>, vector<2x1x128xf32>
        tpu.vector_store %arg26[%c0_90, %c0_91, %c0_92], %229 {strides = array<i32>} : memref<2x1x128xf32, #tpu.memory_space<vmem>>, vector<2x1x128xf32>,
      } else {
      }
    } else {
    }
    return
  }
  func.func @transform_2(%arg0: i32, %arg1: i32, %arg2: memref<4xi32, #tpu.memory_space<smem>>) -> (i32, i32) {
    %c0_i32 = arith.constant 0 : i32
    %c0_i32_0 = arith.constant 0 : i32
    %c0_i32_1 = arith.constant 0 : i32
    return %c0_i32, %c0_i32_0 : i32, i32
  }
  func.func @transform_3(%arg0: i32, %arg1: i32, %arg2: memref<4xi32, #tpu.memory_space<smem>>) -> (i32, i32) {
    %c0_i32 = arith.constant 0 : i32
    %c0_i32_0 = arith.constant 0 : i32
    %c0_i32_1 = arith.constant 0 : i32
    return %c0_i32, %c0_i32_0 : i32, i32
  }
  func.func @transform_4(%arg0: i32, %arg1: i32, %arg2: memref<4xi32, #tpu.memory_space<smem>>) -> (i32, i32) {
    %c0_i32 = arith.constant 0 : i32
    %c0_i32_0 = arith.constant 0 : i32
    %c0_i32_1 = arith.constant 0 : i32
    return %c0_i32, %c0_i32_0 : i32, i32
  }
  func.func @transform_5(%arg0: i32, %arg1: i32, %arg2: memref<4xi32, #tpu.memory_space<smem>>) -> (i32, i32, i32) {
    %c1_i32 = arith.constant 1 : i32
    %0 = arith.minsi %arg1, %c1_i32 : i32
    %c0_i32 = arith.constant 0 : i32
    %c0_i32_0 = arith.constant 0 : i32
    %c0_i32_1 = arith.constant 0 : i32
    return %0, %c0_i32, %c0_i32_0 : i32, i32, i32
  }
  func.func @transform_6(%arg0: i32, %arg1: i32, %arg2: memref<4xi32, #tpu.memory_space<smem>>) -> (i32, i32, i32) {
    %c1_i32 = arith.constant 1 : i32
    %0 = arith.minsi %arg1, %c1_i32 : i32
    %c0_i32 = arith.constant 0 : i32
    %c0_i32_0 = arith.constant 0 : i32
    %c0_i32_1 = arith.constant 0 : i32
    return %0, %c0_i32, %c0_i32_0 : i32, i32, i32
  }
  func.func @transform_7(%arg0: i32, %arg1: i32, %arg2: memref<4xi32, #tpu.memory_space<smem>>) -> (i32, i32, i32) {
    %c1_i32 = arith.constant 1 : i32
    %0 = arith.minsi %arg1, %c1_i32 : i32
    %c0_i32 = arith.constant 0 : i32
    %c0_i32_0 = arith.constant 0 : i32
    %c0_i32_1 = arith.constant 0 : i32
    return %0, %c0_i32, %c0_i32_0 : i32, i32, i32
  }
  func.func @transform_8(%arg0: i32, %arg1: i32, %arg2: memref<4xi32, #tpu.memory_space<smem>>) -> (i32, i32, i32) {
    %c1_i32 = arith.constant 1 : i32
    %0 = arith.minsi %arg1, %c1_i32 : i32
    %c0_i32 = arith.constant 0 : i32
    %c0_i32_0 = arith.constant 0 : i32
    %c0_i32_1 = arith.constant 0 : i32
    return %0, %c0_i32, %c0_i32_0 : i32, i32, i32
  }
  func.func @transform_9(%arg0: i32, %arg1: i32, %arg2: memref<4xi32, #tpu.memory_space<smem>>) -> (i32, i32, i32) {
    %c0_i32 = arith.constant 0 : i32
    %0 = arith.minsi %arg1, %c0_i32 : i32
    %c0_i32_0 = arith.constant 0 : i32
    %c0_i32_1 = arith.constant 0 : i32
    %c0_i32_2 = arith.constant 0 : i32
    return %0, %c0_i32_0, %c0_i32_1 : i32, i32, i32
  }
  func.func @transform_10(%arg0: i32, %arg1: i32, %arg2: memref<4xi32, #tpu.memory_space<smem>>) -> (i32, i32, i32) {
    %c0_i32 = arith.constant 0 : i32
    %0 = arith.minsi %arg1, %c0_i32 : i32
    %c0_i32_0 = arith.constant 0 : i32
    %c0_i32_1 = arith.constant 0 : i32
    %c0_i32_2 = arith.constant 0 : i32
    return %0, %c0_i32_0, %c0_i32_1 : i32, i32, i32
  }
  func.func @transform_11(%arg0: i32, %arg1: i32, %arg2: memref<4xi32, #tpu.memory_space<smem>>) -> (i32, i32, i32) {
    %c0_i32 = arith.constant 0 : i32
    %0 = arith.minsi %arg1, %c0_i32 : i32
    %c0_i32_0 = arith.constant 0 : i32
    %c0_i32_1 = arith.constant 0 : i32
    %c0_i32_2 = arith.constant 0 : i32
    return %0, %c0_i32_0, %c0_i32_1 : i32, i32, i32
  }
  func.func @transform_12(%arg0: i32, %arg1: i32, %arg2: memref<4xi32, #tpu.memory_space<smem>>) -> (i32, i32, i32) {
    %c0_i32 = arith.constant 0 : i32
    %0 = arith.minsi %arg1, %c0_i32 : i32
    %c0_i32_0 = arith.constant 0 : i32
    %c0_i32_1 = arith.constant 0 : i32
    %c0_i32_2 = arith.constant 0 : i32
    return %0, %c0_i32_0, %c0_i32_1 : i32, i32, i32
  }
  func.func @transform_13(%arg0: i32, %arg1: i32, %arg2: memref<4xi32, #tpu.memory_space<smem>>) -> (i32, i32, i32) {
    %c0_i32 = arith.constant 0 : i32
    %0 = arith.minsi %arg1, %c0_i32 : i32
    %c0_i32_0 = arith.constant 0 : i32
    %c0_i32_1 = arith.constant 0 : i32
    %c0_i32_2 = arith.constant 0 : i32
    return %0, %c0_i32_0, %c0_i32_1 : i32, i32, i32
  }
  func.func @transform_14(%arg0: i32, %arg1: i32, %arg2: memref<4xi32, #tpu.memory_space<smem>>) -> (i32, i32, i32) {
    %c0_i32 = arith.constant 0 : i32
    %0 = arith.minsi %arg1, %c0_i32 : i32
    %c0_i32_0 = arith.constant 0 : i32
    %c0_i32_1 = arith.constant 0 : i32
    %c0_i32_2 = arith.constant 0 : i32
    return %0, %c0_i32_0, %c0_i32_1 : i32, i32, i32
  }
  func.func @transform_15(%arg0: i32, %arg1: i32, %arg2: memref<4xi32, #tpu.memory_space<smem>>) -> (i32, i32, i32) {
    %c0_i32 = arith.constant 0 : i32
    %0 = arith.minsi %arg1, %c0_i32 : i32
    %c0_i32_0 = arith.constant 0 : i32
    %c0_i32_1 = arith.constant 0 : i32
    %c0_i32_2 = arith.constant 0 : i32
    return %0, %c0_i32_0, %c0_i32_1 : i32, i32, i32
  }
  func.func @transform_16(%arg0: i32, %arg1: i32, %arg2: memref<4xi32, #tpu.memory_space<smem>>) -> (i32, i32, i32) {
    %c0_i32 = arith.constant 0 : i32
    %0 = arith.minsi %arg1, %c0_i32 : i32
    %c0_i32_0 = arith.constant 0 : i32
    %c0_i32_1 = arith.constant 0 : i32
    %c0_i32_2 = arith.constant 0 : i32
    return %0, %c0_i32_0, %c0_i32_1 : i32, i32, i32
  }
  func.func @transform_17(%arg0: i32, %arg1: i32, %arg2: memref<4xi32, #tpu.memory_space<smem>>) -> (i32, i32, i32) {
    %c0_i32 = arith.constant 0 : i32
    %0 = arith.minsi %arg1, %c0_i32 : i32
    %c0_i32_0 = arith.constant 0 : i32
    %c0_i32_1 = arith.constant 0 : i32
    %c0_i32_2 = arith.constant 0 : i32
    return %0, %c0_i32_0, %c0_i32_1 : i32, i32, i32
  }
  func.func @transform_18(%arg0: i32, %arg1: i32, %arg2: memref<4xi32, #tpu.memory_space<smem>>) -> (i32, i32, i32) {
    %c0_i32 = arith.constant 0 : i32
    %0 = arith.minsi %arg1, %c0_i32 : i32
    %c0_i32_0 = arith.constant 0 : i32
    %c0_i32_1 = arith.constant 0 : i32
    %c0_i32_2 = arith.constant 0 : i32
    return %0, %c0_i32_0, %c0_i32_1 : i32, i32, i32
  }
  func.func @transform_19(%arg0: i32, %arg1: i32, %arg2: memref<4xi32, #tpu.memory_space<smem>>) -> (i32, i32, i32) {
    %c0_i32 = arith.constant 0 : i32
    %0 = arith.minsi %arg1, %c0_i32 : i32
    %c0_i32_0 = arith.constant 0 : i32
    %c0_i32_1 = arith.constant 0 : i32
    %c0_i32_2 = arith.constant 0 : i32
    return %0, %c0_i32_0, %c0_i32_1 : i32, i32, i32
  }
  func.func @transform_20(%arg0: i32, %arg1: i32, %arg2: memref<4xi32, #tpu.memory_space<smem>>) -> (i32, i32, i32) {
    %c0_i32 = arith.constant 0 : i32
    %0 = arith.minsi %arg1, %c0_i32 : i32
    %c0_i32_0 = arith.constant 0 : i32
    %c0_i32_1 = arith.constant 0 : i32
    %c0_i32_2 = arith.constant 0 : i32
    return %0, %c0_i32_0, %c0_i32_1 : i32, i32, i32
  }
  func.func @transform_21(%arg0: i32, %arg1: i32, %arg2: memref<4xi32, #tpu.memory_space<smem>>) -> (i32, i32, i32) {
    %c0_i32 = arith.constant 0 : i32
    %c0_i32_0 = arith.constant 0 : i32
    %c0_i32_1 = arith.constant 0 : i32
    return %arg0, %c0_i32, %c0_i32_0 : i32, i32, i32
  }
  func.func @transform_22(%arg0: i32, %arg1: i32, %arg2: memref<4xi32, #tpu.memory_space<smem>>) -> (i32, i32, i32) {
    %c0_i32 = arith.constant 0 : i32
    %c0_i32_0 = arith.constant 0 : i32
    %c0_i32_1 = arith.constant 0 : i32
    return %arg0, %c0_i32, %c0_i32_0 : i32, i32, i32
  }
  func.func @transform_23(%arg0: i32, %arg1: i32, %arg2: memref<4xi32, #tpu.memory_space<smem>>) -> (i32, i32, i32) {
    %c0_i32 = arith.constant 0 : i32
    %c0_i32_0 = arith.constant 0 : i32
    %c0_i32_1 = arith.constant 0 : i32
    return %arg0, %c0_i32, %c0_i32_0 : i32, i32, i32
  }
}

</mosaic_0001>

<llo_original>
// kernel: custom-call
$region0: #{custom-call}
  #allocation0 [shape = 'u32[8,128]{1,0}', space=vmem, size = 0x1000, scoped, tag = 'scratch']
  #allocation1 [shape = 'u32[8,128]{1,0}', space=vmem, size = 0x1000, scoped, tag = 'scratch']
  #allocation2 [shape = 'u32[8,128]{1,0}', space=vmem, size = 0x1000, scoped, tag = 'scratch']
  #allocation3 [shape = 'u32[8,128]{1,0}', space=vmem, size = 0x1000, scoped, tag = 'scratch']
  #allocation4 [shape = 'u32[8,128]{1,0}', space=vmem, size = 0x1000, scoped, tag = 'scratch']
  #allocation5 [shape = 'u32[8,128]{1,0}', space=vmem, size = 0x1000, scoped, tag = 'scratch']
  #allocation6 [shape = 'u32[8,128]{1,0}', space=vmem, size = 0x1000, scoped, tag = 'scratch']
  %s0 = inlined_call_operand.vmem [shape: f32[2,128], index: 0, kind: input, shape index: {}]
  %s1 = inlined_call_operand.hbm [shape: f32[2,2], index: 1, kind: output, shape index: {0}]
  %s2 = inlined_call_operand.vmem [shape: s32[2,2], index: 2, kind: output, shape index: {1}]
  %3 = xla_tuple %s1, %s2
  %4 = xla_tuple 2147483648, 2147483647
  $region1: #{custom-call} parent=0
    #allocation7 [shape = 'u8[4096]{0}', space=vmem, size = 0x1000, scoped, tag = 'operand span for operand 1']
    #allocation8 [shape = 'u8[1024]{0}', space=vmem, size = 0x400, scoped, tag = 'packed  for operand 1']
    #allocation9 [shape = 's32[1]{0}', space=sflag, size = 0x4, scoped, tag = 'scoped memory for custom-call']
    #allocation10 [shape = 'u8[4096]{0}', space=vmem, size = 0x1000, scoped, tag = 'operand span for operand 2']
    #allocation11 [shape = 'u8[1024]{0}', space=vmem, size = 0x400, scoped, tag = 'packed  for operand 2']
    #allocation12 [shape = 'f32[2,2]{1,0:T(8,128)}', space=vmem, size = 0x1000, scoped, tag = 'scoped memory for custom-call']
    #allocation13 [shape = 'f32[2,2]{1,0:T(8,128)}', space=vmem, size = 0x1000, scoped, tag = 'scoped memory for custom-call']
    #allocation14 [shape = 's32[2,2]{1,0:T(8,128)}', space=vmem, size = 0x1000, scoped, tag = 'scoped memory for custom-call']
    #allocation15 [shape = 's32[2,2]{1,0:T(8,128)}', space=vmem, size = 0x1000, scoped, tag = 'scoped memory for custom-call']
    %5 = vsyncpa [#allocation9], 0
    %6 = xla_tuple [#allocation7], [#allocation10]
    %7 = vst [vmem:[#allocation12] sm:$0xff] 2147483648
    %8 = vst [vmem:[#allocation14] sm:$0xff] 2147483647
    %9 = xla_tuple [#allocation12], [#allocation14]
    %10 = xla_tuple [#allocation13], [#allocation15]
    $region2: #{custom-call} parent=1
      #allocation16 [shape = 'u8[4096]{0}', space=vmem, size = 0x1000, scoped, tag = 'operand span for operand 0']
      #allocation17 [shape = 's32[1024]{0}', space=vmem, size = 0x1000, scoped, tag = 'scoped memory for custom-call']
      // Predicated region
      $region3: #{custom-call} parent=2 // pred_check
        _
      $region4: #{custom-call} parent=2 // pred_check_branch
        %12 = sbr.rel (0) target = $region6
      $region5: #{custom-call} parent=2 // pred_region
        // Predicated region
        $region7: #{custom-call} parent=5 // pred_check
          _
        $region8: #{custom-call} parent=5 // pred_check_branch
          %14 = sbr.rel (0) target = $region10
        $region9: #{custom-call} parent=5 // pred_region
          // Predicated region
          $region11: #{custom-call} parent=9 // pred_check
            _
          $region12: #{custom-call} parent=9 // pred_check_branch
            %16 = sbr.rel target = $region14
          $region13: #{custom-call} parent=9 // pred_region
            // Predicated region
            $region26: #{custom-call} parent=13 // pred_check
              _
            $region27: #{custom-call} parent=13 // pred_check_branch
              %31 = sbr.rel (0) target = $region29
            $region28: #{custom-call} parent=13 // pred_region
              loop: start=0, step=1, limit=1
              $region30: #{custom-call} parent=28 // loop_pre_header
                _
              $region31: #{custom-call} parent=28 // loop_header
                %s34 = sphi 0, %s38
                %p35 = scmp.ge.s32.totalorder %s34, 1
                %s39 = sphi %s0, %s0
                %s40 = sphi [#allocation16], [#allocation16]
              $region32: #{custom-call} parent=28 // loop_header_branch
                %37 = sbr.rel (%p35) target = $region36
              $region33: #{custom-call} parent=28 // loop_body
                %v41 = vld [vmem:[%s39] sm:$0x3]
                %42 = vst [vmem:[%s40] sm:$0x3] %v41
              $region34: #{custom-call} parent=28 // loop_footer
                %s38 = sadd.s32 1, %s34
              $region35: #{custom-call} parent=28 // loop_footer_branch
                %33 = sbr.rel target = $region31
              $region36: #{custom-call} parent=28 // loop_exit
                _
            $region29: #{custom-call} parent=13 // pred_fallthru
              _
          $region14: #{custom-call} parent=9 // pred_fallthru
            _
          // Predicated region
          $region15: #{custom-call} parent=9 // pred_check
            _
          $region16: #{custom-call} parent=9 // pred_check_branch
            %18 = sbr.rel (0) target = $region18
          $region17: #{custom-call} parent=9 // pred_region
            loop: start=0, step=1, limit=1
            $region19: #{custom-call} parent=17 // loop_pre_header
              _
            $region20: #{custom-call} parent=17 // loop_header
              %s21 = sphi 0, %s25
              %p22 = scmp.ge.s32.totalorder %s21, 1
              %s26 = sphi %s0, %s0
              %s27 = sphi [#allocation16], [#allocation16]
            $region21: #{custom-call} parent=17 // loop_header_branch
              %24 = sbr.rel (%p22) target = $region25
            $region22: #{custom-call} parent=17 // loop_body
              %v28 = vld [vmem:[%s26] sm:$0x3]
              %29 = vst [vmem:[%s27] sm:$0x3] %v28
            $region23: #{custom-call} parent=17 // loop_footer
              %s25 = sadd.s32 1, %s21
            $region24: #{custom-call} parent=17 // loop_footer_branch
              %20 = sbr.rel target = $region20
            $region25: #{custom-call} parent=17 // loop_exit
              _
          $region18: #{custom-call} parent=9 // pred_fallthru
            _
        $region10: #{custom-call} parent=5 // pred_fallthru
          _
        %43 = vnop
      $region6: #{custom-call} parent=2 // pred_fallthru
        _
      // Predicated region
      $region37: #{custom-call} parent=2 // pred_check
        _
      $region38: #{custom-call} parent=2 // pred_check_branch
        %45 = sbr.rel (0) target = $region40
      $region39: #{custom-call} parent=2 // pred_region
        _
      $region40: #{custom-call} parent=2 // pred_fallthru
        _
      %v46 = vlaneseq
      %v47 = vand.u32 %v46, 127
      %v48 = vlaneseq
      %v49 = vshrl.u32 %v48, 7
      %v50 = vshrl.u32 %v49, 1
      %v51 = vand.u32 %v49, 1
      %v52 = vmul.u32 %v50, 128
      %v53 = vadd.s32 %v47, %v52
      %v55 = vld [vmem:[#allocation16] sm:$0xff]
      %vm56 = vcmp.lt.s32.totalorder %v55, 0
      %v57 = vsub.s32 2147483647, %v55
      %v58 = vsel %vm56, %v57, %v55
      %vm60 = vcmp.lt.s32.totalorder %v53, 128
      %v61 = vsel %vm60, %v58, 2147483648
      %62 = vst [vmem:[#allocation16] sm:$0xff] %v61
      %v63 = vlaneseq
      %v64 = vand.u32 %v63, 127
      %v65 = vlaneseq
      %v66 = vshrl.u32 %v65, 7
      %v67 = vshrl.u32 %v66, 1
      %v68 = vand.u32 %v66, 1
      %v69 = vmul.u32 %v67, 128
      %v70 = vadd.s32 %v64, %v69
      %73 = vst [vmem:[#allocation17] sm:$0xff] %v70
      %74 = xla_tuple [#allocation16], [#allocation17]
      %75 = vst [vmem:[#allocation13] sm:$0xff] 2147483648
      %76 = vst [vmem:[#allocation15] sm:$0xff] 2147483647
      %77 = xla_tuple [#allocation13], [#allocation15]
      loop: start=0, step=1, limit=2
      $region41: #{custom-call} parent=2 // loop_pre_header
        _
      $region42: #{custom-call} parent=2 // loop_header
        %s79 = sphi 0, %s83
        %p80 = scmp.ge.s32.totalorder %s79, 2
      $region43: #{custom-call} parent=2 // loop_header_branch
        %82 = sbr.rel (%p80) target = $region47
      $region44: #{custom-call} parent=2 // loop_body
        %v84 = vld [vmem:[#allocation16] sm:$0xff]
        %v85 = vld [vmem:[#allocation17] sm:$0xff]
        %86 = xla_tuple %v84, %v85
        %v87 = vrot.slane %v84, 2
        %v88 = vrot.slane %v85, 2
        %89 = xla_tuple %v87, %v88
        %vm90 = vcmp.gt.s32.totalorder %v87, %v84
        %vm91 = vcmp.eq.s32.totalorder %v87, %v84
        %vm92 = vcmp.lt.s32.totalorder %v88, %v85
        %vm93 = vmand %vm91, %vm92
        %vm94 = vmor %vm90, %vm93
        %v95 = vsel %vm94, %v87, %v84
        %v96 = vsel %vm94, %v88, %v85
        %97 = xla_tuple %v95, %v96
        %v98 = vrot.slane %v95, 2
        %v99 = vrot.slane %v96, 2
        %100 = xla_tuple %v98, %v99
        %vm101 = vcmp.gt.s32.totalorder %v98, %v95
        %vm102 = vcmp.eq.s32.totalorder %v98, %v95
        %vm103 = vcmp.lt.s32.totalorder %v99, %v96
        %vm104 = vmand %vm102, %vm103
        %vm105 = vmor %vm101, %vm104
        %v106 = vsel %vm105, %v98, %v95
        %v107 = vsel %vm105, %v99, %v96
        %108 = xla_tuple %v106, %v107
        %v109 = vrot.slane %v106, 2
        %v110 = vrot.slane %v107, 2
        %111 = xla_tuple %v109, %v110
        %vm112 = vcmp.gt.s32.totalorder %v109, %v106
        %vm113 = vcmp.eq.s32.totalorder %v109, %v106
        %vm114 = vcmp.lt.s32.totalorder %v110, %v107
        %vm115 = vmand %vm113, %vm114
        %vm116 = vmor %vm112, %vm115
        %v117 = vsel %vm116, %v109, %v106
        %v118 = vsel %vm116, %v110, %v107
        %119 = xla_tuple %v117, %v118
        %120 = vxpose.xlu0.b32.start [1/16] %v117, 128
        %121 = vxpose.xlu0.b32.cont [2/16] %v117, 128
        %122 = vxpose.xlu0.b32.cont [3/16] %v117, 128
        %123 = vxpose.xlu0.b32.cont [4/16] %v117, 128
        %124 = vxpose.xlu0.b32.cont [5/16] %v117, 128
        %125 = vxpose.xlu0.b32.cont [6/16] %v117, 128
        %126 = vxpose.xlu0.b32.cont [7/16] %v117, 128
        %127 = vxpose.xlu0.b32.cont [8/16] %v117, 128
        %128 = vxpose.xlu0.b32.cont [9/16] %v117, 128
        %129 = vxpose.xlu0.b32.cont [10/16] %v117, 128
        %130 = vxpose.xlu0.b32.cont [11/16] %v117, 128
        %131 = vxpose.xlu0.b32.cont [12/16] %v117, 128
        %132 = vxpose.xlu0.b32.cont [13/16] %v117, 128
        %133 = vxpose.xlu0.b32.cont [14/16] %v117, 128
        %134 = vxpose.xlu0.b32.cont [15/16] %v117, 128
        %135 = vxpose.xlu0.b32.end [16/16] %v117, 128
        %v136 = vpop.trf.xlu0
        %v137 = vpop.trf.xlu0
        %v138 = vpop.trf.xlu0
        %v139 = vpop.trf.xlu0
        %v140 = vpop.trf.xlu0
        %v141 = vpop.trf.xlu0
        %v142 = vpop.trf.xlu0
        %v143 = vpop.trf.xlu0
        %v144 = vpop.trf.xlu0
        %v145 = vpop.trf.xlu0
        %v146 = vpop.trf.xlu0
        %v147 = vpop.trf.xlu0
        %v148 = vpop.trf.xlu0
        %v149 = vpop.trf.xlu0
        %v150 = vpop.trf.xlu0
        %v151 = vpop.trf.xlu0
        %152 = vxpose.xlu0.b32.start [1/16] %v118, 128
        %153 = vxpose.xlu0.b32.cont [2/16] %v118, 128
        %154 = vxpose.xlu0.b32.cont [3/16] %v118, 128
        %155 = vxpose.xlu0.b32.cont [4/16] %v118, 128
        %156 = vxpose.xlu0.b32.cont [5/16] %v118, 128
        %157 = vxpose.xlu0.b32.cont [6/16] %v118, 128
        %158 = vxpose.xlu0.b32.cont [7/16] %v118, 128
        %159 = vxpose.xlu0.b32.cont [8/16] %v118, 128
        %160 = vxpose.xlu0.b32.cont [9/16] %v118, 128
        %161 = vxpose.xlu0.b32.cont [10/16] %v118, 128
        %162 = vxpose.xlu0.b32.cont [11/16] %v118, 128
        %163 = vxpose.xlu0.b32.cont [12/16] %v118, 128
        %164 = vxpose.xlu0.b32.cont [13/16] %v118, 128
        %165 = vxpose.xlu0.b32.cont [14/16] %v118, 128
        %166 = vxpose.xlu0.b32.cont [15/16] %v118, 128
        %167 = vxpose.xlu0.b32.end [16/16] %v118, 128
        %v168 = vpop.trf.xlu0
        %v169 = vpop.trf.xlu0
        %v170 = vpop.trf.xlu0
        %v171 = vpop.trf.xlu0
        %v172 = vpop.trf.xlu0
        %v173 = vpop.trf.xlu0
        %v174 = vpop.trf.xlu0
        %v175 = vpop.trf.xlu0
        %v176 = vpop.trf.xlu0
        %v177 = vpop.trf.xlu0
        %v178 = vpop.trf.xlu0
        %v179 = vpop.trf.xlu0
        %v180 = vpop.trf.xlu0
        %v181 = vpop.trf.xlu0
        %v182 = vpop.trf.xlu0
        %v183 = vpop.trf.xlu0
        %184 = xla_tuple %v136, %v168
        %185 = xla_tuple %v137, %v169
        %vm186 = vcmp.gt.s32.totalorder %v137, %v136
        %vm187 = vcmp.eq.s32.totalorder %v137, %v136
        %vm188 = vcmp.lt.s32.totalorder %v169, %v168
        %vm189 = vmand %vm187, %vm188
        %vm190 = vmor %vm186, %vm189
        %v191 = vsel %vm190, %v137, %v136
        %v192 = vsel %vm190, %v169, %v168
        %193 = xla_tuple %v191, %v192
        %194 = xla_tuple %v138, %v170
        %vm195 = vcmp.gt.s32.totalorder %v138, %v191
        %vm196 = vcmp.eq.s32.totalorder %v138, %v191
        %vm197 = vcmp.lt.s32.totalorder %v170, %v192
        %vm198 = vmand %vm196, %vm197
        %vm199 = vmor %vm195, %vm198
        %v200 = vsel %vm199, %v138, %v191
        %v201 = vsel %vm199, %v170, %v192
        %202 = xla_tuple %v200, %v201
        %203 = xla_tuple %v139, %v171
        %vm204 = vcmp.gt.s32.totalorder %v139, %v200
        %vm205 = vcmp.eq.s32.totalorder %v139, %v200
        %vm206 = vcmp.lt.s32.totalorder %v171, %v201
        %vm207 = vmand %vm205, %vm206
        %vm208 = vmor %vm204, %vm207
        %v209 = vsel %vm208, %v139, %v200
        %v210 = vsel %vm208, %v171, %v201
        %211 = xla_tuple %v209, %v210
        %212 = xla_tuple %v140, %v172
        %vm213 = vcmp.gt.s32.totalorder %v140, %v209
        %vm214 = vcmp.eq.s32.totalorder %v140, %v209
        %vm215 = vcmp.lt.s32.totalorder %v172, %v210
        %vm216 = vmand %vm214, %vm215
        %vm217 = vmor %vm213, %vm216
        %v218 = vsel %vm217, %v140, %v209
        %v219 = vsel %vm217, %v172, %v210
        %220 = xla_tuple %v218, %v219
        %221 = xla_tuple %v141, %v173
        %vm222 = vcmp.gt.s32.totalorder %v141, %v218
        %vm223 = vcmp.eq.s32.totalorder %v141, %v218
        %vm224 = vcmp.lt.s32.totalorder %v173, %v219
        %vm225 = vmand %vm223, %vm224
        %vm226 = vmor %vm222, %vm225
        %v227 = vsel %vm226, %v141, %v218
        %v228 = vsel %vm226, %v173, %v219
        %229 = xla_tuple %v227, %v228
        %230 = xla_tuple %v142, %v174
        %vm231 = vcmp.gt.s32.totalorder %v142, %v227
        %vm232 = vcmp.eq.s32.totalorder %v142, %v227
        %vm233 = vcmp.lt.s32.totalorder %v174, %v228
        %vm234 = vmand %vm232, %vm233
        %vm235 = vmor %vm231, %vm234
        %v236 = vsel %vm235, %v142, %v227
        %v237 = vsel %vm235, %v174, %v228
        %238 = xla_tuple %v236, %v237
        %239 = xla_tuple %v143, %v175
        %vm240 = vcmp.gt.s32.totalorder %v143, %v236
        %vm241 = vcmp.eq.s32.totalorder %v143, %v236
        %vm242 = vcmp.lt.s32.totalorder %v175, %v237
        %vm243 = vmand %vm241, %vm242
        %vm244 = vmor %vm240, %vm243
        %v245 = vsel %vm244, %v143, %v236
        %v246 = vsel %vm244, %v175, %v237
        %247 = xla_tuple %v245, %v246
        %248 = xla_tuple %v144, %v176
        %vm249 = vcmp.gt.s32.totalorder %v144, %v245
        %vm250 = vcmp.eq.s32.totalorder %v144, %v245
        %vm251 = vcmp.lt.s32.totalorder %v176, %v246
        %vm252 = vmand %vm250, %vm251
        %vm253 = vmor %vm249, %vm252
        %v254 = vsel %vm253, %v144, %v245
        %v255 = vsel %vm253, %v176, %v246
        %256 = xla_tuple %v254, %v255
        %257 = xla_tuple %v145, %v177
        %vm258 = vcmp.gt.s32.totalorder %v145, %v254
        %vm259 = vcmp.eq.s32.totalorder %v145, %v254
        %vm260 = vcmp.lt.s32.totalorder %v177, %v255
        %vm261 = vmand %vm259, %vm260
        %vm262 = vmor %vm258, %vm261
        %v263 = vsel %vm262, %v145, %v254
        %v264 = vsel %vm262, %v177, %v255
        %265 = xla_tuple %v263, %v264
        %266 = xla_tuple %v146, %v178
        %vm267 = vcmp.gt.s32.totalorder %v146, %v263
        %vm268 = vcmp.eq.s32.totalorder %v146, %v263
        %vm269 = vcmp.lt.s32.totalorder %v178, %v264
        %vm270 = vmand %vm268, %vm269
        %vm271 = vmor %vm267, %vm270
        %v272 = vsel %vm271, %v146, %v263
        %v273 = vsel %vm271, %v178, %v264
        %274 = xla_tuple %v272, %v273
        %275 = xla_tuple %v147, %v179
        %vm276 = vcmp.gt.s32.totalorder %v147, %v272
        %vm277 = vcmp.eq.s32.totalorder %v147, %v272
        %vm278 = vcmp.lt.s32.totalorder %v179, %v273
        %vm279 = vmand %vm277, %vm278
        %vm280 = vmor %vm276, %vm279
        %v281 = vsel %vm280, %v147, %v272
        %v282 = vsel %vm280, %v179, %v273
        %283 = xla_tuple %v281, %v282
        %284 = xla_tuple %v148, %v180
        %vm285 = vcmp.gt.s32.totalorder %v148, %v281
        %vm286 = vcmp.eq.s32.totalorder %v148, %v281
        %vm287 = vcmp.lt.s32.totalorder %v180, %v282
        %vm288 = vmand %vm286, %vm287
        %vm289 = vmor %vm285, %vm288
        %v290 = vsel %vm289, %v148, %v281
        %v291 = vsel %vm289, %v180, %v282
        %292 = xla_tuple %v290, %v291
        %293 = xla_tuple %v149, %v181
        %vm294 = vcmp.gt.s32.totalorder %v149, %v290
        %vm295 = vcmp.eq.s32.totalorder %v149, %v290
        %vm296 = vcmp.lt.s32.totalorder %v181, %v291
        %vm297 = vmand %vm295, %vm296
        %vm298 = vmor %vm294, %vm297
        %v299 = vsel %vm298, %v149, %v290
        %v300 = vsel %vm298, %v181, %v291
        %301 = xla_tuple %v299, %v300
        %302 = xla_tuple %v150, %v182
        %vm303 = vcmp.gt.s32.totalorder %v150, %v299
        %vm304 = vcmp.eq.s32.totalorder %v150, %v299
        %vm305 = vcmp.lt.s32.totalorder %v182, %v300
        %vm306 = vmand %vm304, %vm305
        %vm307 = vmor %vm303, %vm306
        %v308 = vsel %vm307, %v150, %v299
        %v309 = vsel %vm307, %v182, %v300
        %310 = xla_tuple %v308, %v309
        %311 = xla_tuple %v151, %v183
        %vm312 = vcmp.gt.s32.totalorder %v151, %v308
        %vm313 = vcmp.eq.s32.totalorder %v151, %v308
        %vm314 = vcmp.lt.s32.totalorder %v183, %v309
        %vm315 = vmand %vm313, %vm314
        %vm316 = vmor %vm312, %vm315
        %v317 = vsel %vm316, %v151, %v308
        %v318 = vsel %vm316, %v183, %v309
        %319 = xla_tuple %v317, %v318
        %v320 = vrot.slane %v317, 1
        %v321 = vrot.slane %v318, 1
        %322 = xla_tuple %v320, %v321
        %vm323 = vcmp.gt.s32.totalorder %v320, %v317
        %vm324 = vcmp.eq.s32.totalorder %v320, %v317
        %vm325 = vcmp.lt.s32.totalorder %v321, %v318
        %vm326 = vmand %vm324, %vm325
        %vm327 = vmor %vm323, %vm326
        %v328 = vsel %vm327, %v320, %v317
        %v329 = vsel %vm327, %v321, %v318
        %330 = xla_tuple %v328, %v329
        %v331 = vrot.slane %v328, 1
        %v332 = vrot.slane %v329, 1
        %333 = xla_tuple %v331, %v332
        %vm334 = vcmp.gt.s32.totalorder %v331, %v328
        %vm335 = vcmp.eq.s32.totalorder %v331, %v328
        %vm336 = vcmp.lt.s32.totalorder %v332, %v329
        %vm337 = vmand %vm335, %vm336
        %vm338 = vmor %vm334, %vm337
        %v339 = vsel %vm338, %v331, %v328
        %v340 = vsel %vm338, %v332, %v329
        %341 = xla_tuple %v339, %v340
        %v342 = vrot.slane %v339, 1
        %v343 = vrot.slane %v340, 1
        %344 = xla_tuple %v342, %v343
        %vm345 = vcmp.gt.s32.totalorder %v342, %v339
        %vm346 = vcmp.eq.s32.totalorder %v342, %v339
        %vm347 = vcmp.lt.s32.totalorder %v343, %v340
        %vm348 = vmand %vm346, %vm347
        %vm349 = vmor %vm345, %vm348
        %v350 = vsel %vm349, %v342, %v339
        %v351 = vsel %vm349, %v343, %v340
        %352 = xla_tuple %v350, %v351
        %v353 = vrot.slane %v350, 1
        %v354 = vrot.slane %v351, 1
        %355 = xla_tuple %v353, %v354
        %vm356 = vcmp.gt.s32.totalorder %v353, %v350
        %vm357 = vcmp.eq.s32.totalorder %v353, %v350
        %vm358 = vcmp.lt.s32.totalorder %v354, %v351
        %vm359 = vmand %vm357, %vm358
        %vm360 = vmor %vm356, %vm359
        %v361 = vsel %vm360, %v353, %v350
        %v362 = vsel %vm360, %v354, %v351
        %363 = xla_tuple %v361, %v362
        %v364 = vrot.slane %v361, 1
        %v365 = vrot.slane %v362, 1
        %366 = xla_tuple %v364, %v365
        %vm367 = vcmp.gt.s32.totalorder %v364, %v361
        %vm368 = vcmp.eq.s32.totalorder %v364, %v361
        %vm369 = vcmp.lt.s32.totalorder %v365, %v362
        %vm370 = vmand %vm368, %vm369
        %vm371 = vmor %vm367, %vm370
        %v372 = vsel %vm371, %v364, %v361
        %v373 = vsel %vm371, %v365, %v362
        %374 = xla_tuple %v372, %v373
        %v375 = vrot.slane %v372, 1
        %v376 = vrot.slane %v373, 1
        %377 = xla_tuple %v375, %v376
        %vm378 = vcmp.gt.s32.totalorder %v375, %v372
        %vm379 = vcmp.eq.s32.totalorder %v375, %v372
        %vm380 = vcmp.lt.s32.totalorder %v376, %v373
        %vm381 = vmand %vm379, %vm380
        %vm382 = vmor %vm378, %vm381
        %v383 = vsel %vm382, %v375, %v372
        %v384 = vsel %vm382, %v376, %v373
        %385 = xla_tuple %v383, %v384
        %v386 = vrot.slane %v383, 1
        %v387 = vrot.slane %v384, 1
        %388 = xla_tuple %v386, %v387
        %vm389 = vcmp.gt.s32.totalorder %v386, %v383
        %vm390 = vcmp.eq.s32.totalorder %v386, %v383
        %vm391 = vcmp.lt.s32.totalorder %v387, %v384
        %vm392 = vmand %vm390, %vm391
        %vm393 = vmor %vm389, %vm392
        %v394 = vsel %vm393, %v386, %v383
        %v395 = vsel %vm393, %v387, %v384
        %396 = xla_tuple %v394, %v395
        %s397 = scalar_lea.vmem [#allocation13], %s79
        %398 = vst [vmem:[%s397] sm:$0x1] %v394
        %s399 = scalar_lea.vmem [#allocation15], %s79
        %400 = vst [vmem:[%s399] sm:$0x1] %v395
        %401 = xla_tuple %398, %400
        %402 = vxpose.xlu0.b32.start [1/16] %v395, 128
        %403 = vxpose.xlu0.b32.cont [2/16] 0.0, 128
        %404 = vxpose.xlu0.b32.cont [3/16] 0.0, 128
        %405 = vxpose.xlu0.b32.cont [4/16] 0.0, 128
        %406 = vxpose.xlu0.b32.cont [5/16] 0.0, 128
        %407 = vxpose.xlu0.b32.cont [6/16] 0.0, 128
        %408 = vxpose.xlu0.b32.cont [7/16] 0.0, 128
        %409 = vxpose.xlu0.b32.cont [8/16] 0.0, 128
        %410 = vxpose.xlu0.b32.cont [9/16] 0.0, 128
        %411 = vxpose.xlu0.b32.cont [10/16] 0.0, 128
        %412 = vxpose.xlu0.b32.cont [11/16] 0.0, 128
        %413 = vxpose.xlu0.b32.cont [12/16] 0.0, 128
        %414 = vxpose.xlu0.b32.cont [13/16] 0.0, 128
        %415 = vxpose.xlu0.b32.cont [14/16] 0.0, 128
        %416 = vxpose.xlu0.b32.cont [15/16] 0.0, 128
        %417 = vxpose.xlu0.b32.end [16/16] 0.0, 128
        %v418 = vpop.trf.xlu0
        %v419 = vpop.trf.xlu0
        %v420 = vpop.trf.xlu0
        %v421 = vpop.trf.xlu0
        %v422 = vpop.trf.xlu0
        %v423 = vpop.trf.xlu0
        %v424 = vpop.trf.xlu0
        %v425 = vpop.trf.xlu0
        %v426 = vpop.trf.xlu0
        %v427 = vpop.trf.xlu0
        %v428 = vpop.trf.xlu0
        %v429 = vpop.trf.xlu0
        %v430 = vpop.trf.xlu0
        %v431 = vpop.trf.xlu0
        %v432 = vpop.trf.xlu0
        %v433 = vpop.trf.xlu0
        %s434 = vtos %v418
        %s435 = sshrl.u32 %s434, 9
        %p436 = scmp.lt.s32.totalorder %s434, 0
        %s437 = ssub.s32 0, %s434
        %s438 = scalar_select %p436, %s437, %s434
        %s439 = sand.u32 %s438, 511
        %s440 = ssub.s32 0, %s439
        %s441 = scalar_select %p436, %s440, %s439
        %s442 = sshrl.u32 %s441, 7
        %s443 = smul.u32 %s442, 256
        %s444 = sand.u32 %s441, 127
        %s445 = sadd.s32 %s443, %s444
        %v446 = vlaneseq
        %v447 = vstv %s445
        %vm449 = vcmp.eq.s32.totalorder %v446, %v447
        %s450 = smul.addr %s435, 8
        %s451 = scalar_lea.vmem [#allocation16], %s450
        %452 = vst.msk [vmem:[%s451] sm:$0xff] %vm449, 2147483648
        %s453 = smul.addr %s435, 8
        %s454 = scalar_lea.vmem [#allocation17], %s453
        %455 = vst.msk [vmem:[%s454] sm:$0xff] %vm449, 2147483647
        %456 = xla_tuple %452, %455
        %v457 = vrot.slane %v418, 1
        %s458 = vtos %v457
        %s459 = sshrl.u32 %s458, 9
        %p460 = scmp.lt.s32.totalorder %s458, 0
        %s461 = ssub.s32 0, %s458
        %s462 = scalar_select %p460, %s461, %s458
        %s463 = sand.u32 %s462, 511
        %s464 = ssub.s32 0, %s463
        %s465 = scalar_select %p460, %s464, %s463
        %s466 = sshrl.u32 %s465, 7
        %s467 = smul.u32 %s466, 256
        %s468 = sand.u32 %s465, 127
        %s469 = sadd.s32 %s467, %s468
        %v470 = vlaneseq
        %v471 = vstv %s469
        %v472 = vadd.s32 %v471, 128
        %vm473 = vcmp.eq.s32.totalorder %v470, %v472
        %s474 = smul.addr %s459, 8
        %s475 = scalar_lea.vmem [#allocation16], %s474
        %476 = vst.msk [vmem:[%s475] sm:$0xff] %vm473, 2147483648
        %s477 = smul.addr %s459, 8
        %s478 = scalar_lea.vmem [#allocation17], %s477
        %479 = vst.msk [vmem:[%s478] sm:$0xff] %vm473, 2147483647
        %480 = xla_tuple %476, %479
        %v481 = vrot.slane %v457, 1
      $region45: #{custom-call} parent=2 // loop_footer
        %s83 = sadd.s32 1, %s79
      $region46: #{custom-call} parent=2 // loop_footer_branch
        %78 = sbr.rel target = $region42
      $region47: #{custom-call} parent=2 // loop_exit
        _
      %s482 = scalar_lea.vmem [#allocation13], 7
      %v483 = vld [vmem:[%s482] ss:$-1 sm:$0xff]
      %s484 = scalar_lea.vmem [#allocation13], 7
      %v485 = vld [vmem:[%s484] ss:$-1 sm:$0xff]
      %486 = vst [vmem:[#allocation13] sm:$0xff] %v485
      %487 = vst [vmem:[#allocation13] sm:$0xff] %v483
      %s488 = scalar_lea.vmem [#allocation15], 7
      %v489 = vld [vmem:[%s488] ss:$-1 sm:$0xff]
      %s490 = scalar_lea.vmem [#allocation15], 7
      %v491 = vld [vmem:[%s490] ss:$-1 sm:$0xff]
      %492 = vst [vmem:[#allocation15] sm:$0xff] %v491
      %493 = vst [vmem:[#allocation15] sm:$0xff] %v489
      %494 = xla_tuple %487, %493
      %v495 = vld [vmem:[#allocation12] sm:$0xff]
      %v496 = vld [vmem:[#allocation14] sm:$0xff]
      %497 = xla_tuple %v495, %v496
      %v498 = vld [vmem:[#allocation13] sm:$0xff]
      %v499 = vld [vmem:[#allocation15] sm:$0xff]
      %500 = xla_tuple %v498, %v499
      %vm501 = vcmp.gt.s32.totalorder %v495, %v498
      %vm502 = vcmp.eq.s32.totalorder %v495, %v498
      %vm503 = vcmp.lt.s32.totalorder %v496, %v499
      %vm504 = vmand %vm502, %vm503
      %vm505 = vmor %vm501, %vm504
      %v506 = vsel %vm505, %v495, %v498
      %507 = vst [vmem:[#allocation12] sm:$0xff] %v506
      %v508 = vsel %vm505, %v498, %v495
      %509 = vst [vmem:[#allocation13] sm:$0xff] %v508
      %v510 = vsel %vm505, %v496, %v499
      %511 = vst [vmem:[#allocation14] sm:$0xff] %v510
      %v512 = vsel %vm505, %v499, %v496
      %513 = vst [vmem:[#allocation15] sm:$0xff] %v512
      %514 = xla_tuple %509, %513
      %515 = xla_tuple [#allocation12], [#allocation14]
      %v516 = vld [vmem:[#allocation12] sm:$0xff]
      %v517 = vld [vmem:[#allocation14] sm:$0xff]
      %518 = xla_tuple %v516, %v517
      %v520 = vunpack.c.l.s4 839939668
      %v521 = vunpack.c.0.s8 %v520
      %v522 = vlaneseq
      %v523 = vshrl.u32 %v522, 7
      %v524 = vsub.s32 %v521, %v523
      %v525 = vrot.slane %v516, %v524
      %v527 = vunpack.c.l.s4 839939668
      %v528 = vunpack.c.0.s8 %v527
      %v529 = vlaneseq
      %v530 = vshrl.u32 %v529, 7
      %v531 = vsub.s32 %v528, %v530
      %v532 = vrot.slane %v517, %v531
      %533 = xla_tuple %v525, %v532
      %vm534 = vcmp.gt.s32.totalorder %v516, %v525
      %vm535 = vcmp.eq.s32.totalorder %v516, %v525
      %vm536 = vcmp.lt.s32.totalorder %v517, %v532
      %vm537 = vmand %vm535, %vm536
      %vm538 = vmor %vm534, %vm537
      %v539 = vlaneseq
      %v540 = vshrl.u32 %v539, 7
      %v541 = vand.u32 %v540, 4
      %vm542 = vcmp.ne.s32.totalorder %v541, 0
      %vm543 = vmxor %vm538, %vm542
      %v544 = vsel %vm543, %v516, %v525
      %v545 = vsel %vm543, %v517, %v532
      %546 = xla_tuple %v544, %v545
      %v548 = vunpack.c.l.s4 1417023538
      %v549 = vunpack.c.0.s8 %v548
      %v550 = vlaneseq
      %v551 = vshrl.u32 %v550, 7
      %v552 = vsub.s32 %v549, %v551
      %v553 = vrot.slane %v544, %v552
      %v555 = vunpack.c.l.s4 1417023538
      %v556 = vunpack.c.0.s8 %v555
      %v557 = vlaneseq
      %v558 = vshrl.u32 %v557, 7
      %v559 = vsub.s32 %v556, %v558
      %v560 = vrot.slane %v545, %v559
      %561 = xla_tuple %v553, %v560
      %vm562 = vcmp.gt.s32.totalorder %v544, %v553
      %vm563 = vcmp.eq.s32.totalorder %v544, %v553
      %vm564 = vcmp.lt.s32.totalorder %v545, %v560
      %vm565 = vmand %vm563, %vm564
      %vm566 = vmor %vm562, %vm565
      %v567 = vlaneseq
      %v568 = vshrl.u32 %v567, 7
      %v569 = vand.u32 %v568, 2
      %vm570 = vcmp.ne.s32.totalorder %v569, 0
      %vm571 = vmxor %vm566, %vm570
      %v572 = vsel %vm571, %v544, %v553
      %v573 = vsel %vm571, %v545, %v560
      %574 = xla_tuple %v572, %v573
      %v576 = vunpack.c.l.s4 1732584193
      %v577 = vunpack.c.0.s8 %v576
      %v578 = vlaneseq
      %v579 = vshrl.u32 %v578, 7
      %v580 = vsub.s32 %v577, %v579
      %v581 = vrot.slane %v572, %v580
      %v583 = vunpack.c.l.s4 1732584193
      %v584 = vunpack.c.0.s8 %v583
      %v585 = vlaneseq
      %v586 = vshrl.u32 %v585, 7
      %v587 = vsub.s32 %v584, %v586
      %v588 = vrot.slane %v573, %v587
      %589 = xla_tuple %v581, %v588
      %vm590 = vcmp.gt.s32.totalorder %v572, %v581
      %vm591 = vcmp.eq.s32.totalorder %v572, %v581
      %vm592 = vcmp.lt.s32.totalorder %v573, %v588
      %vm593 = vmand %vm591, %vm592
      %vm594 = vmor %vm590, %vm593
      %v595 = vlaneseq
      %v596 = vshrl.u32 %v595, 7
      %v597 = vand.u32 %v596, 1
      %vm598 = vcmp.ne.s32.totalorder %v597, 0
      %vm599 = vmxor %vm594, %vm598
      %v600 = vsel %vm599, %v572, %v581
      %v601 = vsel %vm599, %v573, %v588
      %602 = xla_tuple %v600, %v601
      %603 = vst [vmem:[#allocation12] sm:$0xff] %v600
      %604 = vst [vmem:[#allocation14] sm:$0xff] %v601
      %605 = xla_tuple %603, %604
      %v606 = vld [vmem:[#allocation12] sm:$0xff]
      %v607 = vld [vmem:[#allocation14] sm:$0xff]
      %608 = xla_tuple %v606, %v607
      %v610 = vunpack.c.l.s4 839939668
      %v611 = vunpack.c.0.s8 %v610
      %v612 = vlaneseq
      %v613 = vshrl.u32 %v612, 7
      %v614 = vsub.s32 %v611, %v613
      %v615 = vrot.slane %v606, %v614
      %v617 = vunpack.c.l.s4 839939668
      %v618 = vunpack.c.0.s8 %v617
      %v619 = vlaneseq
      %v620 = vshrl.u32 %v619, 7
      %v621 = vsub.s32 %v618, %v620
      %v622 = vrot.slane %v607, %v621
      %623 = xla_tuple %v615, %v622
      %vm624 = vcmp.gt.s32.totalorder %v606, %v615
      %vm625 = vcmp.eq.s32.totalorder %v606, %v615
      %vm626 = vcmp.lt.s32.totalorder %v607, %v622
      %vm627 = vmand %vm625, %vm626
      %vm628 = vmor %vm624, %vm627
      %v629 = vlaneseq
      %v630 = vshrl.u32 %v629, 7
      %v631 = vand.u32 %v630, 4
      %vm632 = vcmp.ne.s32.totalorder %v631, 0
      %vm633 = vmxor %vm628, %vm632
      %v634 = vsel %vm633, %v606, %v615
      %v635 = vsel %vm633, %v607, %v622
      %636 = xla_tuple %v634, %v635
      %v638 = vunpack.c.l.s4 1417023538
      %v639 = vunpack.c.0.s8 %v638
      %v640 = vlaneseq
      %v641 = vshrl.u32 %v640, 7
      %v642 = vsub.s32 %v639, %v641
      %v643 = vrot.slane %v634, %v642
      %v645 = vunpack.c.l.s4 1417023538
      %v646 = vunpack.c.0.s8 %v645
      %v647 = vlaneseq
      %v648 = vshrl.u32 %v647, 7
      %v649 = vsub.s32 %v646, %v648
      %v650 = vrot.slane %v635, %v649
      %651 = xla_tuple %v643, %v650
      %vm652 = vcmp.gt.s32.totalorder %v634, %v643
      %vm653 = vcmp.eq.s32.totalorder %v634, %v643
      %vm654 = vcmp.lt.s32.totalorder %v635, %v650
      %vm655 = vmand %vm653, %vm654
      %vm656 = vmor %vm652, %vm655
      %v657 = vlaneseq
      %v658 = vshrl.u32 %v657, 7
      %v659 = vand.u32 %v658, 2
      %vm660 = vcmp.ne.s32.totalorder %v659, 0
      %vm661 = vmxor %vm656, %vm660
      %v662 = vsel %vm661, %v634, %v643
      %v663 = vsel %vm661, %v635, %v650
      %664 = xla_tuple %v662, %v663
      %v666 = vunpack.c.l.s4 1732584193
      %v667 = vunpack.c.0.s8 %v666
      %v668 = vlaneseq
      %v669 = vshrl.u32 %v668, 7
      %v670 = vsub.s32 %v667, %v669
      %v671 = vrot.slane %v662, %v670
      %v673 = vunpack.c.l.s4 1732584193
      %v674 = vunpack.c.0.s8 %v673
      %v675 = vlaneseq
      %v676 = vshrl.u32 %v675, 7
      %v677 = vsub.s32 %v674, %v676
      %v678 = vrot.slane %v663, %v677
      %679 = xla_tuple %v671, %v678
      %vm680 = vcmp.gt.s32.totalorder %v662, %v671
      %vm681 = vcmp.eq.s32.totalorder %v662, %v671
      %vm682 = vcmp.lt.s32.totalorder %v663, %v678
      %vm683 = vmand %vm681, %vm682
      %vm684 = vmor %vm680, %vm683
      %v685 = vlaneseq
      %v686 = vshrl.u32 %v685, 7
      %v687 = vand.u32 %v686, 1
      %vm688 = vcmp.ne.s32.totalorder %v687, 0
      %vm689 = vmxor %vm684, %vm688
      %v690 = vsel %vm689, %v662, %v671
      %v691 = vsel %vm689, %v663, %v678
      %692 = xla_tuple %v690, %v691
      %693 = vst [vmem:[#allocation12] sm:$0xff] %v690
      %694 = vst [vmem:[#allocation14] sm:$0xff] %v691
      %695 = xla_tuple %693, %694
      %696 = xla_tuple [#allocation13], [#allocation15]
      %v697 = vld [vmem:[#allocation13] sm:$0xff]
      %v698 = vld [vmem:[#allocation15] sm:$0xff]
      %699 = xla_tuple %v697, %v698
      %v701 = vunpack.c.l.s4 839939668
      %v702 = vunpack.c.0.s8 %v701
      %v703 = vlaneseq
      %v704 = vshrl.u32 %v703, 7
      %v705 = vsub.s32 %v702, %v704
      %v706 = vrot.slane %v697, %v705
      %v708 = vunpack.c.l.s4 839939668
      %v709 = vunpack.c.0.s8 %v708
      %v710 = vlaneseq
      %v711 = vshrl.u32 %v710, 7
      %v712 = vsub.s32 %v709, %v711
      %v713 = vrot.slane %v698, %v712
      %714 = xla_tuple %v706, %v713
      %vm715 = vcmp.gt.s32.totalorder %v697, %v706
      %vm716 = vcmp.eq.s32.totalorder %v697, %v706
      %vm717 = vcmp.lt.s32.totalorder %v698, %v713
      %vm718 = vmand %vm716, %vm717
      %vm719 = vmor %vm715, %vm718
      %v720 = vlaneseq
      %v721 = vshrl.u32 %v720, 7
      %v722 = vand.u32 %v721, 4
      %vm723 = vcmp.ne.s32.totalorder %v722, 0
      %vm724 = vmxor %vm719, %vm723
      %v725 = vsel %vm724, %v697, %v706
      %v726 = vsel %vm724, %v698, %v713
      %727 = xla_tuple %v725, %v726
      %v729 = vunpack.c.l.s4 1417023538
      %v730 = vunpack.c.0.s8 %v729
      %v731 = vlaneseq
      %v732 = vshrl.u32 %v731, 7
      %v733 = vsub.s32 %v730, %v732
      %v734 = vrot.slane %v725, %v733
      %v736 = vunpack.c.l.s4 1417023538
      %v737 = vunpack.c.0.s8 %v736
      %v738 = vlaneseq
      %v739 = vshrl.u32 %v738, 7
      %v740 = vsub.s32 %v737, %v739
      %v741 = vrot.slane %v726, %v740
      %742 = xla_tuple %v734, %v741
      %vm743 = vcmp.gt.s32.totalorder %v725, %v734
      %vm744 = vcmp.eq.s32.totalorder %v725, %v734
      %vm745 = vcmp.lt.s32.totalorder %v726, %v741
      %vm746 = vmand %vm744, %vm745
      %vm747 = vmor %vm743, %vm746
      %v748 = vlaneseq
      %v749 = vshrl.u32 %v748, 7
      %v750 = vand.u32 %v749, 2
      %vm751 = vcmp.ne.s32.totalorder %v750, 0
      %vm752 = vmxor %vm747, %vm751
      %v753 = vsel %vm752, %v725, %v734
      %v754 = vsel %vm752, %v726, %v741
      %755 = xla_tuple %v753, %v754
      %v757 = vunpack.c.l.s4 1732584193
      %v758 = vunpack.c.0.s8 %v757
      %v759 = vlaneseq
      %v760 = vshrl.u32 %v759, 7
      %v761 = vsub.s32 %v758, %v760
      %v762 = vrot.slane %v753, %v761
      %v764 = vunpack.c.l.s4 1732584193
      %v765 = vunpack.c.0.s8 %v764
      %v766 = vlaneseq
      %v767 = vshrl.u32 %v766, 7
      %v768 = vsub.s32 %v765, %v767
      %v769 = vrot.slane %v754, %v768
      %770 = xla_tuple %v762, %v769
      %vm771 = vcmp.gt.s32.totalorder %v753, %v762
      %vm772 = vcmp.eq.s32.totalorder %v753, %v762
      %vm773 = vcmp.lt.s32.totalorder %v754, %v769
      %vm774 = vmand %vm772, %vm773
      %vm775 = vmor %vm771, %vm774
      %v776 = vlaneseq
      %v777 = vshrl.u32 %v776, 7
      %v778 = vand.u32 %v777, 1
      %vm779 = vcmp.ne.s32.totalorder %v778, 0
      %vm780 = vmxor %vm775, %vm779
      %v781 = vsel %vm780, %v753, %v762
      %v782 = vsel %vm780, %v754, %v769
      %783 = xla_tuple %v781, %v782
      %784 = vst [vmem:[#allocation13] sm:$0xff] %v781
      %785 = vst [vmem:[#allocation15] sm:$0xff] %v782
      %786 = xla_tuple %784, %785
      %v787 = vld [vmem:[#allocation13] sm:$0xff]
      %v788 = vld [vmem:[#allocation15] sm:$0xff]
      %789 = xla_tuple %v787, %v788
      %v791 = vunpack.c.l.s4 839939668
      %v792 = vunpack.c.0.s8 %v791
      %v793 = vlaneseq
      %v794 = vshrl.u32 %v793, 7
      %v795 = vsub.s32 %v792, %v794
      %v796 = vrot.slane %v787, %v795
      %v798 = vunpack.c.l.s4 839939668
      %v799 = vunpack.c.0.s8 %v798
      %v800 = vlaneseq
      %v801 = vshrl.u32 %v800, 7
      %v802 = vsub.s32 %v799, %v801
      %v803 = vrot.slane %v788, %v802
      %804 = xla_tuple %v796, %v803
      %vm805 = vcmp.gt.s32.totalorder %v787, %v796
      %vm806 = vcmp.eq.s32.totalorder %v787, %v796
      %vm807 = vcmp.lt.s32.totalorder %v788, %v803
      %vm808 = vmand %vm806, %vm807
      %vm809 = vmor %vm805, %vm808
      %v810 = vlaneseq
      %v811 = vshrl.u32 %v810, 7
      %v812 = vand.u32 %v811, 4
      %vm813 = vcmp.ne.s32.totalorder %v812, 0
      %vm814 = vmxor %vm809, %vm813
      %v815 = vsel %vm814, %v787, %v796
      %v816 = vsel %vm814, %v788, %v803
      %817 = xla_tuple %v815, %v816
      %v819 = vunpack.c.l.s4 1417023538
      %v820 = vunpack.c.0.s8 %v819
      %v821 = vlaneseq
      %v822 = vshrl.u32 %v821, 7
      %v823 = vsub.s32 %v820, %v822
      %v824 = vrot.slane %v815, %v823
      %v826 = vunpack.c.l.s4 1417023538
      %v827 = vunpack.c.0.s8 %v826
      %v828 = vlaneseq
      %v829 = vshrl.u32 %v828, 7
      %v830 = vsub.s32 %v827, %v829
      %v831 = vrot.slane %v816, %v830
      %832 = xla_tuple %v824, %v831
      %vm833 = vcmp.gt.s32.totalorder %v815, %v824
      %vm834 = vcmp.eq.s32.totalorder %v815, %v824
      %vm835 = vcmp.lt.s32.totalorder %v816, %v831
      %vm836 = vmand %vm834, %vm835
      %vm837 = vmor %vm833, %vm836
      %v838 = vlaneseq
      %v839 = vshrl.u32 %v838, 7
      %v840 = vand.u32 %v839, 2
      %vm841 = vcmp.ne.s32.totalorder %v840, 0
      %vm842 = vmxor %vm837, %vm841
      %v843 = vsel %vm842, %v815, %v824
      %v844 = vsel %vm842, %v816, %v831
      %845 = xla_tuple %v843, %v844
      %v847 = vunpack.c.l.s4 1732584193
      %v848 = vunpack.c.0.s8 %v847
      %v849 = vlaneseq
      %v850 = vshrl.u32 %v849, 7
      %v851 = vsub.s32 %v848, %v850
      %v852 = vrot.slane %v843, %v851
      %v854 = vunpack.c.l.s4 1732584193
      %v855 = vunpack.c.0.s8 %v854
      %v856 = vlaneseq
      %v857 = vshrl.u32 %v856, 7
      %v858 = vsub.s32 %v855, %v857
      %v859 = vrot.slane %v844, %v858
      %860 = xla_tuple %v852, %v859
      %vm861 = vcmp.gt.s32.totalorder %v843, %v852
      %vm862 = vcmp.eq.s32.totalorder %v843, %v852
      %vm863 = vcmp.lt.s32.totalorder %v844, %v859
      %vm864 = vmand %vm862, %vm863
      %vm865 = vmor %vm861, %vm864
      %v866 = vlaneseq
      %v867 = vshrl.u32 %v866, 7
      %v868 = vand.u32 %v867, 1
      %vm869 = vcmp.ne.s32.totalorder %v868, 0
      %vm870 = vmxor %vm865, %vm869
      %v871 = vsel %vm870, %v843, %v852
      %v872 = vsel %vm870, %v844, %v859
      %873 = xla_tuple %v871, %v872
      %874 = vst [vmem:[#allocation13] sm:$0xff] %v871
      %875 = vst [vmem:[#allocation15] sm:$0xff] %v872
      %876 = xla_tuple %874, %875
    %v877 = vld [vmem:[#allocation12] sm:$0xff]
    %vm878 = vcmp.lt.s32.totalorder %v877, 0
    %v879 = vsub.s32 2147483647, %v877
    %v880 = vsel %vm878, %v879, %v877
    %881 = vst [vmem:[#allocation12] sm:$0xff] %v880
    %v882 = vld [vmem:[#allocation12] sm:$0xff]
    %883 = vxpose.xlu0.b32.start.end [1/1] (short) %v882, 128
    %v884 = vpop.trf.xlu0
    %v885 = vpop.trf.xlu0
    %v886 = vpop.trf.xlu0
    %v887 = vpop.trf.xlu0
    %v888 = vpop.trf.xlu0
    %v889 = vpop.trf.xlu0
    %v890 = vpop.trf.xlu0
    %v891 = vpop.trf.xlu0
    %v892 = vpop.trf.xlu0
    %v893 = vpop.trf.xlu0
    %v894 = vpop.trf.xlu0
    %v895 = vpop.trf.xlu0
    %v896 = vpop.trf.xlu0
    %v897 = vpop.trf.xlu0
    %v898 = vpop.trf.xlu0
    %v899 = vpop.trf.xlu0
    %900 = vst [vmem:[#allocation7] sm:$0xff] %v884
    %v901 = vld [vmem:[#allocation14] sm:$0xff]
    %902 = vxpose.xlu0.b32.start.end [1/1] (short) %v901, 128
    %v903 = vpop.trf.xlu0
    %v904 = vpop.trf.xlu0
    %v905 = vpop.trf.xlu0
    %v906 = vpop.trf.xlu0
    %v907 = vpop.trf.xlu0
    %v908 = vpop.trf.xlu0
    %v909 = vpop.trf.xlu0
    %v910 = vpop.trf.xlu0
    %v911 = vpop.trf.xlu0
    %v912 = vpop.trf.xlu0
    %v913 = vpop.trf.xlu0
    %v914 = vpop.trf.xlu0
    %v915 = vpop.trf.xlu0
    %v916 = vpop.trf.xlu0
    %v917 = vpop.trf.xlu0
    %v918 = vpop.trf.xlu0
    %919 = vst [vmem:[#allocation10] sm:$0xff] %v903
    %s921 = sshllo.u32 0, 2
    %v923 = vld [vmem:[#allocation7] sm:%s921]
    %s924 = sshllo.u32 0, 2
    %925 = vst [vmem:[#allocation8] sm:%s924] %v923
    %s927 = sshllo.u32 0, 2
    %v929 = vld [vmem:[#allocation10] sm:%s927]
    %s930 = sshllo.u32 0, 2
    %931 = vst [vmem:[#allocation11] sm:%s930] %v929
    %s933 = ssub.s32 32, 32
    %934 = vsyncadd [#allocation9], %s933
    %s936 = sshll.u32 [#allocation8], 4
    %s937 = int_to_ptr.vmem [resolvable:$true] %s936
    %939 = dma.vmem_to_hbm [thread:$0]  %s937, 32, %s1, [#allocation9]
    // Predicated region
    $region48: #{custom-call} parent=1 // pred_check
      _
    $region49: #{custom-call} parent=1 // pred_check_branch
      %941 = sbr.rel (0) target = $region51
    $region50: #{custom-call} parent=1 // pred_region
      // Predicated region
      $region52: #{custom-call} parent=50 // pred_check
        _
      $region53: #{custom-call} parent=50 // pred_check_branch
        %943 = sbr.rel target = $region55
      $region54: #{custom-call} parent=50 // pred_region
        // Predicated region
        $region67: #{custom-call} parent=54 // pred_check
          _
        $region68: #{custom-call} parent=54 // pred_check_branch
          %958 = sbr.rel (0) target = $region70
        $region69: #{custom-call} parent=54 // pred_region
          loop: start=0, step=1, limit=1
          $region71: #{custom-call} parent=69 // loop_pre_header
            _
          $region72: #{custom-call} parent=69 // loop_header
            %s961 = sphi 0, %s965
            %p962 = scmp.ge.s32.totalorder %s961, 1
            %s966 = sphi [#allocation11], [#allocation11]
            %s967 = sphi %s2, %s2
          $region73: #{custom-call} parent=69 // loop_header_branch
            %964 = sbr.rel (%p962) target = $region77
          $region74: #{custom-call} parent=69 // loop_body
            %v968 = vld [vmem:[%s966] sm:$0x3]
            %969 = vst [vmem:[%s967] sm:$0x3] %v968
          $region75: #{custom-call} parent=69 // loop_footer
            %s965 = sadd.s32 1, %s961
          $region76: #{custom-call} parent=69 // loop_footer_branch
            %960 = sbr.rel target = $region72
          $region77: #{custom-call} parent=69 // loop_exit
            _
        $region70: #{custom-call} parent=54 // pred_fallthru
          _
      $region55: #{custom-call} parent=50 // pred_fallthru
        _
      // Predicated region
      $region56: #{custom-call} parent=50 // pred_check
        _
      $region57: #{custom-call} parent=50 // pred_check_branch
        %945 = sbr.rel (0) target = $region59
      $region58: #{custom-call} parent=50 // pred_region
        loop: start=0, step=1, limit=1
        $region60: #{custom-call} parent=58 // loop_pre_header
          _
        $region61: #{custom-call} parent=58 // loop_header
          %s948 = sphi 0, %s952
          %p949 = scmp.ge.s32.totalorder %s948, 1
          %s953 = sphi [#allocation11], [#allocation11]
          %s954 = sphi %s2, %s2
        $region62: #{custom-call} parent=58 // loop_header_branch
          %951 = sbr.rel (%p949) target = $region66
        $region63: #{custom-call} parent=58 // loop_body
          %v955 = vld [vmem:[%s953] sm:$0x3]
          %956 = vst [vmem:[%s954] sm:$0x3] %v955
        $region64: #{custom-call} parent=58 // loop_footer
          %s952 = sadd.s32 1, %s948
        $region65: #{custom-call} parent=58 // loop_footer_branch
          %947 = sbr.rel target = $region61
        $region66: #{custom-call} parent=58 // loop_exit
          _
      $region59: #{custom-call} parent=50 // pred_fallthru
        _
    $region51: #{custom-call} parent=1 // pred_fallthru
      _
    %970 = vnop
    %971 = dma.done [#allocation9], 32
    %972 = vsyncpa [#allocation9], 1

// kernel: retrieval_database_forward.2
$region0: #{retrieval_database_forward.2}
  #allocation0 [shape = 'u32[]', space=smem, size = 0x4, offset = 0x4, fixed_abs, tag = 'smem constant byte address 0x4 - core index']
  #allocation1 [shape = 'u32[144,128]{1,0:T(1,128)}', space=vmem, size = 0x12000, scoped, tag = 'internal scratch']
  %s0 = inlined_call_operand.hbm [shape: f32[128,128], index: 0, kind: input, shape index: {}]
  %s1 = inlined_call_operand.vmem [shape: f32[1,128], index: 1, kind: input, shape index: {}]
  %s2 = inlined_call_operand.vmem [shape: f32[1,128], index: 2, kind: input, shape index: {}]
  %s3 = inlined_call_operand.vmem [shape: f32[2,128], index: 3, kind: input, shape index: {}]
  %s4 = inlined_call_operand.vmem [shape: f32[2,1], index: 4, kind: input, shape index: {}]
  %s5 = inlined_call_operand.vmem [shape: f32[2,128], index: 5, kind: output, shape index: {}]
  %s6 = sld [smem:[#allocation0]]
  $region34: #{retrieval_database_forward.2} parent=0
    _
  %s8 = ssub.s32 1, %s6
  %s9 = scalar_select 0, %s8, %s6
  $region1: #{retrieval_database_forward.2} parent=0
    #allocation2 [shape = 'u8[65536]{0}', space=vmem, size = 0x10000, scoped, tag = 'input window, operand 0, single buffered']
    #allocation3 [shape = 's32[1]{0}', space=sflag, size = 0x4, scoped, tag = 'scoped memory for retrieval_database_forward.2']
    %10 = vsyncpa [#allocation3], 0
    // Predicated region
    $region2: #{retrieval_database_forward.2} parent=1 // pred_check
      _
    $region3: #{retrieval_database_forward.2} parent=1 // pred_check_branch
      %12 = sbr.rel (0) target = $region5
    $region4: #{retrieval_database_forward.2} parent=1 // pred_region
      %s14 = ssub.s32 2048, 2048
      %15 = vsyncadd [#allocation3], %s14
      %s16 = sshll.u32 [#allocation2], 4
      %s17 = int_to_ptr.vmem [resolvable:$true] %s16
      %22 = dma.hbm_to_vmem [thread:$0]  %s0, 2048, %s17, [#allocation3], 128, 128, 8
    $region5: #{retrieval_database_forward.2} parent=1 // pred_fallthru
      _
    // Predicated region
    $region6: #{retrieval_database_forward.2} parent=1 // pred_check
      _
    $region7: #{retrieval_database_forward.2} parent=1 // pred_check_branch
      %24 = sbr.rel (0) target = $region9
    $region8: #{retrieval_database_forward.2} parent=1 // pred_region
      _
    $region9: #{retrieval_database_forward.2} parent=1 // pred_fallthru
      _
    // Predicated region
    $region10: #{retrieval_database_forward.2} parent=1 // pred_check
      _
    $region11: #{retrieval_database_forward.2} parent=1 // pred_check_branch
      %26 = sbr.rel (0) target = $region13
    $region12: #{retrieval_database_forward.2} parent=1 // pred_region
      _
    $region13: #{retrieval_database_forward.2} parent=1 // pred_fallthru
      _
    // Predicated region
    $region14: #{retrieval_database_forward.2} parent=1 // pred_check
      _
    $region15: #{retrieval_database_forward.2} parent=1 // pred_check_branch
      %28 = sbr.rel (0) target = $region17
    $region16: #{retrieval_database_forward.2} parent=1 // pred_region
      _
    $region17: #{retrieval_database_forward.2} parent=1 // pred_fallthru
      _
    // Predicated region
    $region18: #{retrieval_database_forward.2} parent=1 // pred_check
      _
    $region19: #{retrieval_database_forward.2} parent=1 // pred_check_branch
      %30 = sbr.rel (0) target = $region21
    $region20: #{retrieval_database_forward.2} parent=1 // pred_region
      _
    $region21: #{retrieval_database_forward.2} parent=1 // pred_fallthru
      _
    // Predicated region
    $region22: #{retrieval_database_forward.2} parent=1 // pred_check
      _
    $region23: #{retrieval_database_forward.2} parent=1 // pred_check_branch
      %32 = sbr.rel (0) target = $region25
    $region24: #{retrieval_database_forward.2} parent=1 // pred_region
      %33 = dma.done [#allocation3], 2048
    $region25: #{retrieval_database_forward.2} parent=1 // pred_fallthru
      _
    %v34 = vld [vmem:[#allocation2] sm:$0xff]
    %v35 = vld [vmem:[#allocation2 + $0x8] sm:$0xff]
    %v36 = vld [vmem:[#allocation2 + $0x10] sm:$0xff]
    %v37 = vld [vmem:[#allocation2 + $0x18] sm:$0xff]
    %v38 = vld [vmem:[#allocation2 + $0x20] sm:$0xff]
    %v39 = vld [vmem:[#allocation2 + $0x28] sm:$0xff]
    %v40 = vld [vmem:[#allocation2 + $0x30] sm:$0xff]
    %v41 = vld [vmem:[#allocation2 + $0x38] sm:$0xff]
    %v42 = vld [vmem:[#allocation2 + $0x40] sm:$0xff]
    %v43 = vld [vmem:[#allocation2 + $0x48] sm:$0xff]
    %v44 = vld [vmem:[#allocation2 + $0x50] sm:$0xff]
    %v45 = vld [vmem:[#allocation2 + $0x58] sm:$0xff]
    %v46 = vld [vmem:[#allocation2 + $0x60] sm:$0xff]
    %v47 = vld [vmem:[#allocation2 + $0x68] sm:$0xff]
    %v48 = vld [vmem:[#allocation2 + $0x70] sm:$0xff]
    %v49 = vld [vmem:[#allocation2 + $0x78] sm:$0xff]
    %v50 = vld [vmem:[%s3] sm:$0x3]
    %51 = vmatprep.subr.mxu0 0.0
    %52 = vmatpush1.msra.mxu0 %v34
    %53 = vmatprep.subr.mxu0 0.0
    %54 = vmatpush1.msra.mxu0 %v35
    %55 = vmatprep.subr.mxu0 0.0
    %56 = vmatpush1.msra.mxu0 %v36
    %57 = vmatprep.subr.mxu0 0.0
    %58 = vmatpush1.msra.mxu0 %v37
    %59 = vmatprep.subr.mxu0 0.0
    %60 = vmatpush1.msra.mxu0 %v38
    %61 = vmatprep.subr.mxu0 0.0
    %62 = vmatpush1.msra.mxu0 %v39
    %63 = vmatprep.subr.mxu0 0.0
    %64 = vmatpush1.msra.mxu0 %v40
    %65 = vmatprep.subr.mxu0 0.0
    %66 = vmatpush1.msra.mxu0 %v41
    %67 = vmatprep.subr.mxu0 0.0
    %68 = vmatpush1.msra.mxu0 %v42
    %69 = vmatprep.subr.mxu0 0.0
    %70 = vmatpush1.msra.mxu0 %v43
    %71 = vmatprep.subr.mxu0 0.0
    %72 = vmatpush1.msra.mxu0 %v44
    %73 = vmatprep.subr.mxu0 0.0
    %74 = vmatpush1.msra.mxu0 %v45
    %75 = vmatprep.subr.mxu0 0.0
    %76 = vmatpush1.msra.mxu0 %v46
    %77 = vmatprep.subr.mxu0 0.0
    %78 = vmatpush1.msra.mxu0 %v47
    %79 = vmatprep.subr.mxu0 0.0
    %80 = vmatpush1.msra.mxu0 %v48
    %81 = vmatprep.subr.mxu0 0.0
    %82 = vmatpush1.msra.mxu0 %v49
    %83 = vmatprep.subr.mxu0 0.0
    %84 = vmatpush1.msra.mxu0 0.0
    %85 = vmatprep.subr.mxu0 0.0
    %86 = vmatpush1.msra.mxu0 0.0
    %87 = vmatprep.subr.mxu0 0.0
    %88 = vmatpush1.msra.mxu0 0.0
    %89 = vmatprep.subr.mxu0 0.0
    %90 = vmatpush1.msra.mxu0 0.0
    %91 = vmatprep.subr.mxu0 0.0
    %92 = vmatpush1.msra.mxu0 0.0
    %93 = vmatprep.subr.mxu0 0.0
    %94 = vmatpush1.msra.mxu0 0.0
    %95 = vmatprep.subr.mxu0 0.0
    %96 = vmatpush1.msra.mxu0 0.0
    %97 = vmatprep.subr.mxu0 0.0
    %98 = vmatpush1.msra.mxu0 0.0
    %99 = vmatprep.subr.mxu0 0.0
    %100 = vmatpush1.msra.mxu0 0.0
    %101 = vmatprep.subr.mxu0 0.0
    %102 = vmatpush1.msra.mxu0 0.0
    %103 = vmatprep.subr.mxu0 0.0
    %104 = vmatpush1.msra.mxu0 0.0
    %105 = vmatprep.subr.mxu0 0.0
    %106 = vmatpush1.msra.mxu0 0.0
    %107 = vmatprep.subr.mxu0 0.0
    %108 = vmatpush1.msra.mxu0 0.0
    %109 = vmatprep.subr.mxu0 0.0
    %110 = vmatpush1.msra.mxu0 0.0
    %111 = vmatprep.subr.mxu0 0.0
    %112 = vmatpush1.msra.mxu0 0.0
    %113 = vmatprep.subr.mxu0 0.0
    %114 = vmatpush1.msra.mxu0 0.0
    %115 = vmatprep.mubr.f32.mxu0 0.0
    %116 = vmatmul.mubr.f32.gmra.mrb[0].mxu0 %v50
    %v117 = vpop.f32.mrb[0].mxu0
    %v118 = vadd.f32 0.0, %v117
    %v119 = vpop.f32.mrb[0].mxu0
    %120 = vdwg.mxu0
    %v121 = vmul.f32 %v50, %v50
    %vm122 = vcmask 1041408
    %v123 = vsel %vm122, %v121, 0.0
    %124 = vadd.xlane.f32.xlu0 %v123
    %v125 = vpop.xlane.xlu0 %124
    %v126 = vrsqrt.pop %v125
    %v127 = vmul.f32 %v125, %v126
    %vm128 = vcmp.eq.f32.partialorder %v125, inf
    %v129 = vsel %vm128, %v125, %v127
    %vm130 = vcmp.eq.f32.partialorder %v125, 0.0
    %v131 = vand.u32 %v125, 2147483648
    %v132 = vsel %vm130, %v131, %v129
    %v133 = vmax.f32 %v132, 1e-08
    %v134 = vrcp.pop %v133
    %v135 = vmul.f32 %v118, %v134
    %v136 = vld [vmem:[%s4] sm:$0x3]
    %v137 = vld [vmem:[%s1] sm:$0x1]
    %v139 = vlaneseq
    %v140 = vshrl.u32 %v139, 7
    %v141 = vsub.s32 0, %v140
    %v142 = vrot.slane %v137, %v141
    %145 = vset.pattern.permute.xlu0 0
    %146 = vperm.xlu0 %145, %v136
    %v147 = vpop.permute.xlu0 %146
    %v149 = vsub.f32 %v142, %v147
    %v150 = vand.u32 2147483647, %v149
    %v151 = vmax.f32 %v150, %v147
    %v152 = vrcp.pop %v151
    %v153 = vmul.f32 %v150, %v152
    %v154 = vsub.f32 0.0, %v153
    %v155 = vmul.f32 %v154, 0.1
    %v156 = vmul.f32 %v155, 1.442695
    %v157 = vpow.pop %v156
    %v158 = vmul.f32 %v135, %v157
    %v159 = vld [vmem:[%s2] sm:$0x1]
    %v161 = vlaneseq
    %v162 = vshrl.u32 %v161, 7
    %v163 = vsub.s32 0, %v162
    %v164 = vrot.slane %v159, %v163
    %v166 = vadd.f32 %v158, %v164
    %167 = vst [vmem:[%s5] sm:$0x3] %v166
    // Predicated region
    $region26: #{retrieval_database_forward.2} parent=1 // pred_check
      _
    $region27: #{retrieval_database_forward.2} parent=1 // pred_check_branch
      %169 = sbr.rel (0) target = $region29
    $region28: #{retrieval_database_forward.2} parent=1 // pred_region
      _
    $region29: #{retrieval_database_forward.2} parent=1 // pred_fallthru
      _
    // Predicated region
    $region30: #{retrieval_database_forward.2} parent=1 // pred_check
      _
    $region31: #{retrieval_database_forward.2} parent=1 // pred_check_branch
      %171 = sbr.rel (0) target = $region33
    $region32: #{retrieval_database_forward.2} parent=1 // pred_region
      _
    $region33: #{retrieval_database_forward.2} parent=1 // pred_fallthru
      _
    %172 = vsyncpa [#allocation3], 1

// kernel: retrieval_database_forward.3
$region0: #{retrieval_database_forward.3}
  #allocation0 [shape = 'u32[]', space=smem, size = 0x4, offset = 0x4, fixed_abs, tag = 'smem constant byte address 0x4 - core index']
  #allocation1 [shape = 'u32[144,128]{1,0:T(1,128)}', space=vmem, size = 0x12000, scoped, tag = 'internal scratch']
  #allocation2 [shape = 'f32[2,16,16]{2,1,0:T(8,128)}', space=vmem, size = 0x4000, scoped, tag = 'scratch operand']
  #allocation3 [shape = 'f32[32,128]{1,0:T(8,128)}', space=vmem, size = 0x4000, scoped, tag = 'scratch operand']
  #allocation4 [shape = 'f32[2,8,128]{2,1,0:T(8,128)}', space=vmem, size = 0x2000, scoped, tag = 'scratch operand']
  #allocation5 [shape = 's32[4]{0}', space=sflag, size = 0x10, scoped, tag = 'scratch operand']
  #allocation6 [shape = 's32[1]{0}', space=sflag, size = 0x4, scoped, tag = 'scoped memory for retrieval_database_forward.3']
  #allocation7 [shape = 'u8[512]{0}', space=smem, size = 0x200, scoped, tag = 'prefetched SMEM operand 0']
  #allocation33 [shape = 's32[]', space=sflag, size = 0x4, offset = 0, fixed_abs, tag = 'sflag constant byte address 0x0 - dummy sync flag']
  #allocation34 [shape = 's32[]', space=sflag, size = 0x4, offset = 0, fixed_abs, tag = 'sflag constant byte address 0x0 - dummy sync flag']
  #allocation35 [shape = 's32[]', space=sflag, size = 0x4, offset = 0, fixed_abs, tag = 'sflag constant byte address 0x0 - dummy sync flag']
  #allocation36 [shape = 's32[]', space=sflag, size = 0x4, offset = 0, fixed_abs, tag = 'sflag constant byte address 0x0 - dummy sync flag']
  %s0 = inlined_call_operand.vmem [shape: s32[4], index: 0, kind: input, shape index: {}]
  %s1 = inlined_call_operand.vmem [shape: f32[32,16,16], index: 1, kind: input, shape index: {}]
  %s2 = inlined_call_operand.vmem [shape: f32[32,8,128], index: 2, kind: input, shape index: {}]
  %s3 = inlined_call_operand.vmem [shape: bf16[16,128], index: 3, kind: input, shape index: {}]
  %s4 = inlined_call_operand.hbm [shape: f32[1,128], index: 4, kind: input, shape index: {}]
  %s5 = inlined_call_operand.vmem [shape: f32[16,128], index: 5, kind: input, shape index: {}]
  %s6 = inlined_call_operand.vmem [shape: bf16[2,128,256], index: 6, kind: input, shape index: {}]
  %s7 = inlined_call_operand.vmem [shape: f32[2,1,256], index: 7, kind: input, shape index: {}]
  %s8 = inlined_call_operand.vmem [shape: bf16[2,256,128], index: 8, kind: input, shape index: {}]
  %s9 = inlined_call_operand.hbm [shape: f32[2,1,128], index: 9, kind: input, shape index: {}]
  %s10 = inlined_call_operand.vmem [shape: bf16[1,128,384], index: 10, kind: input, shape index: {}]
  %s11 = inlined_call_operand.hbm [shape: f32[1,1,384], index: 11, kind: input, shape index: {}]
  %s12 = inlined_call_operand.hbm [shape: bf16[1,128,128], index: 12, kind: input, shape index: {}]
  %s13 = inlined_call_operand.hbm [shape: f32[1,1,128], index: 13, kind: input, shape index: {}]
  %s14 = inlined_call_operand.hbm [shape: f32[1,1,128], index: 14, kind: input, shape index: {}]
  %s15 = inlined_call_operand.hbm [shape: f32[1,1,128], index: 15, kind: input, shape index: {}]
  %s16 = inlined_call_operand.hbm [shape: bf16[1,128,256], index: 16, kind: input, shape index: {}]
  %s17 = inlined_call_operand.hbm [shape: f32[1,1,256], index: 17, kind: input, shape index: {}]
  %s18 = inlined_call_operand.hbm [shape: bf16[1,256,128], index: 18, kind: input, shape index: {}]
  %s19 = inlined_call_operand.hbm [shape: f32[1,1,128], index: 19, kind: input, shape index: {}]
  %s20 = inlined_call_operand.hbm [shape: f32[1,1,128], index: 20, kind: input, shape index: {}]
  %s21 = inlined_call_operand.hbm [shape: f32[1,1,128], index: 21, kind: input, shape index: {}]
  %s22 = inlined_call_operand.hbm [shape: f32[4,16,16], index: 22, kind: output, shape index: {0}]
  %s23 = inlined_call_operand.hbm [shape: f32[4,4,128], index: 23, kind: output, shape index: {1}]
  %s24 = inlined_call_operand.hbm [shape: f32[4,1,128], index: 24, kind: output, shape index: {2}]
  %25 = xla_tuple %s22, %s23, %s24
  %s26 = sld [smem:[#allocation0]]
  $region341: #{retrieval_database_forward.3} parent=0
    _
  %s28 = ssub.s32 1, %s26
  %s29 = scalar_select 0, %s28, %s26
  %s30 = sshll.u32 %s0, 4
  %s31 = int_to_ptr.vmem [resolvable:$true] %s30
  %33 = dma.vmem_to_smem %s31, 16, [#allocation7], [#allocation6]
  %34 = dma.done [#allocation6], 16
  %35 = sfence
  $region1: #{retrieval_database_forward.3} parent=0
    #allocation8 [shape = 'u8[512]{0}', space=vmem, size = 0x400, scoped, tag = 'input window, operand 4, single buffered']
    #allocation9 [shape = 's32[2]{0}', space=sflag, size = 0x8, scoped, tag = 'scoped memory for retrieval_database_forward.3']
    #allocation10 [shape = 's32[2]{0}', space=sflag, size = 0x8, scoped, tag = 'scoped memory for retrieval_database_forward.3']
    #allocation11 [shape = 'u8[1024]{0}', space=vmem, size = 0x400, scoped, tag = 'input window, operand 9']
    #allocation12 [shape = 's32[2]{0}', space=sflag, size = 0x8, scoped, tag = 'scoped memory for retrieval_database_forward.3']
    #allocation13 [shape = 'u8[3072]{0}', space=vmem, size = 0xc00, scoped, tag = 'input window, operand 11']
    #allocation14 [shape = 'u8[65536]{0}', space=vmem, size = 0x10000, scoped, tag = 'input window, operand 12']
    #allocation15 [shape = 's32[2]{0}', space=sflag, size = 0x8, scoped, tag = 'scoped memory for retrieval_database_forward.3']
    #allocation16 [shape = 'u8[1024]{0}', space=vmem, size = 0x400, scoped, tag = 'input window, operand 13']
    #allocation17 [shape = 'u8[1024]{0}', space=vmem, size = 0x400, scoped, tag = 'input window, operand 14']
    #allocation18 [shape = 's32[2]{0}', space=sflag, size = 0x8, scoped, tag = 'scoped memory for retrieval_database_forward.3']
    #allocation19 [shape = 'u8[1024]{0}', space=vmem, size = 0x400, scoped, tag = 'input window, operand 15']
    #allocation20 [shape = 'u8[131072]{0}', space=vmem, size = 0x20000, scoped, tag = 'input window, operand 16']
    #allocation21 [shape = 's32[2]{0}', space=sflag, size = 0x8, scoped, tag = 'scoped memory for retrieval_database_forward.3']
    #allocation22 [shape = 'u8[2048]{0}', space=vmem, size = 0x800, scoped, tag = 'input window, operand 17']
    #allocation23 [shape = 'u8[131072]{0}', space=vmem, size = 0x20000, scoped, tag = 'input window, operand 18']
    #allocation24 [shape = 's32[2]{0}', space=sflag, size = 0x8, scoped, tag = 'scoped memory for retrieval_database_forward.3']
    #allocation25 [shape = 'u8[1024]{0}', space=vmem, size = 0x400, scoped, tag = 'input window, operand 19']
    #allocation26 [shape = 'u8[1024]{0}', space=vmem, size = 0x400, scoped, tag = 'input window, operand 20']
    #allocation27 [shape = 's32[2]{0}', space=sflag, size = 0x8, scoped, tag = 'scoped memory for retrieval_database_forward.3']
    #allocation28 [shape = 'u8[1024]{0}', space=vmem, size = 0x400, scoped, tag = 'input window, operand 21']
    #allocation29 [shape = 'u8[32768]{0}', space=vmem, size = 0x8000, scoped, tag = 'output window, operand 0']
    #allocation30 [shape = 'u8[8192]{0}', space=vmem, size = 0x2000, scoped, tag = 'output window, operand 1']
    #allocation31 [shape = 's32[2]{0}', space=sflag, size = 0x8, scoped, tag = 'scoped memory for retrieval_database_forward.3']
    #allocation32 [shape = 'u8[2048]{0}', space=vmem, size = 0x800, scoped, tag = 'output window, operand 2']
    %36 = vsyncpa [#allocation9], 0
    %37 = vsyncpa [#allocation12], 0
    %s38 = scalar_lea.sflag [#allocation12], 1
    %39 = vsyncpa %s38, 0
    %40 = vsyncpa [#allocation15], 0
    %s41 = scalar_lea.sflag [#allocation15], 1
    %42 = vsyncpa %s41, 0
    %43 = vsyncpa [#allocation18], 0
    %s44 = scalar_lea.sflag [#allocation18], 1
    %45 = vsyncpa %s44, 0
    %46 = vsyncpa [#allocation21], 0
    %s47 = scalar_lea.sflag [#allocation21], 1
    %48 = vsyncpa %s47, 0
    %49 = vsyncpa [#allocation24], 0
    %s50 = scalar_lea.sflag [#allocation24], 1
    %51 = vsyncpa %s50, 0
    %52 = vsyncpa [#allocation27], 0
    %s53 = scalar_lea.sflag [#allocation27], 1
    %54 = vsyncpa %s53, 0
    %55 = vsyncpa [#allocation10], 0
    %s56 = scalar_lea.sflag [#allocation10], 1
    %57 = vsyncpa %s56, 0
    %58 = vsyncpa [#allocation31], 0
    %s59 = scalar_lea.sflag [#allocation31], 1
    %60 = vsyncpa %s59, 0
    loop: start=0, step=1, limit=6
    $region2: #{retrieval_database_forward.3} parent=1 // loop_pre_header
      _
    $region3: #{retrieval_database_forward.3} parent=1 // loop_header
      %s62 = sphi 0, %s66
      %p63 = scmp.ge.s32.totalorder %s62, 6
      %s69 = sphi 0, %s81
      %s70 = sphi 0, %s77
      %s71 = sphi 0, %s69
      %s72 = sphi 0, %s70
      %s73 = sphi 0, %s71
      %s74 = sphi 0, %s72
      %s82 = sphi 0, %s82
      %s84 = sphi 0, %s82
      %s85 = sphi 0, %s84
      %s99 = sphi 0, %s85
      %s103 = sphi 0, %s103
      %s105 = sphi 0, %s103
      %s106 = sphi 0, %s105
      %s120 = sphi 0, %s106
      %s124 = sphi 0, %s124
      %s126 = sphi 0, %s124
      %s127 = sphi 0, %s126
      %s141 = sphi 0, %s127
      %s151 = sphi 0, %s153
      %s154 = sphi 0, %s151
      %s155 = sphi 0, %s154
      %s171 = sphi 0, %s155
      %s181 = sphi 0, %s183
      %s184 = sphi 0, %s181
      %s185 = sphi 0, %s184
      %s201 = sphi 0, %s185
      %s211 = sphi 0, %s213
      %s214 = sphi 0, %s211
      %s215 = sphi 0, %s214
      %s231 = sphi 0, %s215
      %s241 = sphi 0, %s243
      %s244 = sphi 0, %s241
      %s245 = sphi 0, %s244
      %s261 = sphi 0, %s245
      %s271 = sphi 0, %s273
      %s274 = sphi 0, %s271
      %s275 = sphi 0, %s274
      %s291 = sphi 0, %s275
      %s301 = sphi 0, %s303
      %s304 = sphi 0, %s301
      %s305 = sphi 0, %s304
      %s321 = sphi 0, %s305
      %s331 = sphi 0, %s333
      %s334 = sphi 0, %s331
      %s335 = sphi 0, %s334
      %s351 = sphi 0, %s335
      %s361 = sphi 0, %s363
      %s364 = sphi 0, %s361
      %s365 = sphi 0, %s364
      %s381 = sphi 0, %s365
      %s391 = sphi 0, %s393
      %s394 = sphi 0, %s391
      %s395 = sphi 0, %s394
      %s411 = sphi 0, %s395
      %s421 = sphi 0, %s423
      %s424 = sphi 0, %s421
      %s425 = sphi 0, %s424
      %s441 = sphi 0, %s425
      %s451 = sphi 0, %s453
      %s454 = sphi 0, %s451
      %s455 = sphi 0, %s454
      %s471 = sphi 0, %s455
      %s481 = sphi 0, %s483
      %s484 = sphi 0, %s481
      %s485 = sphi 0, %s484
      %s501 = sphi 0, %s485
      %s511 = sphi 0, %s513
      %s514 = sphi 0, %s511
      %s515 = sphi 0, %s514
      %s531 = sphi 0, %s515
      %s541 = sphi 0, %s543
      %s544 = sphi 0, %s541
      %s545 = sphi 0, %s544
      %s561 = sphi 0, %s545
      %s571 = sphi 0, %s573
      %s574 = sphi 0, %s571
      %s575 = sphi 0, %s574
      %s591 = sphi 0, %s575
      %s601 = sphi 0, %s603
      %s604 = sphi 0, %s601
      %s605 = sphi 0, %s604
      %s621 = sphi 0, %s605
      %s627 = sphi 0, %s629
      %s630 = sphi 0, %s627
      %s631 = sphi 0, %s630
      %s647 = sphi 0, %s631
      %s653 = sphi 0, %s655
      %s656 = sphi 0, %s653
      %s657 = sphi 0, %s656
      %s673 = sphi 0, %s657
      %s679 = sphi 0, %s681
      %s682 = sphi 0, %s679
      %s683 = sphi 0, %s682
      %s699 = sphi 0, %s683
    $region4: #{retrieval_database_forward.3} parent=1 // loop_header_branch
      %65 = sbr.rel (%p63) target = $region8
    $region5: #{retrieval_database_forward.3} parent=1 // loop_body
      %s67 = ssub.s32 %s62, 1
      %s68 = ssub.s32 %s62, 2
      %s75 = sadd.s32 1, %s70
      %p76 = scmp.ge.s32.totalorder %s75, 2
      %s77 = scalar_select %p76, 0, %s75
      %s78 = sadd.s32 1, %s69
      %s79 = scalar_select %p76, %s78, %s69
      %p80 = scmp.ge.s32.totalorder %s79, 2
      %s81 = scalar_select %p80, 0, %s79
      %s83 = sadd.s32 %s82, 1
      %p86 = scmp.eq.s32.totalorder %s62, 3
      %p87 = scmp.ne.s32.totalorder %s82, %s84
      %p88 = scmp.eq.s32.totalorder %s62, 0
      %p89 = por %p87, %p88
      %p90 = scmp.ne.s32.totalorder %s82, %s84
      %p91 = scmp.eq.s32.totalorder %s67, 3
      %p92 = por %p90, %p91
      %p93 = scmp.ne.s32.totalorder %s84, %s85
      %p94 = scmp.eq.s32.totalorder %s67, 0
      %p95 = por %p93, %p94
      %p96 = scmp.ne.s32.totalorder %s84, %s85
      %p97 = scmp.eq.s32.totalorder %s68, 3
      %p98 = por %p96, %p97
      %p100 = scmp.ne.s32.totalorder %s85, %s99
      %p101 = scmp.eq.s32.totalorder %s68, 0
      %p102 = por %p100, %p101
      %s104 = sadd.s32 %s103, 1
      %p107 = scmp.eq.s32.totalorder %s62, 3
      %p108 = scmp.ne.s32.totalorder %s103, %s105
      %p109 = scmp.eq.s32.totalorder %s62, 0
      %p110 = por %p108, %p109
      %p111 = scmp.ne.s32.totalorder %s103, %s105
      %p112 = scmp.eq.s32.totalorder %s67, 3
      %p113 = por %p111, %p112
      %p114 = scmp.ne.s32.totalorder %s105, %s106
      %p115 = scmp.eq.s32.totalorder %s67, 0
      %p116 = por %p114, %p115
      %p117 = scmp.ne.s32.totalorder %s105, %s106
      %p118 = scmp.eq.s32.totalorder %s68, 3
      %p119 = por %p117, %p118
      %p121 = scmp.ne.s32.totalorder %s106, %s120
      %p122 = scmp.eq.s32.totalorder %s68, 0
      %p123 = por %p121, %p122
      %s125 = sadd.s32 %s124, 1
      %p128 = scmp.eq.s32.totalorder %s62, 3
      %p129 = scmp.ne.s32.totalorder %s124, %s126
      %p130 = scmp.eq.s32.totalorder %s62, 0
      %p131 = por %p129, %p130
      %p132 = scmp.ne.s32.totalorder %s124, %s126
      %p133 = scmp.eq.s32.totalorder %s67, 3
      %p134 = por %p132, %p133
      %p135 = scmp.ne.s32.totalorder %s126, %s127
      %p136 = scmp.eq.s32.totalorder %s67, 0
      %p137 = por %p135, %p136
      %p138 = scmp.ne.s32.totalorder %s126, %s127
      %p139 = scmp.eq.s32.totalorder %s68, 3
      %p140 = por %p138, %p139
      %p142 = scmp.ne.s32.totalorder %s127, %s141
      %p143 = scmp.eq.s32.totalorder %s68, 0
      %p144 = por %p142, %p143
      %p145 = scmp.lt.s32.totalorder %s70, 1
      %s146 = scalar_select %p145, %s70, 1
      %p147 = scmp.lt.s32.totalorder %s77, 1
      %s148 = scalar_select %p147, %s77, 1
      %s149 = ssub.s32 %s146, %s148
      %p150 = scmp.eq.s32.totalorder %s149, 0
      %s152 = sadd.s32 %s151, 1
      %s153 = scalar_select %p150, %s151, %s152
      %p156 = pneg %p150
      %p157 = scmp.eq.s32.totalorder %s62, 3
      %p158 = por %p156, %p157
      %p159 = scmp.ne.s32.totalorder %s151, %s154
      %p160 = scmp.eq.s32.totalorder %s62, 0
      %p161 = por %p159, %p160
      %p162 = scmp.ne.s32.totalorder %s151, %s154
      %p163 = scmp.eq.s32.totalorder %s67, 3
      %p164 = por %p162, %p163
      %p165 = scmp.ne.s32.totalorder %s154, %s155
      %p166 = scmp.eq.s32.totalorder %s67, 0
      %p167 = por %p165, %p166
      %p168 = scmp.ne.s32.totalorder %s154, %s155
      %p169 = scmp.eq.s32.totalorder %s68, 3
      %p170 = por %p168, %p169
      %p172 = scmp.ne.s32.totalorder %s155, %s171
      %p173 = scmp.eq.s32.totalorder %s68, 0
      %p174 = por %p172, %p173
      %p175 = scmp.lt.s32.totalorder %s70, 1
      %s176 = scalar_select %p175, %s70, 1
      %p177 = scmp.lt.s32.totalorder %s77, 1
      %s178 = scalar_select %p177, %s77, 1
      %s179 = ssub.s32 %s176, %s178
      %p180 = scmp.eq.s32.totalorder %s179, 0
      %s182 = sadd.s32 %s181, 1
      %s183 = scalar_select %p180, %s181, %s182
      %p186 = pneg %p180
      %p187 = scmp.eq.s32.totalorder %s62, 3
      %p188 = por %p186, %p187
      %p189 = scmp.ne.s32.totalorder %s181, %s184
      %p190 = scmp.eq.s32.totalorder %s62, 0
      %p191 = por %p189, %p190
      %p192 = scmp.ne.s32.totalorder %s181, %s184
      %p193 = scmp.eq.s32.totalorder %s67, 3
      %p194 = por %p192, %p193
      %p195 = scmp.ne.s32.totalorder %s184, %s185
      %p196 = scmp.eq.s32.totalorder %s67, 0
      %p197 = por %p195, %p196
      %p198 = scmp.ne.s32.totalorder %s184, %s185
      %p199 = scmp.eq.s32.totalorder %s68, 3
      %p200 = por %p198, %p199
      %p202 = scmp.ne.s32.totalorder %s185, %s201
      %p203 = scmp.eq.s32.totalorder %s68, 0
      %p204 = por %p202, %p203
      %p205 = scmp.lt.s32.totalorder %s70, 1
      %s206 = scalar_select %p205, %s70, 1
      %p207 = scmp.lt.s32.totalorder %s77, 1
      %s208 = scalar_select %p207, %s77, 1
      %s209 = ssub.s32 %s206, %s208
      %p210 = scmp.eq.s32.totalorder %s209, 0
      %s212 = sadd.s32 %s211, 1
      %s213 = scalar_select %p210, %s211, %s212
      %p216 = pneg %p210
      %p217 = scmp.eq.s32.totalorder %s62, 3
      %p218 = por %p216, %p217
      %p219 = scmp.ne.s32.totalorder %s211, %s214
      %p220 = scmp.eq.s32.totalorder %s62, 0
      %p221 = por %p219, %p220
      %p222 = scmp.ne.s32.totalorder %s211, %s214
      %p223 = scmp.eq.s32.totalorder %s67, 3
      %p224 = por %p222, %p223
      %p225 = scmp.ne.s32.totalorder %s214, %s215
      %p226 = scmp.eq.s32.totalorder %s67, 0
      %p227 = por %p225, %p226
      %p228 = scmp.ne.s32.totalorder %s214, %s215
      %p229 = scmp.eq.s32.totalorder %s68, 3
      %p230 = por %p228, %p229
      %p232 = scmp.ne.s32.totalorder %s215, %s231
      %p233 = scmp.eq.s32.totalorder %s68, 0
      %p234 = por %p232, %p233
      %p235 = scmp.lt.s32.totalorder %s70, 1
      %s236 = scalar_select %p235, %s70, 1
      %p237 = scmp.lt.s32.totalorder %s77, 1
      %s238 = scalar_select %p237, %s77, 1
      %s239 = ssub.s32 %s236, %s238
      %p240 = scmp.eq.s32.totalorder %s239, 0
      %s242 = sadd.s32 %s241, 1
      %s243 = scalar_select %p240, %s241, %s242
      %p246 = pneg %p240
      %p247 = scmp.eq.s32.totalorder %s62, 3
      %p248 = por %p246, %p247
      %p249 = scmp.ne.s32.totalorder %s241, %s244
      %p250 = scmp.eq.s32.totalorder %s62, 0
      %p251 = por %p249, %p250
      %p252 = scmp.ne.s32.totalorder %s241, %s244
      %p253 = scmp.eq.s32.totalorder %s67, 3
      %p254 = por %p252, %p253
      %p255 = scmp.ne.s32.totalorder %s244, %s245
      %p256 = scmp.eq.s32.totalorder %s67, 0
      %p257 = por %p255, %p256
      %p258 = scmp.ne.s32.totalorder %s244, %s245
      %p259 = scmp.eq.s32.totalorder %s68, 3
      %p260 = por %p258, %p259
      %p262 = scmp.ne.s32.totalorder %s245, %s261
      %p263 = scmp.eq.s32.totalorder %s68, 0
      %p264 = por %p262, %p263
      %p265 = scmp.lt.s32.totalorder %s70, 0
      %s266 = scalar_select %p265, %s70, 0
      %p267 = scmp.lt.s32.totalorder %s77, 0
      %s268 = scalar_select %p267, %s77, 0
      %s269 = ssub.s32 %s266, %s268
      %p270 = scmp.eq.s32.totalorder %s269, 0
      %s272 = sadd.s32 %s271, 1
      %s273 = scalar_select %p270, %s271, %s272
      %p276 = pneg %p270
      %p277 = scmp.eq.s32.totalorder %s62, 3
      %p278 = por %p276, %p277
      %p279 = scmp.ne.s32.totalorder %s271, %s274
      %p280 = scmp.eq.s32.totalorder %s62, 0
      %p281 = por %p279, %p280
      %p282 = scmp.ne.s32.totalorder %s271, %s274
      %p283 = scmp.eq.s32.totalorder %s67, 3
      %p284 = por %p282, %p283
      %p285 = scmp.ne.s32.totalorder %s274, %s275
      %p286 = scmp.eq.s32.totalorder %s67, 0
      %p287 = por %p285, %p286
      %p288 = scmp.ne.s32.totalorder %s274, %s275
      %p289 = scmp.eq.s32.totalorder %s68, 3
      %p290 = por %p288, %p289
      %p292 = scmp.ne.s32.totalorder %s275, %s291
      %p293 = scmp.eq.s32.totalorder %s68, 0
      %p294 = por %p292, %p293
      %p295 = scmp.lt.s32.totalorder %s70, 0
      %s296 = scalar_select %p295, %s70, 0
      %p297 = scmp.lt.s32.totalorder %s77, 0
      %s298 = scalar_select %p297, %s77, 0
      %s299 = ssub.s32 %s296, %s298
      %p300 = scmp.eq.s32.totalorder %s299, 0
      %s302 = sadd.s32 %s301, 1
      %s303 = scalar_select %p300, %s301, %s302
      %p306 = pneg %p300
      %p307 = scmp.eq.s32.totalorder %s62, 3
      %p308 = por %p306, %p307
      %p309 = scmp.ne.s32.totalorder %s301, %s304
      %p310 = scmp.eq.s32.totalorder %s62, 0
      %p311 = por %p309, %p310
      %p312 = scmp.ne.s32.totalorder %s301, %s304
      %p313 = scmp.eq.s32.totalorder %s67, 3
      %p314 = por %p312, %p313
      %p315 = scmp.ne.s32.totalorder %s304, %s305
      %p316 = scmp.eq.s32.totalorder %s67, 0
      %p317 = por %p315, %p316
      %p318 = scmp.ne.s32.totalorder %s304, %s305
      %p319 = scmp.eq.s32.totalorder %s68, 3
      %p320 = por %p318, %p319
      %p322 = scmp.ne.s32.totalorder %s305, %s321
      %p323 = scmp.eq.s32.totalorder %s68, 0
      %p324 = por %p322, %p323
      %p325 = scmp.lt.s32.totalorder %s70, 0
      %s326 = scalar_select %p325, %s70, 0
      %p327 = scmp.lt.s32.totalorder %s77, 0
      %s328 = scalar_select %p327, %s77, 0
      %s329 = ssub.s32 %s326, %s328
      %p330 = scmp.eq.s32.totalorder %s329, 0
      %s332 = sadd.s32 %s331, 1
      %s333 = scalar_select %p330, %s331, %s332
      %p336 = pneg %p330
      %p337 = scmp.eq.s32.totalorder %s62, 3
      %p338 = por %p336, %p337
      %p339 = scmp.ne.s32.totalorder %s331, %s334
      %p340 = scmp.eq.s32.totalorder %s62, 0
      %p341 = por %p339, %p340
      %p342 = scmp.ne.s32.totalorder %s331, %s334
      %p343 = scmp.eq.s32.totalorder %s67, 3
      %p344 = por %p342, %p343
      %p345 = scmp.ne.s32.totalorder %s334, %s335
      %p346 = scmp.eq.s32.totalorder %s67, 0
      %p347 = por %p345, %p346
      %p348 = scmp.ne.s32.totalorder %s334, %s335
      %p349 = scmp.eq.s32.totalorder %s68, 3
      %p350 = por %p348, %p349
      %p352 = scmp.ne.s32.totalorder %s335, %s351
      %p353 = scmp.eq.s32.totalorder %s68, 0
      %p354 = por %p352, %p353
      %p355 = scmp.lt.s32.totalorder %s70, 0
      %s356 = scalar_select %p355, %s70, 0
      %p357 = scmp.lt.s32.totalorder %s77, 0
      %s358 = scalar_select %p357, %s77, 0
      %s359 = ssub.s32 %s356, %s358
      %p360 = scmp.eq.s32.totalorder %s359, 0
      %s362 = sadd.s32 %s361, 1
      %s363 = scalar_select %p360, %s361, %s362
      %p366 = pneg %p360
      %p367 = scmp.eq.s32.totalorder %s62, 3
      %p368 = por %p366, %p367
      %p369 = scmp.ne.s32.totalorder %s361, %s364
      %p370 = scmp.eq.s32.totalorder %s62, 0
      %p371 = por %p369, %p370
      %p372 = scmp.ne.s32.totalorder %s361, %s364
      %p373 = scmp.eq.s32.totalorder %s67, 3
      %p374 = por %p372, %p373
      %p375 = scmp.ne.s32.totalorder %s364, %s365
      %p376 = scmp.eq.s32.totalorder %s67, 0
      %p377 = por %p375, %p376
      %p378 = scmp.ne.s32.totalorder %s364, %s365
      %p379 = scmp.eq.s32.totalorder %s68, 3
      %p380 = por %p378, %p379
      %p382 = scmp.ne.s32.totalorder %s365, %s381
      %p383 = scmp.eq.s32.totalorder %s68, 0
      %p384 = por %p382, %p383
      %p385 = scmp.lt.s32.totalorder %s70, 0
      %s386 = scalar_select %p385, %s70, 0
      %p387 = scmp.lt.s32.totalorder %s77, 0
      %s388 = scalar_select %p387, %s77, 0
      %s389 = ssub.s32 %s386, %s388
      %p390 = scmp.eq.s32.totalorder %s389, 0
      %s392 = sadd.s32 %s391, 1
      %s393 = scalar_select %p390, %s391, %s392
      %p396 = pneg %p390
      %p397 = scmp.eq.s32.totalorder %s62, 3
      %p398 = por %p396, %p397
      %p399 = scmp.ne.s32.totalorder %s391, %s394
      %p400 = scmp.eq.s32.totalorder %s62, 0
      %p401 = por %p399, %p400
      %p402 = scmp.ne.s32.totalorder %s391, %s394
      %p403 = scmp.eq.s32.totalorder %s67, 3
      %p404 = por %p402, %p403
      %p405 = scmp.ne.s32.totalorder %s394, %s395
      %p406 = scmp.eq.s32.totalorder %s67, 0
      %p407 = por %p405, %p406
      %p408 = scmp.ne.s32.totalorder %s394, %s395
      %p409 = scmp.eq.s32.totalorder %s68, 3
      %p410 = por %p408, %p409
      %p412 = scmp.ne.s32.totalorder %s395, %s411
      %p413 = scmp.eq.s32.totalorder %s68, 0
      %p414 = por %p412, %p413
      %p415 = scmp.lt.s32.totalorder %s70, 0
      %s416 = scalar_select %p415, %s70, 0
      %p417 = scmp.lt.s32.totalorder %s77, 0
      %s418 = scalar_select %p417, %s77, 0
      %s419 = ssub.s32 %s416, %s418
      %p420 = scmp.eq.s32.totalorder %s419, 0
      %s422 = sadd.s32 %s421, 1
      %s423 = scalar_select %p420, %s421, %s422
      %p426 = pneg %p420
      %p427 = scmp.eq.s32.totalorder %s62, 3
      %p428 = por %p426, %p427
      %p429 = scmp.ne.s32.totalorder %s421, %s424
      %p430 = scmp.eq.s32.totalorder %s62, 0
      %p431 = por %p429, %p430
      %p432 = scmp.ne.s32.totalorder %s421, %s424
      %p433 = scmp.eq.s32.totalorder %s67, 3
      %p434 = por %p432, %p433
      %p435 = scmp.ne.s32.totalorder %s424, %s425
      %p436 = scmp.eq.s32.totalorder %s67, 0
      %p437 = por %p435, %p436
      %p438 = scmp.ne.s32.totalorder %s424, %s425
      %p439 = scmp.eq.s32.totalorder %s68, 3
      %p440 = por %p438, %p439
      %p442 = scmp.ne.s32.totalorder %s425, %s441
      %p443 = scmp.eq.s32.totalorder %s68, 0
      %p444 = por %p442, %p443
      %p445 = scmp.lt.s32.totalorder %s70, 0
      %s446 = scalar_select %p445, %s70, 0
      %p447 = scmp.lt.s32.totalorder %s77, 0
      %s448 = scalar_select %p447, %s77, 0
      %s449 = ssub.s32 %s446, %s448
      %p450 = scmp.eq.s32.totalorder %s449, 0
      %s452 = sadd.s32 %s451, 1
      %s453 = scalar_select %p450, %s451, %s452
      %p456 = pneg %p450
      %p457 = scmp.eq.s32.totalorder %s62, 3
      %p458 = por %p456, %p457
      %p459 = scmp.ne.s32.totalorder %s451, %s454
      %p460 = scmp.eq.s32.totalorder %s62, 0
      %p461 = por %p459, %p460
      %p462 = scmp.ne.s32.totalorder %s451, %s454
      %p463 = scmp.eq.s32.totalorder %s67, 3
      %p464 = por %p462, %p463
      %p465 = scmp.ne.s32.totalorder %s454, %s455
      %p466 = scmp.eq.s32.totalorder %s67, 0
      %p467 = por %p465, %p466
      %p468 = scmp.ne.s32.totalorder %s454, %s455
      %p469 = scmp.eq.s32.totalorder %s68, 3
      %p470 = por %p468, %p469
      %p472 = scmp.ne.s32.totalorder %s455, %s471
      %p473 = scmp.eq.s32.totalorder %s68, 0
      %p474 = por %p472, %p473
      %p475 = scmp.lt.s32.totalorder %s70, 0
      %s476 = scalar_select %p475, %s70, 0
      %p477 = scmp.lt.s32.totalorder %s77, 0
      %s478 = scalar_select %p477, %s77, 0
      %s479 = ssub.s32 %s476, %s478
      %p480 = scmp.eq.s32.totalorder %s479, 0
      %s482 = sadd.s32 %s481, 1
      %s483 = scalar_select %p480, %s481, %s482
      %p486 = pneg %p480
      %p487 = scmp.eq.s32.totalorder %s62, 3
      %p488 = por %p486, %p487
      %p489 = scmp.ne.s32.totalorder %s481, %s484
      %p490 = scmp.eq.s32.totalorder %s62, 0
      %p491 = por %p489, %p490
      %p492 = scmp.ne.s32.totalorder %s481, %s484
      %p493 = scmp.eq.s32.totalorder %s67, 3
      %p494 = por %p492, %p493
      %p495 = scmp.ne.s32.totalorder %s484, %s485
      %p496 = scmp.eq.s32.totalorder %s67, 0
      %p497 = por %p495, %p496
      %p498 = scmp.ne.s32.totalorder %s484, %s485
      %p499 = scmp.eq.s32.totalorder %s68, 3
      %p500 = por %p498, %p499
      %p502 = scmp.ne.s32.totalorder %s485, %s501
      %p503 = scmp.eq.s32.totalorder %s68, 0
      %p504 = por %p502, %p503
      %p505 = scmp.lt.s32.totalorder %s70, 0
      %s506 = scalar_select %p505, %s70, 0
      %p507 = scmp.lt.s32.totalorder %s77, 0
      %s508 = scalar_select %p507, %s77, 0
      %s509 = ssub.s32 %s506, %s508
      %p510 = scmp.eq.s32.totalorder %s509, 0
      %s512 = sadd.s32 %s511, 1
      %s513 = scalar_select %p510, %s511, %s512
      %p516 = pneg %p510
      %p517 = scmp.eq.s32.totalorder %s62, 3
      %p518 = por %p516, %p517
      %p519 = scmp.ne.s32.totalorder %s511, %s514
      %p520 = scmp.eq.s32.totalorder %s62, 0
      %p521 = por %p519, %p520
      %p522 = scmp.ne.s32.totalorder %s511, %s514
      %p523 = scmp.eq.s32.totalorder %s67, 3
      %p524 = por %p522, %p523
      %p525 = scmp.ne.s32.totalorder %s514, %s515
      %p526 = scmp.eq.s32.totalorder %s67, 0
      %p527 = por %p525, %p526
      %p528 = scmp.ne.s32.totalorder %s514, %s515
      %p529 = scmp.eq.s32.totalorder %s68, 3
      %p530 = por %p528, %p529
      %p532 = scmp.ne.s32.totalorder %s515, %s531
      %p533 = scmp.eq.s32.totalorder %s68, 0
      %p534 = por %p532, %p533
      %p535 = scmp.lt.s32.totalorder %s70, 0
      %s536 = scalar_select %p535, %s70, 0
      %p537 = scmp.lt.s32.totalorder %s77, 0
      %s538 = scalar_select %p537, %s77, 0
      %s539 = ssub.s32 %s536, %s538
      %p540 = scmp.eq.s32.totalorder %s539, 0
      %s542 = sadd.s32 %s541, 1
      %s543 = scalar_select %p540, %s541, %s542
      %p546 = pneg %p540
      %p547 = scmp.eq.s32.totalorder %s62, 3
      %p548 = por %p546, %p547
      %p549 = scmp.ne.s32.totalorder %s541, %s544
      %p550 = scmp.eq.s32.totalorder %s62, 0
      %p551 = por %p549, %p550
      %p552 = scmp.ne.s32.totalorder %s541, %s544
      %p553 = scmp.eq.s32.totalorder %s67, 3
      %p554 = por %p552, %p553
      %p555 = scmp.ne.s32.totalorder %s544, %s545
      %p556 = scmp.eq.s32.totalorder %s67, 0
      %p557 = por %p555, %p556
      %p558 = scmp.ne.s32.totalorder %s544, %s545
      %p559 = scmp.eq.s32.totalorder %s68, 3
      %p560 = por %p558, %p559
      %p562 = scmp.ne.s32.totalorder %s545, %s561
      %p563 = scmp.eq.s32.totalorder %s68, 0
      %p564 = por %p562, %p563
      %p565 = scmp.lt.s32.totalorder %s70, 0
      %s566 = scalar_select %p565, %s70, 0
      %p567 = scmp.lt.s32.totalorder %s77, 0
      %s568 = scalar_select %p567, %s77, 0
      %s569 = ssub.s32 %s566, %s568
      %p570 = scmp.eq.s32.totalorder %s569, 0
      %s572 = sadd.s32 %s571, 1
      %s573 = scalar_select %p570, %s571, %s572
      %p576 = pneg %p570
      %p577 = scmp.eq.s32.totalorder %s62, 3
      %p578 = por %p576, %p577
      %p579 = scmp.ne.s32.totalorder %s571, %s574
      %p580 = scmp.eq.s32.totalorder %s62, 0
      %p581 = por %p579, %p580
      %p582 = scmp.ne.s32.totalorder %s571, %s574
      %p583 = scmp.eq.s32.totalorder %s67, 3
      %p584 = por %p582, %p583
      %p585 = scmp.ne.s32.totalorder %s574, %s575
      %p586 = scmp.eq.s32.totalorder %s67, 0
      %p587 = por %p585, %p586
      %p588 = scmp.ne.s32.totalorder %s574, %s575
      %p589 = scmp.eq.s32.totalorder %s68, 3
      %p590 = por %p588, %p589
      %p592 = scmp.ne.s32.totalorder %s575, %s591
      %p593 = scmp.eq.s32.totalorder %s68, 0
      %p594 = por %p592, %p593
      %p595 = scmp.lt.s32.totalorder %s70, 0
      %s596 = scalar_select %p595, %s70, 0
      %p597 = scmp.lt.s32.totalorder %s77, 0
      %s598 = scalar_select %p597, %s77, 0
      %s599 = ssub.s32 %s596, %s598
      %p600 = scmp.eq.s32.totalorder %s599, 0
      %s602 = sadd.s32 %s601, 1
      %s603 = scalar_select %p600, %s601, %s602
      %p606 = pneg %p600
      %p607 = scmp.eq.s32.totalorder %s62, 3
      %p608 = por %p606, %p607
      %p609 = scmp.ne.s32.totalorder %s601, %s604
      %p610 = scmp.eq.s32.totalorder %s62, 0
      %p611 = por %p609, %p610
      %p612 = scmp.ne.s32.totalorder %s601, %s604
      %p613 = scmp.eq.s32.totalorder %s67, 3
      %p614 = por %p612, %p613
      %p615 = scmp.ne.s32.totalorder %s604, %s605
      %p616 = scmp.eq.s32.totalorder %s67, 0
      %p617 = por %p615, %p616
      %p618 = scmp.ne.s32.totalorder %s604, %s605
      %p619 = scmp.eq.s32.totalorder %s68, 3
      %p620 = por %p618, %p619
      %p622 = scmp.ne.s32.totalorder %s605, %s621
      %p623 = scmp.eq.s32.totalorder %s68, 0
      %p624 = por %p622, %p623
      %s625 = ssub.s32 %s69, %s81
      %p626 = scmp.eq.s32.totalorder %s625, 0
      %s628 = sadd.s32 %s627, 1
      %s629 = scalar_select %p626, %s627, %s628
      %p632 = pneg %p626
      %p633 = scmp.eq.s32.totalorder %s62, 3
      %p634 = por %p632, %p633
      %p635 = scmp.ne.s32.totalorder %s627, %s630
      %p636 = scmp.eq.s32.totalorder %s62, 0
      %p637 = por %p635, %p636
      %p638 = scmp.ne.s32.totalorder %s627, %s630
      %p639 = scmp.eq.s32.totalorder %s67, 3
      %p640 = por %p638, %p639
      %p641 = scmp.ne.s32.totalorder %s630, %s631
      %p642 = scmp.eq.s32.totalorder %s67, 0
      %p643 = por %p641, %p642
      %p644 = scmp.ne.s32.totalorder %s630, %s631
      %p645 = scmp.eq.s32.totalorder %s68, 3
      %p646 = por %p644, %p645
      %p648 = scmp.ne.s32.totalorder %s631, %s647
      %p649 = scmp.eq.s32.totalorder %s68, 0
      %p650 = por %p648, %p649
      %s651 = ssub.s32 %s69, %s81
      %p652 = scmp.eq.s32.totalorder %s651, 0
      %s654 = sadd.s32 %s653, 1
      %s655 = scalar_select %p652, %s653, %s654
      %p658 = pneg %p652
      %p659 = scmp.eq.s32.totalorder %s62, 3
      %p660 = por %p658, %p659
      %p661 = scmp.ne.s32.totalorder %s653, %s656
      %p662 = scmp.eq.s32.totalorder %s62, 0
      %p663 = por %p661, %p662
      %p664 = scmp.ne.s32.totalorder %s653, %s656
      %p665 = scmp.eq.s32.totalorder %s67, 3
      %p666 = por %p664, %p665
      %p667 = scmp.ne.s32.totalorder %s656, %s657
      %p668 = scmp.eq.s32.totalorder %s67, 0
      %p669 = por %p667, %p668
      %p670 = scmp.ne.s32.totalorder %s656, %s657
      %p671 = scmp.eq.s32.totalorder %s68, 3
      %p672 = por %p670, %p671
      %p674 = scmp.ne.s32.totalorder %s657, %s673
      %p675 = scmp.eq.s32.totalorder %s68, 0
      %p676 = por %p674, %p675
      %s677 = ssub.s32 %s69, %s81
      %p678 = scmp.eq.s32.totalorder %s677, 0
      %s680 = sadd.s32 %s679, 1
      %s681 = scalar_select %p678, %s679, %s680
      %p684 = pneg %p678
      %p685 = scmp.eq.s32.totalorder %s62, 3
      %p686 = por %p684, %p685
      %p687 = scmp.ne.s32.totalorder %s679, %s682
      %p688 = scmp.eq.s32.totalorder %s62, 0
      %p689 = por %p687, %p688
      %p690 = scmp.ne.s32.totalorder %s679, %s682
      %p691 = scmp.eq.s32.totalorder %s67, 3
      %p692 = por %p690, %p691
      %p693 = scmp.ne.s32.totalorder %s682, %s683
      %p694 = scmp.eq.s32.totalorder %s67, 0
      %p695 = por %p693, %p694
      %p696 = scmp.ne.s32.totalorder %s682, %s683
      %p697 = scmp.eq.s32.totalorder %s68, 3
      %p698 = por %p696, %p697
      %p700 = scmp.ne.s32.totalorder %s683, %s699
      %p701 = scmp.eq.s32.totalorder %s68, 0
      %p702 = por %p700, %p701
      %p703 = scmp.le.s32.totalorder 1, %s62
      %p704 = scmp.lt.s32.totalorder %s62, 5
      %p705 = pnand %p703, %p704
      %p706 = pneg %p705
      // Predicated region
      $region9: #{retrieval_database_forward.3} parent=5 // pred_check
        _
      $region10: #{retrieval_database_forward.3} parent=5 // pred_check_branch
        %708 = sbr.rel (%p705) target = $region12
      $region11: #{retrieval_database_forward.3} parent=5 // pred_region
        %s709 = ssub.s32 %s62, 1
        // Predicated region
        $region13: #{retrieval_database_forward.3} parent=11 // pred_check
          %p710 = pneg %p95
        $region14: #{retrieval_database_forward.3} parent=11 // pred_check_branch
          %712 = sbr.rel (%p710) target = $region16
        $region15: #{retrieval_database_forward.3} parent=11 // pred_region
          _
        $region16: #{retrieval_database_forward.3} parent=11 // pred_fallthru
          _
        // Predicated region
        $region17: #{retrieval_database_forward.3} parent=11 // pred_check
          %p713 = pneg %p116
        $region18: #{retrieval_database_forward.3} parent=11 // pred_check_branch
          %715 = sbr.rel (%p713) target = $region20
        $region19: #{retrieval_database_forward.3} parent=11 // pred_region
          %s717 = ssub.s32 16, 16
          %718 = vsyncadd [#allocation9], %s717
          %s720 = sshll.u32 [#allocation8], 4
          %s721 = int_to_ptr.vmem [resolvable:$true] %s720
          %723 = dma.hbm_to_vmem [thread:$0]  %s4, 16, %s721, [#allocation9]
        $region20: #{retrieval_database_forward.3} parent=11 // pred_fallthru
          _
        // Predicated region
        $region21: #{retrieval_database_forward.3} parent=11 // pred_check
          %p724 = pneg %p137
        $region22: #{retrieval_database_forward.3} parent=11 // pred_check_branch
          %726 = sbr.rel (%p724) target = $region24
        $region23: #{retrieval_database_forward.3} parent=11 // pred_region
          _
        $region24: #{retrieval_database_forward.3} parent=11 // pred_fallthru
          _
      $region12: #{retrieval_database_forward.3} parent=5 // pred_fallthru
        _
      %p727 = scmp.lt.s32.totalorder %s62, 4
      // Predicated region
      $region25: #{retrieval_database_forward.3} parent=5 // pred_check
        %p728 = pneg %p727
      $region26: #{retrieval_database_forward.3} parent=5 // pred_check_branch
        %730 = sbr.rel (%p728) target = $region28
      $region27: #{retrieval_database_forward.3} parent=5 // pred_region
        // Predicated region
        $region29: #{retrieval_database_forward.3} parent=27 // pred_check
          %p731 = pneg %p161
        $region30: #{retrieval_database_forward.3} parent=27 // pred_check_branch
          %733 = sbr.rel (%p731) target = $region32
        $region31: #{retrieval_database_forward.3} parent=27 // pred_region
          %p734 = scmp.lt.s32.totalorder %s70, 1
          %s735 = scalar_select %p734, %s70, 1
          %p736 = scmp.lt.s32.totalorder %s735, 1
          %s737 = scalar_select %p736, %s735, 1
          %s738 = smul.addr %s737, 32
          %s739 = smul.addr %s738, 4
          %s740 = scalar_lea.vmem %s6, %s739
          %p741 = scmp.lt.s32.totalorder %s70, 1
          %s742 = scalar_select %p741, %s70, 1
        $region32: #{retrieval_database_forward.3} parent=27 // pred_fallthru
          _
        // Predicated region
        $region33: #{retrieval_database_forward.3} parent=27 // pred_check
          %p743 = pneg %p191
        $region34: #{retrieval_database_forward.3} parent=27 // pred_check_branch
          %745 = sbr.rel (%p743) target = $region36
        $region35: #{retrieval_database_forward.3} parent=27 // pred_region
          %p746 = scmp.lt.s32.totalorder %s70, 1
          %s747 = scalar_select %p746, %s70, 1
          %p748 = scmp.lt.s32.totalorder %s747, 1
          %s749 = scalar_select %p748, %s747, 1
          %s750 = smul.addr %s749, 2
          %s751 = scalar_lea.vmem %s7, %s750
          %p752 = scmp.lt.s32.totalorder %s70, 1
          %s753 = scalar_select %p752, %s70, 1
        $region36: #{retrieval_database_forward.3} parent=27 // pred_fallthru
          _
        // Predicated region
        $region37: #{retrieval_database_forward.3} parent=27 // pred_check
          %p754 = pneg %p221
        $region38: #{retrieval_database_forward.3} parent=27 // pred_check_branch
          %756 = sbr.rel (%p754) target = $region40
        $region39: #{retrieval_database_forward.3} parent=27 // pred_region
          %p757 = scmp.lt.s32.totalorder %s70, 1
          %s758 = scalar_select %p757, %s70, 1
          %p759 = scmp.lt.s32.totalorder %s758, 1
          %s760 = scalar_select %p759, %s758, 1
          %s761 = smul.addr %s760, 32
          %s762 = smul.addr %s761, 4
          %s763 = scalar_lea.vmem %s8, %s762
          %p764 = scmp.lt.s32.totalorder %s70, 1
          %s765 = scalar_select %p764, %s70, 1
        $region40: #{retrieval_database_forward.3} parent=27 // pred_fallthru
          _
        // Predicated region
        $region41: #{retrieval_database_forward.3} parent=27 // pred_check
          %p766 = pneg %p251
        $region42: #{retrieval_database_forward.3} parent=27 // pred_check_branch
          %768 = sbr.rel (%p766) target = $region44
        $region43: #{retrieval_database_forward.3} parent=27 // pred_region
          %s769 = sand.u32 %s62, 1
          %s770 = scalar_lea.sflag [#allocation12], %s769
          %s771 = sand.u32 %s241, 1
          %s772 = scalar_lea.vmem [#allocation11], %s771
          %p773 = scmp.lt.s32.totalorder %s70, 1
          %s774 = scalar_select %p773, %s70, 1
          %s776 = ssub.s32 16, 16
          %777 = vsyncadd %s770, %s776
          %s778 = smul.addr %s774, 16
          %s779 = scalar_lea.hbm %s9, %s778
          %s781 = sshll.u32 %s772, 4
          %s782 = int_to_ptr.vmem [resolvable:$true] %s781
          %784 = dma.hbm_to_vmem [thread:$0]  %s779, 16, %s782, %s770
        $region44: #{retrieval_database_forward.3} parent=27 // pred_fallthru
          _
        // Predicated region
        $region45: #{retrieval_database_forward.3} parent=27 // pred_check
          %p785 = pneg %p281
        $region46: #{retrieval_database_forward.3} parent=27 // pred_check_branch
          %787 = sbr.rel (%p785) target = $region48
        $region47: #{retrieval_database_forward.3} parent=27 // pred_region
          %p788 = scmp.lt.s32.totalorder %s70, 0
          %s789 = scalar_select %p788, %s70, 0
          %p790 = scmp.lt.s32.totalorder %s789, 0
          %s791 = scalar_select %p790, %s789, 0
          %s792 = smul.addr %s791, 48
          %s793 = smul.addr %s792, 4
          %s794 = scalar_lea.vmem %s10, %s793
          %p795 = scmp.lt.s32.totalorder %s70, 0
          %s796 = scalar_select %p795, %s70, 0
        $region48: #{retrieval_database_forward.3} parent=27 // pred_fallthru
          _
        // Predicated region
        $region49: #{retrieval_database_forward.3} parent=27 // pred_check
          %p797 = pneg %p311
        $region50: #{retrieval_database_forward.3} parent=27 // pred_check_branch
          %799 = sbr.rel (%p797) target = $region52
        $region51: #{retrieval_database_forward.3} parent=27 // pred_region
          %s800 = sand.u32 %s62, 1
          %s801 = scalar_lea.sflag [#allocation12], %s800
          %s802 = sand.u32 %s301, 1
          %s803 = smul.addr %s802, 3
          %s804 = scalar_lea.vmem [#allocation13], %s803
          %p805 = scmp.lt.s32.totalorder %s70, 0
          %s806 = scalar_select %p805, %s70, 0
          %s808 = ssub.s32 48, 48
          %809 = vsyncadd %s801, %s808
          %s810 = smul.addr %s806, 3
          %s811 = smul.addr %s810, 16
          %s812 = scalar_lea.hbm %s11, %s811
          %s814 = sshll.u32 %s804, 4
          %s815 = int_to_ptr.vmem [resolvable:$true] %s814
          %817 = dma.hbm_to_vmem [thread:$0]  %s812, 48, %s815, %s801
        $region52: #{retrieval_database_forward.3} parent=27 // pred_fallthru
          _
        // Predicated region
        $region53: #{retrieval_database_forward.3} parent=27 // pred_check
          %p818 = pneg %p341
        $region54: #{retrieval_database_forward.3} parent=27 // pred_check_branch
          %820 = sbr.rel (%p818) target = $region56
        $region55: #{retrieval_database_forward.3} parent=27 // pred_region
          %s821 = sand.u32 %s62, 1
          %s822 = scalar_lea.sflag [#allocation15], %s821
          %s823 = sand.u32 %s331, 1
          %s824 = smul.addr %s823, 64
          %s825 = scalar_lea.vmem [#allocation14], %s824
          %p826 = scmp.lt.s32.totalorder %s70, 0
          %s827 = scalar_select %p826, %s70, 0
          %s829 = ssub.s32 1024, 1024
          %830 = vsyncadd %s822, %s829
          %s831 = smul.addr %s827, 16
          %s832 = smul.addr %s831, 64
          %s833 = scalar_lea.hbm %s12, %s832
          %s834 = sshll.u32 %s825, 4
          %s835 = int_to_ptr.vmem [resolvable:$true] %s834
          %840 = dma.hbm_to_vmem [thread:$0]  %s833, 1024, %s835, %s822, 64, 64, 4
        $region56: #{retrieval_database_forward.3} parent=27 // pred_fallthru
          _
        // Predicated region
        $region57: #{retrieval_database_forward.3} parent=27 // pred_check
          %p841 = pneg %p371
        $region58: #{retrieval_database_forward.3} parent=27 // pred_check_branch
          %843 = sbr.rel (%p841) target = $region60
        $region59: #{retrieval_database_forward.3} parent=27 // pred_region
          %s844 = sand.u32 %s62, 1
          %s845 = scalar_lea.sflag [#allocation15], %s844
          %s846 = sand.u32 %s361, 1
          %s847 = scalar_lea.vmem [#allocation16], %s846
          %p848 = scmp.lt.s32.totalorder %s70, 0
          %s849 = scalar_select %p848, %s70, 0
          %s851 = ssub.s32 16, 16
          %852 = vsyncadd %s845, %s851
          %s853 = smul.addr %s849, 16
          %s854 = scalar_lea.hbm %s13, %s853
          %s856 = sshll.u32 %s847, 4
          %s857 = int_to_ptr.vmem [resolvable:$true] %s856
          %859 = dma.hbm_to_vmem [thread:$0]  %s854, 16, %s857, %s845
        $region60: #{retrieval_database_forward.3} parent=27 // pred_fallthru
          _
        // Predicated region
        $region61: #{retrieval_database_forward.3} parent=27 // pred_check
          %p860 = pneg %p401
        $region62: #{retrieval_database_forward.3} parent=27 // pred_check_branch
          %862 = sbr.rel (%p860) target = $region64
        $region63: #{retrieval_database_forward.3} parent=27 // pred_region
          %s863 = sand.u32 %s62, 1
          %s864 = scalar_lea.sflag [#allocation18], %s863
          %s865 = sand.u32 %s391, 1
          %s866 = scalar_lea.vmem [#allocation17], %s865
          %p867 = scmp.lt.s32.totalorder %s70, 0
          %s868 = scalar_select %p867, %s70, 0
          %s870 = ssub.s32 16, 16
          %871 = vsyncadd %s864, %s870
          %s872 = smul.addr %s868, 16
          %s873 = scalar_lea.hbm %s14, %s872
          %s875 = sshll.u32 %s866, 4
          %s876 = int_to_ptr.vmem [resolvable:$true] %s875
          %878 = dma.hbm_to_vmem [thread:$0]  %s873, 16, %s876, %s864
        $region64: #{retrieval_database_forward.3} parent=27 // pred_fallthru
          _
        // Predicated region
        $region65: #{retrieval_database_forward.3} parent=27 // pred_check
          %p879 = pneg %p431
        $region66: #{retrieval_database_forward.3} parent=27 // pred_check_branch
          %881 = sbr.rel (%p879) target = $region68
        $region67: #{retrieval_database_forward.3} parent=27 // pred_region
          %s882 = sand.u32 %s62, 1
          %s883 = scalar_lea.sflag [#allocation18], %s882
          %s884 = sand.u32 %s421, 1
          %s885 = scalar_lea.vmem [#allocation19], %s884
          %p886 = scmp.lt.s32.totalorder %s70, 0
          %s887 = scalar_select %p886, %s70, 0
          %s889 = ssub.s32 16, 16
          %890 = vsyncadd %s883, %s889
          %s891 = smul.addr %s887, 16
          %s892 = scalar_lea.hbm %s15, %s891
          %s894 = sshll.u32 %s885, 4
          %s895 = int_to_ptr.vmem [resolvable:$true] %s894
          %897 = dma.hbm_to_vmem [thread:$0]  %s892, 16, %s895, %s883
        $region68: #{retrieval_database_forward.3} parent=27 // pred_fallthru
          _
        // Predicated region
        $region69: #{retrieval_database_forward.3} parent=27 // pred_check
          %p898 = pneg %p461
        $region70: #{retrieval_database_forward.3} parent=27 // pred_check_branch
          %900 = sbr.rel (%p898) target = $region72
        $region71: #{retrieval_database_forward.3} parent=27 // pred_region
          %s901 = sand.u32 %s62, 1
          %s902 = scalar_lea.sflag [#allocation21], %s901
          %s903 = sand.u32 %s451, 1
          %s904 = smul.addr %s903, 128
          %s905 = scalar_lea.vmem [#allocation20], %s904
          %p906 = scmp.lt.s32.totalorder %s70, 0
          %s907 = scalar_select %p906, %s70, 0
          %s909 = ssub.s32 2048, 2048
          %910 = vsyncadd %s902, %s909
          %s911 = smul.addr %s907, 32
          %s912 = smul.addr %s911, 64
          %s913 = scalar_lea.hbm %s16, %s912
          %s914 = sshll.u32 %s905, 4
          %s915 = int_to_ptr.vmem [resolvable:$true] %s914
          %920 = dma.hbm_to_vmem [thread:$0]  %s913, 2048, %s915, %s902, 128, 128, 8
        $region72: #{retrieval_database_forward.3} parent=27 // pred_fallthru
          _
        // Predicated region
        $region73: #{retrieval_database_forward.3} parent=27 // pred_check
          %p921 = pneg %p491
        $region74: #{retrieval_database_forward.3} parent=27 // pred_check_branch
          %923 = sbr.rel (%p921) target = $region76
        $region75: #{retrieval_database_forward.3} parent=27 // pred_region
          %s924 = sand.u32 %s62, 1
          %s925 = scalar_lea.sflag [#allocation21], %s924
          %s926 = sand.u32 %s481, 1
          %s927 = smul.addr %s926, 2
          %s928 = scalar_lea.vmem [#allocation22], %s927
          %p929 = scmp.lt.s32.totalorder %s70, 0
          %s930 = scalar_select %p929, %s70, 0
          %s932 = ssub.s32 32, 32
          %933 = vsyncadd %s925, %s932
          %s934 = smul.addr %s930, 2
          %s935 = smul.addr %s934, 16
          %s936 = scalar_lea.hbm %s17, %s935
          %s938 = sshll.u32 %s928, 4
          %s939 = int_to_ptr.vmem [resolvable:$true] %s938
          %941 = dma.hbm_to_vmem [thread:$0]  %s936, 32, %s939, %s925
        $region76: #{retrieval_database_forward.3} parent=27 // pred_fallthru
          _
        // Predicated region
        $region77: #{retrieval_database_forward.3} parent=27 // pred_check
          %p942 = pneg %p521
        $region78: #{retrieval_database_forward.3} parent=27 // pred_check_branch
          %944 = sbr.rel (%p942) target = $region80
        $region79: #{retrieval_database_forward.3} parent=27 // pred_region
          %s945 = sand.u32 %s62, 1
          %s946 = scalar_lea.sflag [#allocation24], %s945
          %s947 = sand.u32 %s511, 1
          %s948 = smul.addr %s947, 128
          %s949 = scalar_lea.vmem [#allocation23], %s948
          %p950 = scmp.lt.s32.totalorder %s70, 0
          %s951 = scalar_select %p950, %s70, 0
          %s953 = ssub.s32 2048, 2048
          %954 = vsyncadd %s946, %s953
          %s955 = smul.addr %s951, 32
          %s956 = smul.addr %s955, 64
          %s957 = scalar_lea.hbm %s18, %s956
          %s958 = sshll.u32 %s949, 4
          %s959 = int_to_ptr.vmem [resolvable:$true] %s958
          %964 = dma.hbm_to_vmem [thread:$0]  %s957, 2048, %s959, %s946, 64, 64, 4
        $region80: #{retrieval_database_forward.3} parent=27 // pred_fallthru
          _
        // Predicated region
        $region81: #{retrieval_database_forward.3} parent=27 // pred_check
          %p965 = pneg %p551
        $region82: #{retrieval_database_forward.3} parent=27 // pred_check_branch
          %967 = sbr.rel (%p965) target = $region84
        $region83: #{retrieval_database_forward.3} parent=27 // pred_region
          %s968 = sand.u32 %s62, 1
          %s969 = scalar_lea.sflag [#allocation24], %s968
          %s970 = sand.u32 %s541, 1
          %s971 = scalar_lea.vmem [#allocation25], %s970
          %p972 = scmp.lt.s32.totalorder %s70, 0
          %s973 = scalar_select %p972, %s70, 0
          %s975 = ssub.s32 16, 16
          %976 = vsyncadd %s969, %s975
          %s977 = smul.addr %s973, 16
          %s978 = scalar_lea.hbm %s19, %s977
          %s980 = sshll.u32 %s971, 4
          %s981 = int_to_ptr.vmem [resolvable:$true] %s980
          %983 = dma.hbm_to_vmem [thread:$0]  %s978, 16, %s981, %s969
        $region84: #{retrieval_database_forward.3} parent=27 // pred_fallthru
          _
        // Predicated region
        $region85: #{retrieval_database_forward.3} parent=27 // pred_check
          %p984 = pneg %p581
        $region86: #{retrieval_database_forward.3} parent=27 // pred_check_branch
          %986 = sbr.rel (%p984) target = $region88
        $region87: #{retrieval_database_forward.3} parent=27 // pred_region
          %s987 = sand.u32 %s62, 1
          %s988 = scalar_lea.sflag [#allocation27], %s987
          %s989 = sand.u32 %s571, 1
          %s990 = scalar_lea.vmem [#allocation26], %s989
          %p991 = scmp.lt.s32.totalorder %s70, 0
          %s992 = scalar_select %p991, %s70, 0
          %s994 = ssub.s32 16, 16
          %995 = vsyncadd %s988, %s994
          %s996 = smul.addr %s992, 16
          %s997 = scalar_lea.hbm %s20, %s996
          %s999 = sshll.u32 %s990, 4
          %s1000 = int_to_ptr.vmem [resolvable:$true] %s999
          %1002 = dma.hbm_to_vmem [thread:$0]  %s997, 16, %s1000, %s988
        $region88: #{retrieval_database_forward.3} parent=27 // pred_fallthru
          _
        // Predicated region
        $region89: #{retrieval_database_forward.3} parent=27 // pred_check
          %p1003 = pneg %p611
        $region90: #{retrieval_database_forward.3} parent=27 // pred_check_branch
          %1005 = sbr.rel (%p1003) target = $region92
        $region91: #{retrieval_database_forward.3} parent=27 // pred_region
          %s1006 = sand.u32 %s62, 1
          %s1007 = scalar_lea.sflag [#allocation27], %s1006
          %s1008 = sand.u32 %s601, 1
          %s1009 = scalar_lea.vmem [#allocation28], %s1008
          %p1010 = scmp.lt.s32.totalorder %s70, 0
          %s1011 = scalar_select %p1010, %s70, 0
          %s1013 = ssub.s32 16, 16
          %1014 = vsyncadd %s1007, %s1013
          %s1015 = smul.addr %s1011, 16
          %s1016 = scalar_lea.hbm %s21, %s1015
          %s1018 = sshll.u32 %s1009, 4
          %s1019 = int_to_ptr.vmem [resolvable:$true] %s1018
          %1021 = dma.hbm_to_vmem [thread:$0]  %s1016, 16, %s1019, %s1007
        $region92: #{retrieval_database_forward.3} parent=27 // pred_fallthru
          _
      $region28: #{retrieval_database_forward.3} parent=5 // pred_fallthru
        _
      %p1022 = scmp.le.s32.totalorder 1, %s62
      %p1023 = scmp.lt.s32.totalorder %s62, 5
      %p1024 = pnand %p1022, %p1023
      %p1025 = pneg %p1024
      // Predicated region
      $region93: #{retrieval_database_forward.3} parent=5 // pred_check
        _
      $region94: #{retrieval_database_forward.3} parent=5 // pred_check_branch
        %1027 = sbr.rel (%p1024) target = $region96
      $region95: #{retrieval_database_forward.3} parent=5 // pred_region
        %s1028 = ssub.s32 %s62, 1
        // Predicated region
        $region97: #{retrieval_database_forward.3} parent=95 // pred_check
          %p1029 = pneg %p116
        $region98: #{retrieval_database_forward.3} parent=95 // pred_check_branch
          %1031 = sbr.rel (%p1029) target = $region100
        $region99: #{retrieval_database_forward.3} parent=95 // pred_region
          %1032 = dma.done [#allocation9], 16
        $region100: #{retrieval_database_forward.3} parent=95 // pred_fallthru
          _
        %s1033 = sand.u32 %s67, 1
        %s1034 = scalar_lea.sflag [#allocation12], %s1033
        %s1035 = sand.u32 %s244, 1
        %s1036 = scalar_lea.vmem [#allocation11], %s1035
        // Predicated region
        $region101: #{retrieval_database_forward.3} parent=95 // pred_check
          %p1037 = pneg %p257
        $region102: #{retrieval_database_forward.3} parent=95 // pred_check_branch
          %1039 = sbr.rel (%p1037) target = $region104
        $region103: #{retrieval_database_forward.3} parent=95 // pred_region
          %1040 = dma.done %s1034, 16
        $region104: #{retrieval_database_forward.3} parent=95 // pred_fallthru
          _
        %s1041 = sand.u32 %s67, 1
        %s1042 = scalar_lea.sflag [#allocation12], %s1041
        %s1043 = sand.u32 %s304, 1
        %s1044 = smul.addr %s1043, 3
        %s1045 = scalar_lea.vmem [#allocation13], %s1044
        // Predicated region
        $region105: #{retrieval_database_forward.3} parent=95 // pred_check
          %p1046 = pneg %p317
        $region106: #{retrieval_database_forward.3} parent=95 // pred_check_branch
          %1048 = sbr.rel (%p1046) target = $region108
        $region107: #{retrieval_database_forward.3} parent=95 // pred_region
          %1049 = dma.done %s1042, 48
        $region108: #{retrieval_database_forward.3} parent=95 // pred_fallthru
          _
        %s1050 = sand.u32 %s67, 1
        %s1051 = scalar_lea.sflag [#allocation15], %s1050
        %s1052 = sand.u32 %s334, 1
        %s1053 = smul.addr %s1052, 64
        %s1054 = scalar_lea.vmem [#allocation14], %s1053
        // Predicated region
        $region109: #{retrieval_database_forward.3} parent=95 // pred_check
          %p1055 = pneg %p347
        $region110: #{retrieval_database_forward.3} parent=95 // pred_check_branch
          %1057 = sbr.rel (%p1055) target = $region112
        $region111: #{retrieval_database_forward.3} parent=95 // pred_region
          %1058 = dma.done %s1051, 1024
        $region112: #{retrieval_database_forward.3} parent=95 // pred_fallthru
          _
        %s1059 = sand.u32 %s67, 1
        %s1060 = scalar_lea.sflag [#allocation15], %s1059
        %s1061 = sand.u32 %s364, 1
        %s1062 = scalar_lea.vmem [#allocation16], %s1061
        // Predicated region
        $region113: #{retrieval_database_forward.3} parent=95 // pred_check
          %p1063 = pneg %p377
        $region114: #{retrieval_database_forward.3} parent=95 // pred_check_branch
          %1065 = sbr.rel (%p1063) target = $region116
        $region115: #{retrieval_database_forward.3} parent=95 // pred_region
          %1066 = dma.done %s1060, 16
        $region116: #{retrieval_database_forward.3} parent=95 // pred_fallthru
          _
        %s1067 = sand.u32 %s67, 1
        %s1068 = scalar_lea.sflag [#allocation18], %s1067
        %s1069 = sand.u32 %s394, 1
        %s1070 = scalar_lea.vmem [#allocation17], %s1069
        // Predicated region
        $region117: #{retrieval_database_forward.3} parent=95 // pred_check
          %p1071 = pneg %p407
        $region118: #{retrieval_database_forward.3} parent=95 // pred_check_branch
          %1073 = sbr.rel (%p1071) target = $region120
        $region119: #{retrieval_database_forward.3} parent=95 // pred_region
          %1074 = dma.done %s1068, 16
        $region120: #{retrieval_database_forward.3} parent=95 // pred_fallthru
          _
        %s1075 = sand.u32 %s67, 1
        %s1076 = scalar_lea.sflag [#allocation18], %s1075
        %s1077 = sand.u32 %s424, 1
        %s1078 = scalar_lea.vmem [#allocation19], %s1077
        // Predicated region
        $region121: #{retrieval_database_forward.3} parent=95 // pred_check
          %p1079 = pneg %p437
        $region122: #{retrieval_database_forward.3} parent=95 // pred_check_branch
          %1081 = sbr.rel (%p1079) target = $region124
        $region123: #{retrieval_database_forward.3} parent=95 // pred_region
          %1082 = dma.done %s1076, 16
        $region124: #{retrieval_database_forward.3} parent=95 // pred_fallthru
          _
        %s1083 = sand.u32 %s67, 1
        %s1084 = scalar_lea.sflag [#allocation21], %s1083
        %s1085 = sand.u32 %s454, 1
        %s1086 = smul.addr %s1085, 128
        %s1087 = scalar_lea.vmem [#allocation20], %s1086
        // Predicated region
        $region125: #{retrieval_database_forward.3} parent=95 // pred_check
          %p1088 = pneg %p467
        $region126: #{retrieval_database_forward.3} parent=95 // pred_check_branch
          %1090 = sbr.rel (%p1088) target = $region128
        $region127: #{retrieval_database_forward.3} parent=95 // pred_region
          %1091 = dma.done %s1084, 2048
        $region128: #{retrieval_database_forward.3} parent=95 // pred_fallthru
          _
        %s1092 = sand.u32 %s67, 1
        %s1093 = scalar_lea.sflag [#allocation21], %s1092
        %s1094 = sand.u32 %s484, 1
        %s1095 = smul.addr %s1094, 2
        %s1096 = scalar_lea.vmem [#allocation22], %s1095
        // Predicated region
        $region129: #{retrieval_database_forward.3} parent=95 // pred_check
          %p1097 = pneg %p497
        $region130: #{retrieval_database_forward.3} parent=95 // pred_check_branch
          %1099 = sbr.rel (%p1097) target = $region132
        $region131: #{retrieval_database_forward.3} parent=95 // pred_region
          %1100 = dma.done %s1093, 32
        $region132: #{retrieval_database_forward.3} parent=95 // pred_fallthru
          _
        %s1101 = sand.u32 %s67, 1
        %s1102 = scalar_lea.sflag [#allocation24], %s1101
        %s1103 = sand.u32 %s514, 1
        %s1104 = smul.addr %s1103, 128
        %s1105 = scalar_lea.vmem [#allocation23], %s1104
        // Predicated region
        $region133: #{retrieval_database_forward.3} parent=95 // pred_check
          %p1106 = pneg %p527
        $region134: #{retrieval_database_forward.3} parent=95 // pred_check_branch
          %1108 = sbr.rel (%p1106) target = $region136
        $region135: #{retrieval_database_forward.3} parent=95 // pred_region
          %1109 = dma.done %s1102, 2048
        $region136: #{retrieval_database_forward.3} parent=95 // pred_fallthru
          _
        %s1110 = sand.u32 %s67, 1
        %s1111 = scalar_lea.sflag [#allocation24], %s1110
        %s1112 = sand.u32 %s544, 1
        %s1113 = scalar_lea.vmem [#allocation25], %s1112
        // Predicated region
        $region137: #{retrieval_database_forward.3} parent=95 // pred_check
          %p1114 = pneg %p557
        $region138: #{retrieval_database_forward.3} parent=95 // pred_check_branch
          %1116 = sbr.rel (%p1114) target = $region140
        $region139: #{retrieval_database_forward.3} parent=95 // pred_region
          %1117 = dma.done %s1111, 16
        $region140: #{retrieval_database_forward.3} parent=95 // pred_fallthru
          _
        %s1118 = sand.u32 %s67, 1
        %s1119 = scalar_lea.sflag [#allocation27], %s1118
        %s1120 = sand.u32 %s574, 1
        %s1121 = scalar_lea.vmem [#allocation26], %s1120
        // Predicated region
        $region141: #{retrieval_database_forward.3} parent=95 // pred_check
          %p1122 = pneg %p587
        $region142: #{retrieval_database_forward.3} parent=95 // pred_check_branch
          %1124 = sbr.rel (%p1122) target = $region144
        $region143: #{retrieval_database_forward.3} parent=95 // pred_region
          %1125 = dma.done %s1119, 16
        $region144: #{retrieval_database_forward.3} parent=95 // pred_fallthru
          _
        %s1126 = sand.u32 %s67, 1
        %s1127 = scalar_lea.sflag [#allocation27], %s1126
        %s1128 = sand.u32 %s604, 1
        %s1129 = scalar_lea.vmem [#allocation28], %s1128
        // Predicated region
        $region145: #{retrieval_database_forward.3} parent=95 // pred_check
          %p1130 = pneg %p617
        $region146: #{retrieval_database_forward.3} parent=95 // pred_check_branch
          %1132 = sbr.rel (%p1130) target = $region148
        $region147: #{retrieval_database_forward.3} parent=95 // pred_region
          %1133 = dma.done %s1127, 16
        $region148: #{retrieval_database_forward.3} parent=95 // pred_fallthru
          _
        %p1134 = pneg %p95
        %p1135 = pneg %p92
        %p1136 = pneg %p116
        %p1137 = pneg %p113
        %p1138 = pneg %p137
        %p1139 = pneg %p134
        %p1140 = scmp.lt.s32.totalorder %s72, 1
        %s1141 = scalar_select %p1140, %s72, 1
        %p1142 = scmp.lt.s32.totalorder %s1141, 1
        %s1143 = scalar_select %p1142, %s1141, 1
        %s1144 = smul.addr %s1143, 32
        %s1145 = smul.addr %s1144, 4
        %s1146 = scalar_lea.vmem %s6, %s1145
        %p1147 = pneg %p167
        %p1148 = pneg %p164
        %p1149 = scmp.lt.s32.totalorder %s72, 1
        %s1150 = scalar_select %p1149, %s72, 1
        %p1151 = scmp.lt.s32.totalorder %s1150, 1
        %s1152 = scalar_select %p1151, %s1150, 1
        %s1153 = smul.addr %s1152, 2
        %s1154 = scalar_lea.vmem %s7, %s1153
        %p1155 = pneg %p197
        %p1156 = pneg %p194
        %p1157 = scmp.lt.s32.totalorder %s72, 1
        %s1158 = scalar_select %p1157, %s72, 1
        %p1159 = scmp.lt.s32.totalorder %s1158, 1
        %s1160 = scalar_select %p1159, %s1158, 1
        %s1161 = smul.addr %s1160, 32
        %s1162 = smul.addr %s1161, 4
        %s1163 = scalar_lea.vmem %s8, %s1162
        %p1164 = pneg %p227
        %p1165 = pneg %p224
        %s1166 = sand.u32 %s67, 1
        %s1167 = scalar_lea.sflag [#allocation12], %s1166
        %s1168 = sand.u32 %s244, 1
        %s1169 = scalar_lea.vmem [#allocation11], %s1168
        %p1170 = pneg %p257
        %p1171 = pneg %p254
        %p1172 = scmp.lt.s32.totalorder %s72, 0
        %s1173 = scalar_select %p1172, %s72, 0
        %p1174 = scmp.lt.s32.totalorder %s1173, 0
        %s1175 = scalar_select %p1174, %s1173, 0
        %s1176 = smul.addr %s1175, 48
        %s1177 = smul.addr %s1176, 4
        %s1178 = scalar_lea.vmem %s10, %s1177
        %p1179 = pneg %p287
        %p1180 = pneg %p284
        %s1181 = sand.u32 %s67, 1
        %s1182 = scalar_lea.sflag [#allocation12], %s1181
        %s1183 = sand.u32 %s304, 1
        %s1184 = smul.addr %s1183, 3
        %s1185 = scalar_lea.vmem [#allocation13], %s1184
        %p1186 = pneg %p317
        %p1187 = pneg %p314
        %s1188 = sand.u32 %s67, 1
        %s1189 = scalar_lea.sflag [#allocation15], %s1188
        %s1190 = sand.u32 %s334, 1
        %s1191 = smul.addr %s1190, 64
        %s1192 = scalar_lea.vmem [#allocation14], %s1191
        %p1193 = pneg %p347
        %p1194 = pneg %p344
        %s1195 = sand.u32 %s67, 1
        %s1196 = scalar_lea.sflag [#allocation15], %s1195
        %s1197 = sand.u32 %s364, 1
        %s1198 = scalar_lea.vmem [#allocation16], %s1197
        %p1199 = pneg %p377
        %p1200 = pneg %p374
        %s1201 = sand.u32 %s67, 1
        %s1202 = scalar_lea.sflag [#allocation18], %s1201
        %s1203 = sand.u32 %s394, 1
        %s1204 = scalar_lea.vmem [#allocation17], %s1203
        %p1205 = pneg %p407
        %p1206 = pneg %p404
        %s1207 = sand.u32 %s67, 1
        %s1208 = scalar_lea.sflag [#allocation18], %s1207
        %s1209 = sand.u32 %s424, 1
        %s1210 = scalar_lea.vmem [#allocation19], %s1209
        %p1211 = pneg %p437
        %p1212 = pneg %p434
        %s1213 = sand.u32 %s67, 1
        %s1214 = scalar_lea.sflag [#allocation21], %s1213
        %s1215 = sand.u32 %s454, 1
        %s1216 = smul.addr %s1215, 128
        %s1217 = scalar_lea.vmem [#allocation20], %s1216
        %p1218 = pneg %p467
        %p1219 = pneg %p464
        %s1220 = sand.u32 %s67, 1
        %s1221 = scalar_lea.sflag [#allocation21], %s1220
        %s1222 = sand.u32 %s484, 1
        %s1223 = smul.addr %s1222, 2
        %s1224 = scalar_lea.vmem [#allocation22], %s1223
        %p1225 = pneg %p497
        %p1226 = pneg %p494
        %s1227 = sand.u32 %s67, 1
        %s1228 = scalar_lea.sflag [#allocation24], %s1227
        %s1229 = sand.u32 %s514, 1
        %s1230 = smul.addr %s1229, 128
        %s1231 = scalar_lea.vmem [#allocation23], %s1230
        %p1232 = pneg %p527
        %p1233 = pneg %p524
        %s1234 = sand.u32 %s67, 1
        %s1235 = scalar_lea.sflag [#allocation24], %s1234
        %s1236 = sand.u32 %s544, 1
        %s1237 = scalar_lea.vmem [#allocation25], %s1236
        %p1238 = pneg %p557
        %p1239 = pneg %p554
        %s1240 = sand.u32 %s67, 1
        %s1241 = scalar_lea.sflag [#allocation27], %s1240
        %s1242 = sand.u32 %s574, 1
        %s1243 = scalar_lea.vmem [#allocation26], %s1242
        %p1244 = pneg %p587
        %p1245 = pneg %p584
        %s1246 = sand.u32 %s67, 1
        %s1247 = scalar_lea.sflag [#allocation27], %s1246
        %s1248 = sand.u32 %s604, 1
        %s1249 = scalar_lea.vmem [#allocation28], %s1248
        %p1250 = pneg %p617
        %p1251 = pneg %p614
        %p1252 = pneg %p643
        %p1253 = pneg %p640
        %s1254 = sand.u32 %s630, 1
        %s1255 = scalar_lea.sflag [#allocation10], %s1254
        %s1256 = sand.u32 %s630, 1
        %s1257 = smul.addr %s1256, 32
        %s1258 = scalar_lea.vmem [#allocation29], %s1257
        %p1259 = pneg %p669
        %p1260 = pneg %p666
        %s1261 = sand.u32 %s67, 1
        %s1262 = scalar_lea.sflag [#allocation31], %s1261
        %s1263 = sand.u32 %s656, 1
        %s1264 = smul.addr %s1263, 8
        %s1265 = scalar_lea.vmem [#allocation30], %s1264
        %p1266 = pneg %p695
        %p1267 = pneg %p692
        %s1268 = sand.u32 %s67, 1
        %s1269 = scalar_lea.sflag [#allocation31], %s1268
        %s1270 = sand.u32 %s682, 1
        %s1271 = smul.addr %s1270, 2
        %s1272 = scalar_lea.vmem [#allocation32], %s1271
        %p1273 = scmp.lt.s32.totalorder %s72, 1
        %s1274 = scalar_select %p1273, %s72, 1
        %p1275 = scmp.lt.s32.totalorder %s1274, 1
        %s1276 = scalar_select %p1275, %s1274, 1
        %s1277 = smul.addr %s1276, 32
        %s1278 = smul.addr %s1277, 4
        %s1279 = scalar_lea.vmem %s6, %s1278
        %p1280 = scmp.lt.s32.totalorder %s72, 1
        %s1281 = scalar_select %p1280, %s72, 1
        %p1282 = scmp.lt.s32.totalorder %s72, 1
        %s1283 = scalar_select %p1282, %s72, 1
        %p1284 = scmp.lt.s32.totalorder %s1283, 1
        %s1285 = scalar_select %p1284, %s1283, 1
        %s1286 = smul.addr %s1285, 2
        %s1287 = scalar_lea.vmem %s7, %s1286
        %p1288 = scmp.lt.s32.totalorder %s72, 1
        %s1289 = scalar_select %p1288, %s72, 1
        %p1290 = scmp.lt.s32.totalorder %s72, 1
        %s1291 = scalar_select %p1290, %s72, 1
        %p1292 = scmp.lt.s32.totalorder %s1291, 1
        %s1293 = scalar_select %p1292, %s1291, 1
        %s1294 = smul.addr %s1293, 32
        %s1295 = smul.addr %s1294, 4
        %s1296 = scalar_lea.vmem %s8, %s1295
        %p1297 = scmp.lt.s32.totalorder %s72, 1
        %s1298 = scalar_select %p1297, %s72, 1
        %p1299 = scmp.lt.s32.totalorder %s72, 1
        %s1300 = scalar_select %p1299, %s72, 1
        %p1301 = scmp.lt.s32.totalorder %s72, 0
        %s1302 = scalar_select %p1301, %s72, 0
        %p1303 = scmp.lt.s32.totalorder %s1302, 0
        %s1304 = scalar_select %p1303, %s1302, 0
        %s1305 = smul.addr %s1304, 48
        %s1306 = smul.addr %s1305, 4
        %s1307 = scalar_lea.vmem %s10, %s1306
        %p1308 = scmp.lt.s32.totalorder %s72, 0
        %s1309 = scalar_select %p1308, %s72, 0
        %p1310 = scmp.lt.s32.totalorder %s72, 0
        %s1311 = scalar_select %p1310, %s72, 0
        %p1312 = scmp.lt.s32.totalorder %s72, 0
        %s1313 = scalar_select %p1312, %s72, 0
        %p1314 = scmp.lt.s32.totalorder %s72, 0
        %s1315 = scalar_select %p1314, %s72, 0
        %p1316 = scmp.lt.s32.totalorder %s72, 0
        %s1317 = scalar_select %p1316, %s72, 0
        %p1318 = scmp.lt.s32.totalorder %s72, 0
        %s1319 = scalar_select %p1318, %s72, 0
        %p1320 = scmp.lt.s32.totalorder %s72, 0
        %s1321 = scalar_select %p1320, %s72, 0
        %p1322 = scmp.lt.s32.totalorder %s72, 0
        %s1323 = scalar_select %p1322, %s72, 0
        %p1324 = scmp.lt.s32.totalorder %s72, 0
        %s1325 = scalar_select %p1324, %s72, 0
        %p1326 = scmp.lt.s32.totalorder %s72, 0
        %s1327 = scalar_select %p1326, %s72, 0
        %p1328 = scmp.lt.s32.totalorder %s72, 0
        %s1329 = scalar_select %p1328, %s72, 0
        %p1330 = scmp.lt.s32.totalorder %s72, 0
        %s1331 = scalar_select %p1330, %s72, 0
        %s1332 = smul.u32 2, %s71
        %s1333 = smul.u32 2, %s71
        %s1334 = smul.u32 2, %s71
        %p1336 = scmp.eq.s32.totalorder %s72, 0
        // Predicated region
        $region149: #{retrieval_database_forward.3} parent=95 // pred_check
          %p1337 = pneg %p1336
        $region150: #{retrieval_database_forward.3} parent=95 // pred_check_branch
          %1339 = sbr.rel (%p1337) target = $region152
        $region151: #{retrieval_database_forward.3} parent=95 // pred_region
          %s1340 = smul.u32 %s71, 2
          %s1341 = sld [smem:[#allocation7 + %s1340]]
          %s1342 = smul.u32 %s1341, 16
          %s1343 = scalar_lea.vmem %s1, %s1342
          %p1345 = scmp.lt.u32.totalorder 16, 8
          %p1346 = pneg %p1345
          // Predicated region
          $region153: #{retrieval_database_forward.3} parent=151 // pred_check
            _
          $region154: #{retrieval_database_forward.3} parent=151 // pred_check_branch
            %1348 = sbr.rel (%p1345) target = $region156
          $region155: #{retrieval_database_forward.3} parent=151 // pred_region
            %s1363 = sand.u32 16, 7
            %p1364 = scmp.eq.s32.totalorder %s1363, 0
            // Predicated region
            $region168: #{retrieval_database_forward.3} parent=155 // pred_check
              %p1365 = pneg %p1364
            $region169: #{retrieval_database_forward.3} parent=155 // pred_check_branch
              %1367 = sbr.rel (%p1365) target = $region171
            $region170: #{retrieval_database_forward.3} parent=155 // pred_region
              loop: start=0, step=1, limit=1
              $region172: #{retrieval_database_forward.3} parent=170 // loop_pre_header
                _
              $region173: #{retrieval_database_forward.3} parent=170 // loop_header
                %s1369 = sphi 0, %s1373
                %p1370 = scmp.ge.s32.totalorder %s1369, 1
                %s1374 = sphi %s1343, %s1343
                %s1375 = sphi [#allocation2], [#allocation2]
              $region174: #{retrieval_database_forward.3} parent=170 // loop_header_branch
                %1372 = sbr.rel (%p1370) target = $region178
              $region175: #{retrieval_database_forward.3} parent=170 // loop_body
                %v1376 = vld [vmem:[%s1374] sm:$0xff]
                %1377 = vst [vmem:[%s1375] sm:$0xff] %v1376
                %v1378 = vld [vmem:[%s1374 + $0x8] sm:$0xff]
                %1379 = vst [vmem:[%s1375 + $0x8] sm:$0xff] %v1378
              $region176: #{retrieval_database_forward.3} parent=170 // loop_footer
                %s1373 = sadd.s32 1, %s1369
              $region177: #{retrieval_database_forward.3} parent=170 // loop_footer_branch
                %1368 = sbr.rel target = $region173
              $region178: #{retrieval_database_forward.3} parent=170 // loop_exit
                _
            $region171: #{retrieval_database_forward.3} parent=155 // pred_fallthru
              _
            %p1380 = pneg %p1364
            // Predicated region
            $region179: #{retrieval_database_forward.3} parent=155 // pred_check
              _
            $region180: #{retrieval_database_forward.3} parent=155 // pred_check_branch
              %1382 = sbr.rel (%p1364) target = $region182
            $region181: #{retrieval_database_forward.3} parent=155 // pred_region
              %s1383 = sand.u32 16, 7
            $region182: #{retrieval_database_forward.3} parent=155 // pred_fallthru
              _
          $region156: #{retrieval_database_forward.3} parent=151 // pred_fallthru
            _
          // Predicated region
          $region157: #{retrieval_database_forward.3} parent=151 // pred_check
            %p1349 = pneg %p1345
          $region158: #{retrieval_database_forward.3} parent=151 // pred_check_branch
            %1351 = sbr.rel (%p1349) target = $region160
          $region159: #{retrieval_database_forward.3} parent=151 // pred_region
            %s1352 = sshllo.u32 0, 16
            loop: start=0, step=1, limit=1
            $region161: #{retrieval_database_forward.3} parent=159 // loop_pre_header
              _
            $region162: #{retrieval_database_forward.3} parent=159 // loop_header
              %s1354 = sphi 0, %s1358
              %p1355 = scmp.ge.s32.totalorder %s1354, 1
              %s1359 = sphi %s1343, %s1343
              %s1360 = sphi [#allocation2], [#allocation2]
            $region163: #{retrieval_database_forward.3} parent=159 // loop_header_branch
              %1357 = sbr.rel (%p1355) target = $region167
            $region164: #{retrieval_database_forward.3} parent=159 // loop_body
              %v1361 = vld [vmem:[%s1359] sm:%s1352]
              %1362 = vst [vmem:[%s1360] sm:%s1352] %v1361
            $region165: #{retrieval_database_forward.3} parent=159 // loop_footer
              %s1358 = sadd.s32 1, %s1354
            $region166: #{retrieval_database_forward.3} parent=159 // loop_footer_branch
              %1353 = sbr.rel target = $region162
            $region167: #{retrieval_database_forward.3} parent=159 // loop_exit
              _
          $region160: #{retrieval_database_forward.3} parent=151 // pred_fallthru
            _
          // Predicated region
          $region183: #{retrieval_database_forward.3} parent=151 // pred_check
            _
          $region184: #{retrieval_database_forward.3} parent=151 // pred_check_branch
            %1386 = sbr.rel (0) target = $region186
          $region185: #{retrieval_database_forward.3} parent=151 // pred_region
            %1387 = vsyncadd [#allocation5], 256
          $region186: #{retrieval_database_forward.3} parent=151 // pred_fallthru
            _
          %s1388 = smul.u32 %s1341, 8
          %s1389 = scalar_lea.vmem %s2, %s1388
          %s1390 = scalar_lea.sflag [#allocation5], 2
          %p1392 = scmp.lt.u32.totalorder 8, 8
          %p1393 = pneg %p1392
          // Predicated region
          $region187: #{retrieval_database_forward.3} parent=151 // pred_check
            _
          $region188: #{retrieval_database_forward.3} parent=151 // pred_check_branch
            %1395 = sbr.rel (%p1392) target = $region190
          $region189: #{retrieval_database_forward.3} parent=151 // pred_region
            %s1410 = sand.u32 8, 7
            %p1411 = scmp.eq.s32.totalorder %s1410, 0
            // Predicated region
            $region202: #{retrieval_database_forward.3} parent=189 // pred_check
              %p1412 = pneg %p1411
            $region203: #{retrieval_database_forward.3} parent=189 // pred_check_branch
              %1414 = sbr.rel (%p1412) target = $region205
            $region204: #{retrieval_database_forward.3} parent=189 // pred_region
              loop: start=0, step=1, limit=1
              $region206: #{retrieval_database_forward.3} parent=204 // loop_pre_header
                _
              $region207: #{retrieval_database_forward.3} parent=204 // loop_header
                %s1416 = sphi 0, %s1420
                %p1417 = scmp.ge.s32.totalorder %s1416, 1
                %s1421 = sphi %s1389, %s1389
                %s1422 = sphi [#allocation4], [#allocation4]
              $region208: #{retrieval_database_forward.3} parent=204 // loop_header_branch
                %1419 = sbr.rel (%p1417) target = $region212
              $region209: #{retrieval_database_forward.3} parent=204 // loop_body
                %v1423 = vld [vmem:[%s1421] sm:$0xff]
                %1424 = vst [vmem:[%s1422] sm:$0xff] %v1423
              $region210: #{retrieval_database_forward.3} parent=204 // loop_footer
                %s1420 = sadd.s32 1, %s1416
              $region211: #{retrieval_database_forward.3} parent=204 // loop_footer_branch
                %1415 = sbr.rel target = $region207
              $region212: #{retrieval_database_forward.3} parent=204 // loop_exit
                _
            $region205: #{retrieval_database_forward.3} parent=189 // pred_fallthru
              _
            %p1425 = pneg %p1411
            // Predicated region
            $region213: #{retrieval_database_forward.3} parent=189 // pred_check
              _
            $region214: #{retrieval_database_forward.3} parent=189 // pred_check_branch
              %1427 = sbr.rel (%p1411) target = $region216
            $region215: #{retrieval_database_forward.3} parent=189 // pred_region
              %s1428 = sand.u32 8, 7
            $region216: #{retrieval_database_forward.3} parent=189 // pred_fallthru
              _
          $region190: #{retrieval_database_forward.3} parent=151 // pred_fallthru
            _
          // Predicated region
          $region191: #{retrieval_database_forward.3} parent=151 // pred_check
            %p1396 = pneg %p1392
          $region192: #{retrieval_database_forward.3} parent=151 // pred_check_branch
            %1398 = sbr.rel (%p1396) target = $region194
          $region193: #{retrieval_database_forward.3} parent=151 // pred_region
            %s1399 = sshllo.u32 0, 8
            loop: start=0, step=1, limit=1
            $region195: #{retrieval_database_forward.3} parent=193 // loop_pre_header
              _
            $region196: #{retrieval_database_forward.3} parent=193 // loop_header
              %s1401 = sphi 0, %s1405
              %p1402 = scmp.ge.s32.totalorder %s1401, 1
              %s1406 = sphi %s1389, %s1389
              %s1407 = sphi [#allocation4], [#allocation4]
            $region197: #{retrieval_database_forward.3} parent=193 // loop_header_branch
              %1404 = sbr.rel (%p1402) target = $region201
            $region198: #{retrieval_database_forward.3} parent=193 // loop_body
              %v1408 = vld [vmem:[%s1406] sm:%s1399]
              %1409 = vst [vmem:[%s1407] sm:%s1399] %v1408
            $region199: #{retrieval_database_forward.3} parent=193 // loop_footer
              %s1405 = sadd.s32 1, %s1401
            $region200: #{retrieval_database_forward.3} parent=193 // loop_footer_branch
              %1400 = sbr.rel target = $region196
            $region201: #{retrieval_database_forward.3} parent=193 // loop_exit
              _
          $region194: #{retrieval_database_forward.3} parent=151 // pred_fallthru
            _
          // Predicated region
          $region217: #{retrieval_database_forward.3} parent=151 // pred_check
            _
          $region218: #{retrieval_database_forward.3} parent=151 // pred_check_branch
            %1431 = sbr.rel (0) target = $region220
          $region219: #{retrieval_database_forward.3} parent=151 // pred_region
            %1432 = vsyncadd %s1390, 128
          $region220: #{retrieval_database_forward.3} parent=151 // pred_fallthru
            _
          %s1433 = sadd.s32 %s1340, 1
          %s1434 = sld [smem:[#allocation7 + %s1433]]
          %s1435 = smul.u32 %s1434, 16
          %s1436 = scalar_lea.vmem %s1, %s1435
          %s1437 = scalar_lea.vmem [#allocation2], 16
          %s1438 = scalar_lea.sflag [#allocation5], 1
          %p1440 = scmp.lt.u32.totalorder 16, 8
          %p1441 = pneg %p1440
          // Predicated region
          $region221: #{retrieval_database_forward.3} parent=151 // pred_check
            _
          $region222: #{retrieval_database_forward.3} parent=151 // pred_check_branch
            %1443 = sbr.rel (%p1440) target = $region224
          $region223: #{retrieval_database_forward.3} parent=151 // pred_region
            %s1458 = sand.u32 16, 7
            %p1459 = scmp.eq.s32.totalorder %s1458, 0
            // Predicated region
            $region236: #{retrieval_database_forward.3} parent=223 // pred_check
              %p1460 = pneg %p1459
            $region237: #{retrieval_database_forward.3} parent=223 // pred_check_branch
              %1462 = sbr.rel (%p1460) target = $region239
            $region238: #{retrieval_database_forward.3} parent=223 // pred_region
              loop: start=0, step=1, limit=1
              $region240: #{retrieval_database_forward.3} parent=238 // loop_pre_header
                _
              $region241: #{retrieval_database_forward.3} parent=238 // loop_header
                %s1464 = sphi 0, %s1468
                %p1465 = scmp.ge.s32.totalorder %s1464, 1
                %s1469 = sphi %s1436, %s1436
                %s1470 = sphi %s1437, %s1437
              $region242: #{retrieval_database_forward.3} parent=238 // loop_header_branch
                %1467 = sbr.rel (%p1465) target = $region246
              $region243: #{retrieval_database_forward.3} parent=238 // loop_body
                %v1471 = vld [vmem:[%s1469] sm:$0xff]
                %1472 = vst [vmem:[%s1470] sm:$0xff] %v1471
                %v1473 = vld [vmem:[%s1469 + $0x8] sm:$0xff]
                %1474 = vst [vmem:[%s1470 + $0x8] sm:$0xff] %v1473
              $region244: #{retrieval_database_forward.3} parent=238 // loop_footer
                %s1468 = sadd.s32 1, %s1464
              $region245: #{retrieval_database_forward.3} parent=238 // loop_footer_branch
                %1463 = sbr.rel target = $region241
              $region246: #{retrieval_database_forward.3} parent=238 // loop_exit
                _
            $region239: #{retrieval_database_forward.3} parent=223 // pred_fallthru
              _
            %p1475 = pneg %p1459
            // Predicated region
            $region247: #{retrieval_database_forward.3} parent=223 // pred_check
              _
            $region248: #{retrieval_database_forward.3} parent=223 // pred_check_branch
              %1477 = sbr.rel (%p1459) target = $region250
            $region249: #{retrieval_database_forward.3} parent=223 // pred_region
              %s1478 = sand.u32 16, 7
            $region250: #{retrieval_database_forward.3} parent=223 // pred_fallthru
              _
          $region224: #{retrieval_database_forward.3} parent=151 // pred_fallthru
            _
          // Predicated region
          $region225: #{retrieval_database_forward.3} parent=151 // pred_check
            %p1444 = pneg %p1440
          $region226: #{retrieval_database_forward.3} parent=151 // pred_check_branch
            %1446 = sbr.rel (%p1444) target = $region228
          $region227: #{retrieval_database_forward.3} parent=151 // pred_region
            %s1447 = sshllo.u32 0, 16
            loop: start=0, step=1, limit=1
            $region229: #{retrieval_database_forward.3} parent=227 // loop_pre_header
              _
            $region230: #{retrieval_database_forward.3} parent=227 // loop_header
              %s1449 = sphi 0, %s1453
              %p1450 = scmp.ge.s32.totalorder %s1449, 1
              %s1454 = sphi %s1436, %s1436
              %s1455 = sphi %s1437, %s1437
            $region231: #{retrieval_database_forward.3} parent=227 // loop_header_branch
              %1452 = sbr.rel (%p1450) target = $region235
            $region232: #{retrieval_database_forward.3} parent=227 // loop_body
              %v1456 = vld [vmem:[%s1454] sm:%s1447]
              %1457 = vst [vmem:[%s1455] sm:%s1447] %v1456
            $region233: #{retrieval_database_forward.3} parent=227 // loop_footer
              %s1453 = sadd.s32 1, %s1449
            $region234: #{retrieval_database_forward.3} parent=227 // loop_footer_branch
              %1448 = sbr.rel target = $region230
            $region235: #{retrieval_database_forward.3} parent=227 // loop_exit
              _
          $region228: #{retrieval_database_forward.3} parent=151 // pred_fallthru
            _
          // Predicated region
          $region251: #{retrieval_database_forward.3} parent=151 // pred_check
            _
          $region252: #{retrieval_database_forward.3} parent=151 // pred_check_branch
            %1481 = sbr.rel (0) target = $region254
          $region253: #{retrieval_database_forward.3} parent=151 // pred_region
            %1482 = vsyncadd %s1438, 256
          $region254: #{retrieval_database_forward.3} parent=151 // pred_fallthru
            _
          %s1483 = smul.u32 %s1434, 8
          %s1484 = scalar_lea.vmem %s2, %s1483
          %s1485 = scalar_lea.vmem [#allocation4], 8
          %s1486 = scalar_lea.sflag [#allocation5], 3
          %p1488 = scmp.lt.u32.totalorder 8, 8
          %p1489 = pneg %p1488
          // Predicated region
          $region255: #{retrieval_database_forward.3} parent=151 // pred_check
            _
          $region256: #{retrieval_database_forward.3} parent=151 // pred_check_branch
            %1491 = sbr.rel (%p1488) target = $region258
          $region257: #{retrieval_database_forward.3} parent=151 // pred_region
            %s1506 = sand.u32 8, 7
            %p1507 = scmp.eq.s32.totalorder %s1506, 0
            // Predicated region
            $region270: #{retrieval_database_forward.3} parent=257 // pred_check
              %p1508 = pneg %p1507
            $region271: #{retrieval_database_forward.3} parent=257 // pred_check_branch
              %1510 = sbr.rel (%p1508) target = $region273
            $region272: #{retrieval_database_forward.3} parent=257 // pred_region
              loop: start=0, step=1, limit=1
              $region274: #{retrieval_database_forward.3} parent=272 // loop_pre_header
                _
              $region275: #{retrieval_database_forward.3} parent=272 // loop_header
                %s1512 = sphi 0, %s1516
                %p1513 = scmp.ge.s32.totalorder %s1512, 1
                %s1517 = sphi %s1484, %s1484
                %s1518 = sphi %s1485, %s1485
              $region276: #{retrieval_database_forward.3} parent=272 // loop_header_branch
                %1515 = sbr.rel (%p1513) target = $region280
              $region277: #{retrieval_database_forward.3} parent=272 // loop_body
                %v1519 = vld [vmem:[%s1517] sm:$0xff]
                %1520 = vst [vmem:[%s1518] sm:$0xff] %v1519
              $region278: #{retrieval_database_forward.3} parent=272 // loop_footer
                %s1516 = sadd.s32 1, %s1512
              $region279: #{retrieval_database_forward.3} parent=272 // loop_footer_branch
                %1511 = sbr.rel target = $region275
              $region280: #{retrieval_database_forward.3} parent=272 // loop_exit
                _
            $region273: #{retrieval_database_forward.3} parent=257 // pred_fallthru
              _
            %p1521 = pneg %p1507
            // Predicated region
            $region281: #{retrieval_database_forward.3} parent=257 // pred_check
              _
            $region282: #{retrieval_database_forward.3} parent=257 // pred_check_branch
              %1523 = sbr.rel (%p1507) target = $region284
            $region283: #{retrieval_database_forward.3} parent=257 // pred_region
              %s1524 = sand.u32 8, 7
            $region284: #{retrieval_database_forward.3} parent=257 // pred_fallthru
              _
          $region258: #{retrieval_database_forward.3} parent=151 // pred_fallthru
            _
          // Predicated region
          $region259: #{retrieval_database_forward.3} parent=151 // pred_check
            %p1492 = pneg %p1488
          $region260: #{retrieval_database_forward.3} parent=151 // pred_check_branch
            %1494 = sbr.rel (%p1492) target = $region262
          $region261: #{retrieval_database_forward.3} parent=151 // pred_region
            %s1495 = sshllo.u32 0, 8
            loop: start=0, step=1, limit=1
            $region263: #{retrieval_database_forward.3} parent=261 // loop_pre_header
              _
            $region264: #{retrieval_database_forward.3} parent=261 // loop_header
              %s1497 = sphi 0, %s1501
              %p1498 = scmp.ge.s32.totalorder %s1497, 1
              %s1502 = sphi %s1484, %s1484
              %s1503 = sphi %s1485, %s1485
            $region265: #{retrieval_database_forward.3} parent=261 // loop_header_branch
              %1500 = sbr.rel (%p1498) target = $region269
            $region266: #{retrieval_database_forward.3} parent=261 // loop_body
              %v1504 = vld [vmem:[%s1502] sm:%s1495]
              %1505 = vst [vmem:[%s1503] sm:%s1495] %v1504
            $region267: #{retrieval_database_forward.3} parent=261 // loop_footer
              %s1501 = sadd.s32 1, %s1497
            $region268: #{retrieval_database_forward.3} parent=261 // loop_footer_branch
              %1496 = sbr.rel target = $region264
            $region269: #{retrieval_database_forward.3} parent=261 // loop_exit
              _
          $region262: #{retrieval_database_forward.3} parent=151 // pred_fallthru
            _
          // Predicated region
          $region285: #{retrieval_database_forward.3} parent=151 // pred_check
            _
          $region286: #{retrieval_database_forward.3} parent=151 // pred_check_branch
            %1527 = sbr.rel (0) target = $region288
          $region287: #{retrieval_database_forward.3} parent=151 // pred_region
            %1528 = vsyncadd %s1486, 128
          $region288: #{retrieval_database_forward.3} parent=151 // pred_fallthru
            _
          %s1529 = smul.u32 16, 1
          %s1530 = sshll.u32 %s1529, 4
          %1531 = dma.done [#allocation5], %s1530
          %s1532 = sshll.u32 %s1529, 4
          %1533 = dma.done %s1438, %s1532
          %v1534 = vld [vmem:[#allocation2] sm:$0xff]
          %v1535 = vld [vmem:[#allocation2 + $0x8] sm:$0xff]
          %v1536 = vld [vmem:[#allocation2 + $0x10] sm:$0xff]
          %v1537 = vld [vmem:[#allocation2 + $0x18] sm:$0xff]
          %vm1538 = vcmask 130048
          %1539 = vst.msk [vmem:[%s1258] sm:$0xff] %vm1538, %v1534
          %1540 = vst.msk [vmem:[%s1258 + $0x8] sm:$0xff] %vm1538, %v1535
          %1541 = vst.msk [vmem:[%s1258 + $0x10] sm:$0xff] %vm1538, %v1536
          %1542 = vst.msk [vmem:[%s1258 + $0x18] sm:$0xff] %vm1538, %v1537
          %v1543 = vld [vmem:[#allocation2] sm:$0xff]
          %v1544 = vld [vmem:[#allocation2 + $0x8] sm:$0xff]
          %v1545 = vld [vmem:[#allocation2 + $0x10] sm:$0xff]
          %v1546 = vld [vmem:[#allocation2 + $0x18] sm:$0xff]
          %v1547 = vpack.c.bf16 %v1544, %v1543
          %v1548 = vpack.c.bf16 %v1546, %v1545
          %v1549 = vld [vmem:[%s3] sm:$0xf]
          %v1550 = vld [vmem:[%s3 + $0x4] sm:$0xf]
          %v1551 = vld [vmem:[#allocation8] sm:$0x1]
          %v1553 = vlaneseq
          %v1554 = vshrl.u32 %v1553, 7
          %v1555 = vsub.s32 0, %v1554
          %v1556 = vrot.slane %v1551, %v1555
          %v1560 = vunpack.c.l.b16 %v1549
          %v1561 = vunpack.c.l.b16 %v1550
          %v1562 = vpack.c.b16 %v1561, %v1560
          %v1565 = vsel %vm1538, %v1547, 0
          %v1568 = vsel %vm1538, %v1548, 0
          %1570 = vmatprep.subr.bf16.mxu0 0
          %1571 = vmatpush1.bf16.msra.mxu0 %v1562
          %1572 = vmatprep.subr.bf16.mxu0 0
          %1573 = vmatpush1.bf16.msra.mxu0 0
          %1574 = vmatprep.subr.bf16.mxu0 0
          %1575 = vmatpush1.bf16.msra.mxu0 0
          %1576 = vmatprep.subr.bf16.mxu0 0
          %1577 = vmatpush1.bf16.msra.mxu0 0
          %1578 = vmatprep.subr.bf16.mxu0 0
          %1579 = vmatpush1.bf16.msra.mxu0 0
          %1580 = vmatprep.subr.bf16.mxu0 0
          %1581 = vmatpush1.bf16.msra.mxu0 0
          %1582 = vmatprep.subr.bf16.mxu0 0
          %1583 = vmatpush1.bf16.msra.mxu0 0
          %1584 = vmatprep.subr.bf16.mxu0 0
          %1585 = vmatpush1.bf16.msra.mxu0 0
          %1586 = vmatprep.subr.bf16.mxu0 0
          %1587 = vmatpush1.bf16.msra.mxu0 0
          %1588 = vmatprep.subr.bf16.mxu0 0
          %1589 = vmatpush1.bf16.msra.mxu0 0
          %1590 = vmatprep.subr.bf16.mxu0 0
          %1591 = vmatpush1.bf16.msra.mxu0 0
          %1592 = vmatprep.subr.bf16.mxu0 0
          %1593 = vmatpush1.bf16.msra.mxu0 0
          %1594 = vmatprep.subr.bf16.mxu0 0
          %1595 = vmatpush1.bf16.msra.mxu0 0
          %1596 = vmatprep.subr.bf16.mxu0 0
          %1597 = vmatpush1.bf16.msra.mxu0 0
          %1598 = vmatprep.subr.bf16.mxu0 0
          %1599 = vmatpush1.bf16.msra.mxu0 0
          %1600 = vmatprep.subr.bf16.mxu0 0
          %1601 = vmatpush1.bf16.msra.mxu0 0
          %1602 = vmatprep.mubr.bf16.mxu0 0
          %1603 = vmatmul.mubr.bf16.gmra.mrb[0].mxu0 %v1565
          %v1604 = vpop.f32.mrb[0].mxu0
          %v1605 = vadd.f32 %v1556, %v1604
          %v1606 = vpop.f32.mrb[0].mxu0
          %v1607 = vpop.f32.mrb[0].mxu0
          %v1608 = vadd.f32 %v1556, %v1607
          %v1609 = vpop.f32.mrb[0].mxu0
          %1610 = vmatprep.mubr.bf16.mxu0 0
          %1611 = vmatmul.mubr.bf16.gmra.mrb[0].mxu0 %v1568
          %v1612 = vpop.f32.mrb[0].mxu0
          %v1613 = vadd.f32 %v1556, %v1612
          %v1614 = vpop.f32.mrb[0].mxu0
          %v1615 = vpop.f32.mrb[0].mxu0
          %v1616 = vadd.f32 %v1556, %v1615
          %v1617 = vpop.f32.mrb[0].mxu0
          %1618 = vdwg.mxu0
          %v1619 = vld [vmem:[%s5] sm:$0xff]
          %v1620 = vld [vmem:[%s5 + $0x8] sm:$0xff]
          %v1621 = vadd.f32 %v1605, %v1619
          %v1622 = vadd.f32 %v1608, %v1620
          %v1623 = vadd.f32 %v1613, %v1619
          %v1624 = vadd.f32 %v1616, %v1620
          %1625 = vst [vmem:[#allocation3] sm:$0xff] %v1621
          %1626 = vst [vmem:[#allocation3 + $0x8] sm:$0xff] %v1622
          %1627 = vst [vmem:[#allocation3 + $0x10] sm:$0xff] %v1623
          %1628 = vst [vmem:[#allocation3 + $0x18] sm:$0xff] %v1624
        $region152: #{retrieval_database_forward.3} parent=95 // pred_fallthru
          _
        %p1629 = scmp.lt.s32.totalorder %s72, 2
        // Predicated region
        $region289: #{retrieval_database_forward.3} parent=95 // pred_check
          %p1630 = pneg %p1629
        $region290: #{retrieval_database_forward.3} parent=95 // pred_check_branch
          %1632 = sbr.rel (%p1630) target = $region292
        $region291: #{retrieval_database_forward.3} parent=95 // pred_region
          %v1633 = vld [vmem:[#allocation3] sm:$0xff]
          %v1634 = vld [vmem:[#allocation3 + $0x8] sm:$0xff]
          %v1635 = vld [vmem:[#allocation3 + $0x10] sm:$0xff]
          %v1636 = vld [vmem:[#allocation3 + $0x18] sm:$0xff]
          %v1637 = vpack.c.bf16 %v1634, %v1633
          %v1638 = vpack.c.bf16 %v1636, %v1635
          %v1639 = vld [vmem:[%s1279] sm:$0xff]
          %v1640 = vld [vmem:[%s1279 + $0x8] sm:$0xff]
          %v1641 = vld [vmem:[%s1279 + $0x10] sm:$0xff]
          %v1642 = vld [vmem:[%s1279 + $0x18] sm:$0xff]
          %v1643 = vld [vmem:[%s1279 + $0x20] sm:$0xff]
          %v1644 = vld [vmem:[%s1279 + $0x28] sm:$0xff]
          %v1645 = vld [vmem:[%s1279 + $0x30] sm:$0xff]
          %v1646 = vld [vmem:[%s1279 + $0x38] sm:$0xff]
          %v1647 = vld [vmem:[%s1279 + $0x40] sm:$0xff]
          %v1648 = vld [vmem:[%s1279 + $0x48] sm:$0xff]
          %v1649 = vld [vmem:[%s1279 + $0x50] sm:$0xff]
          %v1650 = vld [vmem:[%s1279 + $0x58] sm:$0xff]
          %v1651 = vld [vmem:[%s1279 + $0x60] sm:$0xff]
          %v1652 = vld [vmem:[%s1279 + $0x68] sm:$0xff]
          %v1653 = vld [vmem:[%s1279 + $0x70] sm:$0xff]
          %v1654 = vld [vmem:[%s1279 + $0x78] sm:$0xff]
          %v1655 = vld [vmem:[%s1287] sm:$0x3]
          %v1657 = vlaneseq
          %v1658 = vshrl.u32 %v1657, 7
          %v1659 = vsub.s32 0, %v1658
          %v1660 = vrot.slane %v1655, %v1659
          %v1661 = vlaneseq
          %v1662 = vshrl.u32 %v1661, 7
          %v1663 = vsub.s32 1, %v1662
          %v1664 = vrot.slane %v1655, %v1663
          %v1683 = vunpack.c.l.b16 %v1639
          %v1684 = vunpack.c.h.b16 %v1639
          %v1685 = vunpack.c.l.b16 %v1640
          %v1686 = vunpack.c.h.b16 %v1640
          %v1687 = vunpack.c.l.b16 %v1641
          %v1688 = vunpack.c.h.b16 %v1641
          %v1689 = vunpack.c.l.b16 %v1642
          %v1690 = vunpack.c.h.b16 %v1642
          %v1691 = vunpack.c.l.b16 %v1643
          %v1692 = vunpack.c.h.b16 %v1643
          %v1693 = vunpack.c.l.b16 %v1644
          %v1694 = vunpack.c.h.b16 %v1644
          %v1695 = vunpack.c.l.b16 %v1645
          %v1696 = vunpack.c.h.b16 %v1645
          %v1697 = vunpack.c.l.b16 %v1646
          %v1698 = vunpack.c.h.b16 %v1646
          %v1699 = vunpack.c.l.b16 %v1647
          %v1700 = vunpack.c.h.b16 %v1647
          %v1701 = vunpack.c.l.b16 %v1648
          %v1702 = vunpack.c.h.b16 %v1648
          %v1703 = vunpack.c.l.b16 %v1649
          %v1704 = vunpack.c.h.b16 %v1649
          %v1705 = vunpack.c.l.b16 %v1650
          %v1706 = vunpack.c.h.b16 %v1650
          %v1707 = vunpack.c.l.b16 %v1651
          %v1708 = vunpack.c.h.b16 %v1651
          %v1709 = vunpack.c.l.b16 %v1652
          %v1710 = vunpack.c.h.b16 %v1652
          %v1711 = vunpack.c.l.b16 %v1653
          %v1712 = vunpack.c.h.b16 %v1653
          %v1713 = vunpack.c.l.b16 %v1654
          %v1714 = vunpack.c.h.b16 %v1654
          %v1715 = vpack.c.b16 %v1685, %v1683
          %v1716 = vpack.c.b16 %v1686, %v1684
          %v1717 = vpack.c.b16 %v1689, %v1687
          %v1718 = vpack.c.b16 %v1690, %v1688
          %v1719 = vpack.c.b16 %v1693, %v1691
          %v1720 = vpack.c.b16 %v1694, %v1692
          %v1721 = vpack.c.b16 %v1697, %v1695
          %v1722 = vpack.c.b16 %v1698, %v1696
          %v1723 = vpack.c.b16 %v1701, %v1699
          %v1724 = vpack.c.b16 %v1702, %v1700
          %v1725 = vpack.c.b16 %v1705, %v1703
          %v1726 = vpack.c.b16 %v1706, %v1704
          %v1727 = vpack.c.b16 %v1709, %v1707
          %v1728 = vpack.c.b16 %v1710, %v1708
          %v1729 = vpack.c.b16 %v1713, %v1711
          %v1730 = vpack.c.b16 %v1714, %v1712
          %1747 = vmatprep.subr.bf16.mxu0 %v1716
          %1748 = vmatpush1.bf16.msra.mxu0 %v1715
          %1749 = vmatprep.subr.bf16.mxu0 %v1718
          %1750 = vmatpush1.bf16.msra.mxu0 %v1717
          %1751 = vmatprep.subr.bf16.mxu0 %v1720
          %1752 = vmatpush1.bf16.msra.mxu0 %v1719
          %1753 = vmatprep.subr.bf16.mxu0 %v1722
          %1754 = vmatpush1.bf16.msra.mxu0 %v1721
          %1755 = vmatprep.subr.bf16.mxu0 %v1724
          %1756 = vmatpush1.bf16.msra.mxu0 %v1723
          %1757 = vmatprep.subr.bf16.mxu0 %v1726
          %1758 = vmatpush1.bf16.msra.mxu0 %v1725
          %1759 = vmatprep.subr.bf16.mxu0 %v1728
          %1760 = vmatpush1.bf16.msra.mxu0 %v1727
          %1761 = vmatprep.subr.bf16.mxu0 %v1730
          %1762 = vmatpush1.bf16.msra.mxu0 %v1729
          %1763 = vmatprep.subr.bf16.mxu0 0
          %1764 = vmatpush1.bf16.msra.mxu0 0
          %1765 = vmatprep.subr.bf16.mxu0 0
          %1766 = vmatpush1.bf16.msra.mxu0 0
          %1767 = vmatprep.subr.bf16.mxu0 0
          %1768 = vmatpush1.bf16.msra.mxu0 0
          %1769 = vmatprep.subr.bf16.mxu0 0
          %1770 = vmatpush1.bf16.msra.mxu0 0
          %1771 = vmatprep.subr.bf16.mxu0 0
          %1772 = vmatpush1.bf16.msra.mxu0 0
          %1773 = vmatprep.subr.bf16.mxu0 0
          %1774 = vmatpush1.bf16.msra.mxu0 0
          %1775 = vmatprep.subr.bf16.mxu0 0
          %1776 = vmatpush1.bf16.msra.mxu0 0
          %1777 = vmatprep.subr.bf16.mxu0 0
          %1778 = vmatpush1.bf16.msra.mxu0 0
          %1779 = vmatprep.mubr.bf16.mxu0 0
          %1780 = vmatmul.mubr.bf16.gmra.mrb[0].mxu0 %v1637
          %v1781 = vpop.f32.mrb[0].mxu0
          %v1782 = vadd.f32 %v1660, %v1781
          %v1783 = vpop.f32.mrb[0].mxu0
          %v1784 = vadd.f32 %v1664, %v1783
          %v1785 = vpop.f32.mrb[0].mxu0
          %v1786 = vadd.f32 %v1660, %v1785
          %v1787 = vpop.f32.mrb[0].mxu0
          %v1788 = vadd.f32 %v1664, %v1787
          %1789 = vmatprep.mubr.bf16.mxu0 0
          %1790 = vmatmul.mubr.bf16.gmra.mrb[0].mxu0 %v1638
          %v1791 = vpop.f32.mrb[0].mxu0
          %v1792 = vadd.f32 %v1660, %v1791
          %v1793 = vpop.f32.mrb[0].mxu0
          %v1794 = vadd.f32 %v1664, %v1793
          %v1795 = vpop.f32.mrb[0].mxu0
          %v1796 = vadd.f32 %v1660, %v1795
          %v1797 = vpop.f32.mrb[0].mxu0
          %v1798 = vadd.f32 %v1664, %v1797
          %1799 = vdwg.mxu0
          %v1800 = vmul.f32 %v1782, 0.5
          %v1801 = vmul.f32 %v1784, 0.5
          %v1802 = vmul.f32 %v1786, 0.5
          %v1803 = vmul.f32 %v1788, 0.5
          %v1804 = vmul.f32 %v1792, 0.5
          %v1805 = vmul.f32 %v1794, 0.5
          %v1806 = vmul.f32 %v1796, 0.5
          %v1807 = vmul.f32 %v1798, 0.5
          %v1808 = vmul.f32 %v1782, 0.044715
          %v1809 = vmul.f32 %v1784, 0.044715
          %v1810 = vmul.f32 %v1786, 0.044715
          %v1811 = vmul.f32 %v1788, 0.044715
          %v1812 = vmul.f32 %v1792, 0.044715
          %v1813 = vmul.f32 %v1794, 0.044715
          %v1814 = vmul.f32 %v1796, 0.044715
          %v1815 = vmul.f32 %v1798, 0.044715
          %v1816 = vmul.f32 %v1808, %v1782
          %v1817 = vmul.f32 %v1809, %v1784
          %v1818 = vmul.f32 %v1810, %v1786
          %v1819 = vmul.f32 %v1811, %v1788
          %v1820 = vmul.f32 %v1812, %v1792
          %v1821 = vmul.f32 %v1813, %v1794
          %v1822 = vmul.f32 %v1814, %v1796
          %v1823 = vmul.f32 %v1815, %v1798
          %v1824 = vmul.f32 %v1816, %v1782
          %v1825 = vmul.f32 %v1817, %v1784
          %v1826 = vmul.f32 %v1818, %v1786
          %v1827 = vmul.f32 %v1819, %v1788
          %v1828 = vmul.f32 %v1820, %v1792
          %v1829 = vmul.f32 %v1821, %v1794
          %v1830 = vmul.f32 %v1822, %v1796
          %v1831 = vmul.f32 %v1823, %v1798
          %v1832 = vadd.f32 %v1782, %v1824
          %v1833 = vadd.f32 %v1784, %v1825
          %v1834 = vadd.f32 %v1786, %v1826
          %v1835 = vadd.f32 %v1788, %v1827
          %v1836 = vadd.f32 %v1792, %v1828
          %v1837 = vadd.f32 %v1794, %v1829
          %v1838 = vadd.f32 %v1796, %v1830
          %v1839 = vadd.f32 %v1798, %v1831
          %v1840 = vmul.f32 %v1832, 0.7978846
          %v1841 = vmul.f32 %v1833, 0.7978846
          %v1842 = vmul.f32 %v1834, 0.7978846
          %v1843 = vmul.f32 %v1835, 0.7978846
          %v1844 = vmul.f32 %v1836, 0.7978846
          %v1845 = vmul.f32 %v1837, 0.7978846
          %v1846 = vmul.f32 %v1838, 0.7978846
          %v1847 = vmul.f32 %v1839, 0.7978846
          %v1848 = vtanh.pop %v1840
          %v1849 = vtanh.pop %v1841
          %v1850 = vtanh.pop %v1842
          %v1851 = vtanh.pop %v1843
          %v1852 = vtanh.pop %v1844
          %v1853 = vtanh.pop %v1845
          %v1854 = vtanh.pop %v1846
          %v1855 = vtanh.pop %v1847
          %v1856 = vadd.f32 %v1848, 1.0
          %v1857 = vadd.f32 %v1849, 1.0
          %v1858 = vadd.f32 %v1850, 1.0
          %v1859 = vadd.f32 %v1851, 1.0
          %v1860 = vadd.f32 %v1852, 1.0
          %v1861 = vadd.f32 %v1853, 1.0
          %v1862 = vadd.f32 %v1854, 1.0
          %v1863 = vadd.f32 %v1855, 1.0
          %v1864 = vmul.f32 %v1800, %v1856
          %v1865 = vmul.f32 %v1801, %v1857
          %v1866 = vmul.f32 %v1802, %v1858
          %v1867 = vmul.f32 %v1803, %v1859
          %v1868 = vmul.f32 %v1804, %v1860
          %v1869 = vmul.f32 %v1805, %v1861
          %v1870 = vmul.f32 %v1806, %v1862
          %v1871 = vmul.f32 %v1807, %v1863
          %v1872 = vpack.c.bf16 %v1866, %v1864
          %v1873 = vpack.c.bf16 %v1867, %v1865
          %v1874 = vpack.c.bf16 %v1870, %v1868
          %v1875 = vpack.c.bf16 %v1871, %v1869
          %v1876 = vld [vmem:[%s1296] sm:$0xf]
          %v1877 = vld [vmem:[%s1296 + $0x4] sm:$0xf]
          %v1878 = vld [vmem:[%s1296 + $0x8] sm:$0xf]
          %v1879 = vld [vmem:[%s1296 + $0xc] sm:$0xf]
          %v1880 = vld [vmem:[%s1296 + $0x10] sm:$0xf]
          %v1881 = vld [vmem:[%s1296 + $0x14] sm:$0xf]
          %v1882 = vld [vmem:[%s1296 + $0x18] sm:$0xf]
          %v1883 = vld [vmem:[%s1296 + $0x1c] sm:$0xf]
          %v1884 = vld [vmem:[%s1296 + $0x20] sm:$0xf]
          %v1885 = vld [vmem:[%s1296 + $0x24] sm:$0xf]
          %v1886 = vld [vmem:[%s1296 + $0x28] sm:$0xf]
          %v1887 = vld [vmem:[%s1296 + $0x2c] sm:$0xf]
          %v1888 = vld [vmem:[%s1296 + $0x30] sm:$0xf]
          %v1889 = vld [vmem:[%s1296 + $0x34] sm:$0xf]
          %v1890 = vld [vmem:[%s1296 + $0x38] sm:$0xf]
          %v1891 = vld [vmem:[%s1296 + $0x3c] sm:$0xf]
          %v1892 = vld [vmem:[%s1296 + $0x40] sm:$0xf]
          %v1893 = vld [vmem:[%s1296 + $0x44] sm:$0xf]
          %v1894 = vld [vmem:[%s1296 + $0x48] sm:$0xf]
          %v1895 = vld [vmem:[%s1296 + $0x4c] sm:$0xf]
          %v1896 = vld [vmem:[%s1296 + $0x50] sm:$0xf]
          %v1897 = vld [vmem:[%s1296 + $0x54] sm:$0xf]
          %v1898 = vld [vmem:[%s1296 + $0x58] sm:$0xf]
          %v1899 = vld [vmem:[%s1296 + $0x5c] sm:$0xf]
          %v1900 = vld [vmem:[%s1296 + $0x60] sm:$0xf]
          %v1901 = vld [vmem:[%s1296 + $0x64] sm:$0xf]
          %v1902 = vld [vmem:[%s1296 + $0x68] sm:$0xf]
          %v1903 = vld [vmem:[%s1296 + $0x6c] sm:$0xf]
          %v1904 = vld [vmem:[%s1296 + $0x70] sm:$0xf]
          %v1905 = vld [vmem:[%s1296 + $0x74] sm:$0xf]
          %v1906 = vld [vmem:[%s1296 + $0x78] sm:$0xf]
          %v1907 = vld [vmem:[%s1296 + $0x7c] sm:$0xf]
          %v1940 = vunpack.c.l.b16 %v1876
          %v1941 = vunpack.c.l.b16 %v1877
          %v1942 = vunpack.c.l.b16 %v1878
          %v1943 = vunpack.c.l.b16 %v1879
          %v1944 = vunpack.c.l.b16 %v1880
          %v1945 = vunpack.c.l.b16 %v1881
          %v1946 = vunpack.c.l.b16 %v1882
          %v1947 = vunpack.c.l.b16 %v1883
          %v1948 = vunpack.c.l.b16 %v1884
          %v1949 = vunpack.c.l.b16 %v1885
          %v1950 = vunpack.c.l.b16 %v1886
          %v1951 = vunpack.c.l.b16 %v1887
          %v1952 = vunpack.c.l.b16 %v1888
          %v1953 = vunpack.c.l.b16 %v1889
          %v1954 = vunpack.c.l.b16 %v1890
          %v1955 = vunpack.c.l.b16 %v1891
          %v1956 = vunpack.c.l.b16 %v1892
          %v1957 = vunpack.c.l.b16 %v1893
          %v1958 = vunpack.c.l.b16 %v1894
          %v1959 = vunpack.c.l.b16 %v1895
          %v1960 = vunpack.c.l.b16 %v1896
          %v1961 = vunpack.c.l.b16 %v1897
          %v1962 = vunpack.c.l.b16 %v1898
          %v1963 = vunpack.c.l.b16 %v1899
          %v1964 = vunpack.c.l.b16 %v1900
          %v1965 = vunpack.c.l.b16 %v1901
          %v1966 = vunpack.c.l.b16 %v1902
          %v1967 = vunpack.c.l.b16 %v1903
          %v1968 = vunpack.c.l.b16 %v1904
          %v1969 = vunpack.c.l.b16 %v1905
          %v1970 = vunpack.c.l.b16 %v1906
          %v1971 = vunpack.c.l.b16 %v1907
          %v1972 = vpack.c.b16 %v1941, %v1940
          %v1973 = vpack.c.b16 %v1943, %v1942
          %v1974 = vpack.c.b16 %v1945, %v1944
          %v1975 = vpack.c.b16 %v1947, %v1946
          %v1976 = vpack.c.b16 %v1949, %v1948
          %v1977 = vpack.c.b16 %v1951, %v1950
          %v1978 = vpack.c.b16 %v1953, %v1952
          %v1979 = vpack.c.b16 %v1955, %v1954
          %v1980 = vpack.c.b16 %v1957, %v1956
          %v1981 = vpack.c.b16 %v1959, %v1958
          %v1982 = vpack.c.b16 %v1961, %v1960
          %v1983 = vpack.c.b16 %v1963, %v1962
          %v1984 = vpack.c.b16 %v1965, %v1964
          %v1985 = vpack.c.b16 %v1967, %v1966
          %v1986 = vpack.c.b16 %v1969, %v1968
          %v1987 = vpack.c.b16 %v1971, %v1970
          %2004 = vmatprep.subr.bf16.mxu0 0
          %2005 = vmatpush1.bf16.msra.mxu0 %v1972
          %2006 = vmatprep.subr.bf16.mxu0 0
          %2007 = vmatpush1.bf16.msra.mxu0 %v1973
          %2008 = vmatprep.subr.bf16.mxu0 0
          %2009 = vmatpush1.bf16.msra.mxu0 %v1974
          %2010 = vmatprep.subr.bf16.mxu0 0
          %2011 = vmatpush1.bf16.msra.mxu0 %v1975
          %2012 = vmatprep.subr.bf16.mxu0 0
          %2013 = vmatpush1.bf16.msra.mxu0 %v1976
          %2014 = vmatprep.subr.bf16.mxu0 0
          %2015 = vmatpush1.bf16.msra.mxu0 %v1977
          %2016 = vmatprep.subr.bf16.mxu0 0
          %2017 = vmatpush1.bf16.msra.mxu0 %v1978
          %2018 = vmatprep.subr.bf16.mxu0 0
          %2019 = vmatpush1.bf16.msra.mxu0 %v1979
          %2020 = vmatprep.subr.bf16.mxu0 0
          %2021 = vmatpush1.bf16.msra.mxu0 %v1980
          %2022 = vmatprep.subr.bf16.mxu0 0
          %2023 = vmatpush1.bf16.msra.mxu0 %v1981
          %2024 = vmatprep.subr.bf16.mxu0 0
          %2025 = vmatpush1.bf16.msra.mxu0 %v1982
          %2026 = vmatprep.subr.bf16.mxu0 0
          %2027 = vmatpush1.bf16.msra.mxu0 %v1983
          %2028 = vmatprep.subr.bf16.mxu0 0
          %2029 = vmatpush1.bf16.msra.mxu0 %v1984
          %2030 = vmatprep.subr.bf16.mxu0 0
          %2031 = vmatpush1.bf16.msra.mxu0 %v1985
          %2032 = vmatprep.subr.bf16.mxu0 0
          %2033 = vmatpush1.bf16.msra.mxu0 %v1986
          %2034 = vmatprep.subr.bf16.mxu0 0
          %2035 = vmatpush1.bf16.msra.mxu0 %v1987
          %2036 = vmatprep.mubr.bf16.mxu0 %v1873
          %2037 = vmatmul.mubr.bf16.gmra.mrb[0].mxu0 %v1872
          %v2038 = vpop.f32.mrb[0].mxu0
          %v2039 = vadd.f32 0.0, %v2038
          %v2040 = vpop.f32.mrb[0].mxu0
          %v2041 = vpop.f32.mrb[0].mxu0
          %v2042 = vadd.f32 0.0, %v2041
          %v2043 = vpop.f32.mrb[0].mxu0
          %2044 = vmatprep.mubr.bf16.mxu0 %v1875
          %2045 = vmatmul.mubr.bf16.gmra.mrb[0].mxu0 %v1874
          %v2046 = vpop.f32.mrb[0].mxu0
          %v2047 = vadd.f32 0.0, %v2046
          %v2048 = vpop.f32.mrb[0].mxu0
          %v2049 = vpop.f32.mrb[0].mxu0
          %v2050 = vadd.f32 0.0, %v2049
          %v2051 = vpop.f32.mrb[0].mxu0
          %2052 = vdwg.mxu0
          %v2053 = vadd.f32 %v1633, %v2039
          %v2054 = vadd.f32 %v1634, %v2042
          %v2055 = vadd.f32 %v1635, %v2047
          %v2056 = vadd.f32 %v1636, %v2050
          %v2057 = vld [vmem:[%s1036] sm:$0x1]
          %v2059 = vlaneseq
          %v2060 = vshrl.u32 %v2059, 7
          %v2061 = vsub.s32 0, %v2060
          %v2062 = vrot.slane %v2057, %v2061
          %v2064 = vadd.f32 %v2053, %v2062
          %v2065 = vadd.f32 %v2054, %v2062
          %v2066 = vadd.f32 %v2055, %v2062
          %v2067 = vadd.f32 %v2056, %v2062
          %2068 = vst [vmem:[#allocation3] sm:$0xff] %v2064
          %2069 = vst [vmem:[#allocation3 + $0x8] sm:$0xff] %v2065
          %2070 = vst [vmem:[#allocation3 + $0x10] sm:$0xff] %v2066
          %2071 = vst [vmem:[#allocation3 + $0x18] sm:$0xff] %v2067
        $region292: #{retrieval_database_forward.3} parent=95 // pred_fallthru
          _
        %p2072 = scmp.eq.s32.totalorder %s72, 1
        // Predicated region
        $region293: #{retrieval_database_forward.3} parent=95 // pred_check
          %p2073 = pneg %p2072
        $region294: #{retrieval_database_forward.3} parent=95 // pred_check_branch
          %2075 = sbr.rel (%p2073) target = $region296
        $region295: #{retrieval_database_forward.3} parent=95 // pred_region
          %v2076 = vld [vmem:[#allocation3] sm:$0xff]
          %v2077 = vld [vmem:[#allocation3 + $0x8] sm:$0xff]
          %v2078 = vld [vmem:[#allocation3 + $0x10] sm:$0xff]
          %v2079 = vld [vmem:[#allocation3 + $0x18] sm:$0xff]
          %2080 = vst [vmem:[%s1265] sm:$0x1] %v2076
          %2081 = vst [vmem:[%s1265 + $0x4] sm:$0x1] %v2078
          %2082 = vst [vmem:[%s1265 - $0x3] sm:$0x10] %v2076
          %2083 = vst [vmem:[%s1265 + $0x1] sm:$0x10] %v2078
          %2084 = vst [vmem:[%s1265 + $0x2] sm:$0x1] %v2077
          %2085 = vst [vmem:[%s1265 + $0x6] sm:$0x1] %v2079
          %2086 = vst [vmem:[%s1265 - $0x1] sm:$0x10] %v2077
          %2087 = vst [vmem:[%s1265 + $0x3] sm:$0x10] %v2079
        $region296: #{retrieval_database_forward.3} parent=95 // pred_fallthru
          _
        %p2088 = scmp.lt.s32.totalorder %s72, 1
        // Predicated region
        $region297: #{retrieval_database_forward.3} parent=95 // pred_check
          %p2089 = pneg %p2088
        $region298: #{retrieval_database_forward.3} parent=95 // pred_check_branch
          %2091 = sbr.rel (%p2089) target = $region300
        $region299: #{retrieval_database_forward.3} parent=95 // pred_region
          // Predicated region
          $region301: #{retrieval_database_forward.3} parent=299 // pred_check
            %p2092 = pneg %p1336
          $region302: #{retrieval_database_forward.3} parent=299 // pred_check_branch
            %2094 = sbr.rel (%p2092) target = $region304
          $region303: #{retrieval_database_forward.3} parent=299 // pred_region
            %s2095 = scalar_lea.sflag [#allocation5], 2
            %s2096 = smul.u32 8, 1
            %s2097 = sshll.u32 %s2096, 4
            %2098 = dma.done %s2095, %s2097
            %s2099 = scalar_lea.sflag [#allocation5], 3
            %s2100 = sshll.u32 %s2096, 4
            %2101 = dma.done %s2099, %s2100
          $region304: #{retrieval_database_forward.3} parent=299 // pred_fallthru
            _
          %v2102 = vld [vmem:[#allocation4] sm:$0xff]
          %v2103 = vld [vmem:[#allocation4 + $0x8] sm:$0xff]
          %v2104 = vpack.c.bf16 %v2103, %v2102
          %v2105 = vld [vmem:[%s1307] sm:$0xff]
          %v2106 = vld [vmem:[%s1307 + $0x8] sm:$0xf]
          %v2107 = vld [vmem:[%s1307 + $0xc] sm:$0xff]
          %v2108 = vld [vmem:[%s1307 + $0x14] sm:$0xf]
          %v2109 = vld [vmem:[%s1307 + $0x18] sm:$0xff]
          %v2110 = vld [vmem:[%s1307 + $0x20] sm:$0xf]
          %v2111 = vld [vmem:[%s1307 + $0x24] sm:$0xff]
          %v2112 = vld [vmem:[%s1307 + $0x2c] sm:$0xf]
          %v2113 = vld [vmem:[%s1307 + $0x30] sm:$0xff]
          %v2114 = vld [vmem:[%s1307 + $0x38] sm:$0xf]
          %v2115 = vld [vmem:[%s1307 + $0x3c] sm:$0xff]
          %v2116 = vld [vmem:[%s1307 + $0x44] sm:$0xf]
          %v2117 = vld [vmem:[%s1307 + $0x48] sm:$0xff]
          %v2118 = vld [vmem:[%s1307 + $0x50] sm:$0xf]
          %v2119 = vld [vmem:[%s1307 + $0x54] sm:$0xff]
          %v2120 = vld [vmem:[%s1307 + $0x5c] sm:$0xf]
          %v2121 = vld [vmem:[%s1307 + $0x60] sm:$0xff]
          %v2122 = vld [vmem:[%s1307 + $0x68] sm:$0xf]
          %v2123 = vld [vmem:[%s1307 + $0x6c] sm:$0xff]
          %v2124 = vld [vmem:[%s1307 + $0x74] sm:$0xf]
          %v2125 = vld [vmem:[%s1307 + $0x78] sm:$0xff]
          %v2126 = vld [vmem:[%s1307 + $0x80] sm:$0xf]
          %v2127 = vld [vmem:[%s1307 + $0x84] sm:$0xff]
          %v2128 = vld [vmem:[%s1307 + $0x8c] sm:$0xf]
          %v2129 = vld [vmem:[%s1307 + $0x90] sm:$0xff]
          %v2130 = vld [vmem:[%s1307 + $0x98] sm:$0xf]
          %v2131 = vld [vmem:[%s1307 + $0x9c] sm:$0xff]
          %v2132 = vld [vmem:[%s1307 + $0xa4] sm:$0xf]
          %v2133 = vld [vmem:[%s1307 + $0xa8] sm:$0xff]
          %v2134 = vld [vmem:[%s1307 + $0xb0] sm:$0xf]
          %v2135 = vld [vmem:[%s1307 + $0xb4] sm:$0xff]
          %v2136 = vld [vmem:[%s1307 + $0xbc] sm:$0xf]
          %v2137 = vld [vmem:[%s1045] sm:$0x7]
          %v2139 = vlaneseq
          %v2140 = vshrl.u32 %v2139, 7
          %v2141 = vsub.s32 0, %v2140
          %v2142 = vrot.slane %v2137, %v2141
          %v2143 = vlaneseq
          %v2144 = vshrl.u32 %v2143, 7
          %v2145 = vsub.s32 1, %v2144
          %v2146 = vrot.slane %v2137, %v2145
          %v2147 = vlaneseq
          %v2148 = vshrl.u32 %v2147, 7
          %v2149 = vsub.s32 2, %v2148
          %v2150 = vrot.slane %v2137, %v2149
          %v2186 = vunpack.c.l.b16 %v2105
          %v2187 = vunpack.c.h.b16 %v2105
          %v2188 = vunpack.c.l.b16 %v2106
          %v2189 = vunpack.c.l.b16 %v2107
          %v2190 = vunpack.c.h.b16 %v2107
          %v2191 = vunpack.c.l.b16 %v2108
          %v2192 = vunpack.c.l.b16 %v2109
          %v2193 = vunpack.c.h.b16 %v2109
          %v2194 = vunpack.c.l.b16 %v2110
          %v2195 = vunpack.c.l.b16 %v2111
          %v2196 = vunpack.c.h.b16 %v2111
          %v2197 = vunpack.c.l.b16 %v2112
          %v2198 = vunpack.c.l.b16 %v2113
          %v2199 = vunpack.c.h.b16 %v2113
          %v2200 = vunpack.c.l.b16 %v2114
          %v2201 = vunpack.c.l.b16 %v2115
          %v2202 = vunpack.c.h.b16 %v2115
          %v2203 = vunpack.c.l.b16 %v2116
          %v2204 = vunpack.c.l.b16 %v2117
          %v2205 = vunpack.c.h.b16 %v2117
          %v2206 = vunpack.c.l.b16 %v2118
          %v2207 = vunpack.c.l.b16 %v2119
          %v2208 = vunpack.c.h.b16 %v2119
          %v2209 = vunpack.c.l.b16 %v2120
          %v2210 = vunpack.c.l.b16 %v2121
          %v2211 = vunpack.c.h.b16 %v2121
          %v2212 = vunpack.c.l.b16 %v2122
          %v2213 = vunpack.c.l.b16 %v2123
          %v2214 = vunpack.c.h.b16 %v2123
          %v2215 = vunpack.c.l.b16 %v2124
          %v2216 = vunpack.c.l.b16 %v2125
          %v2217 = vunpack.c.h.b16 %v2125
          %v2218 = vunpack.c.l.b16 %v2126
          %v2219 = vunpack.c.l.b16 %v2127
          %v2220 = vunpack.c.h.b16 %v2127
          %v2221 = vunpack.c.l.b16 %v2128
          %v2222 = vunpack.c.l.b16 %v2129
          %v2223 = vunpack.c.h.b16 %v2129
          %v2224 = vunpack.c.l.b16 %v2130
          %v2225 = vunpack.c.l.b16 %v2131
          %v2226 = vunpack.c.h.b16 %v2131
          %v2227 = vunpack.c.l.b16 %v2132
          %v2228 = vunpack.c.l.b16 %v2133
          %v2229 = vunpack.c.h.b16 %v2133
          %v2230 = vunpack.c.l.b16 %v2134
          %v2231 = vunpack.c.l.b16 %v2135
          %v2232 = vunpack.c.h.b16 %v2135
          %v2233 = vunpack.c.l.b16 %v2136
          %v2234 = vpack.c.b16 %v2189, %v2186
          %v2235 = vpack.c.b16 %v2190, %v2187
          %v2236 = vpack.c.b16 %v2191, %v2188
          %v2237 = vpack.c.b16 %v2195, %v2192
          %v2238 = vpack.c.b16 %v2196, %v2193
          %v2239 = vpack.c.b16 %v2197, %v2194
          %v2240 = vpack.c.b16 %v2201, %v2198
          %v2241 = vpack.c.b16 %v2202, %v2199
          %v2242 = vpack.c.b16 %v2203, %v2200
          %v2243 = vpack.c.b16 %v2207, %v2204
          %v2244 = vpack.c.b16 %v2208, %v2205
          %v2245 = vpack.c.b16 %v2209, %v2206
          %v2246 = vpack.c.b16 %v2213, %v2210
          %v2247 = vpack.c.b16 %v2214, %v2211
          %v2248 = vpack.c.b16 %v2215, %v2212
          %v2249 = vpack.c.b16 %v2219, %v2216
          %v2250 = vpack.c.b16 %v2220, %v2217
          %v2251 = vpack.c.b16 %v2221, %v2218
          %v2252 = vpack.c.b16 %v2225, %v2222
          %v2253 = vpack.c.b16 %v2226, %v2223
          %v2254 = vpack.c.b16 %v2227, %v2224
          %v2255 = vpack.c.b16 %v2231, %v2228
          %v2256 = vpack.c.b16 %v2232, %v2229
          %v2257 = vpack.c.b16 %v2233, %v2230
          %2282 = vmatprep.subr.bf16.mxu0 %v2235
          %2283 = vmatpush1.bf16.msra.mxu0 %v2234
          %2284 = vmatprep.subr.bf16.mxu0 %v2238
          %2285 = vmatpush1.bf16.msra.mxu0 %v2237
          %2286 = vmatprep.subr.bf16.mxu0 %v2241
          %2287 = vmatpush1.bf16.msra.mxu0 %v2240
          %2288 = vmatprep.subr.bf16.mxu0 %v2244
          %2289 = vmatpush1.bf16.msra.mxu0 %v2243
          %2290 = vmatprep.subr.bf16.mxu0 %v2247
          %2291 = vmatpush1.bf16.msra.mxu0 %v2246
          %2292 = vmatprep.subr.bf16.mxu0 %v2250
          %2293 = vmatpush1.bf16.msra.mxu0 %v2249
          %2294 = vmatprep.subr.bf16.mxu0 %v2253
          %2295 = vmatpush1.bf16.msra.mxu0 %v2252
          %2296 = vmatprep.subr.bf16.mxu0 %v2256
          %2297 = vmatpush1.bf16.msra.mxu0 %v2255
          %2298 = vmatprep.subr.bf16.mxu0 0
          %2299 = vmatpush1.bf16.msra.mxu0 0
          %2300 = vmatprep.subr.bf16.mxu0 0
          %2301 = vmatpush1.bf16.msra.mxu0 0
          %2302 = vmatprep.subr.bf16.mxu0 0
          %2303 = vmatpush1.bf16.msra.mxu0 0
          %2304 = vmatprep.subr.bf16.mxu0 0
          %2305 = vmatpush1.bf16.msra.mxu0 0
          %2306 = vmatprep.subr.bf16.mxu0 0
          %2307 = vmatpush1.bf16.msra.mxu0 0
          %2308 = vmatprep.subr.bf16.mxu0 0
          %2309 = vmatpush1.bf16.msra.mxu0 0
          %2310 = vmatprep.subr.bf16.mxu0 0
          %2311 = vmatpush1.bf16.msra.mxu0 0
          %2312 = vmatprep.subr.bf16.mxu0 0
          %2313 = vmatpush1.bf16.msra.mxu0 0
          %2314 = vmatprep.mubr.bf16.mxu0 0
          %2315 = vmatmul.mubr.bf16.gmra.mrb[0].mxu0 %v2104
          %v2316 = vpop.f32.mrb[0].mxu0
          %v2317 = vadd.f32 %v2142, %v2316
          %v2318 = vpop.f32.mrb[0].mxu0
          %v2319 = vadd.f32 %v2146, %v2318
          %v2320 = vpop.f32.mrb[0].mxu0
          %v2321 = vadd.f32 %v2142, %v2320
          %v2322 = vpop.f32.mrb[0].mxu0
          %v2323 = vadd.f32 %v2146, %v2322
          %2324 = vdwg.mxu0
          %2325 = vmatprep.subr.bf16.mxu0 0
          %2326 = vmatpush1.bf16.msra.mxu0 %v2236
          %2327 = vmatprep.subr.bf16.mxu0 0
          %2328 = vmatpush1.bf16.msra.mxu0 %v2239
          %2329 = vmatprep.subr.bf16.mxu0 0
          %2330 = vmatpush1.bf16.msra.mxu0 %v2242
          %2331 = vmatprep.subr.bf16.mxu0 0
          %2332 = vmatpush1.bf16.msra.mxu0 %v2245
          %2333 = vmatprep.subr.bf16.mxu0 0
          %2334 = vmatpush1.bf16.msra.mxu0 %v2248
          %2335 = vmatprep.subr.bf16.mxu0 0
          %2336 = vmatpush1.bf16.msra.mxu0 %v2251
          %2337 = vmatprep.subr.bf16.mxu0 0
          %2338 = vmatpush1.bf16.msra.mxu0 %v2254
          %2339 = vmatprep.subr.bf16.mxu0 0
          %2340 = vmatpush1.bf16.msra.mxu0 %v2257
          %2341 = vmatprep.subr.bf16.mxu0 0
          %2342 = vmatpush1.bf16.msra.mxu0 0
          %2343 = vmatprep.subr.bf16.mxu0 0
          %2344 = vmatpush1.bf16.msra.mxu0 0
          %2345 = vmatprep.subr.bf16.mxu0 0
          %2346 = vmatpush1.bf16.msra.mxu0 0
          %2347 = vmatprep.subr.bf16.mxu0 0
          %2348 = vmatpush1.bf16.msra.mxu0 0
          %2349 = vmatprep.subr.bf16.mxu0 0
          %2350 = vmatpush1.bf16.msra.mxu0 0
          %2351 = vmatprep.subr.bf16.mxu0 0
          %2352 = vmatpush1.bf16.msra.mxu0 0
          %2353 = vmatprep.subr.bf16.mxu0 0
          %2354 = vmatpush1.bf16.msra.mxu0 0
          %2355 = vmatprep.subr.bf16.mxu0 0
          %2356 = vmatpush1.bf16.msra.mxu0 0
          %2357 = vmatprep.mubr.bf16.mxu0 0
          %2358 = vmatmul.mubr.bf16.gmra.mrb[0].mxu0 %v2104
          %v2359 = vpop.f32.mrb[0].mxu0
          %v2360 = vadd.f32 %v2150, %v2359
          %v2361 = vpop.f32.mrb[0].mxu0
          %v2362 = vpop.f32.mrb[0].mxu0
          %v2363 = vadd.f32 %v2150, %v2362
          %v2364 = vpop.f32.mrb[0].mxu0
          %2365 = vdwg.mxu0
          %v2366 = vld [vmem:[%s1054] sm:$0xf]
          %v2367 = vld [vmem:[%s1054 + $0x4] sm:$0xf]
          %v2368 = vld [vmem:[%s1054 + $0x8] sm:$0xf]
          %v2369 = vld [vmem:[%s1054 + $0xc] sm:$0xf]
          %v2370 = vld [vmem:[%s1054 + $0x10] sm:$0xf]
          %v2371 = vld [vmem:[%s1054 + $0x14] sm:$0xf]
          %v2372 = vld [vmem:[%s1054 + $0x18] sm:$0xf]
          %v2373 = vld [vmem:[%s1054 + $0x1c] sm:$0xf]
          %v2374 = vld [vmem:[%s1054 + $0x20] sm:$0xf]
          %v2375 = vld [vmem:[%s1054 + $0x24] sm:$0xf]
          %v2376 = vld [vmem:[%s1054 + $0x28] sm:$0xf]
          %v2377 = vld [vmem:[%s1054 + $0x2c] sm:$0xf]
          %v2378 = vld [vmem:[%s1054 + $0x30] sm:$0xf]
          %v2379 = vld [vmem:[%s1054 + $0x34] sm:$0xf]
          %v2380 = vld [vmem:[%s1054 + $0x38] sm:$0xf]
          %v2381 = vld [vmem:[%s1054 + $0x3c] sm:$0xf]
          %p2382 = scmp.lt.s32.totalorder %s72, 0
          // Predicated region
          $region305: #{retrieval_database_forward.3} parent=299 // pred_check
            %p2383 = pneg %p2382
          $region306: #{retrieval_database_forward.3} parent=299 // pred_check_branch
            %2385 = sbr.rel (%p2383) target = $region308
          $region307: #{retrieval_database_forward.3} parent=299 // pred_region
            %v2386 = vpack.c.bf16 %v2317, %v2317
            %v2387 = vpack.c.bf16 %v2321, %v2321
            %v2388 = vpack.c.bf16 %v2319, %v2319
            %v2389 = vpack.c.bf16 %v2323, %v2323
            %vm2390 = vcmask 261120
            %v2392 = vsel %vm2390, %v2386, 0
            %v2395 = vsel %vm2390, %v2388, 0
            %2397 = vmatprep.subr.bf16.mxu0 0
            %2398 = vmatpush1.bf16.xpose.msra.mxu0 %v2395
            %2399 = vmatprep.subr.bf16.mxu0 0
            %2400 = vmatpush1.bf16.xpose.msra.mxu0 0
            %2401 = vmatprep.subr.bf16.mxu0 0
            %2402 = vmatpush1.bf16.xpose.msra.mxu0 0
            %2403 = vmatprep.subr.bf16.mxu0 0
            %2404 = vmatpush1.bf16.xpose.msra.mxu0 0
            %2405 = vmatprep.subr.bf16.mxu0 0
            %2406 = vmatpush1.bf16.xpose.msra.mxu0 0
            %2407 = vmatprep.subr.bf16.mxu0 0
            %2408 = vmatpush1.bf16.xpose.msra.mxu0 0
            %2409 = vmatprep.subr.bf16.mxu0 0
            %2410 = vmatpush1.bf16.xpose.msra.mxu0 0
            %2411 = vmatprep.subr.bf16.mxu0 0
            %2412 = vmatpush1.bf16.xpose.msra.mxu0 0
            %2413 = vmatprep.subr.bf16.mxu0 0
            %2414 = vmatpush1.bf16.xpose.msra.mxu0 0
            %2415 = vmatprep.subr.bf16.mxu0 0
            %2416 = vmatpush1.bf16.xpose.msra.mxu0 0
            %2417 = vmatprep.subr.bf16.mxu0 0
            %2418 = vmatpush1.bf16.xpose.msra.mxu0 0
            %2419 = vmatprep.subr.bf16.mxu0 0
            %2420 = vmatpush1.bf16.xpose.msra.mxu0 0
            %2421 = vmatprep.subr.bf16.mxu0 0
            %2422 = vmatpush1.bf16.xpose.msra.mxu0 0
            %2423 = vmatprep.subr.bf16.mxu0 0
            %2424 = vmatpush1.bf16.xpose.msra.mxu0 0
            %2425 = vmatprep.subr.bf16.mxu0 0
            %2426 = vmatpush1.bf16.xpose.msra.mxu0 0
            %2427 = vmatprep.subr.bf16.mxu0 0
            %2428 = vmatpush1.bf16.xpose.msra.mxu0 0
            %2429 = vmatprep.mubr.bf16.mxu0 0
            %2430 = vmatmul.mubr.bf16.gmra.mrb[0].mxu0 %v2392
            %v2431 = vpop.f32.mrb[0].mxu0
            %v2432 = vadd.f32 0.0, %v2431
            %v2433 = vpop.f32.mrb[0].mxu0
            %v2434 = vpop.f32.mrb[0].mxu0
            %v2435 = vpop.f32.mrb[0].mxu0
            %2436 = vdwg.mxu0
            %v2438 = vsel %vm2390, %v2387, 0
            %v2441 = vsel %vm2390, %v2389, 0
            %2443 = vmatprep.subr.bf16.mxu0 0
            %2444 = vmatpush1.bf16.xpose.msra.mxu0 %v2441
            %2445 = vmatprep.subr.bf16.mxu0 0
            %2446 = vmatpush1.bf16.xpose.msra.mxu0 0
            %2447 = vmatprep.subr.bf16.mxu0 0
            %2448 = vmatpush1.bf16.xpose.msra.mxu0 0
            %2449 = vmatprep.subr.bf16.mxu0 0
            %2450 = vmatpush1.bf16.xpose.msra.mxu0 0
            %2451 = vmatprep.subr.bf16.mxu0 0
            %2452 = vmatpush1.bf16.xpose.msra.mxu0 0
            %2453 = vmatprep.subr.bf16.mxu0 0
            %2454 = vmatpush1.bf16.xpose.msra.mxu0 0
            %2455 = vmatprep.subr.bf16.mxu0 0
            %2456 = vmatpush1.bf16.xpose.msra.mxu0 0
            %2457 = vmatprep.subr.bf16.mxu0 0
            %2458 = vmatpush1.bf16.xpose.msra.mxu0 0
            %2459 = vmatprep.subr.bf16.mxu0 0
            %2460 = vmatpush1.bf16.xpose.msra.mxu0 0
            %2461 = vmatprep.subr.bf16.mxu0 0
            %2462 = vmatpush1.bf16.xpose.msra.mxu0 0
            %2463 = vmatprep.subr.bf16.mxu0 0
            %2464 = vmatpush1.bf16.xpose.msra.mxu0 0
            %2465 = vmatprep.subr.bf16.mxu0 0
            %2466 = vmatpush1.bf16.xpose.msra.mxu0 0
            %2467 = vmatprep.subr.bf16.mxu0 0
            %2468 = vmatpush1.bf16.xpose.msra.mxu0 0
            %2469 = vmatprep.subr.bf16.mxu0 0
            %2470 = vmatpush1.bf16.xpose.msra.mxu0 0
            %2471 = vmatprep.subr.bf16.mxu0 0
            %2472 = vmatpush1.bf16.xpose.msra.mxu0 0
            %2473 = vmatprep.subr.bf16.mxu0 0
            %2474 = vmatpush1.bf16.xpose.msra.mxu0 0
            %2475 = vmatprep.mubr.bf16.mxu0 0
            %2476 = vmatmul.mubr.bf16.gmra.mrb[0].mxu0 %v2438
            %v2477 = vpop.f32.mrb[0].mxu0
            %v2478 = vadd.f32 0.0, %v2477
            %v2479 = vpop.f32.mrb[0].mxu0
            %v2480 = vpop.f32.mrb[0].mxu0
            %v2481 = vpop.f32.mrb[0].mxu0
            %2482 = vdwg.mxu0
            %v2483 = vmul.f32 %v2432, 0.17677669
            %v2484 = vmul.f32 %v2478, 0.17677669
            %vm2485 = vcmask 64512
            %v2486 = vsel %vm2485, %v2483, -inf
            %2487 = vmax.xlane.f32.xlu0 %v2486
            %v2488 = vpop.xlane.xlu0 %2487
            %v2489 = vsel %vm2485, %v2484, -inf
            %2490 = vmax.xlane.f32.xlu0 %v2489
            %v2491 = vpop.xlane.xlu0 %2490
            %v2492 = vsub.f32 %v2483, %v2488
            %v2493 = vsub.f32 %v2484, %v2491
            %v2494 = vmul.f32 %v2492, 1.442695
            %v2495 = vpow.pop %v2494
            %v2496 = vmul.f32 %v2493, 1.442695
            %v2497 = vpow.pop %v2496
            %v2498 = vsel %vm2485, %v2495, 0.0
            %2499 = vadd.xlane.f32.xlu0 %v2498
            %v2500 = vpop.xlane.xlu0 %2499
            %v2501 = vsel %vm2485, %v2497, 0.0
            %2502 = vadd.xlane.f32.xlu0 %v2501
            %v2503 = vpop.xlane.xlu0 %2502
            %v2504 = vrcp.pop %v2500
            %v2505 = vmul.f32 %v2495, %v2504
            %v2506 = vrcp.pop %v2503
            %v2507 = vmul.f32 %v2497, %v2506
            %v2508 = vpack.c.bf16 %v2505, %v2505
            %v2509 = vpack.c.bf16 %v2507, %v2507
            %v2510 = vpack.c.bf16 %v2360, %v2360
            %v2511 = vpack.c.bf16 %v2363, %v2363
            %v2513 = vsel %vm2485, %v2508, 0
            %vm2515 = vcmask 1043456
            %v2517 = vsel %vm2515, %v2510, 0
            %2519 = vmatprep.subr.bf16.mxu0 0
            %2520 = vmatpush1.bf16.msra.mxu0 %v2517
            %2521 = vmatprep.subr.bf16.mxu0 0
            %2522 = vmatpush1.bf16.msra.mxu0 0
            %2523 = vmatprep.subr.bf16.mxu0 0
            %2524 = vmatpush1.bf16.msra.mxu0 0
            %2525 = vmatprep.subr.bf16.mxu0 0
            %2526 = vmatpush1.bf16.msra.mxu0 0
            %2527 = vmatprep.subr.bf16.mxu0 0
            %2528 = vmatpush1.bf16.msra.mxu0 0
            %2529 = vmatprep.subr.bf16.mxu0 0
            %2530 = vmatpush1.bf16.msra.mxu0 0
            %2531 = vmatprep.subr.bf16.mxu0 0
            %2532 = vmatpush1.bf16.msra.mxu0 0
            %2533 = vmatprep.subr.bf16.mxu0 0
            %2534 = vmatpush1.bf16.msra.mxu0 0
            %2535 = vmatprep.subr.bf16.mxu0 0
            %2536 = vmatpush1.bf16.msra.mxu0 0
            %2537 = vmatprep.subr.bf16.mxu0 0
            %2538 = vmatpush1.bf16.msra.mxu0 0
            %2539 = vmatprep.subr.bf16.mxu0 0
            %2540 = vmatpush1.bf16.msra.mxu0 0
            %2541 = vmatprep.subr.bf16.mxu0 0
            %2542 = vmatpush1.bf16.msra.mxu0 0
            %2543 = vmatprep.subr.bf16.mxu0 0
            %2544 = vmatpush1.bf16.msra.mxu0 0
            %2545 = vmatprep.subr.bf16.mxu0 0
            %2546 = vmatpush1.bf16.msra.mxu0 0
            %2547 = vmatprep.subr.bf16.mxu0 0
            %2548 = vmatpush1.bf16.msra.mxu0 0
            %2549 = vmatprep.subr.bf16.mxu0 0
            %2550 = vmatpush1.bf16.msra.mxu0 0
            %2551 = vmatprep.mubr.bf16.mxu0 0
            %2552 = vmatmul.mubr.bf16.gmra.mrb[0].mxu0 %v2513
            %v2553 = vpop.f32.mrb[0].mxu0
            %v2554 = vadd.f32 0.0, %v2553
            %v2555 = vpop.f32.mrb[0].mxu0
            %v2556 = vpop.f32.mrb[0].mxu0
            %v2557 = vpop.f32.mrb[0].mxu0
            %2558 = vdwg.mxu0
            %v2560 = vsel %vm2485, %v2509, 0
            %v2563 = vsel %vm2515, %v2511, 0
            %2565 = vmatprep.subr.bf16.mxu0 0
            %2566 = vmatpush1.bf16.msra.mxu0 %v2563
            %2567 = vmatprep.subr.bf16.mxu0 0
            %2568 = vmatpush1.bf16.msra.mxu0 0
            %2569 = vmatprep.subr.bf16.mxu0 0
            %2570 = vmatpush1.bf16.msra.mxu0 0
            %2571 = vmatprep.subr.bf16.mxu0 0
            %2572 = vmatpush1.bf16.msra.mxu0 0
            %2573 = vmatprep.subr.bf16.mxu0 0
            %2574 = vmatpush1.bf16.msra.mxu0 0
            %2575 = vmatprep.subr.bf16.mxu0 0
            %2576 = vmatpush1.bf16.msra.mxu0 0
            %2577 = vmatprep.subr.bf16.mxu0 0
            %2578 = vmatpush1.bf16.msra.mxu0 0
            %2579 = vmatprep.subr.bf16.mxu0 0
            %2580 = vmatpush1.bf16.msra.mxu0 0
            %2581 = vmatprep.subr.bf16.mxu0 0
            %2582 = vmatpush1.bf16.msra.mxu0 0
            %2583 = vmatprep.subr.bf16.mxu0 0
            %2584 = vmatpush1.bf16.msra.mxu0 0
            %2585 = vmatprep.subr.bf16.mxu0 0
            %2586 = vmatpush1.bf16.msra.mxu0 0
            %2587 = vmatprep.subr.bf16.mxu0 0
            %2588 = vmatpush1.bf16.msra.mxu0 0
            %2589 = vmatprep.subr.bf16.mxu0 0
            %2590 = vmatpush1.bf16.msra.mxu0 0
            %2591 = vmatprep.subr.bf16.mxu0 0
            %2592 = vmatpush1.bf16.msra.mxu0 0
            %2593 = vmatprep.subr.bf16.mxu0 0
            %2594 = vmatpush1.bf16.msra.mxu0 0
            %2595 = vmatprep.subr.bf16.mxu0 0
            %2596 = vmatpush1.bf16.msra.mxu0 0
            %2597 = vmatprep.mubr.bf16.mxu0 0
            %2598 = vmatmul.mubr.bf16.gmra.mrb[0].mxu0 %v2560
            %v2599 = vpop.f32.mrb[0].mxu0
            %v2600 = vadd.f32 0.0, %v2599
            %v2601 = vpop.f32.mrb[0].mxu0
            %v2602 = vpop.f32.mrb[0].mxu0
            %v2603 = vpop.f32.mrb[0].mxu0
            %2604 = vdwg.mxu0
            %v2605 = vpack.c.bf16 %v2600, %v2554
            %2607 = vrot.lane.b32.xlu0 %v2386, 96
            %v2608 = vpop.permute.xlu0 %2607
            %2610 = vrot.lane.b32.xlu0 %v2388, 96
            %v2611 = vpop.permute.xlu0 %2610
            %v2613 = vsel %vm2390, %v2608, 0
            %v2616 = vsel %vm2390, %v2611, 0
            %2618 = vmatprep.subr.bf16.mxu0 0
            %2619 = vmatpush1.bf16.xpose.msra.mxu0 %v2616
            %2620 = vmatprep.subr.bf16.mxu0 0
            %2621 = vmatpush1.bf16.xpose.msra.mxu0 0
            %2622 = vmatprep.subr.bf16.mxu0 0
            %2623 = vmatpush1.bf16.xpose.msra.mxu0 0
            %2624 = vmatprep.subr.bf16.mxu0 0
            %2625 = vmatpush1.bf16.xpose.msra.mxu0 0
            %2626 = vmatprep.subr.bf16.mxu0 0
            %2627 = vmatpush1.bf16.xpose.msra.mxu0 0
            %2628 = vmatprep.subr.bf16.mxu0 0
            %2629 = vmatpush1.bf16.xpose.msra.mxu0 0
            %2630 = vmatprep.subr.bf16.mxu0 0
            %2631 = vmatpush1.bf16.xpose.msra.mxu0 0
            %2632 = vmatprep.subr.bf16.mxu0 0
            %2633 = vmatpush1.bf16.xpose.msra.mxu0 0
            %2634 = vmatprep.subr.bf16.mxu0 0
            %2635 = vmatpush1.bf16.xpose.msra.mxu0 0
            %2636 = vmatprep.subr.bf16.mxu0 0
            %2637 = vmatpush1.bf16.xpose.msra.mxu0 0
            %2638 = vmatprep.subr.bf16.mxu0 0
            %2639 = vmatpush1.bf16.xpose.msra.mxu0 0
            %2640 = vmatprep.subr.bf16.mxu0 0
            %2641 = vmatpush1.bf16.xpose.msra.mxu0 0
            %2642 = vmatprep.subr.bf16.mxu0 0
            %2643 = vmatpush1.bf16.xpose.msra.mxu0 0
            %2644 = vmatprep.subr.bf16.mxu0 0
            %2645 = vmatpush1.bf16.xpose.msra.mxu0 0
            %2646 = vmatprep.subr.bf16.mxu0 0
            %2647 = vmatpush1.bf16.xpose.msra.mxu0 0
            %2648 = vmatprep.subr.bf16.mxu0 0
            %2649 = vmatpush1.bf16.xpose.msra.mxu0 0
            %2650 = vmatprep.mubr.bf16.mxu0 0
            %2651 = vmatmul.mubr.bf16.gmra.mrb[0].mxu0 %v2613
            %v2652 = vpop.f32.mrb[0].mxu0
            %v2653 = vadd.f32 0.0, %v2652
            %v2654 = vpop.f32.mrb[0].mxu0
            %v2655 = vpop.f32.mrb[0].mxu0
            %v2656 = vpop.f32.mrb[0].mxu0
            %2657 = vdwg.mxu0
            %2659 = vrot.lane.b32.xlu0 %v2387, 96
            %v2660 = vpop.permute.xlu0 %2659
            %2662 = vrot.lane.b32.xlu0 %v2389, 96
            %v2663 = vpop.permute.xlu0 %2662
            %v2665 = vsel %vm2390, %v2660, 0
            %v2668 = vsel %vm2390, %v2663, 0
            %2670 = vmatprep.subr.bf16.mxu0 0
            %2671 = vmatpush1.bf16.xpose.msra.mxu0 %v2668
            %2672 = vmatprep.subr.bf16.mxu0 0
            %2673 = vmatpush1.bf16.xpose.msra.mxu0 0
            %2674 = vmatprep.subr.bf16.mxu0 0
            %2675 = vmatpush1.bf16.xpose.msra.mxu0 0
            %2676 = vmatprep.subr.bf16.mxu0 0
            %2677 = vmatpush1.bf16.xpose.msra.mxu0 0
            %2678 = vmatprep.subr.bf16.mxu0 0
            %2679 = vmatpush1.bf16.xpose.msra.mxu0 0
            %2680 = vmatprep.subr.bf16.mxu0 0
            %2681 = vmatpush1.bf16.xpose.msra.mxu0 0
            %2682 = vmatprep.subr.bf16.mxu0 0
            %2683 = vmatpush1.bf16.xpose.msra.mxu0 0
            %2684 = vmatprep.subr.bf16.mxu0 0
            %2685 = vmatpush1.bf16.xpose.msra.mxu0 0
            %2686 = vmatprep.subr.bf16.mxu0 0
            %2687 = vmatpush1.bf16.xpose.msra.mxu0 0
            %2688 = vmatprep.subr.bf16.mxu0 0
            %2689 = vmatpush1.bf16.xpose.msra.mxu0 0
            %2690 = vmatprep.subr.bf16.mxu0 0
            %2691 = vmatpush1.bf16.xpose.msra.mxu0 0
            %2692 = vmatprep.subr.bf16.mxu0 0
            %2693 = vmatpush1.bf16.xpose.msra.mxu0 0
            %2694 = vmatprep.subr.bf16.mxu0 0
            %2695 = vmatpush1.bf16.xpose.msra.mxu0 0
            %2696 = vmatprep.subr.bf16.mxu0 0
            %2697 = vmatpush1.bf16.xpose.msra.mxu0 0
            %2698 = vmatprep.subr.bf16.mxu0 0
            %2699 = vmatpush1.bf16.xpose.msra.mxu0 0
            %2700 = vmatprep.subr.bf16.mxu0 0
            %2701 = vmatpush1.bf16.xpose.msra.mxu0 0
            %2702 = vmatprep.mubr.bf16.mxu0 0
            %2703 = vmatmul.mubr.bf16.gmra.mrb[0].mxu0 %v2665
            %v2704 = vpop.f32.mrb[0].mxu0
            %v2705 = vadd.f32 0.0, %v2704
            %v2706 = vpop.f32.mrb[0].mxu0
            %v2707 = vpop.f32.mrb[0].mxu0
            %v2708 = vpop.f32.mrb[0].mxu0
            %2709 = vdwg.mxu0
            %v2710 = vmul.f32 %v2653, 0.17677669
            %v2711 = vmul.f32 %v2705, 0.17677669
            %v2712 = vsel %vm2485, %v2710, -inf
            %2713 = vmax.xlane.f32.xlu0 %v2712
            %v2714 = vpop.xlane.xlu0 %2713
            %v2715 = vsel %vm2485, %v2711, -inf
            %2716 = vmax.xlane.f32.xlu0 %v2715
            %v2717 = vpop.xlane.xlu0 %2716
            %v2718 = vsub.f32 %v2710, %v2714
            %v2719 = vsub.f32 %v2711, %v2717
            %v2720 = vmul.f32 %v2718, 1.442695
            %v2721 = vpow.pop %v2720
            %v2722 = vmul.f32 %v2719, 1.442695
            %v2723 = vpow.pop %v2722
            %v2724 = vsel %vm2485, %v2721, 0.0
            %2725 = vadd.xlane.f32.xlu0 %v2724
            %v2726 = vpop.xlane.xlu0 %2725
            %v2727 = vsel %vm2485, %v2723, 0.0
            %2728 = vadd.xlane.f32.xlu0 %v2727
            %v2729 = vpop.xlane.xlu0 %2728
            %v2730 = vrcp.pop %v2726
            %v2731 = vmul.f32 %v2721, %v2730
            %v2732 = vrcp.pop %v2729
            %v2733 = vmul.f32 %v2723, %v2732
            %v2734 = vpack.c.bf16 %v2731, %v2731
            %v2735 = vpack.c.bf16 %v2733, %v2733
            %2737 = vrot.lane.b32.xlu0 %v2510, 96
            %v2738 = vpop.permute.xlu0 %2737
            %v2740 = vsel %vm2485, %v2734, 0
            %v2743 = vsel %vm2515, %v2738, 0
            %2745 = vmatprep.subr.bf16.mxu0 0
            %2746 = vmatpush1.bf16.msra.mxu0 %v2743
            %2747 = vmatprep.subr.bf16.mxu0 0
            %2748 = vmatpush1.bf16.msra.mxu0 0
            %2749 = vmatprep.subr.bf16.mxu0 0
            %2750 = vmatpush1.bf16.msra.mxu0 0
            %2751 = vmatprep.subr.bf16.mxu0 0
            %2752 = vmatpush1.bf16.msra.mxu0 0
            %2753 = vmatprep.subr.bf16.mxu0 0
            %2754 = vmatpush1.bf16.msra.mxu0 0
            %2755 = vmatprep.subr.bf16.mxu0 0
            %2756 = vmatpush1.bf16.msra.mxu0 0
            %2757 = vmatprep.subr.bf16.mxu0 0
            %2758 = vmatpush1.bf16.msra.mxu0 0
            %2759 = vmatprep.subr.bf16.mxu0 0
            %2760 = vmatpush1.bf16.msra.mxu0 0
            %2761 = vmatprep.subr.bf16.mxu0 0
            %2762 = vmatpush1.bf16.msra.mxu0 0
            %2763 = vmatprep.subr.bf16.mxu0 0
            %2764 = vmatpush1.bf16.msra.mxu0 0
            %2765 = vmatprep.subr.bf16.mxu0 0
            %2766 = vmatpush1.bf16.msra.mxu0 0
            %2767 = vmatprep.subr.bf16.mxu0 0
            %2768 = vmatpush1.bf16.msra.mxu0 0
            %2769 = vmatprep.subr.bf16.mxu0 0
            %2770 = vmatpush1.bf16.msra.mxu0 0
            %2771 = vmatprep.subr.bf16.mxu0 0
            %2772 = vmatpush1.bf16.msra.mxu0 0
            %2773 = vmatprep.subr.bf16.mxu0 0
            %2774 = vmatpush1.bf16.msra.mxu0 0
            %2775 = vmatprep.subr.bf16.mxu0 0
            %2776 = vmatpush1.bf16.msra.mxu0 0
            %2777 = vmatprep.mubr.bf16.mxu0 0
            %2778 = vmatmul.mubr.bf16.gmra.mrb[0].mxu0 %v2740
            %v2779 = vpop.f32.mrb[0].mxu0
            %v2780 = vadd.f32 0.0, %v2779
            %v2781 = vpop.f32.mrb[0].mxu0
            %v2782 = vpop.f32.mrb[0].mxu0
            %v2783 = vpop.f32.mrb[0].mxu0
            %2784 = vdwg.mxu0
            %2786 = vrot.lane.b32.xlu0 %v2511, 96
            %v2787 = vpop.permute.xlu0 %2786
            %v2789 = vsel %vm2485, %v2735, 0
            %v2792 = vsel %vm2515, %v2787, 0
            %2794 = vmatprep.subr.bf16.mxu0 0
            %2795 = vmatpush1.bf16.msra.mxu0 %v2792
            %2796 = vmatprep.subr.bf16.mxu0 0
            %2797 = vmatpush1.bf16.msra.mxu0 0
            %2798 = vmatprep.subr.bf16.mxu0 0
            %2799 = vmatpush1.bf16.msra.mxu0 0
            %2800 = vmatprep.subr.bf16.mxu0 0
            %2801 = vmatpush1.bf16.msra.mxu0 0
            %2802 = vmatprep.subr.bf16.mxu0 0
            %2803 = vmatpush1.bf16.msra.mxu0 0
            %2804 = vmatprep.subr.bf16.mxu0 0
            %2805 = vmatpush1.bf16.msra.mxu0 0
            %2806 = vmatprep.subr.bf16.mxu0 0
            %2807 = vmatpush1.bf16.msra.mxu0 0
            %2808 = vmatprep.subr.bf16.mxu0 0
            %2809 = vmatpush1.bf16.msra.mxu0 0
            %2810 = vmatprep.subr.bf16.mxu0 0
            %2811 = vmatpush1.bf16.msra.mxu0 0
            %2812 = vmatprep.subr.bf16.mxu0 0
            %2813 = vmatpush1.bf16.msra.mxu0 0
            %2814 = vmatprep.subr.bf16.mxu0 0
            %2815 = vmatpush1.bf16.msra.mxu0 0
            %2816 = vmatprep.subr.bf16.mxu0 0
            %2817 = vmatpush1.bf16.msra.mxu0 0
            %2818 = vmatprep.subr.bf16.mxu0 0
            %2819 = vmatpush1.bf16.msra.mxu0 0
            %2820 = vmatprep.subr.bf16.mxu0 0
            %2821 = vmatpush1.bf16.msra.mxu0 0
            %2822 = vmatprep.subr.bf16.mxu0 0
            %2823 = vmatpush1.bf16.msra.mxu0 0
            %2824 = vmatprep.subr.bf16.mxu0 0
            %2825 = vmatpush1.bf16.msra.mxu0 0
            %2826 = vmatprep.mubr.bf16.mxu0 0
            %2827 = vmatmul.mubr.bf16.gmra.mrb[0].mxu0 %v2789
            %v2828 = vpop.f32.mrb[0].mxu0
            %v2829 = vadd.f32 0.0, %v2828
            %v2830 = vpop.f32.mrb[0].mxu0
            %v2831 = vpop.f32.mrb[0].mxu0
            %v2832 = vpop.f32.mrb[0].mxu0
            %2833 = vdwg.mxu0
            %v2834 = vpack.c.bf16 %v2829, %v2780
            %v2839 = vunpack.c.l.b16 %v2370
            %v2840 = vunpack.c.l.b16 %v2371
            %v2841 = vunpack.c.l.b16 %v2372
            %v2842 = vunpack.c.l.b16 %v2373
            %v2843 = vpack.c.b16 %v2840, %v2839
            %v2844 = vpack.c.b16 %v2842, %v2841
            %v2848 = vsel %vm2390, %v2834, 0
            %2850 = vmatprep.subr.bf16.mxu0 0
            %2851 = vmatpush1.bf16.msra.mxu0 %v2843
            %2852 = vmatprep.subr.bf16.mxu0 0
            %2853 = vmatpush1.bf16.msra.mxu0 %v2844
            %2854 = vmatprep.subr.bf16.mxu0 0
            %2855 = vmatpush1.bf16.msra.mxu0 0
            %2856 = vmatprep.subr.bf16.mxu0 0
            %2857 = vmatpush1.bf16.msra.mxu0 0
            %2858 = vmatprep.subr.bf16.mxu0 0
            %2859 = vmatpush1.bf16.msra.mxu0 0
            %2860 = vmatprep.subr.bf16.mxu0 0
            %2861 = vmatpush1.bf16.msra.mxu0 0
            %2862 = vmatprep.subr.bf16.mxu0 0
            %2863 = vmatpush1.bf16.msra.mxu0 0
            %2864 = vmatprep.subr.bf16.mxu0 0
            %2865 = vmatpush1.bf16.msra.mxu0 0
            %2866 = vmatprep.subr.bf16.mxu0 0
            %2867 = vmatpush1.bf16.msra.mxu0 0
            %2868 = vmatprep.subr.bf16.mxu0 0
            %2869 = vmatpush1.bf16.msra.mxu0 0
            %2870 = vmatprep.subr.bf16.mxu0 0
            %2871 = vmatpush1.bf16.msra.mxu0 0
            %2872 = vmatprep.subr.bf16.mxu0 0
            %2873 = vmatpush1.bf16.msra.mxu0 0
            %2874 = vmatprep.subr.bf16.mxu0 0
            %2875 = vmatpush1.bf16.msra.mxu0 0
            %2876 = vmatprep.subr.bf16.mxu0 0
            %2877 = vmatpush1.bf16.msra.mxu0 0
            %2878 = vmatprep.subr.bf16.mxu0 0
            %2879 = vmatpush1.bf16.msra.mxu0 0
            %2880 = vmatprep.subr.bf16.mxu0 0
            %2881 = vmatpush1.bf16.msra.mxu0 0
            %2882 = vmatprep.mubr.bf16.mxu0 0
            %2883 = vmatmul.mubr.bf16.gmra.mrb[0].mxu0 %v2848
            %v2884 = vpop.f32.mrb[0].mxu0
            %v2885 = vadd.f32 0.0, %v2884
            %v2886 = vpop.f32.mrb[0].mxu0
            %v2887 = vpop.f32.mrb[0].mxu0
            %v2888 = vadd.f32 0.0, %v2887
            %v2889 = vpop.f32.mrb[0].mxu0
            %2890 = vdwg.mxu0
            %v2895 = vunpack.c.l.b16 %v2366
            %v2896 = vunpack.c.l.b16 %v2367
            %v2897 = vunpack.c.l.b16 %v2368
            %v2898 = vunpack.c.l.b16 %v2369
            %v2899 = vpack.c.b16 %v2896, %v2895
            %v2900 = vpack.c.b16 %v2898, %v2897
            %v2904 = vsel %vm2390, %v2605, 0
            %2906 = vmatprep.subr.bf16.mxu0 0
            %2907 = vmatpush1.bf16.msra.mxu0 %v2899
            %2908 = vmatprep.subr.bf16.mxu0 0
            %2909 = vmatpush1.bf16.msra.mxu0 %v2900
            %2910 = vmatprep.subr.bf16.mxu0 0
            %2911 = vmatpush1.bf16.msra.mxu0 0
            %2912 = vmatprep.subr.bf16.mxu0 0
            %2913 = vmatpush1.bf16.msra.mxu0 0
            %2914 = vmatprep.subr.bf16.mxu0 0
            %2915 = vmatpush1.bf16.msra.mxu0 0
            %2916 = vmatprep.subr.bf16.mxu0 0
            %2917 = vmatpush1.bf16.msra.mxu0 0
            %2918 = vmatprep.subr.bf16.mxu0 0
            %2919 = vmatpush1.bf16.msra.mxu0 0
            %2920 = vmatprep.subr.bf16.mxu0 0
            %2921 = vmatpush1.bf16.msra.mxu0 0
            %2922 = vmatprep.subr.bf16.mxu0 0
            %2923 = vmatpush1.bf16.msra.mxu0 0
            %2924 = vmatprep.subr.bf16.mxu0 0
            %2925 = vmatpush1.bf16.msra.mxu0 0
            %2926 = vmatprep.subr.bf16.mxu0 0
            %2927 = vmatpush1.bf16.msra.mxu0 0
            %2928 = vmatprep.subr.bf16.mxu0 0
            %2929 = vmatpush1.bf16.msra.mxu0 0
            %2930 = vmatprep.subr.bf16.mxu0 0
            %2931 = vmatpush1.bf16.msra.mxu0 0
            %2932 = vmatprep.subr.bf16.mxu0 0
            %2933 = vmatpush1.bf16.msra.mxu0 0
            %2934 = vmatprep.subr.bf16.mxu0 0
            %2935 = vmatpush1.bf16.msra.mxu0 0
            %2936 = vmatprep.subr.bf16.mxu0 0
            %2937 = vmatpush1.bf16.msra.mxu0 0
            %2938 = vmatprep.mubr.bf16.mxu0 0
            %2939 = vmatmul.mubr.bf16.gmra.mrb[0].mxu0 %v2904
            %v2940 = vpop.f32.mrb[0].mxu0
            %v2941 = vadd.f32 %v2885, %v2940
            %v2942 = vpop.f32.mrb[0].mxu0
            %v2943 = vpop.f32.mrb[0].mxu0
            %v2944 = vadd.f32 %v2888, %v2943
            %v2945 = vpop.f32.mrb[0].mxu0
            %2946 = vdwg.mxu0
            %2947 = vrot.lane.b32.xlu0 %v2386, 64
            %v2948 = vpop.permute.xlu0 %2947
            %2949 = vrot.lane.b32.xlu0 %v2388, 64
            %v2950 = vpop.permute.xlu0 %2949
            %v2952 = vsel %vm2390, %v2948, 0
            %v2955 = vsel %vm2390, %v2950, 0
            %2957 = vmatprep.subr.bf16.mxu0 0
            %2958 = vmatpush1.bf16.xpose.msra.mxu0 %v2955
            %2959 = vmatprep.subr.bf16.mxu0 0
            %2960 = vmatpush1.bf16.xpose.msra.mxu0 0
            %2961 = vmatprep.subr.bf16.mxu0 0
            %2962 = vmatpush1.bf16.xpose.msra.mxu0 0
            %2963 = vmatprep.subr.bf16.mxu0 0
            %2964 = vmatpush1.bf16.xpose.msra.mxu0 0
            %2965 = vmatprep.subr.bf16.mxu0 0
            %2966 = vmatpush1.bf16.xpose.msra.mxu0 0
            %2967 = vmatprep.subr.bf16.mxu0 0
            %2968 = vmatpush1.bf16.xpose.msra.mxu0 0
            %2969 = vmatprep.subr.bf16.mxu0 0
            %2970 = vmatpush1.bf16.xpose.msra.mxu0 0
            %2971 = vmatprep.subr.bf16.mxu0 0
            %2972 = vmatpush1.bf16.xpose.msra.mxu0 0
            %2973 = vmatprep.subr.bf16.mxu0 0
            %2974 = vmatpush1.bf16.xpose.msra.mxu0 0
            %2975 = vmatprep.subr.bf16.mxu0 0
            %2976 = vmatpush1.bf16.xpose.msra.mxu0 0
            %2977 = vmatprep.subr.bf16.mxu0 0
            %2978 = vmatpush1.bf16.xpose.msra.mxu0 0
            %2979 = vmatprep.subr.bf16.mxu0 0
            %2980 = vmatpush1.bf16.xpose.msra.mxu0 0
            %2981 = vmatprep.subr.bf16.mxu0 0
            %2982 = vmatpush1.bf16.xpose.msra.mxu0 0
            %2983 = vmatprep.subr.bf16.mxu0 0
            %2984 = vmatpush1.bf16.xpose.msra.mxu0 0
            %2985 = vmatprep.subr.bf16.mxu0 0
            %2986 = vmatpush1.bf16.xpose.msra.mxu0 0
            %2987 = vmatprep.subr.bf16.mxu0 0
            %2988 = vmatpush1.bf16.xpose.msra.mxu0 0
            %2989 = vmatprep.mubr.bf16.mxu0 0
            %2990 = vmatmul.mubr.bf16.gmra.mrb[0].mxu0 %v2952
            %v2991 = vpop.f32.mrb[0].mxu0
            %v2992 = vadd.f32 0.0, %v2991
            %v2993 = vpop.f32.mrb[0].mxu0
            %v2994 = vpop.f32.mrb[0].mxu0
            %v2995 = vpop.f32.mrb[0].mxu0
            %2996 = vdwg.mxu0
            %2997 = vrot.lane.b32.xlu0 %v2387, 64
            %v2998 = vpop.permute.xlu0 %2997
            %2999 = vrot.lane.b32.xlu0 %v2389, 64
            %v3000 = vpop.permute.xlu0 %2999
            %v3002 = vsel %vm2390, %v2998, 0
            %v3005 = vsel %vm2390, %v3000, 0
            %3007 = vmatprep.subr.bf16.mxu0 0
            %3008 = vmatpush1.bf16.xpose.msra.mxu0 %v3005
            %3009 = vmatprep.subr.bf16.mxu0 0
            %3010 = vmatpush1.bf16.xpose.msra.mxu0 0
            %3011 = vmatprep.subr.bf16.mxu0 0
            %3012 = vmatpush1.bf16.xpose.msra.mxu0 0
            %3013 = vmatprep.subr.bf16.mxu0 0
            %3014 = vmatpush1.bf16.xpose.msra.mxu0 0
            %3015 = vmatprep.subr.bf16.mxu0 0
            %3016 = vmatpush1.bf16.xpose.msra.mxu0 0
            %3017 = vmatprep.subr.bf16.mxu0 0
            %3018 = vmatpush1.bf16.xpose.msra.mxu0 0
            %3019 = vmatprep.subr.bf16.mxu0 0
            %3020 = vmatpush1.bf16.xpose.msra.mxu0 0
            %3021 = vmatprep.subr.bf16.mxu0 0
            %3022 = vmatpush1.bf16.xpose.msra.mxu0 0
            %3023 = vmatprep.subr.bf16.mxu0 0
            %3024 = vmatpush1.bf16.xpose.msra.mxu0 0
            %3025 = vmatprep.subr.bf16.mxu0 0
            %3026 = vmatpush1.bf16.xpose.msra.mxu0 0
            %3027 = vmatprep.subr.bf16.mxu0 0
            %3028 = vmatpush1.bf16.xpose.msra.mxu0 0
            %3029 = vmatprep.subr.bf16.mxu0 0
            %3030 = vmatpush1.bf16.xpose.msra.mxu0 0
            %3031 = vmatprep.subr.bf16.mxu0 0
            %3032 = vmatpush1.bf16.xpose.msra.mxu0 0
            %3033 = vmatprep.subr.bf16.mxu0 0
            %3034 = vmatpush1.bf16.xpose.msra.mxu0 0
            %3035 = vmatprep.subr.bf16.mxu0 0
            %3036 = vmatpush1.bf16.xpose.msra.mxu0 0
            %3037 = vmatprep.subr.bf16.mxu0 0
            %3038 = vmatpush1.bf16.xpose.msra.mxu0 0
            %3039 = vmatprep.mubr.bf16.mxu0 0
            %3040 = vmatmul.mubr.bf16.gmra.mrb[0].mxu0 %v3002
            %v3041 = vpop.f32.mrb[0].mxu0
            %v3042 = vadd.f32 0.0, %v3041
            %v3043 = vpop.f32.mrb[0].mxu0
            %v3044 = vpop.f32.mrb[0].mxu0
            %v3045 = vpop.f32.mrb[0].mxu0
            %3046 = vdwg.mxu0
            %v3047 = vmul.f32 %v2992, 0.17677669
            %v3048 = vmul.f32 %v3042, 0.17677669
            %v3049 = vsel %vm2485, %v3047, -inf
            %3050 = vmax.xlane.f32.xlu0 %v3049
            %v3051 = vpop.xlane.xlu0 %3050
            %v3052 = vsel %vm2485, %v3048, -inf
            %3053 = vmax.xlane.f32.xlu0 %v3052
            %v3054 = vpop.xlane.xlu0 %3053
            %v3055 = vsub.f32 %v3047, %v3051
            %v3056 = vsub.f32 %v3048, %v3054
            %v3057 = vmul.f32 %v3055, 1.442695
            %v3058 = vpow.pop %v3057
            %v3059 = vmul.f32 %v3056, 1.442695
            %v3060 = vpow.pop %v3059
            %v3061 = vsel %vm2485, %v3058, 0.0
            %3062 = vadd.xlane.f32.xlu0 %v3061
            %v3063 = vpop.xlane.xlu0 %3062
            %v3064 = vsel %vm2485, %v3060, 0.0
            %3065 = vadd.xlane.f32.xlu0 %v3064
            %v3066 = vpop.xlane.xlu0 %3065
            %v3067 = vrcp.pop %v3063
            %v3068 = vmul.f32 %v3058, %v3067
            %v3069 = vrcp.pop %v3066
            %v3070 = vmul.f32 %v3060, %v3069
            %v3071 = vpack.c.bf16 %v3068, %v3068
            %v3072 = vpack.c.bf16 %v3070, %v3070
            %3073 = vrot.lane.b32.xlu0 %v2510, 64
            %v3074 = vpop.permute.xlu0 %3073
            %v3076 = vsel %vm2485, %v3071, 0
            %v3079 = vsel %vm2515, %v3074, 0
            %3081 = vmatprep.subr.bf16.mxu0 0
            %3082 = vmatpush1.bf16.msra.mxu0 %v3079
            %3083 = vmatprep.subr.bf16.mxu0 0
            %3084 = vmatpush1.bf16.msra.mxu0 0
            %3085 = vmatprep.subr.bf16.mxu0 0
            %3086 = vmatpush1.bf16.msra.mxu0 0
            %3087 = vmatprep.subr.bf16.mxu0 0
            %3088 = vmatpush1.bf16.msra.mxu0 0
            %3089 = vmatprep.subr.bf16.mxu0 0
            %3090 = vmatpush1.bf16.msra.mxu0 0
            %3091 = vmatprep.subr.bf16.mxu0 0
            %3092 = vmatpush1.bf16.msra.mxu0 0
            %3093 = vmatprep.subr.bf16.mxu0 0
            %3094 = vmatpush1.bf16.msra.mxu0 0
            %3095 = vmatprep.subr.bf16.mxu0 0
            %3096 = vmatpush1.bf16.msra.mxu0 0
            %3097 = vmatprep.subr.bf16.mxu0 0
            %3098 = vmatpush1.bf16.msra.mxu0 0
            %3099 = vmatprep.subr.bf16.mxu0 0
            %3100 = vmatpush1.bf16.msra.mxu0 0
            %3101 = vmatprep.subr.bf16.mxu0 0
            %3102 = vmatpush1.bf16.msra.mxu0 0
            %3103 = vmatprep.subr.bf16.mxu0 0
            %3104 = vmatpush1.bf16.msra.mxu0 0
            %3105 = vmatprep.subr.bf16.mxu0 0
            %3106 = vmatpush1.bf16.msra.mxu0 0
            %3107 = vmatprep.subr.bf16.mxu0 0
            %3108 = vmatpush1.bf16.msra.mxu0 0
            %3109 = vmatprep.subr.bf16.mxu0 0
            %3110 = vmatpush1.bf16.msra.mxu0 0
            %3111 = vmatprep.subr.bf16.mxu0 0
            %3112 = vmatpush1.bf16.msra.mxu0 0
            %3113 = vmatprep.mubr.bf16.mxu0 0
            %3114 = vmatmul.mubr.bf16.gmra.mrb[0].mxu0 %v3076
            %v3115 = vpop.f32.mrb[0].mxu0
            %v3116 = vadd.f32 0.0, %v3115
            %v3117 = vpop.f32.mrb[0].mxu0
            %v3118 = vpop.f32.mrb[0].mxu0
            %v3119 = vpop.f32.mrb[0].mxu0
            %3120 = vdwg.mxu0
            %3121 = vrot.lane.b32.xlu0 %v2511, 64
            %v3122 = vpop.permute.xlu0 %3121
            %v3124 = vsel %vm2485, %v3072, 0
            %v3127 = vsel %vm2515, %v3122, 0
            %3129 = vmatprep.subr.bf16.mxu0 0
            %3130 = vmatpush1.bf16.msra.mxu0 %v3127
            %3131 = vmatprep.subr.bf16.mxu0 0
            %3132 = vmatpush1.bf16.msra.mxu0 0
            %3133 = vmatprep.subr.bf16.mxu0 0
            %3134 = vmatpush1.bf16.msra.mxu0 0
            %3135 = vmatprep.subr.bf16.mxu0 0
            %3136 = vmatpush1.bf16.msra.mxu0 0
            %3137 = vmatprep.subr.bf16.mxu0 0
            %3138 = vmatpush1.bf16.msra.mxu0 0
            %3139 = vmatprep.subr.bf16.mxu0 0
            %3140 = vmatpush1.bf16.msra.mxu0 0
            %3141 = vmatprep.subr.bf16.mxu0 0
            %3142 = vmatpush1.bf16.msra.mxu0 0
            %3143 = vmatprep.subr.bf16.mxu0 0
            %3144 = vmatpush1.bf16.msra.mxu0 0
            %3145 = vmatprep.subr.bf16.mxu0 0
            %3146 = vmatpush1.bf16.msra.mxu0 0
            %3147 = vmatprep.subr.bf16.mxu0 0
            %3148 = vmatpush1.bf16.msra.mxu0 0
            %3149 = vmatprep.subr.bf16.mxu0 0
            %3150 = vmatpush1.bf16.msra.mxu0 0
            %3151 = vmatprep.subr.bf16.mxu0 0
            %3152 = vmatpush1.bf16.msra.mxu0 0
            %3153 = vmatprep.subr.bf16.mxu0 0
            %3154 = vmatpush1.bf16.msra.mxu0 0
            %3155 = vmatprep.subr.bf16.mxu0 0
            %3156 = vmatpush1.bf16.msra.mxu0 0
            %3157 = vmatprep.subr.bf16.mxu0 0
            %3158 = vmatpush1.bf16.msra.mxu0 0
            %3159 = vmatprep.subr.bf16.mxu0 0
            %3160 = vmatpush1.bf16.msra.mxu0 0
            %3161 = vmatprep.mubr.bf16.mxu0 0
            %3162 = vmatmul.mubr.bf16.gmra.mrb[0].mxu0 %v3124
            %v3163 = vpop.f32.mrb[0].mxu0
            %v3164 = vadd.f32 0.0, %v3163
            %v3165 = vpop.f32.mrb[0].mxu0
            %v3166 = vpop.f32.mrb[0].mxu0
            %v3167 = vpop.f32.mrb[0].mxu0
            %3168 = vdwg.mxu0
            %v3169 = vpack.c.bf16 %v3164, %v3116
            %v3174 = vunpack.c.l.b16 %v2374
            %v3175 = vunpack.c.l.b16 %v2375
            %v3176 = vunpack.c.l.b16 %v2376
            %v3177 = vunpack.c.l.b16 %v2377
            %v3178 = vpack.c.b16 %v3175, %v3174
            %v3179 = vpack.c.b16 %v3177, %v3176
            %v3183 = vsel %vm2390, %v3169, 0
            %3185 = vmatprep.subr.bf16.mxu0 0
            %3186 = vmatpush1.bf16.msra.mxu0 %v3178
            %3187 = vmatprep.subr.bf16.mxu0 0
            %3188 = vmatpush1.bf16.msra.mxu0 %v3179
            %3189 = vmatprep.subr.bf16.mxu0 0
            %3190 = vmatpush1.bf16.msra.mxu0 0
            %3191 = vmatprep.subr.bf16.mxu0 0
            %3192 = vmatpush1.bf16.msra.mxu0 0
            %3193 = vmatprep.subr.bf16.mxu0 0
            %3194 = vmatpush1.bf16.msra.mxu0 0
            %3195 = vmatprep.subr.bf16.mxu0 0
            %3196 = vmatpush1.bf16.msra.mxu0 0
            %3197 = vmatprep.subr.bf16.mxu0 0
            %3198 = vmatpush1.bf16.msra.mxu0 0
            %3199 = vmatprep.subr.bf16.mxu0 0
            %3200 = vmatpush1.bf16.msra.mxu0 0
            %3201 = vmatprep.subr.bf16.mxu0 0
            %3202 = vmatpush1.bf16.msra.mxu0 0
            %3203 = vmatprep.subr.bf16.mxu0 0
            %3204 = vmatpush1.bf16.msra.mxu0 0
            %3205 = vmatprep.subr.bf16.mxu0 0
            %3206 = vmatpush1.bf16.msra.mxu0 0
            %3207 = vmatprep.subr.bf16.mxu0 0
            %3208 = vmatpush1.bf16.msra.mxu0 0
            %3209 = vmatprep.subr.bf16.mxu0 0
            %3210 = vmatpush1.bf16.msra.mxu0 0
            %3211 = vmatprep.subr.bf16.mxu0 0
            %3212 = vmatpush1.bf16.msra.mxu0 0
            %3213 = vmatprep.subr.bf16.mxu0 0
            %3214 = vmatpush1.bf16.msra.mxu0 0
            %3215 = vmatprep.subr.bf16.mxu0 0
            %3216 = vmatpush1.bf16.msra.mxu0 0
            %3217 = vmatprep.mubr.bf16.mxu0 0
            %3218 = vmatmul.mubr.bf16.gmra.mrb[0].mxu0 %v3183
            %v3219 = vpop.f32.mrb[0].mxu0
            %v3220 = vadd.f32 0.0, %v3219
            %v3221 = vpop.f32.mrb[0].mxu0
            %v3222 = vpop.f32.mrb[0].mxu0
            %v3223 = vadd.f32 0.0, %v3222
            %v3224 = vpop.f32.mrb[0].mxu0
            %3225 = vdwg.mxu0
            %v3226 = vadd.f32 %v2941, %v3220
            %v3227 = vadd.f32 %v2944, %v3223
            %3228 = vrot.lane.b32.xlu0 %v2386, 32
            %v3229 = vpop.permute.xlu0 %3228
            %3230 = vrot.lane.b32.xlu0 %v2388, 32
            %v3231 = vpop.permute.xlu0 %3230
            %v3233 = vsel %vm2390, %v3229, 0
            %v3236 = vsel %vm2390, %v3231, 0
            %3238 = vmatprep.subr.bf16.mxu0 0
            %3239 = vmatpush1.bf16.xpose.msra.mxu0 %v3236
            %3240 = vmatprep.subr.bf16.mxu0 0
            %3241 = vmatpush1.bf16.xpose.msra.mxu0 0
            %3242 = vmatprep.subr.bf16.mxu0 0
            %3243 = vmatpush1.bf16.xpose.msra.mxu0 0
            %3244 = vmatprep.subr.bf16.mxu0 0
            %3245 = vmatpush1.bf16.xpose.msra.mxu0 0
            %3246 = vmatprep.subr.bf16.mxu0 0
            %3247 = vmatpush1.bf16.xpose.msra.mxu0 0
            %3248 = vmatprep.subr.bf16.mxu0 0
            %3249 = vmatpush1.bf16.xpose.msra.mxu0 0
            %3250 = vmatprep.subr.bf16.mxu0 0
            %3251 = vmatpush1.bf16.xpose.msra.mxu0 0
            %3252 = vmatprep.subr.bf16.mxu0 0
            %3253 = vmatpush1.bf16.xpose.msra.mxu0 0
            %3254 = vmatprep.subr.bf16.mxu0 0
            %3255 = vmatpush1.bf16.xpose.msra.mxu0 0
            %3256 = vmatprep.subr.bf16.mxu0 0
            %3257 = vmatpush1.bf16.xpose.msra.mxu0 0
            %3258 = vmatprep.subr.bf16.mxu0 0
            %3259 = vmatpush1.bf16.xpose.msra.mxu0 0
            %3260 = vmatprep.subr.bf16.mxu0 0
            %3261 = vmatpush1.bf16.xpose.msra.mxu0 0
            %3262 = vmatprep.subr.bf16.mxu0 0
            %3263 = vmatpush1.bf16.xpose.msra.mxu0 0
            %3264 = vmatprep.subr.bf16.mxu0 0
            %3265 = vmatpush1.bf16.xpose.msra.mxu0 0
            %3266 = vmatprep.subr.bf16.mxu0 0
            %3267 = vmatpush1.bf16.xpose.msra.mxu0 0
            %3268 = vmatprep.subr.bf16.mxu0 0
            %3269 = vmatpush1.bf16.xpose.msra.mxu0 0
            %3270 = vmatprep.mubr.bf16.mxu0 0
            %3271 = vmatmul.mubr.bf16.gmra.mrb[0].mxu0 %v3233
            %v3272 = vpop.f32.mrb[0].mxu0
            %v3273 = vadd.f32 0.0, %v3272
            %v3274 = vpop.f32.mrb[0].mxu0
            %v3275 = vpop.f32.mrb[0].mxu0
            %v3276 = vpop.f32.mrb[0].mxu0
            %3277 = vdwg.mxu0
            %3278 = vrot.lane.b32.xlu0 %v2387, 32
            %v3279 = vpop.permute.xlu0 %3278
            %3280 = vrot.lane.b32.xlu0 %v2389, 32
            %v3281 = vpop.permute.xlu0 %3280
            %v3283 = vsel %vm2390, %v3279, 0
            %v3286 = vsel %vm2390, %v3281, 0
            %3288 = vmatprep.subr.bf16.mxu0 0
            %3289 = vmatpush1.bf16.xpose.msra.mxu0 %v3286
            %3290 = vmatprep.subr.bf16.mxu0 0
            %3291 = vmatpush1.bf16.xpose.msra.mxu0 0
            %3292 = vmatprep.subr.bf16.mxu0 0
            %3293 = vmatpush1.bf16.xpose.msra.mxu0 0
            %3294 = vmatprep.subr.bf16.mxu0 0
            %3295 = vmatpush1.bf16.xpose.msra.mxu0 0
            %3296 = vmatprep.subr.bf16.mxu0 0
            %3297 = vmatpush1.bf16.xpose.msra.mxu0 0
            %3298 = vmatprep.subr.bf16.mxu0 0
            %3299 = vmatpush1.bf16.xpose.msra.mxu0 0
            %3300 = vmatprep.subr.bf16.mxu0 0
            %3301 = vmatpush1.bf16.xpose.msra.mxu0 0
            %3302 = vmatprep.subr.bf16.mxu0 0
            %3303 = vmatpush1.bf16.xpose.msra.mxu0 0
            %3304 = vmatprep.subr.bf16.mxu0 0
            %3305 = vmatpush1.bf16.xpose.msra.mxu0 0
            %3306 = vmatprep.subr.bf16.mxu0 0
            %3307 = vmatpush1.bf16.xpose.msra.mxu0 0
            %3308 = vmatprep.subr.bf16.mxu0 0
            %3309 = vmatpush1.bf16.xpose.msra.mxu0 0
            %3310 = vmatprep.subr.bf16.mxu0 0
            %3311 = vmatpush1.bf16.xpose.msra.mxu0 0
            %3312 = vmatprep.subr.bf16.mxu0 0
            %3313 = vmatpush1.bf16.xpose.msra.mxu0 0
            %3314 = vmatprep.subr.bf16.mxu0 0
            %3315 = vmatpush1.bf16.xpose.msra.mxu0 0
            %3316 = vmatprep.subr.bf16.mxu0 0
            %3317 = vmatpush1.bf16.xpose.msra.mxu0 0
            %3318 = vmatprep.subr.bf16.mxu0 0
            %3319 = vmatpush1.bf16.xpose.msra.mxu0 0
            %3320 = vmatprep.mubr.bf16.mxu0 0
            %3321 = vmatmul.mubr.bf16.gmra.mrb[0].mxu0 %v3283
            %v3322 = vpop.f32.mrb[0].mxu0
            %v3323 = vadd.f32 0.0, %v3322
            %v3324 = vpop.f32.mrb[0].mxu0
            %v3325 = vpop.f32.mrb[0].mxu0
            %v3326 = vpop.f32.mrb[0].mxu0
            %3327 = vdwg.mxu0
            %v3328 = vmul.f32 %v3273, 0.17677669
            %v3329 = vmul.f32 %v3323, 0.17677669
            %v3330 = vsel %vm2485, %v3328, -inf
            %3331 = vmax.xlane.f32.xlu0 %v3330
            %v3332 = vpop.xlane.xlu0 %3331
            %v3333 = vsel %vm2485, %v3329, -inf
            %3334 = vmax.xlane.f32.xlu0 %v3333
            %v3335 = vpop.xlane.xlu0 %3334
            %v3336 = vsub.f32 %v3328, %v3332
            %v3337 = vsub.f32 %v3329, %v3335
            %v3338 = vmul.f32 %v3336, 1.442695
            %v3339 = vpow.pop %v3338
            %v3340 = vmul.f32 %v3337, 1.442695
            %v3341 = vpow.pop %v3340
            %v3342 = vsel %vm2485, %v3339, 0.0
            %3343 = vadd.xlane.f32.xlu0 %v3342
            %v3344 = vpop.xlane.xlu0 %3343
            %v3345 = vsel %vm2485, %v3341, 0.0
            %3346 = vadd.xlane.f32.xlu0 %v3345
            %v3347 = vpop.xlane.xlu0 %3346
            %v3348 = vrcp.pop %v3344
            %v3349 = vmul.f32 %v3339, %v3348
            %v3350 = vrcp.pop %v3347
            %v3351 = vmul.f32 %v3341, %v3350
            %v3352 = vpack.c.bf16 %v3349, %v3349
            %v3353 = vpack.c.bf16 %v3351, %v3351
            %3354 = vrot.lane.b32.xlu0 %v2510, 32
            %v3355 = vpop.permute.xlu0 %3354
            %v3357 = vsel %vm2485, %v3352, 0
            %v3360 = vsel %vm2515, %v3355, 0
            %3362 = vmatprep.subr.bf16.mxu0 0
            %3363 = vmatpush1.bf16.msra.mxu0 %v3360
            %3364 = vmatprep.subr.bf16.mxu0 0
            %3365 = vmatpush1.bf16.msra.mxu0 0
            %3366 = vmatprep.subr.bf16.mxu0 0
            %3367 = vmatpush1.bf16.msra.mxu0 0
            %3368 = vmatprep.subr.bf16.mxu0 0
            %3369 = vmatpush1.bf16.msra.mxu0 0
            %3370 = vmatprep.subr.bf16.mxu0 0
            %3371 = vmatpush1.bf16.msra.mxu0 0
            %3372 = vmatprep.subr.bf16.mxu0 0
            %3373 = vmatpush1.bf16.msra.mxu0 0
            %3374 = vmatprep.subr.bf16.mxu0 0
            %3375 = vmatpush1.bf16.msra.mxu0 0
            %3376 = vmatprep.subr.bf16.mxu0 0
            %3377 = vmatpush1.bf16.msra.mxu0 0
            %3378 = vmatprep.subr.bf16.mxu0 0
            %3379 = vmatpush1.bf16.msra.mxu0 0
            %3380 = vmatprep.subr.bf16.mxu0 0
            %3381 = vmatpush1.bf16.msra.mxu0 0
            %3382 = vmatprep.subr.bf16.mxu0 0
            %3383 = vmatpush1.bf16.msra.mxu0 0
            %3384 = vmatprep.subr.bf16.mxu0 0
            %3385 = vmatpush1.bf16.msra.mxu0 0
            %3386 = vmatprep.subr.bf16.mxu0 0
            %3387 = vmatpush1.bf16.msra.mxu0 0
            %3388 = vmatprep.subr.bf16.mxu0 0
            %3389 = vmatpush1.bf16.msra.mxu0 0
            %3390 = vmatprep.subr.bf16.mxu0 0
            %3391 = vmatpush1.bf16.msra.mxu0 0
            %3392 = vmatprep.subr.bf16.mxu0 0
            %3393 = vmatpush1.bf16.msra.mxu0 0
            %3394 = vmatprep.mubr.bf16.mxu0 0
            %3395 = vmatmul.mubr.bf16.gmra.mrb[0].mxu0 %v3357
            %v3396 = vpop.f32.mrb[0].mxu0
            %v3397 = vadd.f32 0.0, %v3396
            %v3398 = vpop.f32.mrb[0].mxu0
            %v3399 = vpop.f32.mrb[0].mxu0
            %v3400 = vpop.f32.mrb[0].mxu0
            %3401 = vdwg.mxu0
            %3402 = vrot.lane.b32.xlu0 %v2511, 32
            %v3403 = vpop.permute.xlu0 %3402
            %v3405 = vsel %vm2485, %v3353, 0
            %v3408 = vsel %vm2515, %v3403, 0
            %3410 = vmatprep.subr.bf16.mxu0 0
            %3411 = vmatpush1.bf16.msra.mxu0 %v3408
            %3412 = vmatprep.subr.bf16.mxu0 0
            %3413 = vmatpush1.bf16.msra.mxu0 0
            %3414 = vmatprep.subr.bf16.mxu0 0
            %3415 = vmatpush1.bf16.msra.mxu0 0
            %3416 = vmatprep.subr.bf16.mxu0 0
            %3417 = vmatpush1.bf16.msra.mxu0 0
            %3418 = vmatprep.subr.bf16.mxu0 0
            %3419 = vmatpush1.bf16.msra.mxu0 0
            %3420 = vmatprep.subr.bf16.mxu0 0
            %3421 = vmatpush1.bf16.msra.mxu0 0
            %3422 = vmatprep.subr.bf16.mxu0 0
            %3423 = vmatpush1.bf16.msra.mxu0 0
            %3424 = vmatprep.subr.bf16.mxu0 0
            %3425 = vmatpush1.bf16.msra.mxu0 0
            %3426 = vmatprep.subr.bf16.mxu0 0
            %3427 = vmatpush1.bf16.msra.mxu0 0
            %3428 = vmatprep.subr.bf16.mxu0 0
            %3429 = vmatpush1.bf16.msra.mxu0 0
            %3430 = vmatprep.subr.bf16.mxu0 0
            %3431 = vmatpush1.bf16.msra.mxu0 0
            %3432 = vmatprep.subr.bf16.mxu0 0
            %3433 = vmatpush1.bf16.msra.mxu0 0
            %3434 = vmatprep.subr.bf16.mxu0 0
            %3435 = vmatpush1.bf16.msra.mxu0 0
            %3436 = vmatprep.subr.bf16.mxu0 0
            %3437 = vmatpush1.bf16.msra.mxu0 0
            %3438 = vmatprep.subr.bf16.mxu0 0
            %3439 = vmatpush1.bf16.msra.mxu0 0
            %3440 = vmatprep.subr.bf16.mxu0 0
            %3441 = vmatpush1.bf16.msra.mxu0 0
            %3442 = vmatprep.mubr.bf16.mxu0 0
            %3443 = vmatmul.mubr.bf16.gmra.mrb[0].mxu0 %v3405
            %v3444 = vpop.f32.mrb[0].mxu0
            %v3445 = vadd.f32 0.0, %v3444
            %v3446 = vpop.f32.mrb[0].mxu0
            %v3447 = vpop.f32.mrb[0].mxu0
            %v3448 = vpop.f32.mrb[0].mxu0
            %3449 = vdwg.mxu0
            %v3450 = vpack.c.bf16 %v3445, %v3397
            %v3455 = vunpack.c.l.b16 %v2378
            %v3456 = vunpack.c.l.b16 %v2379
            %v3457 = vunpack.c.l.b16 %v2380
            %v3458 = vunpack.c.l.b16 %v2381
            %v3459 = vpack.c.b16 %v3456, %v3455
            %v3460 = vpack.c.b16 %v3458, %v3457
            %v3464 = vsel %vm2390, %v3450, 0
            %3466 = vmatprep.subr.bf16.mxu0 0
            %3467 = vmatpush1.bf16.msra.mxu0 %v3459
            %3468 = vmatprep.subr.bf16.mxu0 0
            %3469 = vmatpush1.bf16.msra.mxu0 %v3460
            %3470 = vmatprep.subr.bf16.mxu0 0
            %3471 = vmatpush1.bf16.msra.mxu0 0
            %3472 = vmatprep.subr.bf16.mxu0 0
            %3473 = vmatpush1.bf16.msra.mxu0 0
            %3474 = vmatprep.subr.bf16.mxu0 0
            %3475 = vmatpush1.bf16.msra.mxu0 0
            %3476 = vmatprep.subr.bf16.mxu0 0
            %3477 = vmatpush1.bf16.msra.mxu0 0
            %3478 = vmatprep.subr.bf16.mxu0 0
            %3479 = vmatpush1.bf16.msra.mxu0 0
            %3480 = vmatprep.subr.bf16.mxu0 0
            %3481 = vmatpush1.bf16.msra.mxu0 0
            %3482 = vmatprep.subr.bf16.mxu0 0
            %3483 = vmatpush1.bf16.msra.mxu0 0
            %3484 = vmatprep.subr.bf16.mxu0 0
            %3485 = vmatpush1.bf16.msra.mxu0 0
            %3486 = vmatprep.subr.bf16.mxu0 0
            %3487 = vmatpush1.bf16.msra.mxu0 0
            %3488 = vmatprep.subr.bf16.mxu0 0
            %3489 = vmatpush1.bf16.msra.mxu0 0
            %3490 = vmatprep.subr.bf16.mxu0 0
            %3491 = vmatpush1.bf16.msra.mxu0 0
            %3492 = vmatprep.subr.bf16.mxu0 0
            %3493 = vmatpush1.bf16.msra.mxu0 0
            %3494 = vmatprep.subr.bf16.mxu0 0
            %3495 = vmatpush1.bf16.msra.mxu0 0
            %3496 = vmatprep.subr.bf16.mxu0 0
            %3497 = vmatpush1.bf16.msra.mxu0 0
            %3498 = vmatprep.mubr.bf16.mxu0 0
            %3499 = vmatmul.mubr.bf16.gmra.mrb[0].mxu0 %v3464
            %v3500 = vpop.f32.mrb[0].mxu0
            %v3501 = vadd.f32 0.0, %v3500
            %v3502 = vpop.f32.mrb[0].mxu0
            %v3503 = vpop.f32.mrb[0].mxu0
            %v3504 = vadd.f32 0.0, %v3503
            %v3505 = vpop.f32.mrb[0].mxu0
            %3506 = vdwg.mxu0
            %v3507 = vadd.f32 %v3226, %v3501
            %v3508 = vadd.f32 %v3227, %v3504
            %v3509 = vadd.f32 %v2102, %v3507
            %v3510 = vadd.f32 %v2103, %v3508
            %v3511 = vld [vmem:[%s1062] sm:$0x1]
            %v3513 = vlaneseq
            %v3514 = vshrl.u32 %v3513, 7
            %v3515 = vsub.s32 0, %v3514
            %v3516 = vrot.slane %v3511, %v3515
            %v3518 = vadd.f32 %v3509, %v3516
            %v3519 = vadd.f32 %v3510, %v3516
            %v3520 = vld [vmem:[%s1070] sm:$0x1]
            %v3521 = vld [vmem:[%s1078] sm:$0x1]
            %3522 = vadd.xlane.f32.xlu0 %v3518
            %v3523 = vpop.xlane.xlu0 %3522
            %3524 = vadd.xlane.f32.xlu0 %v3519
            %v3525 = vpop.xlane.xlu0 %3524
            %v3526 = vrcp.pop 128.0
            %v3527 = vmul.f32 %v3523, %v3526
            %v3528 = vmul.f32 %v3525, %v3526
            %v3529 = vsub.f32 %v3518, %v3527
            %v3530 = vsub.f32 %v3519, %v3528
            %v3531 = vmul.f32 %v3529, %v3529
            %v3532 = vmul.f32 %v3530, %v3530
            %3533 = vadd.xlane.f32.xlu0 %v3531
            %v3534 = vpop.xlane.xlu0 %3533
            %3535 = vadd.xlane.f32.xlu0 %v3532
            %v3536 = vpop.xlane.xlu0 %3535
            %v3537 = vmul.f32 %v3534, %v3526
            %v3538 = vmul.f32 %v3536, %v3526
            %v3539 = vadd.f32 %v3537, 1e-05
            %v3540 = vadd.f32 %v3538, 1e-05
            %v3541 = vrsqrt.pop %v3539
            %v3542 = vrsqrt.pop %v3540
            %v3543 = vmul.f32 %v3529, %v3541
            %v3544 = vmul.f32 %v3530, %v3542
            %v3546 = vlaneseq
            %v3547 = vshrl.u32 %v3546, 7
            %v3548 = vsub.s32 0, %v3547
            %v3549 = vrot.slane %v3520, %v3548
            %v3551 = vmul.f32 %v3543, %v3549
            %v3552 = vmul.f32 %v3544, %v3549
            %v3554 = vlaneseq
            %v3555 = vshrl.u32 %v3554, 7
            %v3556 = vsub.s32 0, %v3555
            %v3557 = vrot.slane %v3521, %v3556
            %v3559 = vadd.f32 %v3551, %v3557
            %v3560 = vadd.f32 %v3552, %v3557
            %v3561 = vpack.c.bf16 %v3560, %v3559
            %v3562 = vld [vmem:[%s1087] sm:$0xff]
            %v3563 = vld [vmem:[%s1087 + $0x8] sm:$0xff]
            %v3564 = vld [vmem:[%s1087 + $0x10] sm:$0xff]
            %v3565 = vld [vmem:[%s1087 + $0x18] sm:$0xff]
            %v3566 = vld [vmem:[%s1087 + $0x20] sm:$0xff]
            %v3567 = vld [vmem:[%s1087 + $0x28] sm:$0xff]
            %v3568 = vld [vmem:[%s1087 + $0x30] sm:$0xff]
            %v3569 = vld [vmem:[%s1087 + $0x38] sm:$0xff]
            %v3570 = vld [vmem:[%s1087 + $0x40] sm:$0xff]
            %v3571 = vld [vmem:[%s1087 + $0x48] sm:$0xff]
            %v3572 = vld [vmem:[%s1087 + $0x50] sm:$0xff]
            %v3573 = vld [vmem:[%s1087 + $0x58] sm:$0xff]
            %v3574 = vld [vmem:[%s1087 + $0x60] sm:$0xff]
            %v3575 = vld [vmem:[%s1087 + $0x68] sm:$0xff]
            %v3576 = vld [vmem:[%s1087 + $0x70] sm:$0xff]
            %v3577 = vld [vmem:[%s1087 + $0x78] sm:$0xff]
            %v3578 = vld [vmem:[%s1096] sm:$0x3]
            %v3580 = vlaneseq
            %v3581 = vshrl.u32 %v3580, 7
            %v3582 = vsub.s32 0, %v3581
            %v3583 = vrot.slane %v3578, %v3582
            %v3584 = vlaneseq
            %v3585 = vshrl.u32 %v3584, 7
            %v3586 = vsub.s32 1, %v3585
            %v3587 = vrot.slane %v3578, %v3586
            %v3606 = vunpack.c.l.b16 %v3562
            %v3607 = vunpack.c.h.b16 %v3562
            %v3608 = vunpack.c.l.b16 %v3563
            %v3609 = vunpack.c.h.b16 %v3563
            %v3610 = vunpack.c.l.b16 %v3564
            %v3611 = vunpack.c.h.b16 %v3564
            %v3612 = vunpack.c.l.b16 %v3565
            %v3613 = vunpack.c.h.b16 %v3565
            %v3614 = vunpack.c.l.b16 %v3566
            %v3615 = vunpack.c.h.b16 %v3566
            %v3616 = vunpack.c.l.b16 %v3567
            %v3617 = vunpack.c.h.b16 %v3567
            %v3618 = vunpack.c.l.b16 %v3568
            %v3619 = vunpack.c.h.b16 %v3568
            %v3620 = vunpack.c.l.b16 %v3569
            %v3621 = vunpack.c.h.b16 %v3569
            %v3622 = vunpack.c.l.b16 %v3570
            %v3623 = vunpack.c.h.b16 %v3570
            %v3624 = vunpack.c.l.b16 %v3571
            %v3625 = vunpack.c.h.b16 %v3571
            %v3626 = vunpack.c.l.b16 %v3572
            %v3627 = vunpack.c.h.b16 %v3572
            %v3628 = vunpack.c.l.b16 %v3573
            %v3629 = vunpack.c.h.b16 %v3573
            %v3630 = vunpack.c.l.b16 %v3574
            %v3631 = vunpack.c.h.b16 %v3574
            %v3632 = vunpack.c.l.b16 %v3575
            %v3633 = vunpack.c.h.b16 %v3575
            %v3634 = vunpack.c.l.b16 %v3576
            %v3635 = vunpack.c.h.b16 %v3576
            %v3636 = vunpack.c.l.b16 %v3577
            %v3637 = vunpack.c.h.b16 %v3577
            %v3638 = vpack.c.b16 %v3608, %v3606
            %v3639 = vpack.c.b16 %v3609, %v3607
            %v3640 = vpack.c.b16 %v3612, %v3610
            %v3641 = vpack.c.b16 %v3613, %v3611
            %v3642 = vpack.c.b16 %v3616, %v3614
            %v3643 = vpack.c.b16 %v3617, %v3615
            %v3644 = vpack.c.b16 %v3620, %v3618
            %v3645 = vpack.c.b16 %v3621, %v3619
            %v3646 = vpack.c.b16 %v3624, %v3622
            %v3647 = vpack.c.b16 %v3625, %v3623
            %v3648 = vpack.c.b16 %v3628, %v3626
            %v3649 = vpack.c.b16 %v3629, %v3627
            %v3650 = vpack.c.b16 %v3632, %v3630
            %v3651 = vpack.c.b16 %v3633, %v3631
            %v3652 = vpack.c.b16 %v3636, %v3634
            %v3653 = vpack.c.b16 %v3637, %v3635
            %3670 = vmatprep.subr.bf16.mxu0 %v3639
            %3671 = vmatpush1.bf16.msra.mxu0 %v3638
            %3672 = vmatprep.subr.bf16.mxu0 %v3641
            %3673 = vmatpush1.bf16.msra.mxu0 %v3640
            %3674 = vmatprep.subr.bf16.mxu0 %v3643
            %3675 = vmatpush1.bf16.msra.mxu0 %v3642
            %3676 = vmatprep.subr.bf16.mxu0 %v3645
            %3677 = vmatpush1.bf16.msra.mxu0 %v3644
            %3678 = vmatprep.subr.bf16.mxu0 %v3647
            %3679 = vmatpush1.bf16.msra.mxu0 %v3646
            %3680 = vmatprep.subr.bf16.mxu0 %v3649
            %3681 = vmatpush1.bf16.msra.mxu0 %v3648
            %3682 = vmatprep.subr.bf16.mxu0 %v3651
            %3683 = vmatpush1.bf16.msra.mxu0 %v3650
            %3684 = vmatprep.subr.bf16.mxu0 %v3653
            %3685 = vmatpush1.bf16.msra.mxu0 %v3652
            %3686 = vmatprep.subr.bf16.mxu0 0
            %3687 = vmatpush1.bf16.msra.mxu0 0
            %3688 = vmatprep.subr.bf16.mxu0 0
            %3689 = vmatpush1.bf16.msra.mxu0 0
            %3690 = vmatprep.subr.bf16.mxu0 0
            %3691 = vmatpush1.bf16.msra.mxu0 0
            %3692 = vmatprep.subr.bf16.mxu0 0
            %3693 = vmatpush1.bf16.msra.mxu0 0
            %3694 = vmatprep.subr.bf16.mxu0 0
            %3695 = vmatpush1.bf16.msra.mxu0 0
            %3696 = vmatprep.subr.bf16.mxu0 0
            %3697 = vmatpush1.bf16.msra.mxu0 0
            %3698 = vmatprep.subr.bf16.mxu0 0
            %3699 = vmatpush1.bf16.msra.mxu0 0
            %3700 = vmatprep.subr.bf16.mxu0 0
            %3701 = vmatpush1.bf16.msra.mxu0 0
            %3702 = vmatprep.mubr.bf16.mxu0 0
            %3703 = vmatmul.mubr.bf16.gmra.mrb[0].mxu0 %v3561
            %v3704 = vpop.f32.mrb[0].mxu0
            %v3705 = vadd.f32 %v3583, %v3704
            %v3706 = vpop.f32.mrb[0].mxu0
            %v3707 = vadd.f32 %v3587, %v3706
            %v3708 = vpop.f32.mrb[0].mxu0
            %v3709 = vadd.f32 %v3583, %v3708
            %v3710 = vpop.f32.mrb[0].mxu0
            %v3711 = vadd.f32 %v3587, %v3710
            %3712 = vdwg.mxu0
            %v3713 = vmul.f32 %v3705, 0.5
            %v3714 = vmul.f32 %v3707, 0.5
            %v3715 = vmul.f32 %v3709, 0.5
            %v3716 = vmul.f32 %v3711, 0.5
            %v3717 = vmul.f32 %v3705, 0.044715
            %v3718 = vmul.f32 %v3707, 0.044715
            %v3719 = vmul.f32 %v3709, 0.044715
            %v3720 = vmul.f32 %v3711, 0.044715
            %v3721 = vmul.f32 %v3717, %v3705
            %v3722 = vmul.f32 %v3718, %v3707
            %v3723 = vmul.f32 %v3719, %v3709
            %v3724 = vmul.f32 %v3720, %v3711
            %v3725 = vmul.f32 %v3721, %v3705
            %v3726 = vmul.f32 %v3722, %v3707
            %v3727 = vmul.f32 %v3723, %v3709
            %v3728 = vmul.f32 %v3724, %v3711
            %v3729 = vadd.f32 %v3705, %v3725
            %v3730 = vadd.f32 %v3707, %v3726
            %v3731 = vadd.f32 %v3709, %v3727
            %v3732 = vadd.f32 %v3711, %v3728
            %v3733 = vmul.f32 %v3729, 0.7978846
            %v3734 = vmul.f32 %v3730, 0.7978846
            %v3735 = vmul.f32 %v3731, 0.7978846
            %v3736 = vmul.f32 %v3732, 0.7978846
            %v3737 = vtanh.pop %v3733
            %v3738 = vtanh.pop %v3734
            %v3739 = vtanh.pop %v3735
            %v3740 = vtanh.pop %v3736
            %v3741 = vadd.f32 %v3737, 1.0
            %v3742 = vadd.f32 %v3738, 1.0
            %v3743 = vadd.f32 %v3739, 1.0
            %v3744 = vadd.f32 %v3740, 1.0
            %v3745 = vmul.f32 %v3713, %v3741
            %v3746 = vmul.f32 %v3714, %v3742
            %v3747 = vmul.f32 %v3715, %v3743
            %v3748 = vmul.f32 %v3716, %v3744
            %v3749 = vpack.c.bf16 %v3747, %v3745
            %v3750 = vpack.c.bf16 %v3748, %v3746
            %v3751 = vld [vmem:[%s1105] sm:$0xf]
            %v3752 = vld [vmem:[%s1105 + $0x4] sm:$0xf]
            %v3753 = vld [vmem:[%s1105 + $0x8] sm:$0xf]
            %v3754 = vld [vmem:[%s1105 + $0xc] sm:$0xf]
            %v3755 = vld [vmem:[%s1105 + $0x10] sm:$0xf]
            %v3756 = vld [vmem:[%s1105 + $0x14] sm:$0xf]
            %v3757 = vld [vmem:[%s1105 + $0x18] sm:$0xf]
            %v3758 = vld [vmem:[%s1105 + $0x1c] sm:$0xf]
            %v3759 = vld [vmem:[%s1105 + $0x20] sm:$0xf]
            %v3760 = vld [vmem:[%s1105 + $0x24] sm:$0xf]
            %v3761 = vld [vmem:[%s1105 + $0x28] sm:$0xf]
            %v3762 = vld [vmem:[%s1105 + $0x2c] sm:$0xf]
            %v3763 = vld [vmem:[%s1105 + $0x30] sm:$0xf]
            %v3764 = vld [vmem:[%s1105 + $0x34] sm:$0xf]
            %v3765 = vld [vmem:[%s1105 + $0x38] sm:$0xf]
            %v3766 = vld [vmem:[%s1105 + $0x3c] sm:$0xf]
            %v3767 = vld [vmem:[%s1105 + $0x40] sm:$0xf]
            %v3768 = vld [vmem:[%s1105 + $0x44] sm:$0xf]
            %v3769 = vld [vmem:[%s1105 + $0x48] sm:$0xf]
            %v3770 = vld [vmem:[%s1105 + $0x4c] sm:$0xf]
            %v3771 = vld [vmem:[%s1105 + $0x50] sm:$0xf]
            %v3772 = vld [vmem:[%s1105 + $0x54] sm:$0xf]
            %v3773 = vld [vmem:[%s1105 + $0x58] sm:$0xf]
            %v3774 = vld [vmem:[%s1105 + $0x5c] sm:$0xf]
            %v3775 = vld [vmem:[%s1105 + $0x60] sm:$0xf]
            %v3776 = vld [vmem:[%s1105 + $0x64] sm:$0xf]
            %v3777 = vld [vmem:[%s1105 + $0x68] sm:$0xf]
            %v3778 = vld [vmem:[%s1105 + $0x6c] sm:$0xf]
            %v3779 = vld [vmem:[%s1105 + $0x70] sm:$0xf]
            %v3780 = vld [vmem:[%s1105 + $0x74] sm:$0xf]
            %v3781 = vld [vmem:[%s1105 + $0x78] sm:$0xf]
            %v3782 = vld [vmem:[%s1105 + $0x7c] sm:$0xf]
            %v3783 = vld [vmem:[%s1113] sm:$0x1]
            %v3785 = vlaneseq
            %v3786 = vshrl.u32 %v3785, 7
            %v3787 = vsub.s32 0, %v3786
            %v3788 = vrot.slane %v3783, %v3787
            %v3822 = vunpack.c.l.b16 %v3751
            %v3823 = vunpack.c.l.b16 %v3752
            %v3824 = vunpack.c.l.b16 %v3753
            %v3825 = vunpack.c.l.b16 %v3754
            %v3826 = vunpack.c.l.b16 %v3755
            %v3827 = vunpack.c.l.b16 %v3756
            %v3828 = vunpack.c.l.b16 %v3757
            %v3829 = vunpack.c.l.b16 %v3758
            %v3830 = vunpack.c.l.b16 %v3759
            %v3831 = vunpack.c.l.b16 %v3760
            %v3832 = vunpack.c.l.b16 %v3761
            %v3833 = vunpack.c.l.b16 %v3762
            %v3834 = vunpack.c.l.b16 %v3763
            %v3835 = vunpack.c.l.b16 %v3764
            %v3836 = vunpack.c.l.b16 %v3765
            %v3837 = vunpack.c.l.b16 %v3766
            %v3838 = vunpack.c.l.b16 %v3767
            %v3839 = vunpack.c.l.b16 %v3768
            %v3840 = vunpack.c.l.b16 %v3769
            %v3841 = vunpack.c.l.b16 %v3770
            %v3842 = vunpack.c.l.b16 %v3771
            %v3843 = vunpack.c.l.b16 %v3772
            %v3844 = vunpack.c.l.b16 %v3773
            %v3845 = vunpack.c.l.b16 %v3774
            %v3846 = vunpack.c.l.b16 %v3775
            %v3847 = vunpack.c.l.b16 %v3776
            %v3848 = vunpack.c.l.b16 %v3777
            %v3849 = vunpack.c.l.b16 %v3778
            %v3850 = vunpack.c.l.b16 %v3779
            %v3851 = vunpack.c.l.b16 %v3780
            %v3852 = vunpack.c.l.b16 %v3781
            %v3853 = vunpack.c.l.b16 %v3782
            %v3854 = vpack.c.b16 %v3823, %v3822
            %v3855 = vpack.c.b16 %v3825, %v3824
            %v3856 = vpack.c.b16 %v3827, %v3826
            %v3857 = vpack.c.b16 %v3829, %v3828
            %v3858 = vpack.c.b16 %v3831, %v3830
            %v3859 = vpack.c.b16 %v3833, %v3832
            %v3860 = vpack.c.b16 %v3835, %v3834
            %v3861 = vpack.c.b16 %v3837, %v3836
            %v3862 = vpack.c.b16 %v3839, %v3838
            %v3863 = vpack.c.b16 %v3841, %v3840
            %v3864 = vpack.c.b16 %v3843, %v3842
            %v3865 = vpack.c.b16 %v3845, %v3844
            %v3866 = vpack.c.b16 %v3847, %v3846
            %v3867 = vpack.c.b16 %v3849, %v3848
            %v3868 = vpack.c.b16 %v3851, %v3850
            %v3869 = vpack.c.b16 %v3853, %v3852
            %3886 = vmatprep.subr.bf16.mxu0 0
            %3887 = vmatpush1.bf16.msra.mxu0 %v3854
            %3888 = vmatprep.subr.bf16.mxu0 0
            %3889 = vmatpush1.bf16.msra.mxu0 %v3855
            %3890 = vmatprep.subr.bf16.mxu0 0
            %3891 = vmatpush1.bf16.msra.mxu0 %v3856
            %3892 = vmatprep.subr.bf16.mxu0 0
            %3893 = vmatpush1.bf16.msra.mxu0 %v3857
            %3894 = vmatprep.subr.bf16.mxu0 0
            %3895 = vmatpush1.bf16.msra.mxu0 %v3858
            %3896 = vmatprep.subr.bf16.mxu0 0
            %3897 = vmatpush1.bf16.msra.mxu0 %v3859
            %3898 = vmatprep.subr.bf16.mxu0 0
            %3899 = vmatpush1.bf16.msra.mxu0 %v3860
            %3900 = vmatprep.subr.bf16.mxu0 0
            %3901 = vmatpush1.bf16.msra.mxu0 %v3861
            %3902 = vmatprep.subr.bf16.mxu0 0
            %3903 = vmatpush1.bf16.msra.mxu0 %v3862
            %3904 = vmatprep.subr.bf16.mxu0 0
            %3905 = vmatpush1.bf16.msra.mxu0 %v3863
            %3906 = vmatprep.subr.bf16.mxu0 0
            %3907 = vmatpush1.bf16.msra.mxu0 %v3864
            %3908 = vmatprep.subr.bf16.mxu0 0
            %3909 = vmatpush1.bf16.msra.mxu0 %v3865
            %3910 = vmatprep.subr.bf16.mxu0 0
            %3911 = vmatpush1.bf16.msra.mxu0 %v3866
            %3912 = vmatprep.subr.bf16.mxu0 0
            %3913 = vmatpush1.bf16.msra.mxu0 %v3867
            %3914 = vmatprep.subr.bf16.mxu0 0
            %3915 = vmatpush1.bf16.msra.mxu0 %v3868
            %3916 = vmatprep.subr.bf16.mxu0 0
            %3917 = vmatpush1.bf16.msra.mxu0 %v3869
            %3918 = vmatprep.mubr.bf16.mxu0 %v3750
            %3919 = vmatmul.mubr.bf16.gmra.mrb[0].mxu0 %v3749
            %v3920 = vpop.f32.mrb[0].mxu0
            %v3921 = vadd.f32 %v3788, %v3920
            %v3922 = vpop.f32.mrb[0].mxu0
            %v3923 = vpop.f32.mrb[0].mxu0
            %v3924 = vadd.f32 %v3788, %v3923
            %v3925 = vpop.f32.mrb[0].mxu0
            %3926 = vdwg.mxu0
            %v3927 = vadd.f32 %v3559, %v3921
            %v3928 = vadd.f32 %v3560, %v3924
            %v3929 = vld [vmem:[%s1121] sm:$0x1]
            %v3930 = vld [vmem:[%s1129] sm:$0x1]
            %3931 = vadd.xlane.f32.xlu0 %v3927
            %v3932 = vpop.xlane.xlu0 %3931
            %3933 = vadd.xlane.f32.xlu0 %v3928
            %v3934 = vpop.xlane.xlu0 %3933
            %v3935 = vmul.f32 %v3932, %v3526
            %v3936 = vmul.f32 %v3934, %v3526
            %v3937 = vsub.f32 %v3927, %v3935
            %v3938 = vsub.f32 %v3928, %v3936
            %v3939 = vmul.f32 %v3937, %v3937
            %v3940 = vmul.f32 %v3938, %v3938
            %3941 = vadd.xlane.f32.xlu0 %v3939
            %v3942 = vpop.xlane.xlu0 %3941
            %3943 = vadd.xlane.f32.xlu0 %v3940
            %v3944 = vpop.xlane.xlu0 %3943
            %v3945 = vmul.f32 %v3942, %v3526
            %v3946 = vmul.f32 %v3944, %v3526
            %v3947 = vadd.f32 %v3945, 1e-05
            %v3948 = vadd.f32 %v3946, 1e-05
            %v3949 = vrsqrt.pop %v3947
            %v3950 = vrsqrt.pop %v3948
            %v3951 = vmul.f32 %v3937, %v3949
            %v3952 = vmul.f32 %v3938, %v3950
            %v3954 = vlaneseq
            %v3955 = vshrl.u32 %v3954, 7
            %v3956 = vsub.s32 0, %v3955
            %v3957 = vrot.slane %v3929, %v3956
            %v3959 = vmul.f32 %v3951, %v3957
            %v3960 = vmul.f32 %v3952, %v3957
            %v3962 = vlaneseq
            %v3963 = vshrl.u32 %v3962, 7
            %v3964 = vsub.s32 0, %v3963
            %v3965 = vrot.slane %v3930, %v3964
            %v3967 = vadd.f32 %v3959, %v3965
            %v3968 = vadd.f32 %v3960, %v3965
            %3969 = vst [vmem:[#allocation4] sm:$0xff] %v3967
            %3970 = vst [vmem:[#allocation4 + $0x8] sm:$0xff] %v3968
          $region308: #{retrieval_database_forward.3} parent=299 // pred_fallthru
            _
          // Predicated region
          $region309: #{retrieval_database_forward.3} parent=299 // pred_check
            %p3971 = pneg %p1336
          $region310: #{retrieval_database_forward.3} parent=299 // pred_check_branch
            %3973 = sbr.rel (%p3971) target = $region312
          $region311: #{retrieval_database_forward.3} parent=299 // pred_region
            %v3974 = vpack.c.bf16 %v2317, %v2317
            %v3975 = vpack.c.bf16 %v2321, %v2321
            %v3976 = vpack.c.bf16 %v2319, %v2319
            %v3977 = vpack.c.bf16 %v2323, %v2323
            %v3979 = vshrl.u32 %v3974, 16
            %v3981 = vrot.slane %v3979, 3
            %vm3982 = vcmask 261120
            %v3984 = vsel %vm3982, %v3981, 0
            %v3987 = vsel %vm3982, %v3976, 0
            %3989 = vmatprep.subr.bf16.mxu0 0
            %3990 = vmatpush1.bf16.xpose.msra.mxu0 %v3987
            %3991 = vmatprep.subr.bf16.mxu0 0
            %3992 = vmatpush1.bf16.xpose.msra.mxu0 0
            %3993 = vmatprep.subr.bf16.mxu0 0
            %3994 = vmatpush1.bf16.xpose.msra.mxu0 0
            %3995 = vmatprep.subr.bf16.mxu0 0
            %3996 = vmatpush1.bf16.xpose.msra.mxu0 0
            %3997 = vmatprep.subr.bf16.mxu0 0
            %3998 = vmatpush1.bf16.xpose.msra.mxu0 0
            %3999 = vmatprep.subr.bf16.mxu0 0
            %4000 = vmatpush1.bf16.xpose.msra.mxu0 0
            %4001 = vmatprep.subr.bf16.mxu0 0
            %4002 = vmatpush1.bf16.xpose.msra.mxu0 0
            %4003 = vmatprep.subr.bf16.mxu0 0
            %4004 = vmatpush1.bf16.xpose.msra.mxu0 0
            %4005 = vmatprep.subr.bf16.mxu0 0
            %4006 = vmatpush1.bf16.xpose.msra.mxu0 0
            %4007 = vmatprep.subr.bf16.mxu0 0
            %4008 = vmatpush1.bf16.xpose.msra.mxu0 0
            %4009 = vmatprep.subr.bf16.mxu0 0
            %4010 = vmatpush1.bf16.xpose.msra.mxu0 0
            %4011 = vmatprep.subr.bf16.mxu0 0
            %4012 = vmatpush1.bf16.xpose.msra.mxu0 0
            %4013 = vmatprep.subr.bf16.mxu0 0
            %4014 = vmatpush1.bf16.xpose.msra.mxu0 0
            %4015 = vmatprep.subr.bf16.mxu0 0
            %4016 = vmatpush1.bf16.xpose.msra.mxu0 0
            %4017 = vmatprep.subr.bf16.mxu0 0
            %4018 = vmatpush1.bf16.xpose.msra.mxu0 0
            %4019 = vmatprep.subr.bf16.mxu0 0
            %4020 = vmatpush1.bf16.xpose.msra.mxu0 0
            %4021 = vmatprep.mubr.bf16.mxu0 0
            %4022 = vmatmul.mubr.bf16.gmra.mrb[0].mxu0 %v3984
            %v4023 = vpop.f32.mrb[0].mxu0
            %v4024 = vadd.f32 0.0, %v4023
            %v4025 = vpop.f32.mrb[0].mxu0
            %v4026 = vpop.f32.mrb[0].mxu0
            %v4027 = vpop.f32.mrb[0].mxu0
            %4028 = vdwg.mxu0
            %v4030 = vshrl.u32 %v3975, 16
            %v4032 = vrot.slane %v4030, 3
            %v4034 = vsel %vm3982, %v4032, 0
            %v4037 = vsel %vm3982, %v3977, 0
            %4039 = vmatprep.subr.bf16.mxu0 0
            %4040 = vmatpush1.bf16.xpose.msra.mxu0 %v4037
            %4041 = vmatprep.subr.bf16.mxu0 0
            %4042 = vmatpush1.bf16.xpose.msra.mxu0 0
            %4043 = vmatprep.subr.bf16.mxu0 0
            %4044 = vmatpush1.bf16.xpose.msra.mxu0 0
            %4045 = vmatprep.subr.bf16.mxu0 0
            %4046 = vmatpush1.bf16.xpose.msra.mxu0 0
            %4047 = vmatprep.subr.bf16.mxu0 0
            %4048 = vmatpush1.bf16.xpose.msra.mxu0 0
            %4049 = vmatprep.subr.bf16.mxu0 0
            %4050 = vmatpush1.bf16.xpose.msra.mxu0 0
            %4051 = vmatprep.subr.bf16.mxu0 0
            %4052 = vmatpush1.bf16.xpose.msra.mxu0 0
            %4053 = vmatprep.subr.bf16.mxu0 0
            %4054 = vmatpush1.bf16.xpose.msra.mxu0 0
            %4055 = vmatprep.subr.bf16.mxu0 0
            %4056 = vmatpush1.bf16.xpose.msra.mxu0 0
            %4057 = vmatprep.subr.bf16.mxu0 0
            %4058 = vmatpush1.bf16.xpose.msra.mxu0 0
            %4059 = vmatprep.subr.bf16.mxu0 0
            %4060 = vmatpush1.bf16.xpose.msra.mxu0 0
            %4061 = vmatprep.subr.bf16.mxu0 0
            %4062 = vmatpush1.bf16.xpose.msra.mxu0 0
            %4063 = vmatprep.subr.bf16.mxu0 0
            %4064 = vmatpush1.bf16.xpose.msra.mxu0 0
            %4065 = vmatprep.subr.bf16.mxu0 0
            %4066 = vmatpush1.bf16.xpose.msra.mxu0 0
            %4067 = vmatprep.subr.bf16.mxu0 0
            %4068 = vmatpush1.bf16.xpose.msra.mxu0 0
            %4069 = vmatprep.subr.bf16.mxu0 0
            %4070 = vmatpush1.bf16.xpose.msra.mxu0 0
            %4071 = vmatprep.mubr.bf16.mxu0 0
            %4072 = vmatmul.mubr.bf16.gmra.mrb[0].mxu0 %v4034
            %v4073 = vpop.f32.mrb[0].mxu0
            %v4074 = vadd.f32 0.0, %v4073
            %v4075 = vpop.f32.mrb[0].mxu0
            %v4076 = vpop.f32.mrb[0].mxu0
            %v4077 = vpop.f32.mrb[0].mxu0
            %4078 = vdwg.mxu0
            %v4079 = vmul.f32 %v4024, 0.17677669
            %v4080 = vmul.f32 %v4074, 0.17677669
            %vm4081 = vcmask 57344
            %v4082 = vsel %vm4081, %v4079, -inf
            %4083 = vmax.xlane.f32.xlu0 %v4082
            %v4084 = vpop.xlane.xlu0 %4083
            %v4085 = vsel %vm4081, %v4080, -inf
            %4086 = vmax.xlane.f32.xlu0 %v4085
            %v4087 = vpop.xlane.xlu0 %4086
            %v4088 = vsub.f32 %v4079, %v4084
            %v4089 = vsub.f32 %v4080, %v4087
            %v4090 = vmul.f32 %v4088, 1.442695
            %v4091 = vpow.pop %v4090
            %v4092 = vmul.f32 %v4089, 1.442695
            %v4093 = vpow.pop %v4092
            %v4094 = vsel %vm4081, %v4091, 0.0
            %4095 = vadd.xlane.f32.xlu0 %v4094
            %v4096 = vpop.xlane.xlu0 %4095
            %v4097 = vsel %vm4081, %v4093, 0.0
            %4098 = vadd.xlane.f32.xlu0 %v4097
            %v4099 = vpop.xlane.xlu0 %4098
            %v4100 = vrcp.pop %v4096
            %v4101 = vmul.f32 %v4091, %v4100
            %v4102 = vrcp.pop %v4099
            %v4103 = vmul.f32 %v4093, %v4102
            %v4104 = vpack.c.bf16 %v4101, %v4101
            %v4105 = vpack.c.bf16 %v4103, %v4103
            %v4106 = vpack.c.bf16 %v2360, %v2360
            %v4107 = vpack.c.bf16 %v2363, %v2363
            %vm4108 = vcmask 64512
            %v4110 = vsel %vm4108, %v4104, 0
            %vm4112 = vcmask 1043456
            %v4114 = vsel %vm4112, %v4106, 0
            %4116 = vmatprep.subr.bf16.mxu0 0
            %4117 = vmatpush1.bf16.msra.mxu0 %v4114
            %4118 = vmatprep.subr.bf16.mxu0 0
            %4119 = vmatpush1.bf16.msra.mxu0 0
            %4120 = vmatprep.subr.bf16.mxu0 0
            %4121 = vmatpush1.bf16.msra.mxu0 0
            %4122 = vmatprep.subr.bf16.mxu0 0
            %4123 = vmatpush1.bf16.msra.mxu0 0
            %4124 = vmatprep.subr.bf16.mxu0 0
            %4125 = vmatpush1.bf16.msra.mxu0 0
            %4126 = vmatprep.subr.bf16.mxu0 0
            %4127 = vmatpush1.bf16.msra.mxu0 0
            %4128 = vmatprep.subr.bf16.mxu0 0
            %4129 = vmatpush1.bf16.msra.mxu0 0
            %4130 = vmatprep.subr.bf16.mxu0 0
            %4131 = vmatpush1.bf16.msra.mxu0 0
            %4132 = vmatprep.subr.bf16.mxu0 0
            %4133 = vmatpush1.bf16.msra.mxu0 0
            %4134 = vmatprep.subr.bf16.mxu0 0
            %4135 = vmatpush1.bf16.msra.mxu0 0
            %4136 = vmatprep.subr.bf16.mxu0 0
            %4137 = vmatpush1.bf16.msra.mxu0 0
            %4138 = vmatprep.subr.bf16.mxu0 0
            %4139 = vmatpush1.bf16.msra.mxu0 0
            %4140 = vmatprep.subr.bf16.mxu0 0
            %4141 = vmatpush1.bf16.msra.mxu0 0
            %4142 = vmatprep.subr.bf16.mxu0 0
            %4143 = vmatpush1.bf16.msra.mxu0 0
            %4144 = vmatprep.subr.bf16.mxu0 0
            %4145 = vmatpush1.bf16.msra.mxu0 0
            %4146 = vmatprep.subr.bf16.mxu0 0
            %4147 = vmatpush1.bf16.msra.mxu0 0
            %4148 = vmatprep.mubr.bf16.mxu0 0
            %4149 = vmatmul.mubr.bf16.gmra.mrb[0].mxu0 %v4110
            %v4150 = vpop.f32.mrb[0].mxu0
            %v4151 = vadd.f32 0.0, %v4150
            %v4152 = vpop.f32.mrb[0].mxu0
            %v4153 = vpop.f32.mrb[0].mxu0
            %v4154 = vpop.f32.mrb[0].mxu0
            %4155 = vdwg.mxu0
            %v4157 = vsel %vm4108, %v4105, 0
            %v4160 = vsel %vm4112, %v4107, 0
            %4162 = vmatprep.subr.bf16.mxu0 0
            %4163 = vmatpush1.bf16.msra.mxu0 %v4160
            %4164 = vmatprep.subr.bf16.mxu0 0
            %4165 = vmatpush1.bf16.msra.mxu0 0
            %4166 = vmatprep.subr.bf16.mxu0 0
            %4167 = vmatpush1.bf16.msra.mxu0 0
            %4168 = vmatprep.subr.bf16.mxu0 0
            %4169 = vmatpush1.bf16.msra.mxu0 0
            %4170 = vmatprep.subr.bf16.mxu0 0
            %4171 = vmatpush1.bf16.msra.mxu0 0
            %4172 = vmatprep.subr.bf16.mxu0 0
            %4173 = vmatpush1.bf16.msra.mxu0 0
            %4174 = vmatprep.subr.bf16.mxu0 0
            %4175 = vmatpush1.bf16.msra.mxu0 0
            %4176 = vmatprep.subr.bf16.mxu0 0
            %4177 = vmatpush1.bf16.msra.mxu0 0
            %4178 = vmatprep.subr.bf16.mxu0 0
            %4179 = vmatpush1.bf16.msra.mxu0 0
            %4180 = vmatprep.subr.bf16.mxu0 0
            %4181 = vmatpush1.bf16.msra.mxu0 0
            %4182 = vmatprep.subr.bf16.mxu0 0
            %4183 = vmatpush1.bf16.msra.mxu0 0
            %4184 = vmatprep.subr.bf16.mxu0 0
            %4185 = vmatpush1.bf16.msra.mxu0 0
            %4186 = vmatprep.subr.bf16.mxu0 0
            %4187 = vmatpush1.bf16.msra.mxu0 0
            %4188 = vmatprep.subr.bf16.mxu0 0
            %4189 = vmatpush1.bf16.msra.mxu0 0
            %4190 = vmatprep.subr.bf16.mxu0 0
            %4191 = vmatpush1.bf16.msra.mxu0 0
            %4192 = vmatprep.subr.bf16.mxu0 0
            %4193 = vmatpush1.bf16.msra.mxu0 0
            %4194 = vmatprep.mubr.bf16.mxu0 0
            %4195 = vmatmul.mubr.bf16.gmra.mrb[0].mxu0 %v4157
            %v4196 = vpop.f32.mrb[0].mxu0
            %v4197 = vadd.f32 0.0, %v4196
            %v4198 = vpop.f32.mrb[0].mxu0
            %v4199 = vpop.f32.mrb[0].mxu0
            %v4200 = vpop.f32.mrb[0].mxu0
            %4201 = vdwg.mxu0
            %v4202 = vpack.c.bf16 %v4151, %v4151
            %v4203 = vpack.c.bf16 %v4197, %v4197
            %4204 = vrot.lane.b32.xlu0 %v3981, 96
            %v4205 = vpop.permute.xlu0 %4204
            %4207 = vrot.lane.b32.xlu0 %v3976, 96
            %v4208 = vpop.permute.xlu0 %4207
            %v4210 = vsel %vm3982, %v4205, 0
            %v4213 = vsel %vm3982, %v4208, 0
            %4215 = vmatprep.subr.bf16.mxu0 0
            %4216 = vmatpush1.bf16.xpose.msra.mxu0 %v4213
            %4217 = vmatprep.subr.bf16.mxu0 0
            %4218 = vmatpush1.bf16.xpose.msra.mxu0 0
            %4219 = vmatprep.subr.bf16.mxu0 0
            %4220 = vmatpush1.bf16.xpose.msra.mxu0 0
            %4221 = vmatprep.subr.bf16.mxu0 0
            %4222 = vmatpush1.bf16.xpose.msra.mxu0 0
            %4223 = vmatprep.subr.bf16.mxu0 0
            %4224 = vmatpush1.bf16.xpose.msra.mxu0 0
            %4225 = vmatprep.subr.bf16.mxu0 0
            %4226 = vmatpush1.bf16.xpose.msra.mxu0 0
            %4227 = vmatprep.subr.bf16.mxu0 0
            %4228 = vmatpush1.bf16.xpose.msra.mxu0 0
            %4229 = vmatprep.subr.bf16.mxu0 0
            %4230 = vmatpush1.bf16.xpose.msra.mxu0 0
            %4231 = vmatprep.subr.bf16.mxu0 0
            %4232 = vmatpush1.bf16.xpose.msra.mxu0 0
            %4233 = vmatprep.subr.bf16.mxu0 0
            %4234 = vmatpush1.bf16.xpose.msra.mxu0 0
            %4235 = vmatprep.subr.bf16.mxu0 0
            %4236 = vmatpush1.bf16.xpose.msra.mxu0 0
            %4237 = vmatprep.subr.bf16.mxu0 0
            %4238 = vmatpush1.bf16.xpose.msra.mxu0 0
            %4239 = vmatprep.subr.bf16.mxu0 0
            %4240 = vmatpush1.bf16.xpose.msra.mxu0 0
            %4241 = vmatprep.subr.bf16.mxu0 0
            %4242 = vmatpush1.bf16.xpose.msra.mxu0 0
            %4243 = vmatprep.subr.bf16.mxu0 0
            %4244 = vmatpush1.bf16.xpose.msra.mxu0 0
            %4245 = vmatprep.subr.bf16.mxu0 0
            %4246 = vmatpush1.bf16.xpose.msra.mxu0 0
            %4247 = vmatprep.mubr.bf16.mxu0 0
            %4248 = vmatmul.mubr.bf16.gmra.mrb[0].mxu0 %v4210
            %v4249 = vpop.f32.mrb[0].mxu0
            %v4250 = vadd.f32 0.0, %v4249
            %v4251 = vpop.f32.mrb[0].mxu0
            %v4252 = vpop.f32.mrb[0].mxu0
            %v4253 = vpop.f32.mrb[0].mxu0
            %4254 = vdwg.mxu0
            %4255 = vrot.lane.b32.xlu0 %v4032, 96
            %v4256 = vpop.permute.xlu0 %4255
            %4258 = vrot.lane.b32.xlu0 %v3977, 96
            %v4259 = vpop.permute.xlu0 %4258
            %v4261 = vsel %vm3982, %v4256, 0
            %v4264 = vsel %vm3982, %v4259, 0
            %4266 = vmatprep.subr.bf16.mxu0 0
            %4267 = vmatpush1.bf16.xpose.msra.mxu0 %v4264
            %4268 = vmatprep.subr.bf16.mxu0 0
            %4269 = vmatpush1.bf16.xpose.msra.mxu0 0
            %4270 = vmatprep.subr.bf16.mxu0 0
            %4271 = vmatpush1.bf16.xpose.msra.mxu0 0
            %4272 = vmatprep.subr.bf16.mxu0 0
            %4273 = vmatpush1.bf16.xpose.msra.mxu0 0
            %4274 = vmatprep.subr.bf16.mxu0 0
            %4275 = vmatpush1.bf16.xpose.msra.mxu0 0
            %4276 = vmatprep.subr.bf16.mxu0 0
            %4277 = vmatpush1.bf16.xpose.msra.mxu0 0
            %4278 = vmatprep.subr.bf16.mxu0 0
            %4279 = vmatpush1.bf16.xpose.msra.mxu0 0
            %4280 = vmatprep.subr.bf16.mxu0 0
            %4281 = vmatpush1.bf16.xpose.msra.mxu0 0
            %4282 = vmatprep.subr.bf16.mxu0 0
            %4283 = vmatpush1.bf16.xpose.msra.mxu0 0
            %4284 = vmatprep.subr.bf16.mxu0 0
            %4285 = vmatpush1.bf16.xpose.msra.mxu0 0
            %4286 = vmatprep.subr.bf16.mxu0 0
            %4287 = vmatpush1.bf16.xpose.msra.mxu0 0
            %4288 = vmatprep.subr.bf16.mxu0 0
            %4289 = vmatpush1.bf16.xpose.msra.mxu0 0
            %4290 = vmatprep.subr.bf16.mxu0 0
            %4291 = vmatpush1.bf16.xpose.msra.mxu0 0
            %4292 = vmatprep.subr.bf16.mxu0 0
            %4293 = vmatpush1.bf16.xpose.msra.mxu0 0
            %4294 = vmatprep.subr.bf16.mxu0 0
            %4295 = vmatpush1.bf16.xpose.msra.mxu0 0
            %4296 = vmatprep.subr.bf16.mxu0 0
            %4297 = vmatpush1.bf16.xpose.msra.mxu0 0
            %4298 = vmatprep.mubr.bf16.mxu0 0
            %4299 = vmatmul.mubr.bf16.gmra.mrb[0].mxu0 %v4261
            %v4300 = vpop.f32.mrb[0].mxu0
            %v4301 = vadd.f32 0.0, %v4300
            %v4302 = vpop.f32.mrb[0].mxu0
            %v4303 = vpop.f32.mrb[0].mxu0
            %v4304 = vpop.f32.mrb[0].mxu0
            %4305 = vdwg.mxu0
            %v4306 = vmul.f32 %v4250, 0.17677669
            %v4307 = vmul.f32 %v4301, 0.17677669
            %v4308 = vsel %vm4081, %v4306, -inf
            %4309 = vmax.xlane.f32.xlu0 %v4308
            %v4310 = vpop.xlane.xlu0 %4309
            %v4311 = vsel %vm4081, %v4307, -inf
            %4312 = vmax.xlane.f32.xlu0 %v4311
            %v4313 = vpop.xlane.xlu0 %4312
            %v4314 = vsub.f32 %v4306, %v4310
            %v4315 = vsub.f32 %v4307, %v4313
            %v4316 = vmul.f32 %v4314, 1.442695
            %v4317 = vpow.pop %v4316
            %v4318 = vmul.f32 %v4315, 1.442695
            %v4319 = vpow.pop %v4318
            %v4320 = vsel %vm4081, %v4317, 0.0
            %4321 = vadd.xlane.f32.xlu0 %v4320
            %v4322 = vpop.xlane.xlu0 %4321
            %v4323 = vsel %vm4081, %v4319, 0.0
            %4324 = vadd.xlane.f32.xlu0 %v4323
            %v4325 = vpop.xlane.xlu0 %4324
            %v4326 = vrcp.pop %v4322
            %v4327 = vmul.f32 %v4317, %v4326
            %v4328 = vrcp.pop %v4325
            %v4329 = vmul.f32 %v4319, %v4328
            %v4330 = vpack.c.bf16 %v4327, %v4327
            %v4331 = vpack.c.bf16 %v4329, %v4329
            %4333 = vrot.lane.b32.xlu0 %v4106, 96
            %v4334 = vpop.permute.xlu0 %4333
            %v4336 = vsel %vm4108, %v4330, 0
            %v4339 = vsel %vm4112, %v4334, 0
            %4341 = vmatprep.subr.bf16.mxu0 0
            %4342 = vmatpush1.bf16.msra.mxu0 %v4339
            %4343 = vmatprep.subr.bf16.mxu0 0
            %4344 = vmatpush1.bf16.msra.mxu0 0
            %4345 = vmatprep.subr.bf16.mxu0 0
            %4346 = vmatpush1.bf16.msra.mxu0 0
            %4347 = vmatprep.subr.bf16.mxu0 0
            %4348 = vmatpush1.bf16.msra.mxu0 0
            %4349 = vmatprep.subr.bf16.mxu0 0
            %4350 = vmatpush1.bf16.msra.mxu0 0
            %4351 = vmatprep.subr.bf16.mxu0 0
            %4352 = vmatpush1.bf16.msra.mxu0 0
            %4353 = vmatprep.subr.bf16.mxu0 0
            %4354 = vmatpush1.bf16.msra.mxu0 0
            %4355 = vmatprep.subr.bf16.mxu0 0
            %4356 = vmatpush1.bf16.msra.mxu0 0
            %4357 = vmatprep.subr.bf16.mxu0 0
            %4358 = vmatpush1.bf16.msra.mxu0 0
            %4359 = vmatprep.subr.bf16.mxu0 0
            %4360 = vmatpush1.bf16.msra.mxu0 0
            %4361 = vmatprep.subr.bf16.mxu0 0
            %4362 = vmatpush1.bf16.msra.mxu0 0
            %4363 = vmatprep.subr.bf16.mxu0 0
            %4364 = vmatpush1.bf16.msra.mxu0 0
            %4365 = vmatprep.subr.bf16.mxu0 0
            %4366 = vmatpush1.bf16.msra.mxu0 0
            %4367 = vmatprep.subr.bf16.mxu0 0
            %4368 = vmatpush1.bf16.msra.mxu0 0
            %4369 = vmatprep.subr.bf16.mxu0 0
            %4370 = vmatpush1.bf16.msra.mxu0 0
            %4371 = vmatprep.subr.bf16.mxu0 0
            %4372 = vmatpush1.bf16.msra.mxu0 0
            %4373 = vmatprep.mubr.bf16.mxu0 0
            %4374 = vmatmul.mubr.bf16.gmra.mrb[0].mxu0 %v4336
            %v4375 = vpop.f32.mrb[0].mxu0
            %v4376 = vadd.f32 0.0, %v4375
            %v4377 = vpop.f32.mrb[0].mxu0
            %v4378 = vpop.f32.mrb[0].mxu0
            %v4379 = vpop.f32.mrb[0].mxu0
            %4380 = vdwg.mxu0
            %4382 = vrot.lane.b32.xlu0 %v4107, 96
            %v4383 = vpop.permute.xlu0 %4382
            %v4385 = vsel %vm4108, %v4331, 0
            %v4388 = vsel %vm4112, %v4383, 0
            %4390 = vmatprep.subr.bf16.mxu0 0
            %4391 = vmatpush1.bf16.msra.mxu0 %v4388
            %4392 = vmatprep.subr.bf16.mxu0 0
            %4393 = vmatpush1.bf16.msra.mxu0 0
            %4394 = vmatprep.subr.bf16.mxu0 0
            %4395 = vmatpush1.bf16.msra.mxu0 0
            %4396 = vmatprep.subr.bf16.mxu0 0
            %4397 = vmatpush1.bf16.msra.mxu0 0
            %4398 = vmatprep.subr.bf16.mxu0 0
            %4399 = vmatpush1.bf16.msra.mxu0 0
            %4400 = vmatprep.subr.bf16.mxu0 0
            %4401 = vmatpush1.bf16.msra.mxu0 0
            %4402 = vmatprep.subr.bf16.mxu0 0
            %4403 = vmatpush1.bf16.msra.mxu0 0
            %4404 = vmatprep.subr.bf16.mxu0 0
            %4405 = vmatpush1.bf16.msra.mxu0 0
            %4406 = vmatprep.subr.bf16.mxu0 0
            %4407 = vmatpush1.bf16.msra.mxu0 0
            %4408 = vmatprep.subr.bf16.mxu0 0
            %4409 = vmatpush1.bf16.msra.mxu0 0
            %4410 = vmatprep.subr.bf16.mxu0 0
            %4411 = vmatpush1.bf16.msra.mxu0 0
            %4412 = vmatprep.subr.bf16.mxu0 0
            %4413 = vmatpush1.bf16.msra.mxu0 0
            %4414 = vmatprep.subr.bf16.mxu0 0
            %4415 = vmatpush1.bf16.msra.mxu0 0
            %4416 = vmatprep.subr.bf16.mxu0 0
            %4417 = vmatpush1.bf16.msra.mxu0 0
            %4418 = vmatprep.subr.bf16.mxu0 0
            %4419 = vmatpush1.bf16.msra.mxu0 0
            %4420 = vmatprep.subr.bf16.mxu0 0
            %4421 = vmatpush1.bf16.msra.mxu0 0
            %4422 = vmatprep.mubr.bf16.mxu0 0
            %4423 = vmatmul.mubr.bf16.gmra.mrb[0].mxu0 %v4385
            %v4424 = vpop.f32.mrb[0].mxu0
            %v4425 = vadd.f32 0.0, %v4424
            %v4426 = vpop.f32.mrb[0].mxu0
            %v4427 = vpop.f32.mrb[0].mxu0
            %v4428 = vpop.f32.mrb[0].mxu0
            %4429 = vdwg.mxu0
            %v4430 = vpack.c.bf16 %v4376, %v4376
            %v4431 = vpack.c.bf16 %v4425, %v4425
            %v4434 = vunpack.c.l.b16 %v4430
            %v4435 = vunpack.c.l.b16 %v4431
            %v4436 = vrot.slane %v4435, 7
            %vm4437 = vcmask 1041409
            %v4438 = vsel %vm4437, %v4436, %v4434
            %v4439 = vpack.c.b16 %v4438, %v4438
            %v4444 = vunpack.c.l.b16 %v2370
            %v4445 = vunpack.c.l.b16 %v2371
            %v4446 = vunpack.c.l.b16 %v2372
            %v4447 = vunpack.c.l.b16 %v2373
            %v4448 = vpack.c.b16 %v4445, %v4444
            %v4449 = vpack.c.b16 %v4447, %v4446
            %v4453 = vsel %vm3982, %v4439, 0
            %4455 = vmatprep.subr.bf16.mxu0 0
            %4456 = vmatpush1.bf16.msra.mxu0 %v4448
            %4457 = vmatprep.subr.bf16.mxu0 0
            %4458 = vmatpush1.bf16.msra.mxu0 %v4449
            %4459 = vmatprep.subr.bf16.mxu0 0
            %4460 = vmatpush1.bf16.msra.mxu0 0
            %4461 = vmatprep.subr.bf16.mxu0 0
            %4462 = vmatpush1.bf16.msra.mxu0 0
            %4463 = vmatprep.subr.bf16.mxu0 0
            %4464 = vmatpush1.bf16.msra.mxu0 0
            %4465 = vmatprep.subr.bf16.mxu0 0
            %4466 = vmatpush1.bf16.msra.mxu0 0
            %4467 = vmatprep.subr.bf16.mxu0 0
            %4468 = vmatpush1.bf16.msra.mxu0 0
            %4469 = vmatprep.subr.bf16.mxu0 0
            %4470 = vmatpush1.bf16.msra.mxu0 0
            %4471 = vmatprep.subr.bf16.mxu0 0
            %4472 = vmatpush1.bf16.msra.mxu0 0
            %4473 = vmatprep.subr.bf16.mxu0 0
            %4474 = vmatpush1.bf16.msra.mxu0 0
            %4475 = vmatprep.subr.bf16.mxu0 0
            %4476 = vmatpush1.bf16.msra.mxu0 0
            %4477 = vmatprep.subr.bf16.mxu0 0
            %4478 = vmatpush1.bf16.msra.mxu0 0
            %4479 = vmatprep.subr.bf16.mxu0 0
            %4480 = vmatpush1.bf16.msra.mxu0 0
            %4481 = vmatprep.subr.bf16.mxu0 0
            %4482 = vmatpush1.bf16.msra.mxu0 0
            %4483 = vmatprep.subr.bf16.mxu0 0
            %4484 = vmatpush1.bf16.msra.mxu0 0
            %4485 = vmatprep.subr.bf16.mxu0 0
            %4486 = vmatpush1.bf16.msra.mxu0 0
            %4487 = vmatprep.mubr.bf16.mxu0 0
            %4488 = vmatmul.mubr.bf16.gmra.mrb[0].mxu0 %v4453
            %v4489 = vpop.f32.mrb[0].mxu0
            %v4490 = vadd.f32 0.0, %v4489
            %v4491 = vpop.f32.mrb[0].mxu0
            %v4492 = vpop.f32.mrb[0].mxu0
            %v4493 = vpop.f32.mrb[0].mxu0
            %4494 = vdwg.mxu0
            %v4497 = vunpack.c.l.b16 %v4202
            %v4498 = vunpack.c.l.b16 %v4203
            %v4499 = vrot.slane %v4498, 7
            %v4500 = vsel %vm4437, %v4499, %v4497
            %v4501 = vpack.c.b16 %v4500, %v4500
            %v4506 = vunpack.c.l.b16 %v2366
            %v4507 = vunpack.c.l.b16 %v2367
            %v4508 = vunpack.c.l.b16 %v2368
            %v4509 = vunpack.c.l.b16 %v2369
            %v4510 = vpack.c.b16 %v4507, %v4506
            %v4511 = vpack.c.b16 %v4509, %v4508
            %v4515 = vsel %vm3982, %v4501, 0
            %4517 = vmatprep.subr.bf16.mxu0 0
            %4518 = vmatpush1.bf16.msra.mxu0 %v4510
            %4519 = vmatprep.subr.bf16.mxu0 0
            %4520 = vmatpush1.bf16.msra.mxu0 %v4511
            %4521 = vmatprep.subr.bf16.mxu0 0
            %4522 = vmatpush1.bf16.msra.mxu0 0
            %4523 = vmatprep.subr.bf16.mxu0 0
            %4524 = vmatpush1.bf16.msra.mxu0 0
            %4525 = vmatprep.subr.bf16.mxu0 0
            %4526 = vmatpush1.bf16.msra.mxu0 0
            %4527 = vmatprep.subr.bf16.mxu0 0
            %4528 = vmatpush1.bf16.msra.mxu0 0
            %4529 = vmatprep.subr.bf16.mxu0 0
            %4530 = vmatpush1.bf16.msra.mxu0 0
            %4531 = vmatprep.subr.bf16.mxu0 0
            %4532 = vmatpush1.bf16.msra.mxu0 0
            %4533 = vmatprep.subr.bf16.mxu0 0
            %4534 = vmatpush1.bf16.msra.mxu0 0
            %4535 = vmatprep.subr.bf16.mxu0 0
            %4536 = vmatpush1.bf16.msra.mxu0 0
            %4537 = vmatprep.subr.bf16.mxu0 0
            %4538 = vmatpush1.bf16.msra.mxu0 0
            %4539 = vmatprep.subr.bf16.mxu0 0
            %4540 = vmatpush1.bf16.msra.mxu0 0
            %4541 = vmatprep.subr.bf16.mxu0 0
            %4542 = vmatpush1.bf16.msra.mxu0 0
            %4543 = vmatprep.subr.bf16.mxu0 0
            %4544 = vmatpush1.bf16.msra.mxu0 0
            %4545 = vmatprep.subr.bf16.mxu0 0
            %4546 = vmatpush1.bf16.msra.mxu0 0
            %4547 = vmatprep.subr.bf16.mxu0 0
            %4548 = vmatpush1.bf16.msra.mxu0 0
            %4549 = vmatprep.mubr.bf16.mxu0 0
            %4550 = vmatmul.mubr.bf16.gmra.mrb[0].mxu0 %v4515
            %v4551 = vpop.f32.mrb[0].mxu0
            %v4552 = vadd.f32 %v4490, %v4551
            %v4553 = vpop.f32.mrb[0].mxu0
            %v4554 = vpop.f32.mrb[0].mxu0
            %v4555 = vpop.f32.mrb[0].mxu0
            %4556 = vdwg.mxu0
            %4557 = vrot.lane.b32.xlu0 %v3981, 64
            %v4558 = vpop.permute.xlu0 %4557
            %4559 = vrot.lane.b32.xlu0 %v3976, 64
            %v4560 = vpop.permute.xlu0 %4559
            %v4562 = vsel %vm3982, %v4558, 0
            %v4565 = vsel %vm3982, %v4560, 0
            %4567 = vmatprep.subr.bf16.mxu0 0
            %4568 = vmatpush1.bf16.xpose.msra.mxu0 %v4565
            %4569 = vmatprep.subr.bf16.mxu0 0
            %4570 = vmatpush1.bf16.xpose.msra.mxu0 0
            %4571 = vmatprep.subr.bf16.mxu0 0
            %4572 = vmatpush1.bf16.xpose.msra.mxu0 0
            %4573 = vmatprep.subr.bf16.mxu0 0
            %4574 = vmatpush1.bf16.xpose.msra.mxu0 0
            %4575 = vmatprep.subr.bf16.mxu0 0
            %4576 = vmatpush1.bf16.xpose.msra.mxu0 0
            %4577 = vmatprep.subr.bf16.mxu0 0
            %4578 = vmatpush1.bf16.xpose.msra.mxu0 0
            %4579 = vmatprep.subr.bf16.mxu0 0
            %4580 = vmatpush1.bf16.xpose.msra.mxu0 0
            %4581 = vmatprep.subr.bf16.mxu0 0
            %4582 = vmatpush1.bf16.xpose.msra.mxu0 0
            %4583 = vmatprep.subr.bf16.mxu0 0
            %4584 = vmatpush1.bf16.xpose.msra.mxu0 0
            %4585 = vmatprep.subr.bf16.mxu0 0
            %4586 = vmatpush1.bf16.xpose.msra.mxu0 0
            %4587 = vmatprep.subr.bf16.mxu0 0
            %4588 = vmatpush1.bf16.xpose.msra.mxu0 0
            %4589 = vmatprep.subr.bf16.mxu0 0
            %4590 = vmatpush1.bf16.xpose.msra.mxu0 0
            %4591 = vmatprep.subr.bf16.mxu0 0
            %4592 = vmatpush1.bf16.xpose.msra.mxu0 0
            %4593 = vmatprep.subr.bf16.mxu0 0
            %4594 = vmatpush1.bf16.xpose.msra.mxu0 0
            %4595 = vmatprep.subr.bf16.mxu0 0
            %4596 = vmatpush1.bf16.xpose.msra.mxu0 0
            %4597 = vmatprep.subr.bf16.mxu0 0
            %4598 = vmatpush1.bf16.xpose.msra.mxu0 0
            %4599 = vmatprep.mubr.bf16.mxu0 0
            %4600 = vmatmul.mubr.bf16.gmra.mrb[0].mxu0 %v4562
            %v4601 = vpop.f32.mrb[0].mxu0
            %v4602 = vadd.f32 0.0, %v4601
            %v4603 = vpop.f32.mrb[0].mxu0
            %v4604 = vpop.f32.mrb[0].mxu0
            %v4605 = vpop.f32.mrb[0].mxu0
            %4606 = vdwg.mxu0
            %4607 = vrot.lane.b32.xlu0 %v4032, 64
            %v4608 = vpop.permute.xlu0 %4607
            %4609 = vrot.lane.b32.xlu0 %v3977, 64
            %v4610 = vpop.permute.xlu0 %4609
            %v4612 = vsel %vm3982, %v4608, 0
            %v4615 = vsel %vm3982, %v4610, 0
            %4617 = vmatprep.subr.bf16.mxu0 0
            %4618 = vmatpush1.bf16.xpose.msra.mxu0 %v4615
            %4619 = vmatprep.subr.bf16.mxu0 0
            %4620 = vmatpush1.bf16.xpose.msra.mxu0 0
            %4621 = vmatprep.subr.bf16.mxu0 0
            %4622 = vmatpush1.bf16.xpose.msra.mxu0 0
            %4623 = vmatprep.subr.bf16.mxu0 0
            %4624 = vmatpush1.bf16.xpose.msra.mxu0 0
            %4625 = vmatprep.subr.bf16.mxu0 0
            %4626 = vmatpush1.bf16.xpose.msra.mxu0 0
            %4627 = vmatprep.subr.bf16.mxu0 0
            %4628 = vmatpush1.bf16.xpose.msra.mxu0 0
            %4629 = vmatprep.subr.bf16.mxu0 0
            %4630 = vmatpush1.bf16.xpose.msra.mxu0 0
            %4631 = vmatprep.subr.bf16.mxu0 0
            %4632 = vmatpush1.bf16.xpose.msra.mxu0 0
            %4633 = vmatprep.subr.bf16.mxu0 0
            %4634 = vmatpush1.bf16.xpose.msra.mxu0 0
            %4635 = vmatprep.subr.bf16.mxu0 0
            %4636 = vmatpush1.bf16.xpose.msra.mxu0 0
            %4637 = vmatprep.subr.bf16.mxu0 0
            %4638 = vmatpush1.bf16.xpose.msra.mxu0 0
            %4639 = vmatprep.subr.bf16.mxu0 0
            %4640 = vmatpush1.bf16.xpose.msra.mxu0 0
            %4641 = vmatprep.subr.bf16.mxu0 0
            %4642 = vmatpush1.bf16.xpose.msra.mxu0 0
            %4643 = vmatprep.subr.bf16.mxu0 0
            %4644 = vmatpush1.bf16.xpose.msra.mxu0 0
            %4645 = vmatprep.subr.bf16.mxu0 0
            %4646 = vmatpush1.bf16.xpose.msra.mxu0 0
            %4647 = vmatprep.subr.bf16.mxu0 0
            %4648 = vmatpush1.bf16.xpose.msra.mxu0 0
            %4649 = vmatprep.mubr.bf16.mxu0 0
            %4650 = vmatmul.mubr.bf16.gmra.mrb[0].mxu0 %v4612
            %v4651 = vpop.f32.mrb[0].mxu0
            %v4652 = vadd.f32 0.0, %v4651
            %v4653 = vpop.f32.mrb[0].mxu0
            %v4654 = vpop.f32.mrb[0].mxu0
            %v4655 = vpop.f32.mrb[0].mxu0
            %4656 = vdwg.mxu0
            %v4657 = vmul.f32 %v4602, 0.17677669
            %v4658 = vmul.f32 %v4652, 0.17677669
            %v4659 = vsel %vm4081, %v4657, -inf
            %4660 = vmax.xlane.f32.xlu0 %v4659
            %v4661 = vpop.xlane.xlu0 %4660
            %v4662 = vsel %vm4081, %v4658, -inf
            %4663 = vmax.xlane.f32.xlu0 %v4662
            %v4664 = vpop.xlane.xlu0 %4663
            %v4665 = vsub.f32 %v4657, %v4661
            %v4666 = vsub.f32 %v4658, %v4664
            %v4667 = vmul.f32 %v4665, 1.442695
            %v4668 = vpow.pop %v4667
            %v4669 = vmul.f32 %v4666, 1.442695
            %v4670 = vpow.pop %v4669
            %v4671 = vsel %vm4081, %v4668, 0.0
            %4672 = vadd.xlane.f32.xlu0 %v4671
            %v4673 = vpop.xlane.xlu0 %4672
            %v4674 = vsel %vm4081, %v4670, 0.0
            %4675 = vadd.xlane.f32.xlu0 %v4674
            %v4676 = vpop.xlane.xlu0 %4675
            %v4677 = vrcp.pop %v4673
            %v4678 = vmul.f32 %v4668, %v4677
            %v4679 = vrcp.pop %v4676
            %v4680 = vmul.f32 %v4670, %v4679
            %v4681 = vpack.c.bf16 %v4678, %v4678
            %v4682 = vpack.c.bf16 %v4680, %v4680
            %4683 = vrot.lane.b32.xlu0 %v4106, 64
            %v4684 = vpop.permute.xlu0 %4683
            %v4686 = vsel %vm4108, %v4681, 0
            %v4689 = vsel %vm4112, %v4684, 0
            %4691 = vmatprep.subr.bf16.mxu0 0
            %4692 = vmatpush1.bf16.msra.mxu0 %v4689
            %4693 = vmatprep.subr.bf16.mxu0 0
            %4694 = vmatpush1.bf16.msra.mxu0 0
            %4695 = vmatprep.subr.bf16.mxu0 0
            %4696 = vmatpush1.bf16.msra.mxu0 0
            %4697 = vmatprep.subr.bf16.mxu0 0
            %4698 = vmatpush1.bf16.msra.mxu0 0
            %4699 = vmatprep.subr.bf16.mxu0 0
            %4700 = vmatpush1.bf16.msra.mxu0 0
            %4701 = vmatprep.subr.bf16.mxu0 0
            %4702 = vmatpush1.bf16.msra.mxu0 0
            %4703 = vmatprep.subr.bf16.mxu0 0
            %4704 = vmatpush1.bf16.msra.mxu0 0
            %4705 = vmatprep.subr.bf16.mxu0 0
            %4706 = vmatpush1.bf16.msra.mxu0 0
            %4707 = vmatprep.subr.bf16.mxu0 0
            %4708 = vmatpush1.bf16.msra.mxu0 0
            %4709 = vmatprep.subr.bf16.mxu0 0
            %4710 = vmatpush1.bf16.msra.mxu0 0
            %4711 = vmatprep.subr.bf16.mxu0 0
            %4712 = vmatpush1.bf16.msra.mxu0 0
            %4713 = vmatprep.subr.bf16.mxu0 0
            %4714 = vmatpush1.bf16.msra.mxu0 0
            %4715 = vmatprep.subr.bf16.mxu0 0
            %4716 = vmatpush1.bf16.msra.mxu0 0
            %4717 = vmatprep.subr.bf16.mxu0 0
            %4718 = vmatpush1.bf16.msra.mxu0 0
            %4719 = vmatprep.subr.bf16.mxu0 0
            %4720 = vmatpush1.bf16.msra.mxu0 0
            %4721 = vmatprep.subr.bf16.mxu0 0
            %4722 = vmatpush1.bf16.msra.mxu0 0
            %4723 = vmatprep.mubr.bf16.mxu0 0
            %4724 = vmatmul.mubr.bf16.gmra.mrb[0].mxu0 %v4686
            %v4725 = vpop.f32.mrb[0].mxu0
            %v4726 = vadd.f32 0.0, %v4725
            %v4727 = vpop.f32.mrb[0].mxu0
            %v4728 = vpop.f32.mrb[0].mxu0
            %v4729 = vpop.f32.mrb[0].mxu0
            %4730 = vdwg.mxu0
            %4731 = vrot.lane.b32.xlu0 %v4107, 64
            %v4732 = vpop.permute.xlu0 %4731
            %v4734 = vsel %vm4108, %v4682, 0
            %v4737 = vsel %vm4112, %v4732, 0
            %4739 = vmatprep.subr.bf16.mxu0 0
            %4740 = vmatpush1.bf16.msra.mxu0 %v4737
            %4741 = vmatprep.subr.bf16.mxu0 0
            %4742 = vmatpush1.bf16.msra.mxu0 0
            %4743 = vmatprep.subr.bf16.mxu0 0
            %4744 = vmatpush1.bf16.msra.mxu0 0
            %4745 = vmatprep.subr.bf16.mxu0 0
            %4746 = vmatpush1.bf16.msra.mxu0 0
            %4747 = vmatprep.subr.bf16.mxu0 0
            %4748 = vmatpush1.bf16.msra.mxu0 0
            %4749 = vmatprep.subr.bf16.mxu0 0
            %4750 = vmatpush1.bf16.msra.mxu0 0
            %4751 = vmatprep.subr.bf16.mxu0 0
            %4752 = vmatpush1.bf16.msra.mxu0 0
            %4753 = vmatprep.subr.bf16.mxu0 0
            %4754 = vmatpush1.bf16.msra.mxu0 0
            %4755 = vmatprep.subr.bf16.mxu0 0
            %4756 = vmatpush1.bf16.msra.mxu0 0
            %4757 = vmatprep.subr.bf16.mxu0 0
            %4758 = vmatpush1.bf16.msra.mxu0 0
            %4759 = vmatprep.subr.bf16.mxu0 0
            %4760 = vmatpush1.bf16.msra.mxu0 0
            %4761 = vmatprep.subr.bf16.mxu0 0
            %4762 = vmatpush1.bf16.msra.mxu0 0
            %4763 = vmatprep.subr.bf16.mxu0 0
            %4764 = vmatpush1.bf16.msra.mxu0 0
            %4765 = vmatprep.subr.bf16.mxu0 0
            %4766 = vmatpush1.bf16.msra.mxu0 0
            %4767 = vmatprep.subr.bf16.mxu0 0
            %4768 = vmatpush1.bf16.msra.mxu0 0
            %4769 = vmatprep.subr.bf16.mxu0 0
            %4770 = vmatpush1.bf16.msra.mxu0 0
            %4771 = vmatprep.mubr.bf16.mxu0 0
            %4772 = vmatmul.mubr.bf16.gmra.mrb[0].mxu0 %v4734
            %v4773 = vpop.f32.mrb[0].mxu0
            %v4774 = vadd.f32 0.0, %v4773
            %v4775 = vpop.f32.mrb[0].mxu0
            %v4776 = vpop.f32.mrb[0].mxu0
            %v4777 = vpop.f32.mrb[0].mxu0
            %4778 = vdwg.mxu0
            %v4779 = vpack.c.bf16 %v4726, %v4726
            %v4780 = vpack.c.bf16 %v4774, %v4774
            %v4783 = vunpack.c.l.b16 %v4779
            %v4784 = vunpack.c.l.b16 %v4780
            %v4785 = vrot.slane %v4784, 7
            %v4786 = vsel %vm4437, %v4785, %v4783
            %v4787 = vpack.c.b16 %v4786, %v4786
            %v4792 = vunpack.c.l.b16 %v2374
            %v4793 = vunpack.c.l.b16 %v2375
            %v4794 = vunpack.c.l.b16 %v2376
            %v4795 = vunpack.c.l.b16 %v2377
            %v4796 = vpack.c.b16 %v4793, %v4792
            %v4797 = vpack.c.b16 %v4795, %v4794
            %v4801 = vsel %vm3982, %v4787, 0
            %4803 = vmatprep.subr.bf16.mxu0 0
            %4804 = vmatpush1.bf16.msra.mxu0 %v4796
            %4805 = vmatprep.subr.bf16.mxu0 0
            %4806 = vmatpush1.bf16.msra.mxu0 %v4797
            %4807 = vmatprep.subr.bf16.mxu0 0
            %4808 = vmatpush1.bf16.msra.mxu0 0
            %4809 = vmatprep.subr.bf16.mxu0 0
            %4810 = vmatpush1.bf16.msra.mxu0 0
            %4811 = vmatprep.subr.bf16.mxu0 0
            %4812 = vmatpush1.bf16.msra.mxu0 0
            %4813 = vmatprep.subr.bf16.mxu0 0
            %4814 = vmatpush1.bf16.msra.mxu0 0
            %4815 = vmatprep.subr.bf16.mxu0 0
            %4816 = vmatpush1.bf16.msra.mxu0 0
            %4817 = vmatprep.subr.bf16.mxu0 0
            %4818 = vmatpush1.bf16.msra.mxu0 0
            %4819 = vmatprep.subr.bf16.mxu0 0
            %4820 = vmatpush1.bf16.msra.mxu0 0
            %4821 = vmatprep.subr.bf16.mxu0 0
            %4822 = vmatpush1.bf16.msra.mxu0 0
            %4823 = vmatprep.subr.bf16.mxu0 0
            %4824 = vmatpush1.bf16.msra.mxu0 0
            %4825 = vmatprep.subr.bf16.mxu0 0
            %4826 = vmatpush1.bf16.msra.mxu0 0
            %4827 = vmatprep.subr.bf16.mxu0 0
            %4828 = vmatpush1.bf16.msra.mxu0 0
            %4829 = vmatprep.subr.bf16.mxu0 0
            %4830 = vmatpush1.bf16.msra.mxu0 0
            %4831 = vmatprep.subr.bf16.mxu0 0
            %4832 = vmatpush1.bf16.msra.mxu0 0
            %4833 = vmatprep.subr.bf16.mxu0 0
            %4834 = vmatpush1.bf16.msra.mxu0 0
            %4835 = vmatprep.mubr.bf16.mxu0 0
            %4836 = vmatmul.mubr.bf16.gmra.mrb[0].mxu0 %v4801
            %v4837 = vpop.f32.mrb[0].mxu0
            %v4838 = vadd.f32 0.0, %v4837
            %v4839 = vpop.f32.mrb[0].mxu0
            %v4840 = vpop.f32.mrb[0].mxu0
            %v4841 = vpop.f32.mrb[0].mxu0
            %4842 = vdwg.mxu0
            %v4843 = vadd.f32 %v4552, %v4838
            %4844 = vrot.lane.b32.xlu0 %v3981, 32
            %v4845 = vpop.permute.xlu0 %4844
            %4846 = vrot.lane.b32.xlu0 %v3976, 32
            %v4847 = vpop.permute.xlu0 %4846
            %v4849 = vsel %vm3982, %v4845, 0
            %v4852 = vsel %vm3982, %v4847, 0
            %4854 = vmatprep.subr.bf16.mxu0 0
            %4855 = vmatpush1.bf16.xpose.msra.mxu0 %v4852
            %4856 = vmatprep.subr.bf16.mxu0 0
            %4857 = vmatpush1.bf16.xpose.msra.mxu0 0
            %4858 = vmatprep.subr.bf16.mxu0 0
            %4859 = vmatpush1.bf16.xpose.msra.mxu0 0
            %4860 = vmatprep.subr.bf16.mxu0 0
            %4861 = vmatpush1.bf16.xpose.msra.mxu0 0
            %4862 = vmatprep.subr.bf16.mxu0 0
            %4863 = vmatpush1.bf16.xpose.msra.mxu0 0
            %4864 = vmatprep.subr.bf16.mxu0 0
            %4865 = vmatpush1.bf16.xpose.msra.mxu0 0
            %4866 = vmatprep.subr.bf16.mxu0 0
            %4867 = vmatpush1.bf16.xpose.msra.mxu0 0
            %4868 = vmatprep.subr.bf16.mxu0 0
            %4869 = vmatpush1.bf16.xpose.msra.mxu0 0
            %4870 = vmatprep.subr.bf16.mxu0 0
            %4871 = vmatpush1.bf16.xpose.msra.mxu0 0
            %4872 = vmatprep.subr.bf16.mxu0 0
            %4873 = vmatpush1.bf16.xpose.msra.mxu0 0
            %4874 = vmatprep.subr.bf16.mxu0 0
            %4875 = vmatpush1.bf16.xpose.msra.mxu0 0
            %4876 = vmatprep.subr.bf16.mxu0 0
            %4877 = vmatpush1.bf16.xpose.msra.mxu0 0
            %4878 = vmatprep.subr.bf16.mxu0 0
            %4879 = vmatpush1.bf16.xpose.msra.mxu0 0
            %4880 = vmatprep.subr.bf16.mxu0 0
            %4881 = vmatpush1.bf16.xpose.msra.mxu0 0
            %4882 = vmatprep.subr.bf16.mxu0 0
            %4883 = vmatpush1.bf16.xpose.msra.mxu0 0
            %4884 = vmatprep.subr.bf16.mxu0 0
            %4885 = vmatpush1.bf16.xpose.msra.mxu0 0
            %4886 = vmatprep.mubr.bf16.mxu0 0
            %4887 = vmatmul.mubr.bf16.gmra.mrb[0].mxu0 %v4849
            %v4888 = vpop.f32.mrb[0].mxu0
            %v4889 = vadd.f32 0.0, %v4888
            %v4890 = vpop.f32.mrb[0].mxu0
            %v4891 = vpop.f32.mrb[0].mxu0
            %v4892 = vpop.f32.mrb[0].mxu0
            %4893 = vdwg.mxu0
            %4894 = vrot.lane.b32.xlu0 %v4032, 32
            %v4895 = vpop.permute.xlu0 %4894
            %4896 = vrot.lane.b32.xlu0 %v3977, 32
            %v4897 = vpop.permute.xlu0 %4896
            %v4899 = vsel %vm3982, %v4895, 0
            %v4902 = vsel %vm3982, %v4897, 0
            %4904 = vmatprep.subr.bf16.mxu0 0
            %4905 = vmatpush1.bf16.xpose.msra.mxu0 %v4902
            %4906 = vmatprep.subr.bf16.mxu0 0
            %4907 = vmatpush1.bf16.xpose.msra.mxu0 0
            %4908 = vmatprep.subr.bf16.mxu0 0
            %4909 = vmatpush1.bf16.xpose.msra.mxu0 0
            %4910 = vmatprep.subr.bf16.mxu0 0
            %4911 = vmatpush1.bf16.xpose.msra.mxu0 0
            %4912 = vmatprep.subr.bf16.mxu0 0
            %4913 = vmatpush1.bf16.xpose.msra.mxu0 0
            %4914 = vmatprep.subr.bf16.mxu0 0
            %4915 = vmatpush1.bf16.xpose.msra.mxu0 0
            %4916 = vmatprep.subr.bf16.mxu0 0
            %4917 = vmatpush1.bf16.xpose.msra.mxu0 0
            %4918 = vmatprep.subr.bf16.mxu0 0
            %4919 = vmatpush1.bf16.xpose.msra.mxu0 0
            %4920 = vmatprep.subr.bf16.mxu0 0
            %4921 = vmatpush1.bf16.xpose.msra.mxu0 0
            %4922 = vmatprep.subr.bf16.mxu0 0
            %4923 = vmatpush1.bf16.xpose.msra.mxu0 0
            %4924 = vmatprep.subr.bf16.mxu0 0
            %4925 = vmatpush1.bf16.xpose.msra.mxu0 0
            %4926 = vmatprep.subr.bf16.mxu0 0
            %4927 = vmatpush1.bf16.xpose.msra.mxu0 0
            %4928 = vmatprep.subr.bf16.mxu0 0
            %4929 = vmatpush1.bf16.xpose.msra.mxu0 0
            %4930 = vmatprep.subr.bf16.mxu0 0
            %4931 = vmatpush1.bf16.xpose.msra.mxu0 0
            %4932 = vmatprep.subr.bf16.mxu0 0
            %4933 = vmatpush1.bf16.xpose.msra.mxu0 0
            %4934 = vmatprep.subr.bf16.mxu0 0
            %4935 = vmatpush1.bf16.xpose.msra.mxu0 0
            %4936 = vmatprep.mubr.bf16.mxu0 0
            %4937 = vmatmul.mubr.bf16.gmra.mrb[0].mxu0 %v4899
            %v4938 = vpop.f32.mrb[0].mxu0
            %v4939 = vadd.f32 0.0, %v4938
            %v4940 = vpop.f32.mrb[0].mxu0
            %v4941 = vpop.f32.mrb[0].mxu0
            %v4942 = vpop.f32.mrb[0].mxu0
            %4943 = vdwg.mxu0
            %v4944 = vmul.f32 %v4889, 0.17677669
            %v4945 = vmul.f32 %v4939, 0.17677669
            %v4946 = vsel %vm4081, %v4944, -inf
            %4947 = vmax.xlane.f32.xlu0 %v4946
            %v4948 = vpop.xlane.xlu0 %4947
            %v4949 = vsel %vm4081, %v4945, -inf
            %4950 = vmax.xlane.f32.xlu0 %v4949
            %v4951 = vpop.xlane.xlu0 %4950
            %v4952 = vsub.f32 %v4944, %v4948
            %v4953 = vsub.f32 %v4945, %v4951
            %v4954 = vmul.f32 %v4952, 1.442695
            %v4955 = vpow.pop %v4954
            %v4956 = vmul.f32 %v4953, 1.442695
            %v4957 = vpow.pop %v4956
            %v4958 = vsel %vm4081, %v4955, 0.0
            %4959 = vadd.xlane.f32.xlu0 %v4958
            %v4960 = vpop.xlane.xlu0 %4959
            %v4961 = vsel %vm4081, %v4957, 0.0
            %4962 = vadd.xlane.f32.xlu0 %v4961
            %v4963 = vpop.xlane.xlu0 %4962
            %v4964 = vrcp.pop %v4960
            %v4965 = vmul.f32 %v4955, %v4964
            %v4966 = vrcp.pop %v4963
            %v4967 = vmul.f32 %v4957, %v4966
            %v4968 = vpack.c.bf16 %v4965, %v4965
            %v4969 = vpack.c.bf16 %v4967, %v4967
            %4970 = vrot.lane.b32.xlu0 %v4106, 32
            %v4971 = vpop.permute.xlu0 %4970
            %v4973 = vsel %vm4108, %v4968, 0
            %v4976 = vsel %vm4112, %v4971, 0
            %4978 = vmatprep.subr.bf16.mxu0 0
            %4979 = vmatpush1.bf16.msra.mxu0 %v4976
            %4980 = vmatprep.subr.bf16.mxu0 0
            %4981 = vmatpush1.bf16.msra.mxu0 0
            %4982 = vmatprep.subr.bf16.mxu0 0
            %4983 = vmatpush1.bf16.msra.mxu0 0
            %4984 = vmatprep.subr.bf16.mxu0 0
            %4985 = vmatpush1.bf16.msra.mxu0 0
            %4986 = vmatprep.subr.bf16.mxu0 0
            %4987 = vmatpush1.bf16.msra.mxu0 0
            %4988 = vmatprep.subr.bf16.mxu0 0
            %4989 = vmatpush1.bf16.msra.mxu0 0
            %4990 = vmatprep.subr.bf16.mxu0 0
            %4991 = vmatpush1.bf16.msra.mxu0 0
            %4992 = vmatprep.subr.bf16.mxu0 0
            %4993 = vmatpush1.bf16.msra.mxu0 0
            %4994 = vmatprep.subr.bf16.mxu0 0
            %4995 = vmatpush1.bf16.msra.mxu0 0
            %4996 = vmatprep.subr.bf16.mxu0 0
            %4997 = vmatpush1.bf16.msra.mxu0 0
            %4998 = vmatprep.subr.bf16.mxu0 0
            %4999 = vmatpush1.bf16.msra.mxu0 0
            %5000 = vmatprep.subr.bf16.mxu0 0
            %5001 = vmatpush1.bf16.msra.mxu0 0
            %5002 = vmatprep.subr.bf16.mxu0 0
            %5003 = vmatpush1.bf16.msra.mxu0 0
            %5004 = vmatprep.subr.bf16.mxu0 0
            %5005 = vmatpush1.bf16.msra.mxu0 0
            %5006 = vmatprep.subr.bf16.mxu0 0
            %5007 = vmatpush1.bf16.msra.mxu0 0
            %5008 = vmatprep.subr.bf16.mxu0 0
            %5009 = vmatpush1.bf16.msra.mxu0 0
            %5010 = vmatprep.mubr.bf16.mxu0 0
            %5011 = vmatmul.mubr.bf16.gmra.mrb[0].mxu0 %v4973
            %v5012 = vpop.f32.mrb[0].mxu0
            %v5013 = vadd.f32 0.0, %v5012
            %v5014 = vpop.f32.mrb[0].mxu0
            %v5015 = vpop.f32.mrb[0].mxu0
            %v5016 = vpop.f32.mrb[0].mxu0
            %5017 = vdwg.mxu0
            %5018 = vrot.lane.b32.xlu0 %v4107, 32
            %v5019 = vpop.permute.xlu0 %5018
            %v5021 = vsel %vm4108, %v4969, 0
            %v5024 = vsel %vm4112, %v5019, 0
            %5026 = vmatprep.subr.bf16.mxu0 0
            %5027 = vmatpush1.bf16.msra.mxu0 %v5024
            %5028 = vmatprep.subr.bf16.mxu0 0
            %5029 = vmatpush1.bf16.msra.mxu0 0
            %5030 = vmatprep.subr.bf16.mxu0 0
            %5031 = vmatpush1.bf16.msra.mxu0 0
            %5032 = vmatprep.subr.bf16.mxu0 0
            %5033 = vmatpush1.bf16.msra.mxu0 0
            %5034 = vmatprep.subr.bf16.mxu0 0
            %5035 = vmatpush1.bf16.msra.mxu0 0
            %5036 = vmatprep.subr.bf16.mxu0 0
            %5037 = vmatpush1.bf16.msra.mxu0 0
            %5038 = vmatprep.subr.bf16.mxu0 0
            %5039 = vmatpush1.bf16.msra.mxu0 0
            %5040 = vmatprep.subr.bf16.mxu0 0
            %5041 = vmatpush1.bf16.msra.mxu0 0
            %5042 = vmatprep.subr.bf16.mxu0 0
            %5043 = vmatpush1.bf16.msra.mxu0 0
            %5044 = vmatprep.subr.bf16.mxu0 0
            %5045 = vmatpush1.bf16.msra.mxu0 0
            %5046 = vmatprep.subr.bf16.mxu0 0
            %5047 = vmatpush1.bf16.msra.mxu0 0
            %5048 = vmatprep.subr.bf16.mxu0 0
            %5049 = vmatpush1.bf16.msra.mxu0 0
            %5050 = vmatprep.subr.bf16.mxu0 0
            %5051 = vmatpush1.bf16.msra.mxu0 0
            %5052 = vmatprep.subr.bf16.mxu0 0
            %5053 = vmatpush1.bf16.msra.mxu0 0
            %5054 = vmatprep.subr.bf16.mxu0 0
            %5055 = vmatpush1.bf16.msra.mxu0 0
            %5056 = vmatprep.subr.bf16.mxu0 0
            %5057 = vmatpush1.bf16.msra.mxu0 0
            %5058 = vmatprep.mubr.bf16.mxu0 0
            %5059 = vmatmul.mubr.bf16.gmra.mrb[0].mxu0 %v5021
            %v5060 = vpop.f32.mrb[0].mxu0
            %v5061 = vadd.f32 0.0, %v5060
            %v5062 = vpop.f32.mrb[0].mxu0
            %v5063 = vpop.f32.mrb[0].mxu0
            %v5064 = vpop.f32.mrb[0].mxu0
            %5065 = vdwg.mxu0
            %v5066 = vpack.c.bf16 %v5013, %v5013
            %v5067 = vpack.c.bf16 %v5061, %v5061
            %v5070 = vunpack.c.l.b16 %v5066
            %v5071 = vunpack.c.l.b16 %v5067
            %v5072 = vrot.slane %v5071, 7
            %v5073 = vsel %vm4437, %v5072, %v5070
            %v5074 = vpack.c.b16 %v5073, %v5073
            %v5079 = vunpack.c.l.b16 %v2378
            %v5080 = vunpack.c.l.b16 %v2379
            %v5081 = vunpack.c.l.b16 %v2380
            %v5082 = vunpack.c.l.b16 %v2381
            %v5083 = vpack.c.b16 %v5080, %v5079
            %v5084 = vpack.c.b16 %v5082, %v5081
            %v5088 = vsel %vm3982, %v5074, 0
            %5090 = vmatprep.subr.bf16.mxu0 0
            %5091 = vmatpush1.bf16.msra.mxu0 %v5083
            %5092 = vmatprep.subr.bf16.mxu0 0
            %5093 = vmatpush1.bf16.msra.mxu0 %v5084
            %5094 = vmatprep.subr.bf16.mxu0 0
            %5095 = vmatpush1.bf16.msra.mxu0 0
            %5096 = vmatprep.subr.bf16.mxu0 0
            %5097 = vmatpush1.bf16.msra.mxu0 0
            %5098 = vmatprep.subr.bf16.mxu0 0
            %5099 = vmatpush1.bf16.msra.mxu0 0
            %5100 = vmatprep.subr.bf16.mxu0 0
            %5101 = vmatpush1.bf16.msra.mxu0 0
            %5102 = vmatprep.subr.bf16.mxu0 0
            %5103 = vmatpush1.bf16.msra.mxu0 0
            %5104 = vmatprep.subr.bf16.mxu0 0
            %5105 = vmatpush1.bf16.msra.mxu0 0
            %5106 = vmatprep.subr.bf16.mxu0 0
            %5107 = vmatpush1.bf16.msra.mxu0 0
            %5108 = vmatprep.subr.bf16.mxu0 0
            %5109 = vmatpush1.bf16.msra.mxu0 0
            %5110 = vmatprep.subr.bf16.mxu0 0
            %5111 = vmatpush1.bf16.msra.mxu0 0
            %5112 = vmatprep.subr.bf16.mxu0 0
            %5113 = vmatpush1.bf16.msra.mxu0 0
            %5114 = vmatprep.subr.bf16.mxu0 0
            %5115 = vmatpush1.bf16.msra.mxu0 0
            %5116 = vmatprep.subr.bf16.mxu0 0
            %5117 = vmatpush1.bf16.msra.mxu0 0
            %5118 = vmatprep.subr.bf16.mxu0 0
            %5119 = vmatpush1.bf16.msra.mxu0 0
            %5120 = vmatprep.subr.bf16.mxu0 0
            %5121 = vmatpush1.bf16.msra.mxu0 0
            %5122 = vmatprep.mubr.bf16.mxu0 0
            %5123 = vmatmul.mubr.bf16.gmra.mrb[0].mxu0 %v5088
            %v5124 = vpop.f32.mrb[0].mxu0
            %v5125 = vadd.f32 0.0, %v5124
            %v5126 = vpop.f32.mrb[0].mxu0
            %v5127 = vpop.f32.mrb[0].mxu0
            %v5128 = vpop.f32.mrb[0].mxu0
            %5129 = vdwg.mxu0
            %v5130 = vadd.f32 %v4843, %v5125
            %v5132 = vrot.slane %v5130, 1
            %v5133 = vrot.slane %v5130, 2
            %v5136 = vadd.f32 %v2102, %v5132
            %v5137 = vadd.f32 %v2103, %v5133
            %v5138 = vld [vmem:[%s1062] sm:$0x1]
            %v5140 = vlaneseq
            %v5141 = vshrl.u32 %v5140, 7
            %v5142 = vsub.s32 0, %v5141
            %v5143 = vrot.slane %v5138, %v5142
            %v5145 = vadd.f32 %v5136, %v5143
            %v5146 = vadd.f32 %v5137, %v5143
            %v5147 = vld [vmem:[%s1070] sm:$0x1]
            %v5148 = vld [vmem:[%s1078] sm:$0x1]
            %v5151 = vrot.slane %v5146, 7
            %vm5154 = vcmask 1047559
            %v5155 = vsel %vm5154, %v5145, 0.0
            %5156 = vadd.xlane.f32.xlu0 %v5155
            %v5157 = vpop.xlane.xlu0 %5156
            %vm5158 = vcmask 1040384
            %v5159 = vsel %vm5158, %v5151, 0.0
            %5160 = vadd.xlane.f32.xlu0 %v5159
            %v5161 = vpop.xlane.xlu0 %5160
            %v5162 = vrcp.pop 128.0
            %v5163 = vmul.f32 %v5157, %v5162
            %v5164 = vmul.f32 %v5161, %v5162
            %v5167 = vrot.slane %v5164, 1
            %v5170 = vsub.f32 %v5145, %v5163
            %v5171 = vsub.f32 %v5146, %v5167
            %v5172 = vmul.f32 %v5170, %v5170
            %v5173 = vmul.f32 %v5171, %v5171
            %v5176 = vrot.slane %v5173, 7
            %v5179 = vsel %vm5154, %v5172, 0.0
            %5180 = vadd.xlane.f32.xlu0 %v5179
            %v5181 = vpop.xlane.xlu0 %5180
            %v5182 = vsel %vm5158, %v5176, 0.0
            %5183 = vadd.xlane.f32.xlu0 %v5182
            %v5184 = vpop.xlane.xlu0 %5183
            %v5185 = vmul.f32 %v5181, %v5162
            %v5186 = vmul.f32 %v5184, %v5162
            %v5187 = vadd.f32 %v5185, 1e-05
            %v5188 = vadd.f32 %v5186, 1e-05
            %v5189 = vrsqrt.pop %v5187
            %v5190 = vrsqrt.pop %v5188
            %v5193 = vrot.slane %v5190, 1
            %v5196 = vmul.f32 %v5170, %v5189
            %v5197 = vmul.f32 %v5171, %v5193
            %v5199 = vlaneseq
            %v5200 = vshrl.u32 %v5199, 7
            %v5201 = vsub.s32 0, %v5200
            %v5202 = vrot.slane %v5147, %v5201
            %v5204 = vmul.f32 %v5196, %v5202
            %v5205 = vmul.f32 %v5197, %v5202
            %v5207 = vlaneseq
            %v5208 = vshrl.u32 %v5207, 7
            %v5209 = vsub.s32 0, %v5208
            %v5210 = vrot.slane %v5148, %v5209
            %v5212 = vadd.f32 %v5204, %v5210
            %v5213 = vadd.f32 %v5205, %v5210
            %v5214 = vpack.c.bf16 %v5212, %v5212
            %v5215 = vpack.c.bf16 %v5213, %v5213
            %v5216 = vld [vmem:[%s1087] sm:$0xff]
            %v5217 = vld [vmem:[%s1087 + $0x8] sm:$0xff]
            %v5218 = vld [vmem:[%s1087 + $0x10] sm:$0xff]
            %v5219 = vld [vmem:[%s1087 + $0x18] sm:$0xff]
            %v5220 = vld [vmem:[%s1087 + $0x20] sm:$0xff]
            %v5221 = vld [vmem:[%s1087 + $0x28] sm:$0xff]
            %v5222 = vld [vmem:[%s1087 + $0x30] sm:$0xff]
            %v5223 = vld [vmem:[%s1087 + $0x38] sm:$0xff]
            %v5224 = vld [vmem:[%s1087 + $0x40] sm:$0xff]
            %v5225 = vld [vmem:[%s1087 + $0x48] sm:$0xff]
            %v5226 = vld [vmem:[%s1087 + $0x50] sm:$0xff]
            %v5227 = vld [vmem:[%s1087 + $0x58] sm:$0xff]
            %v5228 = vld [vmem:[%s1087 + $0x60] sm:$0xff]
            %v5229 = vld [vmem:[%s1087 + $0x68] sm:$0xff]
            %v5230 = vld [vmem:[%s1087 + $0x70] sm:$0xff]
            %v5231 = vld [vmem:[%s1087 + $0x78] sm:$0xff]
            %v5232 = vld [vmem:[%s1096] sm:$0x3]
            %v5234 = vlaneseq
            %v5235 = vshrl.u32 %v5234, 7
            %v5236 = vsub.s32 0, %v5235
            %v5237 = vrot.slane %v5232, %v5236
            %v5238 = vlaneseq
            %v5239 = vshrl.u32 %v5238, 7
            %v5240 = vsub.s32 1, %v5239
            %v5241 = vrot.slane %v5232, %v5240
            %v5246 = vunpack.c.l.b16 %v5214
            %v5247 = vunpack.c.l.b16 %v5215
            %v5248 = vrot.slane %v5246, 7
            %v5249 = vrot.slane %v5247, 6
            %v5250 = vsel %vm4437, %v5249, %v5248
            %v5251 = vpack.c.b16 %v5250, %v5250
            %v5269 = vunpack.c.l.b16 %v5216
            %v5270 = vunpack.c.h.b16 %v5216
            %v5271 = vunpack.c.l.b16 %v5217
            %v5272 = vunpack.c.h.b16 %v5217
            %v5273 = vunpack.c.l.b16 %v5218
            %v5274 = vunpack.c.h.b16 %v5218
            %v5275 = vunpack.c.l.b16 %v5219
            %v5276 = vunpack.c.h.b16 %v5219
            %v5277 = vunpack.c.l.b16 %v5220
            %v5278 = vunpack.c.h.b16 %v5220
            %v5279 = vunpack.c.l.b16 %v5221
            %v5280 = vunpack.c.h.b16 %v5221
            %v5281 = vunpack.c.l.b16 %v5222
            %v5282 = vunpack.c.h.b16 %v5222
            %v5283 = vunpack.c.l.b16 %v5223
            %v5284 = vunpack.c.h.b16 %v5223
            %v5285 = vunpack.c.l.b16 %v5224
            %v5286 = vunpack.c.h.b16 %v5224
            %v5287 = vunpack.c.l.b16 %v5225
            %v5288 = vunpack.c.h.b16 %v5225
            %v5289 = vunpack.c.l.b16 %v5226
            %v5290 = vunpack.c.h.b16 %v5226
            %v5291 = vunpack.c.l.b16 %v5227
            %v5292 = vunpack.c.h.b16 %v5227
            %v5293 = vunpack.c.l.b16 %v5228
            %v5294 = vunpack.c.h.b16 %v5228
            %v5295 = vunpack.c.l.b16 %v5229
            %v5296 = vunpack.c.h.b16 %v5229
            %v5297 = vunpack.c.l.b16 %v5230
            %v5298 = vunpack.c.h.b16 %v5230
            %v5299 = vunpack.c.l.b16 %v5231
            %v5300 = vunpack.c.h.b16 %v5231
            %v5301 = vpack.c.b16 %v5271, %v5269
            %v5302 = vpack.c.b16 %v5272, %v5270
            %v5303 = vpack.c.b16 %v5275, %v5273
            %v5304 = vpack.c.b16 %v5276, %v5274
            %v5305 = vpack.c.b16 %v5279, %v5277
            %v5306 = vpack.c.b16 %v5280, %v5278
            %v5307 = vpack.c.b16 %v5283, %v5281
            %v5308 = vpack.c.b16 %v5284, %v5282
            %v5309 = vpack.c.b16 %v5287, %v5285
            %v5310 = vpack.c.b16 %v5288, %v5286
            %v5311 = vpack.c.b16 %v5291, %v5289
            %v5312 = vpack.c.b16 %v5292, %v5290
            %v5313 = vpack.c.b16 %v5295, %v5293
            %v5314 = vpack.c.b16 %v5296, %v5294
            %v5315 = vpack.c.b16 %v5299, %v5297
            %v5316 = vpack.c.b16 %v5300, %v5298
            %5333 = vmatprep.subr.bf16.mxu0 %v5302
            %5334 = vmatpush1.bf16.msra.mxu0 %v5301
            %5335 = vmatprep.subr.bf16.mxu0 %v5304
            %5336 = vmatpush1.bf16.msra.mxu0 %v5303
            %5337 = vmatprep.subr.bf16.mxu0 %v5306
            %5338 = vmatpush1.bf16.msra.mxu0 %v5305
            %5339 = vmatprep.subr.bf16.mxu0 %v5308
            %5340 = vmatpush1.bf16.msra.mxu0 %v5307
            %5341 = vmatprep.subr.bf16.mxu0 %v5310
            %5342 = vmatpush1.bf16.msra.mxu0 %v5309
            %5343 = vmatprep.subr.bf16.mxu0 %v5312
            %5344 = vmatpush1.bf16.msra.mxu0 %v5311
            %5345 = vmatprep.subr.bf16.mxu0 %v5314
            %5346 = vmatpush1.bf16.msra.mxu0 %v5313
            %5347 = vmatprep.subr.bf16.mxu0 %v5316
            %5348 = vmatpush1.bf16.msra.mxu0 %v5315
            %5349 = vmatprep.subr.bf16.mxu0 0
            %5350 = vmatpush1.bf16.msra.mxu0 0
            %5351 = vmatprep.subr.bf16.mxu0 0
            %5352 = vmatpush1.bf16.msra.mxu0 0
            %5353 = vmatprep.subr.bf16.mxu0 0
            %5354 = vmatpush1.bf16.msra.mxu0 0
            %5355 = vmatprep.subr.bf16.mxu0 0
            %5356 = vmatpush1.bf16.msra.mxu0 0
            %5357 = vmatprep.subr.bf16.mxu0 0
            %5358 = vmatpush1.bf16.msra.mxu0 0
            %5359 = vmatprep.subr.bf16.mxu0 0
            %5360 = vmatpush1.bf16.msra.mxu0 0
            %5361 = vmatprep.subr.bf16.mxu0 0
            %5362 = vmatpush1.bf16.msra.mxu0 0
            %5363 = vmatprep.subr.bf16.mxu0 0
            %5364 = vmatpush1.bf16.msra.mxu0 0
            %5365 = vmatprep.mubr.bf16.mxu0 0
            %5366 = vmatmul.mubr.bf16.gmra.mrb[0].mxu0 %v5251
            %v5367 = vpop.f32.mrb[0].mxu0
            %v5368 = vadd.f32 %v5237, %v5367
            %v5369 = vpop.f32.mrb[0].mxu0
            %v5370 = vadd.f32 %v5241, %v5369
            %v5371 = vpop.f32.mrb[0].mxu0
            %v5372 = vpop.f32.mrb[0].mxu0
            %5373 = vdwg.mxu0
            %v5374 = vmul.f32 %v5368, 0.5
            %v5375 = vmul.f32 %v5370, 0.5
            %v5376 = vmul.f32 %v5368, 0.044715
            %v5377 = vmul.f32 %v5370, 0.044715
            %v5378 = vmul.f32 %v5376, %v5368
            %v5379 = vmul.f32 %v5377, %v5370
            %v5380 = vmul.f32 %v5378, %v5368
            %v5381 = vmul.f32 %v5379, %v5370
            %v5382 = vadd.f32 %v5368, %v5380
            %v5383 = vadd.f32 %v5370, %v5381
            %v5384 = vmul.f32 %v5382, 0.7978846
            %v5385 = vmul.f32 %v5383, 0.7978846
            %v5386 = vtanh.pop %v5384
            %v5387 = vtanh.pop %v5385
            %v5388 = vadd.f32 %v5386, 1.0
            %v5389 = vadd.f32 %v5387, 1.0
            %v5390 = vmul.f32 %v5374, %v5388
            %v5391 = vmul.f32 %v5375, %v5389
            %v5392 = vpack.c.bf16 %v5390, %v5390
            %v5393 = vpack.c.bf16 %v5391, %v5391
            %v5394 = vld [vmem:[%s1105] sm:$0xf]
            %v5395 = vld [vmem:[%s1105 + $0x4] sm:$0xf]
            %v5396 = vld [vmem:[%s1105 + $0x8] sm:$0xf]
            %v5397 = vld [vmem:[%s1105 + $0xc] sm:$0xf]
            %v5398 = vld [vmem:[%s1105 + $0x10] sm:$0xf]
            %v5399 = vld [vmem:[%s1105 + $0x14] sm:$0xf]
            %v5400 = vld [vmem:[%s1105 + $0x18] sm:$0xf]
            %v5401 = vld [vmem:[%s1105 + $0x1c] sm:$0xf]
            %v5402 = vld [vmem:[%s1105 + $0x20] sm:$0xf]
            %v5403 = vld [vmem:[%s1105 + $0x24] sm:$0xf]
            %v5404 = vld [vmem:[%s1105 + $0x28] sm:$0xf]
            %v5405 = vld [vmem:[%s1105 + $0x2c] sm:$0xf]
            %v5406 = vld [vmem:[%s1105 + $0x30] sm:$0xf]
            %v5407 = vld [vmem:[%s1105 + $0x34] sm:$0xf]
            %v5408 = vld [vmem:[%s1105 + $0x38] sm:$0xf]
            %v5409 = vld [vmem:[%s1105 + $0x3c] sm:$0xf]
            %v5410 = vld [vmem:[%s1105 + $0x40] sm:$0xf]
            %v5411 = vld [vmem:[%s1105 + $0x44] sm:$0xf]
            %v5412 = vld [vmem:[%s1105 + $0x48] sm:$0xf]
            %v5413 = vld [vmem:[%s1105 + $0x4c] sm:$0xf]
            %v5414 = vld [vmem:[%s1105 + $0x50] sm:$0xf]
            %v5415 = vld [vmem:[%s1105 + $0x54] sm:$0xf]
            %v5416 = vld [vmem:[%s1105 + $0x58] sm:$0xf]
            %v5417 = vld [vmem:[%s1105 + $0x5c] sm:$0xf]
            %v5418 = vld [vmem:[%s1105 + $0x60] sm:$0xf]
            %v5419 = vld [vmem:[%s1105 + $0x64] sm:$0xf]
            %v5420 = vld [vmem:[%s1105 + $0x68] sm:$0xf]
            %v5421 = vld [vmem:[%s1105 + $0x6c] sm:$0xf]
            %v5422 = vld [vmem:[%s1105 + $0x70] sm:$0xf]
            %v5423 = vld [vmem:[%s1105 + $0x74] sm:$0xf]
            %v5424 = vld [vmem:[%s1105 + $0x78] sm:$0xf]
            %v5425 = vld [vmem:[%s1105 + $0x7c] sm:$0xf]
            %v5426 = vld [vmem:[%s1113] sm:$0x1]
            %v5428 = vlaneseq
            %v5429 = vshrl.u32 %v5428, 7
            %v5430 = vsub.s32 0, %v5429
            %v5431 = vrot.slane %v5426, %v5430
            %v5465 = vunpack.c.l.b16 %v5394
            %v5466 = vunpack.c.l.b16 %v5395
            %v5467 = vunpack.c.l.b16 %v5396
            %v5468 = vunpack.c.l.b16 %v5397
            %v5469 = vunpack.c.l.b16 %v5398
            %v5470 = vunpack.c.l.b16 %v5399
            %v5471 = vunpack.c.l.b16 %v5400
            %v5472 = vunpack.c.l.b16 %v5401
            %v5473 = vunpack.c.l.b16 %v5402
            %v5474 = vunpack.c.l.b16 %v5403
            %v5475 = vunpack.c.l.b16 %v5404
            %v5476 = vunpack.c.l.b16 %v5405
            %v5477 = vunpack.c.l.b16 %v5406
            %v5478 = vunpack.c.l.b16 %v5407
            %v5479 = vunpack.c.l.b16 %v5408
            %v5480 = vunpack.c.l.b16 %v5409
            %v5481 = vunpack.c.l.b16 %v5410
            %v5482 = vunpack.c.l.b16 %v5411
            %v5483 = vunpack.c.l.b16 %v5412
            %v5484 = vunpack.c.l.b16 %v5413
            %v5485 = vunpack.c.l.b16 %v5414
            %v5486 = vunpack.c.l.b16 %v5415
            %v5487 = vunpack.c.l.b16 %v5416
            %v5488 = vunpack.c.l.b16 %v5417
            %v5489 = vunpack.c.l.b16 %v5418
            %v5490 = vunpack.c.l.b16 %v5419
            %v5491 = vunpack.c.l.b16 %v5420
            %v5492 = vunpack.c.l.b16 %v5421
            %v5493 = vunpack.c.l.b16 %v5422
            %v5494 = vunpack.c.l.b16 %v5423
            %v5495 = vunpack.c.l.b16 %v5424
            %v5496 = vunpack.c.l.b16 %v5425
            %v5497 = vpack.c.b16 %v5466, %v5465
            %v5498 = vpack.c.b16 %v5468, %v5467
            %v5499 = vpack.c.b16 %v5470, %v5469
            %v5500 = vpack.c.b16 %v5472, %v5471
            %v5501 = vpack.c.b16 %v5474, %v5473
            %v5502 = vpack.c.b16 %v5476, %v5475
            %v5503 = vpack.c.b16 %v5478, %v5477
            %v5504 = vpack.c.b16 %v5480, %v5479
            %v5505 = vpack.c.b16 %v5482, %v5481
            %v5506 = vpack.c.b16 %v5484, %v5483
            %v5507 = vpack.c.b16 %v5486, %v5485
            %v5508 = vpack.c.b16 %v5488, %v5487
            %v5509 = vpack.c.b16 %v5490, %v5489
            %v5510 = vpack.c.b16 %v5492, %v5491
            %v5511 = vpack.c.b16 %v5494, %v5493
            %v5512 = vpack.c.b16 %v5496, %v5495
            %5529 = vmatprep.subr.bf16.mxu0 0
            %5530 = vmatpush1.bf16.msra.mxu0 %v5497
            %5531 = vmatprep.subr.bf16.mxu0 0
            %5532 = vmatpush1.bf16.msra.mxu0 %v5498
            %5533 = vmatprep.subr.bf16.mxu0 0
            %5534 = vmatpush1.bf16.msra.mxu0 %v5499
            %5535 = vmatprep.subr.bf16.mxu0 0
            %5536 = vmatpush1.bf16.msra.mxu0 %v5500
            %5537 = vmatprep.subr.bf16.mxu0 0
            %5538 = vmatpush1.bf16.msra.mxu0 %v5501
            %5539 = vmatprep.subr.bf16.mxu0 0
            %5540 = vmatpush1.bf16.msra.mxu0 %v5502
            %5541 = vmatprep.subr.bf16.mxu0 0
            %5542 = vmatpush1.bf16.msra.mxu0 %v5503
            %5543 = vmatprep.subr.bf16.mxu0 0
            %5544 = vmatpush1.bf16.msra.mxu0 %v5504
            %5545 = vmatprep.subr.bf16.mxu0 0
            %5546 = vmatpush1.bf16.msra.mxu0 %v5505
            %5547 = vmatprep.subr.bf16.mxu0 0
            %5548 = vmatpush1.bf16.msra.mxu0 %v5506
            %5549 = vmatprep.subr.bf16.mxu0 0
            %5550 = vmatpush1.bf16.msra.mxu0 %v5507
            %5551 = vmatprep.subr.bf16.mxu0 0
            %5552 = vmatpush1.bf16.msra.mxu0 %v5508
            %5553 = vmatprep.subr.bf16.mxu0 0
            %5554 = vmatpush1.bf16.msra.mxu0 %v5509
            %5555 = vmatprep.subr.bf16.mxu0 0
            %5556 = vmatpush1.bf16.msra.mxu0 %v5510
            %5557 = vmatprep.subr.bf16.mxu0 0
            %5558 = vmatpush1.bf16.msra.mxu0 %v5511
            %5559 = vmatprep.subr.bf16.mxu0 0
            %5560 = vmatpush1.bf16.msra.mxu0 %v5512
            %5561 = vmatprep.mubr.bf16.mxu0 %v5393
            %5562 = vmatmul.mubr.bf16.gmra.mrb[0].mxu0 %v5392
            %v5563 = vpop.f32.mrb[0].mxu0
            %v5564 = vadd.f32 %v5431, %v5563
            %v5565 = vpop.f32.mrb[0].mxu0
            %v5566 = vpop.f32.mrb[0].mxu0
            %v5567 = vpop.f32.mrb[0].mxu0
            %5568 = vdwg.mxu0
            %v5570 = vrot.slane %v5564, 1
            %v5571 = vrot.slane %v5564, 2
            %v5574 = vadd.f32 %v5212, %v5570
            %v5575 = vadd.f32 %v5213, %v5571
            %v5576 = vld [vmem:[%s1121] sm:$0x1]
            %v5577 = vld [vmem:[%s1129] sm:$0x1]
            %v5580 = vrot.slane %v5575, 7
            %v5583 = vsel %vm5154, %v5574, 0.0
            %5584 = vadd.xlane.f32.xlu0 %v5583
            %v5585 = vpop.xlane.xlu0 %5584
            %v5586 = vsel %vm5158, %v5580, 0.0
            %5587 = vadd.xlane.f32.xlu0 %v5586
            %v5588 = vpop.xlane.xlu0 %5587
            %v5589 = vmul.f32 %v5585, %v5162
            %v5590 = vmul.f32 %v5588, %v5162
            %v5593 = vrot.slane %v5590, 1
            %v5596 = vsub.f32 %v5574, %v5589
            %v5597 = vsub.f32 %v5575, %v5593
            %v5598 = vmul.f32 %v5596, %v5596
            %v5599 = vmul.f32 %v5597, %v5597
            %v5602 = vrot.slane %v5599, 7
            %v5605 = vsel %vm5154, %v5598, 0.0
            %5606 = vadd.xlane.f32.xlu0 %v5605
            %v5607 = vpop.xlane.xlu0 %5606
            %v5608 = vsel %vm5158, %v5602, 0.0
            %5609 = vadd.xlane.f32.xlu0 %v5608
            %v5610 = vpop.xlane.xlu0 %5609
            %v5611 = vmul.f32 %v5607, %v5162
            %v5612 = vmul.f32 %v5610, %v5162
            %v5613 = vadd.f32 %v5611, 1e-05
            %v5614 = vadd.f32 %v5612, 1e-05
            %v5615 = vrsqrt.pop %v5613
            %v5616 = vrsqrt.pop %v5614
            %v5619 = vrot.slane %v5616, 1
            %v5622 = vmul.f32 %v5596, %v5615
            %v5623 = vmul.f32 %v5597, %v5619
            %v5625 = vlaneseq
            %v5626 = vshrl.u32 %v5625, 7
            %v5627 = vsub.s32 0, %v5626
            %v5628 = vrot.slane %v5576, %v5627
            %v5630 = vmul.f32 %v5622, %v5628
            %v5631 = vmul.f32 %v5623, %v5628
            %v5633 = vlaneseq
            %v5634 = vshrl.u32 %v5633, 7
            %v5635 = vsub.s32 0, %v5634
            %v5636 = vrot.slane %v5577, %v5635
            %v5638 = vadd.f32 %v5630, %v5636
            %v5639 = vadd.f32 %v5631, %v5636
            %5640 = vst [vmem:[%s1272 - $0x7] sm:$0x80] %v5638
            %5641 = vst [vmem:[%s1272 - $0x6] sm:$0x80] %v5639
          $region312: #{retrieval_database_forward.3} parent=299 // pred_fallthru
            _
        $region300: #{retrieval_database_forward.3} parent=95 // pred_fallthru
          _
        %s5642 = sand.u32 %s630, 1
        %s5643 = scalar_lea.sflag [#allocation10], %s5642
        %s5644 = sand.u32 %s630, 1
        %s5645 = smul.addr %s5644, 32
        %s5646 = scalar_lea.vmem [#allocation29], %s5645
        %s5647 = sand.u32 %s67, 1
        %s5648 = scalar_lea.sflag [#allocation31], %s5647
        %s5649 = sand.u32 %s656, 1
        %s5650 = smul.addr %s5649, 8
        %s5651 = scalar_lea.vmem [#allocation30], %s5650
        %s5652 = sand.u32 %s67, 1
        %s5653 = scalar_lea.sflag [#allocation31], %s5652
        %s5654 = sand.u32 %s682, 1
        %s5655 = smul.addr %s5654, 2
        %s5656 = scalar_lea.vmem [#allocation32], %s5655
        // Predicated region
        $region313: #{retrieval_database_forward.3} parent=95 // pred_check
          %p5657 = pneg %p640
        $region314: #{retrieval_database_forward.3} parent=95 // pred_check_branch
          %5659 = sbr.rel (%p5657) target = $region316
        $region315: #{retrieval_database_forward.3} parent=95 // pred_region
          %s5660 = smul.u32 2, %s71
          %s5662 = ssub.s32 512, 512
          %5663 = vsyncadd %s5643, %s5662
          %s5664 = smul.addr %s5660, 2
          %s5665 = smul.addr %s5664, 128
          %s5666 = scalar_lea.hbm %s22, %s5665
          %s5667 = sshll.u32 %s5646, 4
          %s5668 = int_to_ptr.vmem [resolvable:$true] %s5667
          %5673 = dma.vmem_to_hbm [thread:$0]  %s5668, 512, %s5666, %s5643, 128, 128, 8
        $region316: #{retrieval_database_forward.3} parent=95 // pred_fallthru
          _
        // Predicated region
        $region317: #{retrieval_database_forward.3} parent=95 // pred_check
          %p5674 = pneg %p666
        $region318: #{retrieval_database_forward.3} parent=95 // pred_check_branch
          %5676 = sbr.rel (%p5674) target = $region320
        $region319: #{retrieval_database_forward.3} parent=95 // pred_region
          %s5677 = smul.u32 2, %s71
          %s5679 = ssub.s32 128, 128
          %5680 = vsyncadd %s5648, %s5679
          %s5681 = smul.addr %s5677, 64
          %s5682 = scalar_lea.hbm %s23, %s5681
          %s5683 = sshll.u32 %s5651, 4
          %s5684 = int_to_ptr.vmem [resolvable:$true] %s5683
          %5689 = dma.vmem_to_hbm [thread:$0]  %s5684, 128, %s5682, %s5648, 64, 64, 4
        $region320: #{retrieval_database_forward.3} parent=95 // pred_fallthru
          _
        // Predicated region
        $region321: #{retrieval_database_forward.3} parent=95 // pred_check
          %p5690 = pneg %p692
        $region322: #{retrieval_database_forward.3} parent=95 // pred_check_branch
          %5692 = sbr.rel (%p5690) target = $region324
        $region323: #{retrieval_database_forward.3} parent=95 // pred_region
          %s5693 = smul.u32 2, %s71
          %s5695 = ssub.s32 32, 32
          %5696 = vsyncadd %s5653, %s5695
          %s5697 = smul.addr %s5693, 16
          %s5698 = scalar_lea.hbm %s24, %s5697
          %s5699 = sshll.u32 %s5656, 4
          %s5700 = int_to_ptr.vmem [resolvable:$true] %s5699
          %5705 = dma.vmem_to_hbm [thread:$0]  %s5700, 32, %s5698, %s5653, 16, 16, 1
        $region324: #{retrieval_database_forward.3} parent=95 // pred_fallthru
          _
      $region96: #{retrieval_database_forward.3} parent=5 // pred_fallthru
        _
      %p5706 = scmp.le.s32.totalorder 2, %s62
      // Predicated region
      $region325: #{retrieval_database_forward.3} parent=5 // pred_check
        %p5707 = pneg %p5706
      $region326: #{retrieval_database_forward.3} parent=5 // pred_check_branch
        %5709 = sbr.rel (%p5707) target = $region328
      $region327: #{retrieval_database_forward.3} parent=5 // pred_region
        %s5710 = ssub.s32 %s62, 2
        // Predicated region
        $region329: #{retrieval_database_forward.3} parent=327 // pred_check
          %p5711 = pneg %p646
        $region330: #{retrieval_database_forward.3} parent=327 // pred_check_branch
          %5713 = sbr.rel (%p5711) target = $region332
        $region331: #{retrieval_database_forward.3} parent=327 // pred_region
          %s5714 = sand.u32 %s631, 1
          %s5715 = scalar_lea.sflag [#allocation10], %s5714
          %s5716 = sand.u32 %s631, 1
          %s5717 = smul.addr %s5716, 32
          %s5718 = scalar_lea.vmem [#allocation29], %s5717
          %5719 = dma.done %s5715, 512
        $region332: #{retrieval_database_forward.3} parent=327 // pred_fallthru
          _
        // Predicated region
        $region333: #{retrieval_database_forward.3} parent=327 // pred_check
          %p5720 = pneg %p672
        $region334: #{retrieval_database_forward.3} parent=327 // pred_check_branch
          %5722 = sbr.rel (%p5720) target = $region336
        $region335: #{retrieval_database_forward.3} parent=327 // pred_region
          %s5723 = sand.u32 %s68, 1
          %s5724 = scalar_lea.sflag [#allocation31], %s5723
          %s5725 = sand.u32 %s657, 1
          %s5726 = smul.addr %s5725, 8
          %s5727 = scalar_lea.vmem [#allocation30], %s5726
          %5728 = dma.done %s5724, 128
        $region336: #{retrieval_database_forward.3} parent=327 // pred_fallthru
          _
        // Predicated region
        $region337: #{retrieval_database_forward.3} parent=327 // pred_check
          %p5729 = pneg %p698
        $region338: #{retrieval_database_forward.3} parent=327 // pred_check_branch
          %5731 = sbr.rel (%p5729) target = $region340
        $region339: #{retrieval_database_forward.3} parent=327 // pred_region
          %s5732 = sand.u32 %s68, 1
          %s5733 = scalar_lea.sflag [#allocation31], %s5732
          %s5734 = sand.u32 %s683, 1
          %s5735 = smul.addr %s5734, 2
          %s5736 = scalar_lea.vmem [#allocation32], %s5735
          %5737 = dma.done %s5733, 32
        $region340: #{retrieval_database_forward.3} parent=327 // pred_fallthru
          _
      $region328: #{retrieval_database_forward.3} parent=5 // pred_fallthru
        _
    $region6: #{retrieval_database_forward.3} parent=1 // loop_footer
      %s66 = sadd.s32 1, %s62
    $region7: #{retrieval_database_forward.3} parent=1 // loop_footer_branch
      %61 = sbr.rel target = $region3
    $region8: #{retrieval_database_forward.3} parent=1 // loop_exit
      _
    %5738 = vsyncpa [#allocation9], 1
    %s5739 = scalar_lea.sflag [#allocation9], 1
    %5740 = vsyncpa %s5739, 1
    %5741 = vsyncpa [#allocation12], 1
    %s5742 = scalar_lea.sflag [#allocation12], 1
    %5743 = vsyncpa %s5742, 1
    %5744 = vsyncpa [#allocation15], 1
    %s5745 = scalar_lea.sflag [#allocation15], 1
    %5746 = vsyncpa %s5745, 1
    %5747 = vsyncpa [#allocation18], 1
    %s5748 = scalar_lea.sflag [#allocation18], 1
    %5749 = vsyncpa %s5748, 1
    %5750 = vsyncpa [#allocation21], 1
    %s5751 = scalar_lea.sflag [#allocation21], 1
    %5752 = vsyncpa %s5751, 1
    %5753 = vsyncpa [#allocation24], 1
    %s5754 = scalar_lea.sflag [#allocation24], 1
    %5755 = vsyncpa %s5754, 1
    %5756 = vsyncpa [#allocation27], 1
    %s5757 = scalar_lea.sflag [#allocation27], 1
    %5758 = vsyncpa %s5757, 1
    %5759 = vsyncpa [#allocation10], 1
    %s5760 = scalar_lea.sflag [#allocation10], 1
    %5761 = vsyncpa %s5760, 1
    %5762 = vsyncpa [#allocation31], 1
    %s5763 = scalar_lea.sflag [#allocation31], 1
    %5764 = vsyncpa %s5763, 1
  %5765 = vsyncmov [#allocation5]
  %s5766 = vpop.sfrf %5765
  %p5767 = scmp.eq.s32.totalorder %s5766, 0
  %p5768 = pneg %p5767
  %5770 = shalt.err (%p5768)
  %s5771 = scalar_lea.sflag [#allocation5], 1
  %5772 = vsyncmov %s5771
  %s5773 = vpop.sfrf %5772
  %p5774 = scmp.eq.s32.totalorder %s5773, 0
  %p5775 = pneg %p5774
  %5777 = shalt.err (%p5775)
  %s5778 = scalar_lea.sflag [#allocation5], 2
  %5779 = vsyncmov %s5778
  %s5780 = vpop.sfrf %5779
  %p5781 = scmp.eq.s32.totalorder %s5780, 0
  %p5782 = pneg %p5781
  %5784 = shalt.err (%p5782)
  %s5785 = scalar_lea.sflag [#allocation5], 3
  %5786 = vsyncmov %s5785
  %s5787 = vpop.sfrf %5786
  %p5788 = scmp.eq.s32.totalorder %s5787, 0
  %p5789 = pneg %p5788
  %5791 = shalt.err (%p5789)

</llo_original>
